<compile_context>
chip_gen: v7x
topology: tpu7x:2x2x1
jax: 0.10.0
libtpu: 0.0.40
codegen_flags: <defaults>
</compile_context>

<pallas_src>
import functools

import jax
import jax.numpy as jnp
from jax import lax
from jax.experimental import pallas as pl
from jax.experimental.pallas import tpu as pltpu


def _fast_recip(x):
    # EUP approximate reciprocal seed + one Newton-Raphson step (~f32 accurate,
    # keeps the exact-divide sequence off the VALU critical path).
    r = pl.reciprocal(x, approx=True)
    return r * (2.0 - x * r)


def _softmax_lastdim(x):
    # softmax over the last axis (output_caps); reciprocal only of the reduced
    # (..., 1) denominator, then broadcast-multiply.
    m = jnp.max(x, axis=-1, keepdims=True)
    e = jnp.exp(x - m)
    return e * _fast_recip(jnp.sum(e, axis=-1, keepdims=True))


def _mm(a, b):
    # Small helper matmul: contract last dim of a with first dim of b.
    # HIGHEST keeps f32 contraction accuracy (required for the 1e-3 tolerance
    # after 3 routing iterations); the MXU is otherwise idle in this kernel.
    return lax.dot_general(a, b, (((1,), (0,)), ((), ())),
                           precision=lax.Precision.HIGHEST,
                           preferred_element_type=jnp.float32)


def _squash_scale(s, et_mat):
    # s: (bt, OD) folded capsule sums.  Returns the per-capsule squash scale
    # scale[b, o] = sqrt(l2)/(1+l2) with l2[b,o] = sum_d s[b, o*D+d]^2.
    # (sqrt(l2)/(1+l2) == l2/(1+l2)/sqrt(l2); this form avoids the reference's
    # 0/0 NaN at s == 0 -- never hit for random inputs.)
    l2 = _mm(s * s, et_mat)                        # (bt, O) group reduce on MXU
    return jnp.sqrt(l2) * _fast_recip(1.0 + l2)    # (bt, O)


def _routing_kernel(b_ref, c0e_ref, e_ref, et_ref, u_ref, v_ref, *,
                    n_iterations, batch_tile, input_caps, output_caps,
                    output_dim):
    bt, I, O = batch_tile, input_caps, output_caps
    OD = O * output_dim

    u = u_ref[...]                                 # (bt, I, OD) f32
    e_mat = e_ref[...]                             # (O, OD)  0/1 group expand
    et_mat = et_ref[...]                           # (OD, O)  0/1 group collapse

    # Iteration 0: batch-independent coupling coefficients (softmax(b)
    # expanded over D, hoisted to the wrapper).
    s = jnp.sum(c0e_ref[...][None, :, :] * u, axis=1)         # (bt, OD)
    scale = _squash_scale(s, et_mat)                           # (bt, O)

    b_batch = b_ref[...][None, :, :]                           # (1, I, O)
    for _ in range(n_iterations):
        # agreement[b,i,o] = sum_d u[b,i,o*D+d] * v[b,o*D+d]
        #                  = scale[b,o] * sum_d u[b,i,o*D+d] * s[b,o*D+d]
        us = (u * s[:, None, :]).reshape(bt * I, OD)
        raw = _mm(us, et_mat).reshape(bt, I, O)                # (bt, I, O)
        b_batch = b_batch + raw * scale[:, None, :]            # (bt, I, O)
        c = _softmax_lastdim(b_batch)                          # (bt, I, O)
        c_exp = _mm(c.reshape(bt * I, O), e_mat).reshape(bt, I, OD)
        s = jnp.sum(c_exp * u, axis=1)                         # (bt, OD)
        scale = _squash_scale(s, et_mat)

    # Final squashed output, single dense (bt, OD) store.
    v_ref[...] = (s * _mm(scale, e_mat)).astype(v_ref.dtype)


def _pick_batch_tile(batch, requested):
    bt = max(1, min(requested, batch))
    # Keep bt a divisor of batch and (unless it covers the whole batch) a
    # multiple of 8 so the (bt, O*D) f32 output block tiles sublanes cleanly.
    while batch % bt or (bt % 8 and bt != batch):
        bt -= 1
        if bt == 0:
            return batch
    # Prefer >= 2 grid steps when batch allows it: feeds both v7x TensorCores
    # (dimension_semantics=("parallel",)); on single-TC chips the extra
    # ~0.35us grid step is negligible.
    if bt == batch and batch % 2 == 0 and (batch // 2) % 8 == 0:
        bt = batch // 2
    return bt


def agreement_routing(b, u_predict, n_iterations, *, batch_tile=8):
    """Pallas TPU implementation of AgreementRouting.forward.

    b:         (input_caps, output_caps) float32 routing logits
    u_predict: (batch, input_caps, output_caps, output_dim) float32
    returns v: (batch, output_caps, output_dim) float32
    """
    batch, input_caps, output_caps, output_dim = u_predict.shape
    od = output_caps * output_dim

    if u_predict.dtype != jnp.float32 or b.dtype != jnp.float32:
        # TODO(synk): sub-32-bit inputs need bt % 16 == 0 and packed stores.
        raise NotImplementedError("agreement_routing kernel requires float32")

    # Lane-dense folded view (contiguous reshape -- free in HBM).
    u_folded = u_predict.reshape(batch, input_caps, od)

    bt = _pick_batch_tile(batch, batch_tile)
    grid = (batch // bt,)

    # Hoisted constants (exact f32, computed once in the wrapper).
    group = jnp.repeat(jnp.arange(output_caps, dtype=jnp.int32), output_dim)
    e_mat = (jnp.arange(output_caps, dtype=jnp.int32)[:, None]
             == group[None, :]).astype(jnp.float32)            # (O, OD)
    et_mat = jnp.transpose(e_mat)                               # (OD, O)
    c0_exp = jnp.repeat(jax.nn.softmax(b, axis=1), output_dim, axis=1)  # (I, OD)

    kernel = functools.partial(
        _routing_kernel, n_iterations=n_iterations, batch_tile=bt,
        input_caps=input_caps, output_caps=output_caps, output_dim=output_dim)

    # Chip-aware VMEM budget: double-buffered u/out blocks + constants, with
    # generous headroom for in-kernel temporaries, capped at 50% of physical
    # VMEM (fits v7x's 64 MiB as well as v5e/v6e's 128 MiB).
    itemsize = 4
    u_block_bytes = bt * input_caps * od * itemsize
    out_block_bytes = bt * od * itemsize
    const_bytes = (input_caps * output_caps + input_caps * od
                   + 2 * output_caps * od) * itemsize
    needed = 2 * (u_block_bytes + out_block_bytes + const_bytes) + 8 * u_block_bytes
    try:
        info = pltpu.get_tpu_info()
        vmem_physical = int(getattr(info, "vmem_capacity_bytes", 0)) or (64 << 20)
    except Exception:
        vmem_physical = 64 << 20
    vmem_limit = int(min(vmem_physical // 2, max(16 << 20, needed)))

    v_folded = pl.pallas_call(
        kernel,
        out_shape=jax.ShapeDtypeStruct((batch, od), u_predict.dtype),
        grid_spec=pltpu.PrefetchScalarGridSpec(
            num_scalar_prefetch=0,
            grid=grid,
            in_specs=[
                # Constant block index => DMA'd once, VMEM-resident.
                pl.BlockSpec((input_caps, output_caps), lambda i: (0, 0)),  # b
                pl.BlockSpec((input_caps, od), lambda i: (0, 0)),           # c0_exp
                pl.BlockSpec((output_caps, od), lambda i: (0, 0)),          # E
                pl.BlockSpec((od, output_caps), lambda i: (0, 0)),          # E^T
                # Batch tile of folded predictions.
                pl.BlockSpec((bt, input_caps, od), lambda i: (i, 0, 0)),
            ],
            out_specs=pl.BlockSpec((bt, od), lambda i: (i, 0)),
        ),
        compiler_params=pltpu.CompilerParams(
            dimension_semantics=("parallel",),
            vmem_limit_bytes=vmem_limit),
    )(b, c0_exp, e_mat, et_mat, u_folded)

    return v_folded.reshape(batch, output_caps, output_dim)


# ---------------- pure-JAX reference (mirrors the PyTorch code) -------------
def _squash_ref(x):
    lengths2 = jnp.sum(x ** 2, axis=2)
    lengths = jnp.sqrt(lengths2)
    return x * (lengths2 / (1 + lengths2) / lengths)[:, :, None]


def agreement_routing_ref(b, u_predict, n_iterations):
    batch, input_caps, output_caps, output_dim = u_predict.shape
    c = jax.nn.softmax(b, axis=1)
    s = jnp.sum(c[None, :, :, None] * u_predict, axis=1)
    v = _squash_ref(s)
    if n_iterations > 0:
        b_batch = jnp.broadcast_to(b, (batch, input_caps, output_caps))
        for _ in range(n_iterations):
            b_batch = b_batch + jnp.sum(u_predict * v[:, None, :, :], axis=-1)
            c = jax.nn.softmax(b_batch, axis=-1)[:, :, :, None]
            s = jnp.sum(c * u_predict, axis=1)
            v = _squash_ref(s)
    return v


if __name__ == "__main__":
    # CapsNet-style routing at small scale: batch=16, input_caps=8,
    # output_caps=10, output_dim=16, 3 routing iterations.
    batch, input_caps, output_caps, output_dim = 16, 8, 10, 16
    n_iterations = 3

    key = jax.random.PRNGKey(0)
    k_u, k_b = jax.random.split(key)
    u_predict = jax.random.normal(
        k_u, (batch, input_caps, output_caps, output_dim), dtype=jnp.float32)

    # Case 1: b as initialized by the module (zeros).
    b0 = jnp.zeros((input_caps, output_caps), dtype=jnp.float32)
    v = jax.block_until_ready(
        agreement_routing(b0, u_predict, n_iterations, batch_tile=8))  # grid=(2,)
    v_ref = agreement_routing_ref(b0, u_predict, n_iterations)
    assert v.shape == (batch, output_caps, output_dim)
    assert jnp.allclose(v, v_ref, atol=1e-3, rtol=1e-3), "mismatch vs reference (b=0)"

    # Case 2: non-trivial routing logits (exercises the non-uniform softmax path).
    b1 = 0.5 * jax.random.normal(k_b, (input_caps, output_caps), dtype=jnp.float32)
    v1 = jax.block_until_ready(
        agreement_routing(b1, u_predict, n_iterations, batch_tile=8))
    v1_ref = agreement_routing_ref(b1, u_predict, n_iterations)
    assert jnp.allclose(v1, v1_ref, atol=1e-3, rtol=1e-3), "mismatch vs reference (b!=0)"

    print("KERNEL_OK")
</pallas_src>

<mosaic_0001>
module attributes {stable_mosaic.version = 11 : i64} {
  func.func @_routing_kernel(%arg0: i32, %arg1: memref<8x10xf32, #tpu.memory_space<vmem>>, %arg2: memref<8x160xf32, #tpu.memory_space<vmem>>, %arg3: memref<10x160xf32, #tpu.memory_space<vmem>>, %arg4: memref<160x10xf32, #tpu.memory_space<vmem>>, %arg5: memref<8x8x160xf32, #tpu.memory_space<vmem>>, %arg6: memref<8x160xf32, #tpu.memory_space<vmem>>) attributes {dimension_semantics = [#tpu.dimension_semantics<parallel>], iteration_bounds = array<i64: 2>, scalar_prefetch = 0 : i64, scratch_operands = 0 : i64, tpu.core_type = #tpu.core_type<tc>, window_params = [{pipeline_mode = #tpu.pipeline_mode<synchronous>, transform_indices = @transform_0, window_bounds = array<i64: 8, 10>}, {pipeline_mode = #tpu.pipeline_mode<synchronous>, transform_indices = @transform_1, window_bounds = array<i64: 8, 160>}, {pipeline_mode = #tpu.pipeline_mode<synchronous>, transform_indices = @transform_2, window_bounds = array<i64: 10, 160>}, {pipeline_mode = #tpu.pipeline_mode<synchronous>, transform_indices = @transform_3, window_bounds = array<i64: 160, 10>}, {transform_indices = @transform_4, window_bounds = array<i64: 8, 8, 160>}, {transform_indices = @transform_5, window_bounds = array<i64: 8, 160>}]} {
    %c0 = arith.constant 0 : index
    %c0_0 = arith.constant 0 : index
    %c0_1 = arith.constant 0 : index
    %0 = vector.load %arg5[%c0, %c0_0, %c0_1] : memref<8x8x160xf32, #tpu.memory_space<vmem>>, vector<8x8x160xf32>
    %c0_2 = arith.constant 0 : index
    %c0_3 = arith.constant 0 : index
    %1 = vector.load %arg3[%c0_2, %c0_3] : memref<10x160xf32, #tpu.memory_space<vmem>>, vector<10x160xf32>
    %c0_4 = arith.constant 0 : index
    %c0_5 = arith.constant 0 : index
    %2 = vector.load %arg4[%c0_4, %c0_5] : memref<160x10xf32, #tpu.memory_space<vmem>>, vector<160x10xf32>
    %c0_6 = arith.constant 0 : index
    %c0_7 = arith.constant 0 : index
    %3 = vector.load %arg2[%c0_6, %c0_7] : memref<8x160xf32, #tpu.memory_space<vmem>>, vector<8x160xf32>
    %4 = vector.shape_cast %3 : vector<8x160xf32> to vector<1x8x160xf32>
    %5 = vector.broadcast %4 : vector<1x8x160xf32> to vector<8x8x160xf32>
    %6 = arith.mulf %5, %0 : vector<8x8x160xf32>
    %cst = arith.constant dense<0.000000e+00> : vector<8x160xf32>
    %7 = vector.multi_reduction <add>, %6, %cst [1] : vector<8x8x160xf32> to vector<8x160xf32>
    %8 = arith.mulf %7, %7 : vector<8x160xf32>
    %cst_8 = arith.constant dense<0.000000e+00> : vector<8x10xf32>
    %9 = tpu.matmul %8, %2, %cst_8 {dimension_numbers = #tpu.dot_dimension_numbers<[1], [0], [0], [1], [0, 0, 1, 1], [], []>, precision = #tpu.contract_precision<fp32>} : vector<8x160xf32>, vector<160x10xf32>, vector<8x10xf32> -> vector<8x10xf32>
    %10 = math.sqrt %9 : vector<8x10xf32>
    %cst_9 = arith.constant 1.000000e+00 : f32
    %11 = vector.broadcast %cst_9 : f32 to vector<8x10xf32>
    %12 = arith.addf %11, %9 : vector<8x10xf32>
    %13 = tpu.reciprocal %12 {approx = true} : vector<8x10xf32> -> vector<8x10xf32>
    %14 = arith.mulf %12, %13 : vector<8x10xf32>
    %cst_10 = arith.constant 2.000000e+00 : f32
    %15 = vector.broadcast %cst_10 : f32 to vector<8x10xf32>
    %16 = arith.subf %15, %14 : vector<8x10xf32>
    %17 = arith.mulf %13, %16 : vector<8x10xf32>
    %18 = arith.mulf %10, %17 : vector<8x10xf32>
    %c0_11 = arith.constant 0 : index
    %c0_12 = arith.constant 0 : index
    %19 = vector.load %arg1[%c0_11, %c0_12] : memref<8x10xf32, #tpu.memory_space<vmem>>, vector<8x10xf32>
    %20 = vector.shape_cast %19 : vector<8x10xf32> to vector<1x8x10xf32>
    %21 = vector.shape_cast %7 : vector<8x160xf32> to vector<8x1x160xf32>
    %22 = vector.broadcast %21 : vector<8x1x160xf32> to vector<8x8x160xf32>
    %23 = arith.mulf %0, %22 : vector<8x8x160xf32>
    %24 = vector.shape_cast %23 : vector<8x8x160xf32> to vector<64x160xf32>
    %cst_13 = arith.constant dense<0.000000e+00> : vector<64x10xf32>
    %25 = tpu.matmul %24, %2, %cst_13 {dimension_numbers = #tpu.dot_dimension_numbers<[1], [0], [0], [1], [0, 0, 1, 1], [], []>, precision = #tpu.contract_precision<fp32>} : vector<64x160xf32>, vector<160x10xf32>, vector<64x10xf32> -> vector<64x10xf32>
    %26 = vector.shape_cast %25 : vector<64x10xf32> to vector<8x8x10xf32>
    %27 = vector.shape_cast %18 : vector<8x10xf32> to vector<8x1x10xf32>
    %28 = vector.broadcast %27 : vector<8x1x10xf32> to vector<8x8x10xf32>
    %29 = arith.mulf %26, %28 : vector<8x8x10xf32>
    %30 = vector.broadcast %20 : vector<1x8x10xf32> to vector<8x8x10xf32>
    %31 = arith.addf %30, %29 : vector<8x8x10xf32>
    %cst_14 = arith.constant dense<0xFF800000> : vector<8x8xf32>
    %32 = vector.multi_reduction <maximumf>, %31, %cst_14 [2] : vector<8x8x10xf32> to vector<8x8xf32>
    %33 = vector.shape_cast %32 : vector<8x8xf32> to vector<8x8x1xf32>
    %34 = vector.broadcast %33 : vector<8x8x1xf32> to vector<8x8x10xf32>
    %35 = arith.subf %31, %34 : vector<8x8x10xf32>
    %36 = math.exp %35 : vector<8x8x10xf32>
    %cst_15 = arith.constant dense<0.000000e+00> : vector<8x8xf32>
    %37 = vector.multi_reduction <add>, %36, %cst_15 [2] : vector<8x8x10xf32> to vector<8x8xf32>
    %38 = vector.shape_cast %37 : vector<8x8xf32> to vector<8x8x1xf32>
    %39 = tpu.reciprocal %38 {approx = true} : vector<8x8x1xf32> -> vector<8x8x1xf32>
    %40 = arith.mulf %38, %39 : vector<8x8x1xf32>
    %cst_16 = arith.constant 2.000000e+00 : f32
    %41 = vector.broadcast %cst_16 : f32 to vector<8x8x1xf32>
    %42 = arith.subf %41, %40 : vector<8x8x1xf32>
    %43 = arith.mulf %39, %42 : vector<8x8x1xf32>
    %44 = vector.broadcast %43 : vector<8x8x1xf32> to vector<8x8x10xf32>
    %45 = arith.mulf %36, %44 : vector<8x8x10xf32>
    %46 = vector.shape_cast %45 : vector<8x8x10xf32> to vector<64x10xf32>
    %cst_17 = arith.constant dense<0.000000e+00> : vector<64x160xf32>
    %47 = tpu.matmul %46, %1, %cst_17 {dimension_numbers = #tpu.dot_dimension_numbers<[1], [0], [0], [1], [0, 0, 1, 1], [], []>, precision = #tpu.contract_precision<fp32>} : vector<64x10xf32>, vector<10x160xf32>, vector<64x160xf32> -> vector<64x160xf32>
    %48 = vector.shape_cast %47 : vector<64x160xf32> to vector<8x8x160xf32>
    %49 = arith.mulf %48, %0 : vector<8x8x160xf32>
    %cst_18 = arith.constant dense<0.000000e+00> : vector<8x160xf32>
    %50 = vector.multi_reduction <add>, %49, %cst_18 [1] : vector<8x8x160xf32> to vector<8x160xf32>
    %51 = arith.mulf %50, %50 : vector<8x160xf32>
    %cst_19 = arith.constant dense<0.000000e+00> : vector<8x10xf32>
    %52 = tpu.matmul %51, %2, %cst_19 {dimension_numbers = #tpu.dot_dimension_numbers<[1], [0], [0], [1], [0, 0, 1, 1], [], []>, precision = #tpu.contract_precision<fp32>} : vector<8x160xf32>, vector<160x10xf32>, vector<8x10xf32> -> vector<8x10xf32>
    %53 = math.sqrt %52 : vector<8x10xf32>
    %cst_20 = arith.constant 1.000000e+00 : f32
    %54 = vector.broadcast %cst_20 : f32 to vector<8x10xf32>
    %55 = arith.addf %54, %52 : vector<8x10xf32>
    %56 = tpu.reciprocal %55 {approx = true} : vector<8x10xf32> -> vector<8x10xf32>
    %57 = arith.mulf %55, %56 : vector<8x10xf32>
    %cst_21 = arith.constant 2.000000e+00 : f32
    %58 = vector.broadcast %cst_21 : f32 to vector<8x10xf32>
    %59 = arith.subf %58, %57 : vector<8x10xf32>
    %60 = arith.mulf %56, %59 : vector<8x10xf32>
    %61 = arith.mulf %53, %60 : vector<8x10xf32>
    %62 = vector.shape_cast %50 : vector<8x160xf32> to vector<8x1x160xf32>
    %63 = vector.broadcast %62 : vector<8x1x160xf32> to vector<8x8x160xf32>
    %64 = arith.mulf %0, %63 : vector<8x8x160xf32>
    %65 = vector.shape_cast %64 : vector<8x8x160xf32> to vector<64x160xf32>
    %cst_22 = arith.constant dense<0.000000e+00> : vector<64x10xf32>
    %66 = tpu.matmul %65, %2, %cst_22 {dimension_numbers = #tpu.dot_dimension_numbers<[1], [0], [0], [1], [0, 0, 1, 1], [], []>, precision = #tpu.contract_precision<fp32>} : vector<64x160xf32>, vector<160x10xf32>, vector<64x10xf32> -> vector<64x10xf32>
    %67 = vector.shape_cast %66 : vector<64x10xf32> to vector<8x8x10xf32>
    %68 = vector.shape_cast %61 : vector<8x10xf32> to vector<8x1x10xf32>
    %69 = vector.broadcast %68 : vector<8x1x10xf32> to vector<8x8x10xf32>
    %70 = arith.mulf %67, %69 : vector<8x8x10xf32>
    %71 = arith.addf %31, %70 : vector<8x8x10xf32>
    %cst_23 = arith.constant dense<0xFF800000> : vector<8x8xf32>
    %72 = vector.multi_reduction <maximumf>, %71, %cst_23 [2] : vector<8x8x10xf32> to vector<8x8xf32>
    %73 = vector.shape_cast %72 : vector<8x8xf32> to vector<8x8x1xf32>
    %74 = vector.broadcast %73 : vector<8x8x1xf32> to vector<8x8x10xf32>
    %75 = arith.subf %71, %74 : vector<8x8x10xf32>
    %76 = math.exp %75 : vector<8x8x10xf32>
    %cst_24 = arith.constant dense<0.000000e+00> : vector<8x8xf32>
    %77 = vector.multi_reduction <add>, %76, %cst_24 [2] : vector<8x8x10xf32> to vector<8x8xf32>
    %78 = vector.shape_cast %77 : vector<8x8xf32> to vector<8x8x1xf32>
    %79 = tpu.reciprocal %78 {approx = true} : vector<8x8x1xf32> -> vector<8x8x1xf32>
    %80 = arith.mulf %78, %79 : vector<8x8x1xf32>
    %cst_25 = arith.constant 2.000000e+00 : f32
    %81 = vector.broadcast %cst_25 : f32 to vector<8x8x1xf32>
    %82 = arith.subf %81, %80 : vector<8x8x1xf32>
    %83 = arith.mulf %79, %82 : vector<8x8x1xf32>
    %84 = vector.broadcast %83 : vector<8x8x1xf32> to vector<8x8x10xf32>
    %85 = arith.mulf %76, %84 : vector<8x8x10xf32>
    %86 = vector.shape_cast %85 : vector<8x8x10xf32> to vector<64x10xf32>
    %cst_26 = arith.constant dense<0.000000e+00> : vector<64x160xf32>
    %87 = tpu.matmul %86, %1, %cst_26 {dimension_numbers = #tpu.dot_dimension_numbers<[1], [0], [0], [1], [0, 0, 1, 1], [], []>, precision = #tpu.contract_precision<fp32>} : vector<64x10xf32>, vector<10x160xf32>, vector<64x160xf32> -> vector<64x160xf32>
    %88 = vector.shape_cast %87 : vector<64x160xf32> to vector<8x8x160xf32>
    %89 = arith.mulf %88, %0 : vector<8x8x160xf32>
    %cst_27 = arith.constant dense<0.000000e+00> : vector<8x160xf32>
    %90 = vector.multi_reduction <add>, %89, %cst_27 [1] : vector<8x8x160xf32> to vector<8x160xf32>
    %91 = arith.mulf %90, %90 : vector<8x160xf32>
    %cst_28 = arith.constant dense<0.000000e+00> : vector<8x10xf32>
    %92 = tpu.matmul %91, %2, %cst_28 {dimension_numbers = #tpu.dot_dimension_numbers<[1], [0], [0], [1], [0, 0, 1, 1], [], []>, precision = #tpu.contract_precision<fp32>} : vector<8x160xf32>, vector<160x10xf32>, vector<8x10xf32> -> vector<8x10xf32>
    %93 = math.sqrt %92 : vector<8x10xf32>
    %cst_29 = arith.constant 1.000000e+00 : f32
    %94 = vector.broadcast %cst_29 : f32 to vector<8x10xf32>
    %95 = arith.addf %94, %92 : vector<8x10xf32>
    %96 = tpu.reciprocal %95 {approx = true} : vector<8x10xf32> -> vector<8x10xf32>
    %97 = arith.mulf %95, %96 : vector<8x10xf32>
    %cst_30 = arith.constant 2.000000e+00 : f32
    %98 = vector.broadcast %cst_30 : f32 to vector<8x10xf32>
    %99 = arith.subf %98, %97 : vector<8x10xf32>
    %100 = arith.mulf %96, %99 : vector<8x10xf32>
    %101 = arith.mulf %93, %100 : vector<8x10xf32>
    %102 = vector.shape_cast %90 : vector<8x160xf32> to vector<8x1x160xf32>
    %103 = vector.broadcast %102 : vector<8x1x160xf32> to vector<8x8x160xf32>
    %104 = arith.mulf %0, %103 : vector<8x8x160xf32>
    %105 = vector.shape_cast %104 : vector<8x8x160xf32> to vector<64x160xf32>
    %cst_31 = arith.constant dense<0.000000e+00> : vector<64x10xf32>
    %106 = tpu.matmul %105, %2, %cst_31 {dimension_numbers = #tpu.dot_dimension_numbers<[1], [0], [0], [1], [0, 0, 1, 1], [], []>, precision = #tpu.contract_precision<fp32>} : vector<64x160xf32>, vector<160x10xf32>, vector<64x10xf32> -> vector<64x10xf32>
    %107 = vector.shape_cast %106 : vector<64x10xf32> to vector<8x8x10xf32>
    %108 = vector.shape_cast %101 : vector<8x10xf32> to vector<8x1x10xf32>
    %109 = vector.broadcast %108 : vector<8x1x10xf32> to vector<8x8x10xf32>
    %110 = arith.mulf %107, %109 : vector<8x8x10xf32>
    %111 = arith.addf %71, %110 : vector<8x8x10xf32>
    %cst_32 = arith.constant dense<0xFF800000> : vector<8x8xf32>
    %112 = vector.multi_reduction <maximumf>, %111, %cst_32 [2] : vector<8x8x10xf32> to vector<8x8xf32>
    %113 = vector.shape_cast %112 : vector<8x8xf32> to vector<8x8x1xf32>
    %114 = vector.broadcast %113 : vector<8x8x1xf32> to vector<8x8x10xf32>
    %115 = arith.subf %111, %114 : vector<8x8x10xf32>
    %116 = math.exp %115 : vector<8x8x10xf32>
    %cst_33 = arith.constant dense<0.000000e+00> : vector<8x8xf32>
    %117 = vector.multi_reduction <add>, %116, %cst_33 [2] : vector<8x8x10xf32> to vector<8x8xf32>
    %118 = vector.shape_cast %117 : vector<8x8xf32> to vector<8x8x1xf32>
    %119 = tpu.reciprocal %118 {approx = true} : vector<8x8x1xf32> -> vector<8x8x1xf32>
    %120 = arith.mulf %118, %119 : vector<8x8x1xf32>
    %cst_34 = arith.constant 2.000000e+00 : f32
    %121 = vector.broadcast %cst_34 : f32 to vector<8x8x1xf32>
    %122 = arith.subf %121, %120 : vector<8x8x1xf32>
    %123 = arith.mulf %119, %122 : vector<8x8x1xf32>
    %124 = vector.broadcast %123 : vector<8x8x1xf32> to vector<8x8x10xf32>
    %125 = arith.mulf %116, %124 : vector<8x8x10xf32>
    %126 = vector.shape_cast %125 : vector<8x8x10xf32> to vector<64x10xf32>
    %cst_35 = arith.constant dense<0.000000e+00> : vector<64x160xf32>
    %127 = tpu.matmul %126, %1, %cst_35 {dimension_numbers = #tpu.dot_dimension_numbers<[1], [0], [0], [1], [0, 0, 1, 1], [], []>, precision = #tpu.contract_precision<fp32>} : vector<64x10xf32>, vector<10x160xf32>, vector<64x160xf32> -> vector<64x160xf32>
    %128 = vector.shape_cast %127 : vector<64x160xf32> to vector<8x8x160xf32>
    %129 = arith.mulf %128, %0 : vector<8x8x160xf32>
    %cst_36 = arith.constant dense<0.000000e+00> : vector<8x160xf32>
    %130 = vector.multi_reduction <add>, %129, %cst_36 [1] : vector<8x8x160xf32> to vector<8x160xf32>
    %131 = arith.mulf %130, %130 : vector<8x160xf32>
    %cst_37 = arith.constant dense<0.000000e+00> : vector<8x10xf32>
    %132 = tpu.matmul %131, %2, %cst_37 {dimension_numbers = #tpu.dot_dimension_numbers<[1], [0], [0], [1], [0, 0, 1, 1], [], []>, precision = #tpu.contract_precision<fp32>} : vector<8x160xf32>, vector<160x10xf32>, vector<8x10xf32> -> vector<8x10xf32>
    %133 = math.sqrt %132 : vector<8x10xf32>
    %cst_38 = arith.constant 1.000000e+00 : f32
    %134 = vector.broadcast %cst_38 : f32 to vector<8x10xf32>
    %135 = arith.addf %134, %132 : vector<8x10xf32>
    %136 = tpu.reciprocal %135 {approx = true} : vector<8x10xf32> -> vector<8x10xf32>
    %137 = arith.mulf %135, %136 : vector<8x10xf32>
    %cst_39 = arith.constant 2.000000e+00 : f32
    %138 = vector.broadcast %cst_39 : f32 to vector<8x10xf32>
    %139 = arith.subf %138, %137 : vector<8x10xf32>
    %140 = arith.mulf %136, %139 : vector<8x10xf32>
    %141 = arith.mulf %133, %140 : vector<8x10xf32>
    %cst_40 = arith.constant dense<0.000000e+00> : vector<8x160xf32>
    %142 = tpu.matmul %141, %1, %cst_40 {dimension_numbers = #tpu.dot_dimension_numbers<[1], [0], [0], [1], [0, 0, 1, 1], [], []>, precision = #tpu.contract_precision<fp32>} : vector<8x10xf32>, vector<10x160xf32>, vector<8x160xf32> -> vector<8x160xf32>
    %143 = arith.mulf %130, %142 : vector<8x160xf32>
    %c0_41 = arith.constant 0 : index
    %c0_42 = arith.constant 0 : index
    %144 = vector.load %arg6[%c0_41, %c0_42] : memref<8x160xf32, #tpu.memory_space<vmem>>, vector<8x160xf32>
    tpu.vector_store %arg6[%c0_41, %c0_42], %143 {strides = array<i32>} : memref<8x160xf32, #tpu.memory_space<vmem>>, vector<8x160xf32>,
    return
  }
  func.func @transform_0(%arg0: i32) -> (i32, i32) {
    %c0_i32 = arith.constant 0 : i32
    %c0_i32_0 = arith.constant 0 : i32
    %c0_i32_1 = arith.constant 0 : i32
    return %c0_i32, %c0_i32_0 : i32, i32
  }
  func.func @transform_1(%arg0: i32) -> (i32, i32) {
    %c0_i32 = arith.constant 0 : i32
    %c0_i32_0 = arith.constant 0 : i32
    %c0_i32_1 = arith.constant 0 : i32
    return %c0_i32, %c0_i32_0 : i32, i32
  }
  func.func @transform_2(%arg0: i32) -> (i32, i32) {
    %c0_i32 = arith.constant 0 : i32
    %c0_i32_0 = arith.constant 0 : i32
    %c0_i32_1 = arith.constant 0 : i32
    return %c0_i32, %c0_i32_0 : i32, i32
  }
  func.func @transform_3(%arg0: i32) -> (i32, i32) {
    %c0_i32 = arith.constant 0 : i32
    %c0_i32_0 = arith.constant 0 : i32
    %c0_i32_1 = arith.constant 0 : i32
    return %c0_i32, %c0_i32_0 : i32, i32
  }
  func.func @transform_4(%arg0: i32) -> (i32, i32, i32) {
    %c0_i32 = arith.constant 0 : i32
    %c0_i32_0 = arith.constant 0 : i32
    %c0_i32_1 = arith.constant 0 : i32
    return %arg0, %c0_i32, %c0_i32_0 : i32, i32, i32
  }
  func.func @transform_5(%arg0: i32) -> (i32, i32) {
    %c0_i32 = arith.constant 0 : i32
    %c0_i32_0 = arith.constant 0 : i32
    return %arg0, %c0_i32 : i32, i32
  }
}

</mosaic_0001>

<llo_original>
// kernel: tpu_custom_call.1
$region0: #{tpu_custom_call.1}
  #allocation0 [shape = 'u32[]', space=smem, size = 0x4, offset = 0x4, fixed_abs, tag = 'smem constant byte address 0x4 - core index']
  #allocation1 [shape = 'u32[144,128]{1,0:T(1,128)}', space=vmem, size = 0x12000, scoped, tag = 'internal scratch']
  %s0 = inlined_call_operand.vmem [shape: f32[8,10], index: 0, kind: input, shape index: {}]
  %s1 = inlined_call_operand.vmem [shape: f32[8,160], index: 1, kind: input, shape index: {}]
  %s2 = inlined_call_operand.vmem [shape: f32[10,160], index: 2, kind: input, shape index: {}]
  %s3 = inlined_call_operand.vmem [shape: f32[160,10], index: 3, kind: input, shape index: {}]
  %s4 = inlined_call_operand.hbm [shape: f32[16,8,160], index: 4, kind: input, shape index: {}]
  %s5 = inlined_call_operand.hbm [shape: f32[16,160], index: 5, kind: output, shape index: {}]
  %s6 = sld [smem:[#allocation0]]
  $region57: #{tpu_custom_call.1} parent=0
    _
  %s8 = ssub.s32 1, %s6
  %s9 = scalar_select 0, %s8, %s6
  $region1: #{tpu_custom_call.1} parent=0
    #allocation2 [shape = 'u8[131072]{0}', space=vmem, size = 0x20000, scoped, tag = 'input window, operand 4']
    #allocation3 [shape = 's32[2]{0}', space=sflag, size = 0x8, scoped, tag = 'scoped memory for tpu_custom_call.1']
    #allocation4 [shape = 's32[2]{0}', space=sflag, size = 0x8, scoped, tag = 'scoped memory for tpu_custom_call.1']
    #allocation5 [shape = 'u8[16384]{0}', space=vmem, size = 0x4000, scoped, tag = 'output window, operand 0']
    %10 = vsyncpa [#allocation3], 0
    %s11 = scalar_lea.sflag [#allocation3], 1
    %12 = vsyncpa %s11, 0
    %13 = vsyncpa [#allocation4], 0
    %s14 = scalar_lea.sflag [#allocation4], 1
    %15 = vsyncpa %s14, 0
    loop: start=0, step=1, limit=4
    $region2: #{tpu_custom_call.1} parent=1 // loop_pre_header
      _
    $region3: #{tpu_custom_call.1} parent=1 // loop_header
      %s17 = sphi 0, %s21
      %p18 = scmp.ge.s32.totalorder %s17, 4
      %s25 = sphi 0, %s25
      %s27 = sphi 0, %s25
      %s28 = sphi 0, %s27
      %s42 = sphi 0, %s28
      %s46 = sphi 0, %s46
      %s48 = sphi 0, %s46
      %s49 = sphi 0, %s48
      %s63 = sphi 0, %s49
      %s67 = sphi 0, %s67
      %s69 = sphi 0, %s67
      %s70 = sphi 0, %s69
      %s84 = sphi 0, %s70
      %s88 = sphi 0, %s88
      %s90 = sphi 0, %s88
      %s91 = sphi 0, %s90
      %s105 = sphi 0, %s91
      %s111 = sphi 0, %s113
      %s114 = sphi 0, %s111
      %s115 = sphi 0, %s114
      %s131 = sphi 0, %s115
      %s137 = sphi 0, %s139
      %s140 = sphi 0, %s137
      %s141 = sphi 0, %s140
      %s157 = sphi 0, %s141
    $region4: #{tpu_custom_call.1} parent=1 // loop_header_branch
      %20 = sbr.rel (%p18) target = $region8
    $region5: #{tpu_custom_call.1} parent=1 // loop_body
      %s22 = ssub.s32 %s17, 1
      %s23 = ssub.s32 %s17, 2
      %s24 = sadd.s32 %s17, 1
      %s26 = sadd.s32 %s25, 1
      %p29 = scmp.eq.s32.totalorder %s17, 1
      %p30 = scmp.ne.s32.totalorder %s25, %s27
      %p31 = scmp.eq.s32.totalorder %s17, 0
      %p32 = por %p30, %p31
      %p33 = scmp.ne.s32.totalorder %s25, %s27
      %p34 = scmp.eq.s32.totalorder %s22, 1
      %p35 = por %p33, %p34
      %p36 = scmp.ne.s32.totalorder %s27, %s28
      %p37 = scmp.eq.s32.totalorder %s22, 0
      %p38 = por %p36, %p37
      %p39 = scmp.ne.s32.totalorder %s27, %s28
      %p40 = scmp.eq.s32.totalorder %s23, 1
      %p41 = por %p39, %p40
      %p43 = scmp.ne.s32.totalorder %s28, %s42
      %p44 = scmp.eq.s32.totalorder %s23, 0
      %p45 = por %p43, %p44
      %s47 = sadd.s32 %s46, 1
      %p50 = scmp.eq.s32.totalorder %s17, 1
      %p51 = scmp.ne.s32.totalorder %s46, %s48
      %p52 = scmp.eq.s32.totalorder %s17, 0
      %p53 = por %p51, %p52
      %p54 = scmp.ne.s32.totalorder %s46, %s48
      %p55 = scmp.eq.s32.totalorder %s22, 1
      %p56 = por %p54, %p55
      %p57 = scmp.ne.s32.totalorder %s48, %s49
      %p58 = scmp.eq.s32.totalorder %s22, 0
      %p59 = por %p57, %p58
      %p60 = scmp.ne.s32.totalorder %s48, %s49
      %p61 = scmp.eq.s32.totalorder %s23, 1
      %p62 = por %p60, %p61
      %p64 = scmp.ne.s32.totalorder %s49, %s63
      %p65 = scmp.eq.s32.totalorder %s23, 0
      %p66 = por %p64, %p65
      %s68 = sadd.s32 %s67, 1
      %p71 = scmp.eq.s32.totalorder %s17, 1
      %p72 = scmp.ne.s32.totalorder %s67, %s69
      %p73 = scmp.eq.s32.totalorder %s17, 0
      %p74 = por %p72, %p73
      %p75 = scmp.ne.s32.totalorder %s67, %s69
      %p76 = scmp.eq.s32.totalorder %s22, 1
      %p77 = por %p75, %p76
      %p78 = scmp.ne.s32.totalorder %s69, %s70
      %p79 = scmp.eq.s32.totalorder %s22, 0
      %p80 = por %p78, %p79
      %p81 = scmp.ne.s32.totalorder %s69, %s70
      %p82 = scmp.eq.s32.totalorder %s23, 1
      %p83 = por %p81, %p82
      %p85 = scmp.ne.s32.totalorder %s70, %s84
      %p86 = scmp.eq.s32.totalorder %s23, 0
      %p87 = por %p85, %p86
      %s89 = sadd.s32 %s88, 1
      %p92 = scmp.eq.s32.totalorder %s17, 1
      %p93 = scmp.ne.s32.totalorder %s88, %s90
      %p94 = scmp.eq.s32.totalorder %s17, 0
      %p95 = por %p93, %p94
      %p96 = scmp.ne.s32.totalorder %s88, %s90
      %p97 = scmp.eq.s32.totalorder %s22, 1
      %p98 = por %p96, %p97
      %p99 = scmp.ne.s32.totalorder %s90, %s91
      %p100 = scmp.eq.s32.totalorder %s22, 0
      %p101 = por %p99, %p100
      %p102 = scmp.ne.s32.totalorder %s90, %s91
      %p103 = scmp.eq.s32.totalorder %s23, 1
      %p104 = por %p102, %p103
      %p106 = scmp.ne.s32.totalorder %s91, %s105
      %p107 = scmp.eq.s32.totalorder %s23, 0
      %p108 = por %p106, %p107
      %s109 = ssub.s32 %s17, %s24
      %p110 = scmp.eq.s32.totalorder %s109, 0
      %s112 = sadd.s32 %s111, 1
      %s113 = scalar_select %p110, %s111, %s112
      %p116 = pneg %p110
      %p117 = scmp.eq.s32.totalorder %s17, 1
      %p118 = por %p116, %p117
      %p119 = scmp.ne.s32.totalorder %s111, %s114
      %p120 = scmp.eq.s32.totalorder %s17, 0
      %p121 = por %p119, %p120
      %p122 = scmp.ne.s32.totalorder %s111, %s114
      %p123 = scmp.eq.s32.totalorder %s22, 1
      %p124 = por %p122, %p123
      %p125 = scmp.ne.s32.totalorder %s114, %s115
      %p126 = scmp.eq.s32.totalorder %s22, 0
      %p127 = por %p125, %p126
      %p128 = scmp.ne.s32.totalorder %s114, %s115
      %p129 = scmp.eq.s32.totalorder %s23, 1
      %p130 = por %p128, %p129
      %p132 = scmp.ne.s32.totalorder %s115, %s131
      %p133 = scmp.eq.s32.totalorder %s23, 0
      %p134 = por %p132, %p133
      %s135 = ssub.s32 %s17, %s24
      %p136 = scmp.eq.s32.totalorder %s135, 0
      %s138 = sadd.s32 %s137, 1
      %s139 = scalar_select %p136, %s137, %s138
      %p142 = pneg %p136
      %p143 = scmp.eq.s32.totalorder %s17, 1
      %p144 = por %p142, %p143
      %p145 = scmp.ne.s32.totalorder %s137, %s140
      %p146 = scmp.eq.s32.totalorder %s17, 0
      %p147 = por %p145, %p146
      %p148 = scmp.ne.s32.totalorder %s137, %s140
      %p149 = scmp.eq.s32.totalorder %s22, 1
      %p150 = por %p148, %p149
      %p151 = scmp.ne.s32.totalorder %s140, %s141
      %p152 = scmp.eq.s32.totalorder %s22, 0
      %p153 = por %p151, %p152
      %p154 = scmp.ne.s32.totalorder %s140, %s141
      %p155 = scmp.eq.s32.totalorder %s23, 1
      %p156 = por %p154, %p155
      %p158 = scmp.ne.s32.totalorder %s141, %s157
      %p159 = scmp.eq.s32.totalorder %s23, 0
      %p160 = por %p158, %p159
      %p161 = scmp.le.s32.totalorder 1, %s17
      %p162 = scmp.lt.s32.totalorder %s17, 3
      %p163 = pnand %p161, %p162
      %p164 = pneg %p163
      // Predicated region
      $region9: #{tpu_custom_call.1} parent=5 // pred_check
        _
      $region10: #{tpu_custom_call.1} parent=5 // pred_check_branch
        %166 = sbr.rel (%p163) target = $region12
      $region11: #{tpu_custom_call.1} parent=5 // pred_region
        %s167 = ssub.s32 %s17, 1
        // Predicated region
        $region13: #{tpu_custom_call.1} parent=11 // pred_check
          %p168 = pneg %p38
        $region14: #{tpu_custom_call.1} parent=11 // pred_check_branch
          %170 = sbr.rel (%p168) target = $region16
        $region15: #{tpu_custom_call.1} parent=11 // pred_region
          _
        $region16: #{tpu_custom_call.1} parent=11 // pred_fallthru
          _
        // Predicated region
        $region17: #{tpu_custom_call.1} parent=11 // pred_check
          %p171 = pneg %p59
        $region18: #{tpu_custom_call.1} parent=11 // pred_check_branch
          %173 = sbr.rel (%p171) target = $region20
        $region19: #{tpu_custom_call.1} parent=11 // pred_region
          _
        $region20: #{tpu_custom_call.1} parent=11 // pred_fallthru
          _
        // Predicated region
        $region21: #{tpu_custom_call.1} parent=11 // pred_check
          %p174 = pneg %p80
        $region22: #{tpu_custom_call.1} parent=11 // pred_check_branch
          %176 = sbr.rel (%p174) target = $region24
        $region23: #{tpu_custom_call.1} parent=11 // pred_region
          _
        $region24: #{tpu_custom_call.1} parent=11 // pred_fallthru
          _
        // Predicated region
        $region25: #{tpu_custom_call.1} parent=11 // pred_check
          %p177 = pneg %p101
        $region26: #{tpu_custom_call.1} parent=11 // pred_check_branch
          %179 = sbr.rel (%p177) target = $region28
        $region27: #{tpu_custom_call.1} parent=11 // pred_region
          _
        $region28: #{tpu_custom_call.1} parent=11 // pred_fallthru
          _
      $region12: #{tpu_custom_call.1} parent=5 // pred_fallthru
        _
      %p180 = scmp.lt.s32.totalorder %s17, 2
      // Predicated region
      $region29: #{tpu_custom_call.1} parent=5 // pred_check
        %p181 = pneg %p180
      $region30: #{tpu_custom_call.1} parent=5 // pred_check_branch
        %183 = sbr.rel (%p181) target = $region32
      $region31: #{tpu_custom_call.1} parent=5 // pred_region
        // Predicated region
        $region33: #{tpu_custom_call.1} parent=31 // pred_check
          %p184 = pneg %p121
        $region34: #{tpu_custom_call.1} parent=31 // pred_check_branch
          %186 = sbr.rel (%p184) target = $region36
        $region35: #{tpu_custom_call.1} parent=31 // pred_region
          %s187 = sand.u32 %s111, 1
          %s188 = scalar_lea.sflag [#allocation3], %s187
          %s189 = sand.u32 %s111, 1
          %s190 = smul.addr %s189, 128
          %s191 = scalar_lea.vmem [#allocation2], %s190
          %s192 = smul.u32 8, %s17
          %s194 = ssub.s32 2048, 2048
          %195 = vsyncadd %s188, %s194
          %s196 = smul.addr %s192, 2
          %s197 = smul.addr %s196, 128
          %s198 = scalar_lea.hbm %s4, %s197
          %s199 = sshll.u32 %s191, 4
          %s200 = int_to_ptr.vmem [resolvable:$true] %s199
          %205 = dma.hbm_to_vmem [thread:$0]  %s198, 2048, %s200, %s188, 256, 256, 16
        $region36: #{tpu_custom_call.1} parent=31 // pred_fallthru
          _
      $region32: #{tpu_custom_call.1} parent=5 // pred_fallthru
        _
      %p206 = scmp.le.s32.totalorder 1, %s17
      %p207 = scmp.lt.s32.totalorder %s17, 3
      %p208 = pnand %p206, %p207
      %p209 = pneg %p208
      // Predicated region
      $region37: #{tpu_custom_call.1} parent=5 // pred_check
        _
      $region38: #{tpu_custom_call.1} parent=5 // pred_check_branch
        %211 = sbr.rel (%p208) target = $region40
      $region39: #{tpu_custom_call.1} parent=5 // pred_region
        %s212 = ssub.s32 %s17, 1
        %s213 = sand.u32 %s114, 1
        %s214 = scalar_lea.sflag [#allocation3], %s213
        %s215 = sand.u32 %s114, 1
        %s216 = smul.addr %s215, 128
        %s217 = scalar_lea.vmem [#allocation2], %s216
        // Predicated region
        $region41: #{tpu_custom_call.1} parent=39 // pred_check
          %p218 = pneg %p127
        $region42: #{tpu_custom_call.1} parent=39 // pred_check_branch
          %220 = sbr.rel (%p218) target = $region44
        $region43: #{tpu_custom_call.1} parent=39 // pred_region
          %221 = dma.done %s214, 2048
        $region44: #{tpu_custom_call.1} parent=39 // pred_fallthru
          _
        %p222 = pneg %p38
        %p223 = pneg %p35
        %p224 = pneg %p59
        %p225 = pneg %p56
        %p226 = pneg %p80
        %p227 = pneg %p77
        %p228 = pneg %p101
        %p229 = pneg %p98
        %s230 = sand.u32 %s114, 1
        %s231 = scalar_lea.sflag [#allocation3], %s230
        %s232 = sand.u32 %s114, 1
        %s233 = smul.addr %s232, 128
        %s234 = scalar_lea.vmem [#allocation2], %s233
        %p235 = pneg %p127
        %p236 = pneg %p124
        %p237 = pneg %p153
        %p238 = pneg %p150
        %s239 = sand.u32 %s140, 1
        %s240 = scalar_lea.sflag [#allocation4], %s239
        %s241 = sand.u32 %s140, 1
        %s242 = smul.addr %s241, 16
        %s243 = scalar_lea.vmem [#allocation5], %s242
        %s244 = smul.u32 8, %s22
        %v245 = vld [vmem:[%s217] sm:$0xff]
        %v246 = vld [vmem:[%s217 + $0x8] sm:$0xff]
        %v247 = vld [vmem:[%s217 + $0x10] sm:$0xff]
        %v248 = vld [vmem:[%s217 + $0x18] sm:$0xff]
        %v249 = vld [vmem:[%s217 + $0x20] sm:$0xff]
        %v250 = vld [vmem:[%s217 + $0x28] sm:$0xff]
        %v251 = vld [vmem:[%s217 + $0x30] sm:$0xff]
        %v252 = vld [vmem:[%s217 + $0x38] sm:$0xff]
        %v253 = vld [vmem:[%s217 + $0x40] sm:$0xff]
        %v254 = vld [vmem:[%s217 + $0x48] sm:$0xff]
        %v255 = vld [vmem:[%s217 + $0x50] sm:$0xff]
        %v256 = vld [vmem:[%s217 + $0x58] sm:$0xff]
        %v257 = vld [vmem:[%s217 + $0x60] sm:$0xff]
        %v258 = vld [vmem:[%s217 + $0x68] sm:$0xff]
        %v259 = vld [vmem:[%s217 + $0x70] sm:$0xff]
        %v260 = vld [vmem:[%s217 + $0x78] sm:$0xff]
        %v261 = vld [vmem:[%s2] sm:$0xff]
        %v262 = vld [vmem:[%s2 + $0x8] sm:$0xff]
        %v263 = vld [vmem:[%s2 + $0x10] sm:$0x3]
        %v264 = vld [vmem:[%s2 + $0x18] sm:$0x3]
        %v265 = vld [vmem:[%s3] sm:$0xff]
        %v266 = vld [vmem:[%s3 + $0x8] sm:$0xff]
        %v267 = vld [vmem:[%s3 + $0x10] sm:$0xff]
        %v268 = vld [vmem:[%s3 + $0x18] sm:$0xff]
        %v269 = vld [vmem:[%s3 + $0x20] sm:$0xff]
        %v270 = vld [vmem:[%s3 + $0x28] sm:$0xff]
        %v271 = vld [vmem:[%s3 + $0x30] sm:$0xff]
        %v272 = vld [vmem:[%s3 + $0x38] sm:$0xff]
        %v273 = vld [vmem:[%s3 + $0x40] sm:$0xff]
        %v274 = vld [vmem:[%s3 + $0x48] sm:$0xff]
        %v275 = vld [vmem:[%s3 + $0x50] sm:$0xff]
        %v276 = vld [vmem:[%s3 + $0x58] sm:$0xff]
        %v277 = vld [vmem:[%s3 + $0x60] sm:$0xff]
        %v278 = vld [vmem:[%s3 + $0x68] sm:$0xff]
        %v279 = vld [vmem:[%s3 + $0x70] sm:$0xff]
        %v280 = vld [vmem:[%s3 + $0x78] sm:$0xff]
        %v281 = vld [vmem:[%s3 + $0x80] sm:$0xff]
        %v282 = vld [vmem:[%s3 + $0x88] sm:$0xff]
        %v283 = vld [vmem:[%s3 + $0x90] sm:$0xff]
        %v284 = vld [vmem:[%s3 + $0x98] sm:$0xff]
        %v285 = vld [vmem:[%s1] sm:$0xff]
        %v286 = vld [vmem:[%s1 + $0x8] sm:$0xff]
        %v287 = vmul.f32 %v285, %v245
        %v288 = vmul.f32 %v286, %v246
        %v289 = vmul.f32 %v285, %v247
        %v290 = vmul.f32 %v286, %v248
        %v291 = vmul.f32 %v285, %v249
        %v292 = vmul.f32 %v286, %v250
        %v293 = vmul.f32 %v285, %v251
        %v294 = vmul.f32 %v286, %v252
        %v295 = vmul.f32 %v285, %v253
        %v296 = vmul.f32 %v286, %v254
        %v297 = vmul.f32 %v285, %v255
        %v298 = vmul.f32 %v286, %v256
        %v299 = vmul.f32 %v285, %v257
        %v300 = vmul.f32 %v286, %v258
        %v301 = vmul.f32 %v285, %v259
        %v302 = vmul.f32 %v286, %v260
        %v303 = vrot.slane %v287, 4
        %v304 = vadd.f32 %v287, %v303
        %v305 = vrot.slane %v304, 2
        %v306 = vadd.f32 %v304, %v305
        %v307 = vrot.slane %v306, 1
        %v308 = vadd.f32 %v306, %v307
        %vm309 = vcmask 261120
        %v310 = vsel %vm309, %v288, 0.0
        %v311 = vrot.slane %v310, 4
        %v312 = vadd.f32 %v310, %v311
        %v313 = vrot.slane %v312, 2
        %v314 = vadd.f32 %v312, %v313
        %v315 = vrot.slane %v314, 1
        %v316 = vadd.f32 %v314, %v315
        %v317 = vrot.slane %v289, 4
        %v318 = vadd.f32 %v289, %v317
        %v319 = vrot.slane %v318, 2
        %v320 = vadd.f32 %v318, %v319
        %v321 = vrot.slane %v320, 1
        %v322 = vadd.f32 %v320, %v321
        %v323 = vsel %vm309, %v290, 0.0
        %v324 = vrot.slane %v323, 4
        %v325 = vadd.f32 %v323, %v324
        %v326 = vrot.slane %v325, 2
        %v327 = vadd.f32 %v325, %v326
        %v328 = vrot.slane %v327, 1
        %v329 = vadd.f32 %v327, %v328
        %v330 = vrot.slane %v291, 4
        %v331 = vadd.f32 %v291, %v330
        %v332 = vrot.slane %v331, 2
        %v333 = vadd.f32 %v331, %v332
        %v334 = vrot.slane %v333, 1
        %v335 = vadd.f32 %v333, %v334
        %v336 = vsel %vm309, %v292, 0.0
        %v337 = vrot.slane %v336, 4
        %v338 = vadd.f32 %v336, %v337
        %v339 = vrot.slane %v338, 2
        %v340 = vadd.f32 %v338, %v339
        %v341 = vrot.slane %v340, 1
        %v342 = vadd.f32 %v340, %v341
        %v343 = vrot.slane %v293, 4
        %v344 = vadd.f32 %v293, %v343
        %v345 = vrot.slane %v344, 2
        %v346 = vadd.f32 %v344, %v345
        %v347 = vrot.slane %v346, 1
        %v348 = vadd.f32 %v346, %v347
        %v349 = vsel %vm309, %v294, 0.0
        %v350 = vrot.slane %v349, 4
        %v351 = vadd.f32 %v349, %v350
        %v352 = vrot.slane %v351, 2
        %v353 = vadd.f32 %v351, %v352
        %v354 = vrot.slane %v353, 1
        %v355 = vadd.f32 %v353, %v354
        %v356 = vrot.slane %v295, 4
        %v357 = vadd.f32 %v295, %v356
        %v358 = vrot.slane %v357, 2
        %v359 = vadd.f32 %v357, %v358
        %v360 = vrot.slane %v359, 1
        %v361 = vadd.f32 %v359, %v360
        %v362 = vsel %vm309, %v296, 0.0
        %v363 = vrot.slane %v362, 4
        %v364 = vadd.f32 %v362, %v363
        %v365 = vrot.slane %v364, 2
        %v366 = vadd.f32 %v364, %v365
        %v367 = vrot.slane %v366, 1
        %v368 = vadd.f32 %v366, %v367
        %v369 = vrot.slane %v297, 4
        %v370 = vadd.f32 %v297, %v369
        %v371 = vrot.slane %v370, 2
        %v372 = vadd.f32 %v370, %v371
        %v373 = vrot.slane %v372, 1
        %v374 = vadd.f32 %v372, %v373
        %v375 = vsel %vm309, %v298, 0.0
        %v376 = vrot.slane %v375, 4
        %v377 = vadd.f32 %v375, %v376
        %v378 = vrot.slane %v377, 2
        %v379 = vadd.f32 %v377, %v378
        %v380 = vrot.slane %v379, 1
        %v381 = vadd.f32 %v379, %v380
        %v382 = vrot.slane %v299, 4
        %v383 = vadd.f32 %v299, %v382
        %v384 = vrot.slane %v383, 2
        %v385 = vadd.f32 %v383, %v384
        %v386 = vrot.slane %v385, 1
        %v387 = vadd.f32 %v385, %v386
        %v388 = vsel %vm309, %v300, 0.0
        %v389 = vrot.slane %v388, 4
        %v390 = vadd.f32 %v388, %v389
        %v391 = vrot.slane %v390, 2
        %v392 = vadd.f32 %v390, %v391
        %v393 = vrot.slane %v392, 1
        %v394 = vadd.f32 %v392, %v393
        %v395 = vrot.slane %v301, 4
        %v396 = vadd.f32 %v301, %v395
        %v397 = vrot.slane %v396, 2
        %v398 = vadd.f32 %v396, %v397
        %v399 = vrot.slane %v398, 1
        %v400 = vadd.f32 %v398, %v399
        %v401 = vsel %vm309, %v302, 0.0
        %v402 = vrot.slane %v401, 4
        %v403 = vadd.f32 %v401, %v402
        %v404 = vrot.slane %v403, 2
        %v405 = vadd.f32 %v403, %v404
        %v406 = vrot.slane %v405, 1
        %v407 = vadd.f32 %v405, %v406
        %v408 = vmul.f32 %v308, %v308
        %v409 = vmul.f32 %v316, %v316
        %v410 = vmul.f32 %v322, %v322
        %v411 = vmul.f32 %v329, %v329
        %v412 = vmul.f32 %v335, %v335
        %v413 = vmul.f32 %v342, %v342
        %v414 = vmul.f32 %v348, %v348
        %v415 = vmul.f32 %v355, %v355
        %v416 = vmul.f32 %v361, %v361
        %v417 = vmul.f32 %v368, %v368
        %v418 = vmul.f32 %v374, %v374
        %v419 = vmul.f32 %v381, %v381
        %v420 = vmul.f32 %v387, %v387
        %v421 = vmul.f32 %v394, %v394
        %v422 = vmul.f32 %v400, %v400
        %v423 = vmul.f32 %v407, %v407
        %vm440 = vcmask 1041409
        %v441 = vsel %vm440, %v410, %v408
        %vm442 = vcmask 1042434
        %v443 = vsel %vm442, %v412, %v441
        %vm444 = vcmask 1043459
        %v445 = vsel %vm444, %v414, %v443
        %vm446 = vcmask 1044484
        %v447 = vsel %vm446, %v416, %v445
        %vm448 = vcmask 1045509
        %v449 = vsel %vm448, %v418, %v447
        %vm450 = vcmask 1046534
        %v451 = vsel %vm450, %v420, %v449
        %vm452 = vcmask 1047559
        %v453 = vsel %vm452, %v422, %v451
        %v454 = vsel %vm440, %v411, %v409
        %v455 = vsel %vm442, %v413, %v454
        %v456 = vsel %vm444, %v415, %v455
        %v457 = vsel %vm446, %v417, %v456
        %v458 = vsel %vm448, %v419, %v457
        %v459 = vsel %vm450, %v421, %v458
        %v460 = vsel %vm452, %v423, %v459
        %v462 = vsel %vm309, %v460, 0
        %464 = vmatprep.subr.mxu0 0.0
        %v465 = vand.u32 %v265, 4294901760
        %466 = vmatpush1.msra.mxu0 %v465
        %467 = vmatprep.subr.mxu0 0.0
        %v468 = vand.u32 %v266, 4294901760
        %469 = vmatpush1.msra.mxu0 %v468
        %470 = vmatprep.subr.mxu0 0.0
        %v471 = vand.u32 %v267, 4294901760
        %472 = vmatpush1.msra.mxu0 %v471
        %473 = vmatprep.subr.mxu0 0.0
        %v474 = vand.u32 %v268, 4294901760
        %475 = vmatpush1.msra.mxu0 %v474
        %476 = vmatprep.subr.mxu0 0.0
        %v477 = vand.u32 %v269, 4294901760
        %478 = vmatpush1.msra.mxu0 %v477
        %479 = vmatprep.subr.mxu0 0.0
        %v480 = vand.u32 %v270, 4294901760
        %481 = vmatpush1.msra.mxu0 %v480
        %482 = vmatprep.subr.mxu0 0.0
        %v483 = vand.u32 %v271, 4294901760
        %484 = vmatpush1.msra.mxu0 %v483
        %485 = vmatprep.subr.mxu0 0.0
        %v486 = vand.u32 %v272, 4294901760
        %487 = vmatpush1.msra.mxu0 %v486
        %488 = vmatprep.subr.mxu0 0.0
        %v489 = vand.u32 %v273, 4294901760
        %490 = vmatpush1.msra.mxu0 %v489
        %491 = vmatprep.subr.mxu0 0.0
        %v492 = vand.u32 %v274, 4294901760
        %493 = vmatpush1.msra.mxu0 %v492
        %494 = vmatprep.subr.mxu0 0.0
        %v495 = vand.u32 %v275, 4294901760
        %496 = vmatpush1.msra.mxu0 %v495
        %497 = vmatprep.subr.mxu0 0.0
        %v498 = vand.u32 %v276, 4294901760
        %499 = vmatpush1.msra.mxu0 %v498
        %500 = vmatprep.subr.mxu0 0.0
        %v501 = vand.u32 %v277, 4294901760
        %502 = vmatpush1.msra.mxu0 %v501
        %503 = vmatprep.subr.mxu0 0.0
        %v504 = vand.u32 %v278, 4294901760
        %505 = vmatpush1.msra.mxu0 %v504
        %506 = vmatprep.subr.mxu0 0.0
        %v507 = vand.u32 %v279, 4294901760
        %508 = vmatpush1.msra.mxu0 %v507
        %509 = vmatprep.subr.mxu0 0.0
        %v510 = vand.u32 %v280, 4294901760
        %511 = vmatpush1.msra.mxu0 %v510
        %512 = vmatprep.subr.mxu0 0.0
        %v513 = vand.u32 %v281, 4294901760
        %514 = vmatpush1.msra.mxu0 %v513
        %515 = vmatprep.subr.mxu0 0.0
        %v516 = vand.u32 %v282, 4294901760
        %517 = vmatpush1.msra.mxu0 %v516
        %518 = vmatprep.subr.mxu0 0.0
        %v519 = vand.u32 %v283, 4294901760
        %520 = vmatpush1.msra.mxu0 %v519
        %521 = vmatprep.subr.mxu0 0.0
        %v522 = vand.u32 %v284, 4294901760
        %523 = vmatpush1.msra.mxu0 %v522
        %524 = vmatprep.subr.mxu0 0.0
        %525 = vmatpush1.msra.mxu0 0.0
        %526 = vmatprep.subr.mxu0 0.0
        %527 = vmatpush1.msra.mxu0 0.0
        %528 = vmatprep.subr.mxu0 0.0
        %529 = vmatpush1.msra.mxu0 0.0
        %530 = vmatprep.subr.mxu0 0.0
        %531 = vmatpush1.msra.mxu0 0.0
        %532 = vmatprep.subr.mxu0 0.0
        %533 = vmatpush1.msra.mxu0 0.0
        %534 = vmatprep.subr.mxu0 0.0
        %535 = vmatpush1.msra.mxu0 0.0
        %536 = vmatprep.subr.mxu0 0.0
        %537 = vmatpush1.msra.mxu0 0.0
        %538 = vmatprep.subr.mxu0 0.0
        %539 = vmatpush1.msra.mxu0 0.0
        %540 = vmatprep.subr.mxu0 0.0
        %541 = vmatpush1.msra.mxu0 0.0
        %542 = vmatprep.subr.mxu0 0.0
        %543 = vmatpush1.msra.mxu0 0.0
        %544 = vmatprep.subr.mxu0 0.0
        %545 = vmatpush1.msra.mxu0 0.0
        %546 = vmatprep.subr.mxu0 0.0
        %547 = vmatpush1.msra.mxu0 0.0
        %v548 = vand.u32 %v462, 4294901760
        %v549 = vsub.f32 %v462, %v548
        %v550 = vand.u32 %v549, 4294901760
        %v551 = vsub.f32 %v549, %v550
        %v552 = vand.u32 %v551, 4294901760
        %553 = vmatprep.mubr.f32.mxu0 %v552
        %v554 = vand.u32 %v453, 4294901760
        %v555 = vsub.f32 %v453, %v554
        %v556 = vand.u32 %v555, 4294901760
        %v557 = vsub.f32 %v555, %v556
        %v558 = vand.u32 %v557, 4294901760
        %559 = vmatmul.mubr.f32.gmra.mrb[0].mxu0 %v558
        %v560 = vpop.f32.mrb[0].mxu0
        %v561 = vadd.f32 0.0, %v560
        %v562 = vpop.f32.mrb[0].mxu0
        %563 = vdwg.mxu0
        %564 = vmatprep.subr.mxu0 0.0
        %v565 = vand.u32 %v265, 4294901760
        %v566 = vsub.f32 %v265, %v565
        %v567 = vand.u32 %v566, 4294901760
        %v568 = vsub.f32 %v566, %v567
        %v569 = vand.u32 %v568, 4294901760
        %570 = vmatpush1.msra.mxu0 %v569
        %571 = vmatprep.subr.mxu0 0.0
        %v572 = vand.u32 %v266, 4294901760
        %v573 = vsub.f32 %v266, %v572
        %v574 = vand.u32 %v573, 4294901760
        %v575 = vsub.f32 %v573, %v574
        %v576 = vand.u32 %v575, 4294901760
        %577 = vmatpush1.msra.mxu0 %v576
        %578 = vmatprep.subr.mxu0 0.0
        %v579 = vand.u32 %v267, 4294901760
        %v580 = vsub.f32 %v267, %v579
        %v581 = vand.u32 %v580, 4294901760
        %v582 = vsub.f32 %v580, %v581
        %v583 = vand.u32 %v582, 4294901760
        %584 = vmatpush1.msra.mxu0 %v583
        %585 = vmatprep.subr.mxu0 0.0
        %v586 = vand.u32 %v268, 4294901760
        %v587 = vsub.f32 %v268, %v586
        %v588 = vand.u32 %v587, 4294901760
        %v589 = vsub.f32 %v587, %v588
        %v590 = vand.u32 %v589, 4294901760
        %591 = vmatpush1.msra.mxu0 %v590
        %592 = vmatprep.subr.mxu0 0.0
        %v593 = vand.u32 %v269, 4294901760
        %v594 = vsub.f32 %v269, %v593
        %v595 = vand.u32 %v594, 4294901760
        %v596 = vsub.f32 %v594, %v595
        %v597 = vand.u32 %v596, 4294901760
        %598 = vmatpush1.msra.mxu0 %v597
        %599 = vmatprep.subr.mxu0 0.0
        %v600 = vand.u32 %v270, 4294901760
        %v601 = vsub.f32 %v270, %v600
        %v602 = vand.u32 %v601, 4294901760
        %v603 = vsub.f32 %v601, %v602
        %v604 = vand.u32 %v603, 4294901760
        %605 = vmatpush1.msra.mxu0 %v604
        %606 = vmatprep.subr.mxu0 0.0
        %v607 = vand.u32 %v271, 4294901760
        %v608 = vsub.f32 %v271, %v607
        %v609 = vand.u32 %v608, 4294901760
        %v610 = vsub.f32 %v608, %v609
        %v611 = vand.u32 %v610, 4294901760
        %612 = vmatpush1.msra.mxu0 %v611
        %613 = vmatprep.subr.mxu0 0.0
        %v614 = vand.u32 %v272, 4294901760
        %v615 = vsub.f32 %v272, %v614
        %v616 = vand.u32 %v615, 4294901760
        %v617 = vsub.f32 %v615, %v616
        %v618 = vand.u32 %v617, 4294901760
        %619 = vmatpush1.msra.mxu0 %v618
        %620 = vmatprep.subr.mxu0 0.0
        %v621 = vand.u32 %v273, 4294901760
        %v622 = vsub.f32 %v273, %v621
        %v623 = vand.u32 %v622, 4294901760
        %v624 = vsub.f32 %v622, %v623
        %v625 = vand.u32 %v624, 4294901760
        %626 = vmatpush1.msra.mxu0 %v625
        %627 = vmatprep.subr.mxu0 0.0
        %v628 = vand.u32 %v274, 4294901760
        %v629 = vsub.f32 %v274, %v628
        %v630 = vand.u32 %v629, 4294901760
        %v631 = vsub.f32 %v629, %v630
        %v632 = vand.u32 %v631, 4294901760
        %633 = vmatpush1.msra.mxu0 %v632
        %634 = vmatprep.subr.mxu0 0.0
        %v635 = vand.u32 %v275, 4294901760
        %v636 = vsub.f32 %v275, %v635
        %v637 = vand.u32 %v636, 4294901760
        %v638 = vsub.f32 %v636, %v637
        %v639 = vand.u32 %v638, 4294901760
        %640 = vmatpush1.msra.mxu0 %v639
        %641 = vmatprep.subr.mxu0 0.0
        %v642 = vand.u32 %v276, 4294901760
        %v643 = vsub.f32 %v276, %v642
        %v644 = vand.u32 %v643, 4294901760
        %v645 = vsub.f32 %v643, %v644
        %v646 = vand.u32 %v645, 4294901760
        %647 = vmatpush1.msra.mxu0 %v646
        %648 = vmatprep.subr.mxu0 0.0
        %v649 = vand.u32 %v277, 4294901760
        %v650 = vsub.f32 %v277, %v649
        %v651 = vand.u32 %v650, 4294901760
        %v652 = vsub.f32 %v650, %v651
        %v653 = vand.u32 %v652, 4294901760
        %654 = vmatpush1.msra.mxu0 %v653
        %655 = vmatprep.subr.mxu0 0.0
        %v656 = vand.u32 %v278, 4294901760
        %v657 = vsub.f32 %v278, %v656
        %v658 = vand.u32 %v657, 4294901760
        %v659 = vsub.f32 %v657, %v658
        %v660 = vand.u32 %v659, 4294901760
        %661 = vmatpush1.msra.mxu0 %v660
        %662 = vmatprep.subr.mxu0 0.0
        %v663 = vand.u32 %v279, 4294901760
        %v664 = vsub.f32 %v279, %v663
        %v665 = vand.u32 %v664, 4294901760
        %v666 = vsub.f32 %v664, %v665
        %v667 = vand.u32 %v666, 4294901760
        %668 = vmatpush1.msra.mxu0 %v667
        %669 = vmatprep.subr.mxu0 0.0
        %v670 = vand.u32 %v280, 4294901760
        %v671 = vsub.f32 %v280, %v670
        %v672 = vand.u32 %v671, 4294901760
        %v673 = vsub.f32 %v671, %v672
        %v674 = vand.u32 %v673, 4294901760
        %675 = vmatpush1.msra.mxu0 %v674
        %676 = vmatprep.subr.mxu0 0.0
        %v677 = vand.u32 %v281, 4294901760
        %v678 = vsub.f32 %v281, %v677
        %v679 = vand.u32 %v678, 4294901760
        %v680 = vsub.f32 %v678, %v679
        %v681 = vand.u32 %v680, 4294901760
        %682 = vmatpush1.msra.mxu0 %v681
        %683 = vmatprep.subr.mxu0 0.0
        %v684 = vand.u32 %v282, 4294901760
        %v685 = vsub.f32 %v282, %v684
        %v686 = vand.u32 %v685, 4294901760
        %v687 = vsub.f32 %v685, %v686
        %v688 = vand.u32 %v687, 4294901760
        %689 = vmatpush1.msra.mxu0 %v688
        %690 = vmatprep.subr.mxu0 0.0
        %v691 = vand.u32 %v283, 4294901760
        %v692 = vsub.f32 %v283, %v691
        %v693 = vand.u32 %v692, 4294901760
        %v694 = vsub.f32 %v692, %v693
        %v695 = vand.u32 %v694, 4294901760
        %696 = vmatpush1.msra.mxu0 %v695
        %697 = vmatprep.subr.mxu0 0.0
        %v698 = vand.u32 %v284, 4294901760
        %v699 = vsub.f32 %v284, %v698
        %v700 = vand.u32 %v699, 4294901760
        %v701 = vsub.f32 %v699, %v700
        %v702 = vand.u32 %v701, 4294901760
        %703 = vmatpush1.msra.mxu0 %v702
        %704 = vmatprep.subr.mxu0 0.0
        %705 = vmatpush1.msra.mxu0 0.0
        %706 = vmatprep.subr.mxu0 0.0
        %707 = vmatpush1.msra.mxu0 0.0
        %708 = vmatprep.subr.mxu0 0.0
        %709 = vmatpush1.msra.mxu0 0.0
        %710 = vmatprep.subr.mxu0 0.0
        %711 = vmatpush1.msra.mxu0 0.0
        %712 = vmatprep.subr.mxu0 0.0
        %713 = vmatpush1.msra.mxu0 0.0
        %714 = vmatprep.subr.mxu0 0.0
        %715 = vmatpush1.msra.mxu0 0.0
        %716 = vmatprep.subr.mxu0 0.0
        %717 = vmatpush1.msra.mxu0 0.0
        %718 = vmatprep.subr.mxu0 0.0
        %719 = vmatpush1.msra.mxu0 0.0
        %720 = vmatprep.subr.mxu0 0.0
        %721 = vmatpush1.msra.mxu0 0.0
        %722 = vmatprep.subr.mxu0 0.0
        %723 = vmatpush1.msra.mxu0 0.0
        %724 = vmatprep.subr.mxu0 0.0
        %725 = vmatpush1.msra.mxu0 0.0
        %726 = vmatprep.subr.mxu0 0.0
        %727 = vmatpush1.msra.mxu0 0.0
        %v728 = vand.u32 %v462, 4294901760
        %729 = vmatprep.mubr.f32.mxu0 %v728
        %v730 = vand.u32 %v453, 4294901760
        %731 = vmatmul.mubr.f32.gmra.mrb[0].mxu0 %v730
        %v732 = vpop.f32.mrb[0].mxu0
        %v733 = vadd.f32 %v561, %v732
        %v734 = vpop.f32.mrb[0].mxu0
        %735 = vdwg.mxu0
        %736 = vmatprep.subr.mxu0 0.0
        %v737 = vand.u32 %v265, 4294901760
        %v738 = vsub.f32 %v265, %v737
        %739 = vmatpush1.msra.mxu0 %v738
        %740 = vmatprep.subr.mxu0 0.0
        %v741 = vand.u32 %v266, 4294901760
        %v742 = vsub.f32 %v266, %v741
        %743 = vmatpush1.msra.mxu0 %v742
        %744 = vmatprep.subr.mxu0 0.0
        %v745 = vand.u32 %v267, 4294901760
        %v746 = vsub.f32 %v267, %v745
        %747 = vmatpush1.msra.mxu0 %v746
        %748 = vmatprep.subr.mxu0 0.0
        %v749 = vand.u32 %v268, 4294901760
        %v750 = vsub.f32 %v268, %v749
        %751 = vmatpush1.msra.mxu0 %v750
        %752 = vmatprep.subr.mxu0 0.0
        %v753 = vand.u32 %v269, 4294901760
        %v754 = vsub.f32 %v269, %v753
        %755 = vmatpush1.msra.mxu0 %v754
        %756 = vmatprep.subr.mxu0 0.0
        %v757 = vand.u32 %v270, 4294901760
        %v758 = vsub.f32 %v270, %v757
        %759 = vmatpush1.msra.mxu0 %v758
        %760 = vmatprep.subr.mxu0 0.0
        %v761 = vand.u32 %v271, 4294901760
        %v762 = vsub.f32 %v271, %v761
        %763 = vmatpush1.msra.mxu0 %v762
        %764 = vmatprep.subr.mxu0 0.0
        %v765 = vand.u32 %v272, 4294901760
        %v766 = vsub.f32 %v272, %v765
        %767 = vmatpush1.msra.mxu0 %v766
        %768 = vmatprep.subr.mxu0 0.0
        %v769 = vand.u32 %v273, 4294901760
        %v770 = vsub.f32 %v273, %v769
        %771 = vmatpush1.msra.mxu0 %v770
        %772 = vmatprep.subr.mxu0 0.0
        %v773 = vand.u32 %v274, 4294901760
        %v774 = vsub.f32 %v274, %v773
        %775 = vmatpush1.msra.mxu0 %v774
        %776 = vmatprep.subr.mxu0 0.0
        %v777 = vand.u32 %v275, 4294901760
        %v778 = vsub.f32 %v275, %v777
        %779 = vmatpush1.msra.mxu0 %v778
        %780 = vmatprep.subr.mxu0 0.0
        %v781 = vand.u32 %v276, 4294901760
        %v782 = vsub.f32 %v276, %v781
        %783 = vmatpush1.msra.mxu0 %v782
        %784 = vmatprep.subr.mxu0 0.0
        %v785 = vand.u32 %v277, 4294901760
        %v786 = vsub.f32 %v277, %v785
        %787 = vmatpush1.msra.mxu0 %v786
        %788 = vmatprep.subr.mxu0 0.0
        %v789 = vand.u32 %v278, 4294901760
        %v790 = vsub.f32 %v278, %v789
        %791 = vmatpush1.msra.mxu0 %v790
        %792 = vmatprep.subr.mxu0 0.0
        %v793 = vand.u32 %v279, 4294901760
        %v794 = vsub.f32 %v279, %v793
        %795 = vmatpush1.msra.mxu0 %v794
        %796 = vmatprep.subr.mxu0 0.0
        %v797 = vand.u32 %v280, 4294901760
        %v798 = vsub.f32 %v280, %v797
        %799 = vmatpush1.msra.mxu0 %v798
        %800 = vmatprep.subr.mxu0 0.0
        %v801 = vand.u32 %v281, 4294901760
        %v802 = vsub.f32 %v281, %v801
        %803 = vmatpush1.msra.mxu0 %v802
        %804 = vmatprep.subr.mxu0 0.0
        %v805 = vand.u32 %v282, 4294901760
        %v806 = vsub.f32 %v282, %v805
        %807 = vmatpush1.msra.mxu0 %v806
        %808 = vmatprep.subr.mxu0 0.0
        %v809 = vand.u32 %v283, 4294901760
        %v810 = vsub.f32 %v283, %v809
        %811 = vmatpush1.msra.mxu0 %v810
        %812 = vmatprep.subr.mxu0 0.0
        %v813 = vand.u32 %v284, 4294901760
        %v814 = vsub.f32 %v284, %v813
        %815 = vmatpush1.msra.mxu0 %v814
        %816 = vmatprep.subr.mxu0 0.0
        %817 = vmatpush1.msra.mxu0 0.0
        %818 = vmatprep.subr.mxu0 0.0
        %819 = vmatpush1.msra.mxu0 0.0
        %820 = vmatprep.subr.mxu0 0.0
        %821 = vmatpush1.msra.mxu0 0.0
        %822 = vmatprep.subr.mxu0 0.0
        %823 = vmatpush1.msra.mxu0 0.0
        %824 = vmatprep.subr.mxu0 0.0
        %825 = vmatpush1.msra.mxu0 0.0
        %826 = vmatprep.subr.mxu0 0.0
        %827 = vmatpush1.msra.mxu0 0.0
        %828 = vmatprep.subr.mxu0 0.0
        %829 = vmatpush1.msra.mxu0 0.0
        %830 = vmatprep.subr.mxu0 0.0
        %831 = vmatpush1.msra.mxu0 0.0
        %832 = vmatprep.subr.mxu0 0.0
        %833 = vmatpush1.msra.mxu0 0.0
        %834 = vmatprep.subr.mxu0 0.0
        %835 = vmatpush1.msra.mxu0 0.0
        %836 = vmatprep.subr.mxu0 0.0
        %837 = vmatpush1.msra.mxu0 0.0
        %838 = vmatprep.subr.mxu0 0.0
        %839 = vmatpush1.msra.mxu0 0.0
        %v840 = vand.u32 %v462, 4294901760
        %v841 = vsub.f32 %v462, %v840
        %842 = vmatprep.mubr.f32.mxu0 %v841
        %v843 = vand.u32 %v453, 4294901760
        %v844 = vsub.f32 %v453, %v843
        %845 = vmatmul.mubr.f32.gmra.mrb[0].mxu0 %v844
        %v846 = vpop.f32.mrb[0].mxu0
        %v847 = vadd.f32 %v733, %v846
        %v848 = vpop.f32.mrb[0].mxu0
        %849 = vdwg.mxu0
        %850 = vmatprep.subr.mxu0 0.0
        %v851 = vand.u32 %v265, 4294901760
        %852 = vmatpush1.msra.mxu0 %v851
        %853 = vmatprep.subr.mxu0 0.0
        %v854 = vand.u32 %v266, 4294901760
        %855 = vmatpush1.msra.mxu0 %v854
        %856 = vmatprep.subr.mxu0 0.0
        %v857 = vand.u32 %v267, 4294901760
        %858 = vmatpush1.msra.mxu0 %v857
        %859 = vmatprep.subr.mxu0 0.0
        %v860 = vand.u32 %v268, 4294901760
        %861 = vmatpush1.msra.mxu0 %v860
        %862 = vmatprep.subr.mxu0 0.0
        %v863 = vand.u32 %v269, 4294901760
        %864 = vmatpush1.msra.mxu0 %v863
        %865 = vmatprep.subr.mxu0 0.0
        %v866 = vand.u32 %v270, 4294901760
        %867 = vmatpush1.msra.mxu0 %v866
        %868 = vmatprep.subr.mxu0 0.0
        %v869 = vand.u32 %v271, 4294901760
        %870 = vmatpush1.msra.mxu0 %v869
        %871 = vmatprep.subr.mxu0 0.0
        %v872 = vand.u32 %v272, 4294901760
        %873 = vmatpush1.msra.mxu0 %v872
        %874 = vmatprep.subr.mxu0 0.0
        %v875 = vand.u32 %v273, 4294901760
        %876 = vmatpush1.msra.mxu0 %v875
        %877 = vmatprep.subr.mxu0 0.0
        %v878 = vand.u32 %v274, 4294901760
        %879 = vmatpush1.msra.mxu0 %v878
        %880 = vmatprep.subr.mxu0 0.0
        %v881 = vand.u32 %v275, 4294901760
        %882 = vmatpush1.msra.mxu0 %v881
        %883 = vmatprep.subr.mxu0 0.0
        %v884 = vand.u32 %v276, 4294901760
        %885 = vmatpush1.msra.mxu0 %v884
        %886 = vmatprep.subr.mxu0 0.0
        %v887 = vand.u32 %v277, 4294901760
        %888 = vmatpush1.msra.mxu0 %v887
        %889 = vmatprep.subr.mxu0 0.0
        %v890 = vand.u32 %v278, 4294901760
        %891 = vmatpush1.msra.mxu0 %v890
        %892 = vmatprep.subr.mxu0 0.0
        %v893 = vand.u32 %v279, 4294901760
        %894 = vmatpush1.msra.mxu0 %v893
        %895 = vmatprep.subr.mxu0 0.0
        %v896 = vand.u32 %v280, 4294901760
        %897 = vmatpush1.msra.mxu0 %v896
        %898 = vmatprep.subr.mxu0 0.0
        %v899 = vand.u32 %v281, 4294901760
        %900 = vmatpush1.msra.mxu0 %v899
        %901 = vmatprep.subr.mxu0 0.0
        %v902 = vand.u32 %v282, 4294901760
        %903 = vmatpush1.msra.mxu0 %v902
        %904 = vmatprep.subr.mxu0 0.0
        %v905 = vand.u32 %v283, 4294901760
        %906 = vmatpush1.msra.mxu0 %v905
        %907 = vmatprep.subr.mxu0 0.0
        %v908 = vand.u32 %v284, 4294901760
        %909 = vmatpush1.msra.mxu0 %v908
        %910 = vmatprep.subr.mxu0 0.0
        %911 = vmatpush1.msra.mxu0 0.0
        %912 = vmatprep.subr.mxu0 0.0
        %913 = vmatpush1.msra.mxu0 0.0
        %914 = vmatprep.subr.mxu0 0.0
        %915 = vmatpush1.msra.mxu0 0.0
        %916 = vmatprep.subr.mxu0 0.0
        %917 = vmatpush1.msra.mxu0 0.0
        %918 = vmatprep.subr.mxu0 0.0
        %919 = vmatpush1.msra.mxu0 0.0
        %920 = vmatprep.subr.mxu0 0.0
        %921 = vmatpush1.msra.mxu0 0.0
        %922 = vmatprep.subr.mxu0 0.0
        %923 = vmatpush1.msra.mxu0 0.0
        %924 = vmatprep.subr.mxu0 0.0
        %925 = vmatpush1.msra.mxu0 0.0
        %926 = vmatprep.subr.mxu0 0.0
        %927 = vmatpush1.msra.mxu0 0.0
        %928 = vmatprep.subr.mxu0 0.0
        %929 = vmatpush1.msra.mxu0 0.0
        %930 = vmatprep.subr.mxu0 0.0
        %931 = vmatpush1.msra.mxu0 0.0
        %932 = vmatprep.subr.mxu0 0.0
        %933 = vmatpush1.msra.mxu0 0.0
        %v934 = vand.u32 %v462, 4294901760
        %v935 = vsub.f32 %v462, %v934
        %v936 = vand.u32 %v935, 4294901760
        %937 = vmatprep.mubr.f32.mxu0 %v936
        %v938 = vand.u32 %v453, 4294901760
        %v939 = vsub.f32 %v453, %v938
        %v940 = vand.u32 %v939, 4294901760
        %941 = vmatmul.mubr.f32.gmra.mrb[0].mxu0 %v940
        %v942 = vpop.f32.mrb[0].mxu0
        %v943 = vadd.f32 %v847, %v942
        %v944 = vpop.f32.mrb[0].mxu0
        %945 = vdwg.mxu0
        %946 = vmatprep.subr.mxu0 0.0
        %v947 = vand.u32 %v265, 4294901760
        %v948 = vsub.f32 %v265, %v947
        %v949 = vand.u32 %v948, 4294901760
        %950 = vmatpush1.msra.mxu0 %v949
        %951 = vmatprep.subr.mxu0 0.0
        %v952 = vand.u32 %v266, 4294901760
        %v953 = vsub.f32 %v266, %v952
        %v954 = vand.u32 %v953, 4294901760
        %955 = vmatpush1.msra.mxu0 %v954
        %956 = vmatprep.subr.mxu0 0.0
        %v957 = vand.u32 %v267, 4294901760
        %v958 = vsub.f32 %v267, %v957
        %v959 = vand.u32 %v958, 4294901760
        %960 = vmatpush1.msra.mxu0 %v959
        %961 = vmatprep.subr.mxu0 0.0
        %v962 = vand.u32 %v268, 4294901760
        %v963 = vsub.f32 %v268, %v962
        %v964 = vand.u32 %v963, 4294901760
        %965 = vmatpush1.msra.mxu0 %v964
        %966 = vmatprep.subr.mxu0 0.0
        %v967 = vand.u32 %v269, 4294901760
        %v968 = vsub.f32 %v269, %v967
        %v969 = vand.u32 %v968, 4294901760
        %970 = vmatpush1.msra.mxu0 %v969
        %971 = vmatprep.subr.mxu0 0.0
        %v972 = vand.u32 %v270, 4294901760
        %v973 = vsub.f32 %v270, %v972
        %v974 = vand.u32 %v973, 4294901760
        %975 = vmatpush1.msra.mxu0 %v974
        %976 = vmatprep.subr.mxu0 0.0
        %v977 = vand.u32 %v271, 4294901760
        %v978 = vsub.f32 %v271, %v977
        %v979 = vand.u32 %v978, 4294901760
        %980 = vmatpush1.msra.mxu0 %v979
        %981 = vmatprep.subr.mxu0 0.0
        %v982 = vand.u32 %v272, 4294901760
        %v983 = vsub.f32 %v272, %v982
        %v984 = vand.u32 %v983, 4294901760
        %985 = vmatpush1.msra.mxu0 %v984
        %986 = vmatprep.subr.mxu0 0.0
        %v987 = vand.u32 %v273, 4294901760
        %v988 = vsub.f32 %v273, %v987
        %v989 = vand.u32 %v988, 4294901760
        %990 = vmatpush1.msra.mxu0 %v989
        %991 = vmatprep.subr.mxu0 0.0
        %v992 = vand.u32 %v274, 4294901760
        %v993 = vsub.f32 %v274, %v992
        %v994 = vand.u32 %v993, 4294901760
        %995 = vmatpush1.msra.mxu0 %v994
        %996 = vmatprep.subr.mxu0 0.0
        %v997 = vand.u32 %v275, 4294901760
        %v998 = vsub.f32 %v275, %v997
        %v999 = vand.u32 %v998, 4294901760
        %1000 = vmatpush1.msra.mxu0 %v999
        %1001 = vmatprep.subr.mxu0 0.0
        %v1002 = vand.u32 %v276, 4294901760
        %v1003 = vsub.f32 %v276, %v1002
        %v1004 = vand.u32 %v1003, 4294901760
        %1005 = vmatpush1.msra.mxu0 %v1004
        %1006 = vmatprep.subr.mxu0 0.0
        %v1007 = vand.u32 %v277, 4294901760
        %v1008 = vsub.f32 %v277, %v1007
        %v1009 = vand.u32 %v1008, 4294901760
        %1010 = vmatpush1.msra.mxu0 %v1009
        %1011 = vmatprep.subr.mxu0 0.0
        %v1012 = vand.u32 %v278, 4294901760
        %v1013 = vsub.f32 %v278, %v1012
        %v1014 = vand.u32 %v1013, 4294901760
        %1015 = vmatpush1.msra.mxu0 %v1014
        %1016 = vmatprep.subr.mxu0 0.0
        %v1017 = vand.u32 %v279, 4294901760
        %v1018 = vsub.f32 %v279, %v1017
        %v1019 = vand.u32 %v1018, 4294901760
        %1020 = vmatpush1.msra.mxu0 %v1019
        %1021 = vmatprep.subr.mxu0 0.0
        %v1022 = vand.u32 %v280, 4294901760
        %v1023 = vsub.f32 %v280, %v1022
        %v1024 = vand.u32 %v1023, 4294901760
        %1025 = vmatpush1.msra.mxu0 %v1024
        %1026 = vmatprep.subr.mxu0 0.0
        %v1027 = vand.u32 %v281, 4294901760
        %v1028 = vsub.f32 %v281, %v1027
        %v1029 = vand.u32 %v1028, 4294901760
        %1030 = vmatpush1.msra.mxu0 %v1029
        %1031 = vmatprep.subr.mxu0 0.0
        %v1032 = vand.u32 %v282, 4294901760
        %v1033 = vsub.f32 %v282, %v1032
        %v1034 = vand.u32 %v1033, 4294901760
        %1035 = vmatpush1.msra.mxu0 %v1034
        %1036 = vmatprep.subr.mxu0 0.0
        %v1037 = vand.u32 %v283, 4294901760
        %v1038 = vsub.f32 %v283, %v1037
        %v1039 = vand.u32 %v1038, 4294901760
        %1040 = vmatpush1.msra.mxu0 %v1039
        %1041 = vmatprep.subr.mxu0 0.0
        %v1042 = vand.u32 %v284, 4294901760
        %v1043 = vsub.f32 %v284, %v1042
        %v1044 = vand.u32 %v1043, 4294901760
        %1045 = vmatpush1.msra.mxu0 %v1044
        %1046 = vmatprep.subr.mxu0 0.0
        %1047 = vmatpush1.msra.mxu0 0.0
        %1048 = vmatprep.subr.mxu0 0.0
        %1049 = vmatpush1.msra.mxu0 0.0
        %1050 = vmatprep.subr.mxu0 0.0
        %1051 = vmatpush1.msra.mxu0 0.0
        %1052 = vmatprep.subr.mxu0 0.0
        %1053 = vmatpush1.msra.mxu0 0.0
        %1054 = vmatprep.subr.mxu0 0.0
        %1055 = vmatpush1.msra.mxu0 0.0
        %1056 = vmatprep.subr.mxu0 0.0
        %1057 = vmatpush1.msra.mxu0 0.0
        %1058 = vmatprep.subr.mxu0 0.0
        %1059 = vmatpush1.msra.mxu0 0.0
        %1060 = vmatprep.subr.mxu0 0.0
        %1061 = vmatpush1.msra.mxu0 0.0
        %1062 = vmatprep.subr.mxu0 0.0
        %1063 = vmatpush1.msra.mxu0 0.0
        %1064 = vmatprep.subr.mxu0 0.0
        %1065 = vmatpush1.msra.mxu0 0.0
        %1066 = vmatprep.subr.mxu0 0.0
        %1067 = vmatpush1.msra.mxu0 0.0
        %1068 = vmatprep.subr.mxu0 0.0
        %1069 = vmatpush1.msra.mxu0 0.0
        %v1070 = vand.u32 %v462, 4294901760
        %1071 = vmatprep.mubr.f32.mxu0 %v1070
        %v1072 = vand.u32 %v453, 4294901760
        %1073 = vmatmul.mubr.f32.gmra.mrb[0].mxu0 %v1072
        %v1074 = vpop.f32.mrb[0].mxu0
        %v1075 = vadd.f32 %v943, %v1074
        %v1076 = vpop.f32.mrb[0].mxu0
        %1077 = vdwg.mxu0
        %1078 = vmatprep.subr.mxu0 0.0
        %v1079 = vand.u32 %v265, 4294901760
        %1080 = vmatpush1.msra.mxu0 %v1079
        %1081 = vmatprep.subr.mxu0 0.0
        %v1082 = vand.u32 %v266, 4294901760
        %1083 = vmatpush1.msra.mxu0 %v1082
        %1084 = vmatprep.subr.mxu0 0.0
        %v1085 = vand.u32 %v267, 4294901760
        %1086 = vmatpush1.msra.mxu0 %v1085
        %1087 = vmatprep.subr.mxu0 0.0
        %v1088 = vand.u32 %v268, 4294901760
        %1089 = vmatpush1.msra.mxu0 %v1088
        %1090 = vmatprep.subr.mxu0 0.0
        %v1091 = vand.u32 %v269, 4294901760
        %1092 = vmatpush1.msra.mxu0 %v1091
        %1093 = vmatprep.subr.mxu0 0.0
        %v1094 = vand.u32 %v270, 4294901760
        %1095 = vmatpush1.msra.mxu0 %v1094
        %1096 = vmatprep.subr.mxu0 0.0
        %v1097 = vand.u32 %v271, 4294901760
        %1098 = vmatpush1.msra.mxu0 %v1097
        %1099 = vmatprep.subr.mxu0 0.0
        %v1100 = vand.u32 %v272, 4294901760
        %1101 = vmatpush1.msra.mxu0 %v1100
        %1102 = vmatprep.subr.mxu0 0.0
        %v1103 = vand.u32 %v273, 4294901760
        %1104 = vmatpush1.msra.mxu0 %v1103
        %1105 = vmatprep.subr.mxu0 0.0
        %v1106 = vand.u32 %v274, 4294901760
        %1107 = vmatpush1.msra.mxu0 %v1106
        %1108 = vmatprep.subr.mxu0 0.0
        %v1109 = vand.u32 %v275, 4294901760
        %1110 = vmatpush1.msra.mxu0 %v1109
        %1111 = vmatprep.subr.mxu0 0.0
        %v1112 = vand.u32 %v276, 4294901760
        %1113 = vmatpush1.msra.mxu0 %v1112
        %1114 = vmatprep.subr.mxu0 0.0
        %v1115 = vand.u32 %v277, 4294901760
        %1116 = vmatpush1.msra.mxu0 %v1115
        %1117 = vmatprep.subr.mxu0 0.0
        %v1118 = vand.u32 %v278, 4294901760
        %1119 = vmatpush1.msra.mxu0 %v1118
        %1120 = vmatprep.subr.mxu0 0.0
        %v1121 = vand.u32 %v279, 4294901760
        %1122 = vmatpush1.msra.mxu0 %v1121
        %1123 = vmatprep.subr.mxu0 0.0
        %v1124 = vand.u32 %v280, 4294901760
        %1125 = vmatpush1.msra.mxu0 %v1124
        %1126 = vmatprep.subr.mxu0 0.0
        %v1127 = vand.u32 %v281, 4294901760
        %1128 = vmatpush1.msra.mxu0 %v1127
        %1129 = vmatprep.subr.mxu0 0.0
        %v1130 = vand.u32 %v282, 4294901760
        %1131 = vmatpush1.msra.mxu0 %v1130
        %1132 = vmatprep.subr.mxu0 0.0
        %v1133 = vand.u32 %v283, 4294901760
        %1134 = vmatpush1.msra.mxu0 %v1133
        %1135 = vmatprep.subr.mxu0 0.0
        %v1136 = vand.u32 %v284, 4294901760
        %1137 = vmatpush1.msra.mxu0 %v1136
        %1138 = vmatprep.subr.mxu0 0.0
        %1139 = vmatpush1.msra.mxu0 0.0
        %1140 = vmatprep.subr.mxu0 0.0
        %1141 = vmatpush1.msra.mxu0 0.0
        %1142 = vmatprep.subr.mxu0 0.0
        %1143 = vmatpush1.msra.mxu0 0.0
        %1144 = vmatprep.subr.mxu0 0.0
        %1145 = vmatpush1.msra.mxu0 0.0
        %1146 = vmatprep.subr.mxu0 0.0
        %1147 = vmatpush1.msra.mxu0 0.0
        %1148 = vmatprep.subr.mxu0 0.0
        %1149 = vmatpush1.msra.mxu0 0.0
        %1150 = vmatprep.subr.mxu0 0.0
        %1151 = vmatpush1.msra.mxu0 0.0
        %1152 = vmatprep.subr.mxu0 0.0
        %1153 = vmatpush1.msra.mxu0 0.0
        %1154 = vmatprep.subr.mxu0 0.0
        %1155 = vmatpush1.msra.mxu0 0.0
        %1156 = vmatprep.subr.mxu0 0.0
        %1157 = vmatpush1.msra.mxu0 0.0
        %1158 = vmatprep.subr.mxu0 0.0
        %1159 = vmatpush1.msra.mxu0 0.0
        %1160 = vmatprep.subr.mxu0 0.0
        %1161 = vmatpush1.msra.mxu0 0.0
        %v1162 = vand.u32 %v462, 4294901760
        %1163 = vmatprep.mubr.f32.mxu0 %v1162
        %v1164 = vand.u32 %v453, 4294901760
        %1165 = vmatmul.mubr.f32.gmra.mrb[0].mxu0 %v1164
        %v1166 = vpop.f32.mrb[0].mxu0
        %v1167 = vadd.f32 %v1075, %v1166
        %v1168 = vpop.f32.mrb[0].mxu0
        %1169 = vdwg.mxu0
        %v1170 = vrsqrt.pop %v1167
        %v1171 = vmul.f32 %v1167, %v1170
        %vm1172 = vcmp.eq.f32.partialorder %v1167, inf
        %v1173 = vsel %vm1172, %v1167, %v1171
        %vm1174 = vcmp.eq.f32.partialorder %v1167, 0.0
        %v1175 = vand.u32 %v1167, 2147483648
        %v1176 = vsel %vm1174, %v1175, %v1173
        %v1177 = vadd.f32 %v1167, 1.0
        %v1178 = vrcp.pop %v1177
        %v1179 = vmul.f32 %v1177, %v1178
        %v1180 = vsub.f32 2.0, %v1179
        %v1181 = vmul.f32 %v1178, %v1180
        %v1182 = vmul.f32 %v1176, %v1181
        %v1183 = vld [vmem:[%s0] sm:$0xff]
        %v1184 = vmul.f32 %v245, %v308
        %v1185 = vmul.f32 %v246, %v316
        %v1186 = vmul.f32 %v247, %v322
        %v1187 = vmul.f32 %v248, %v329
        %v1188 = vmul.f32 %v249, %v335
        %v1189 = vmul.f32 %v250, %v342
        %v1190 = vmul.f32 %v251, %v348
        %v1191 = vmul.f32 %v252, %v355
        %v1192 = vmul.f32 %v253, %v361
        %v1193 = vmul.f32 %v254, %v368
        %v1194 = vmul.f32 %v255, %v374
        %v1195 = vmul.f32 %v256, %v381
        %v1196 = vmul.f32 %v257, %v387
        %v1197 = vmul.f32 %v258, %v394
        %v1198 = vmul.f32 %v259, %v400
        %v1199 = vmul.f32 %v260, %v407
        %v1201 = vsel %vm309, %v1185, 0
        %v1204 = vsel %vm309, %v1187, 0
        %v1207 = vsel %vm309, %v1189, 0
        %v1210 = vsel %vm309, %v1191, 0
        %v1213 = vsel %vm309, %v1193, 0
        %v1216 = vsel %vm309, %v1195, 0
        %v1219 = vsel %vm309, %v1197, 0
        %v1222 = vsel %vm309, %v1199, 0
        %1224 = vmatprep.subr.mxu0 0.0
        %v1225 = vand.u32 %v265, 4294901760
        %1226 = vmatpush1.msra.mxu0 %v1225
        %1227 = vmatprep.subr.mxu0 0.0
        %v1228 = vand.u32 %v266, 4294901760
        %1229 = vmatpush1.msra.mxu0 %v1228
        %1230 = vmatprep.subr.mxu0 0.0
        %v1231 = vand.u32 %v267, 4294901760
        %1232 = vmatpush1.msra.mxu0 %v1231
        %1233 = vmatprep.subr.mxu0 0.0
        %v1234 = vand.u32 %v268, 4294901760
        %1235 = vmatpush1.msra.mxu0 %v1234
        %1236 = vmatprep.subr.mxu0 0.0
        %v1237 = vand.u32 %v269, 4294901760
        %1238 = vmatpush1.msra.mxu0 %v1237
        %1239 = vmatprep.subr.mxu0 0.0
        %v1240 = vand.u32 %v270, 4294901760
        %1241 = vmatpush1.msra.mxu0 %v1240
        %1242 = vmatprep.subr.mxu0 0.0
        %v1243 = vand.u32 %v271, 4294901760
        %1244 = vmatpush1.msra.mxu0 %v1243
        %1245 = vmatprep.subr.mxu0 0.0
        %v1246 = vand.u32 %v272, 4294901760
        %1247 = vmatpush1.msra.mxu0 %v1246
        %1248 = vmatprep.subr.mxu0 0.0
        %v1249 = vand.u32 %v273, 4294901760
        %1250 = vmatpush1.msra.mxu0 %v1249
        %1251 = vmatprep.subr.mxu0 0.0
        %v1252 = vand.u32 %v274, 4294901760
        %1253 = vmatpush1.msra.mxu0 %v1252
        %1254 = vmatprep.subr.mxu0 0.0
        %v1255 = vand.u32 %v275, 4294901760
        %1256 = vmatpush1.msra.mxu0 %v1255
        %1257 = vmatprep.subr.mxu0 0.0
        %v1258 = vand.u32 %v276, 4294901760
        %1259 = vmatpush1.msra.mxu0 %v1258
        %1260 = vmatprep.subr.mxu0 0.0
        %v1261 = vand.u32 %v277, 4294901760
        %1262 = vmatpush1.msra.mxu0 %v1261
        %1263 = vmatprep.subr.mxu0 0.0
        %v1264 = vand.u32 %v278, 4294901760
        %1265 = vmatpush1.msra.mxu0 %v1264
        %1266 = vmatprep.subr.mxu0 0.0
        %v1267 = vand.u32 %v279, 4294901760
        %1268 = vmatpush1.msra.mxu0 %v1267
        %1269 = vmatprep.subr.mxu0 0.0
        %v1270 = vand.u32 %v280, 4294901760
        %1271 = vmatpush1.msra.mxu0 %v1270
        %1272 = vmatprep.subr.mxu0 0.0
        %v1273 = vand.u32 %v281, 4294901760
        %1274 = vmatpush1.msra.mxu0 %v1273
        %1275 = vmatprep.subr.mxu0 0.0
        %v1276 = vand.u32 %v282, 4294901760
        %1277 = vmatpush1.msra.mxu0 %v1276
        %1278 = vmatprep.subr.mxu0 0.0
        %v1279 = vand.u32 %v283, 4294901760
        %1280 = vmatpush1.msra.mxu0 %v1279
        %1281 = vmatprep.subr.mxu0 0.0
        %v1282 = vand.u32 %v284, 4294901760
        %1283 = vmatpush1.msra.mxu0 %v1282
        %1284 = vmatprep.subr.mxu0 0.0
        %1285 = vmatpush1.msra.mxu0 0.0
        %1286 = vmatprep.subr.mxu0 0.0
        %1287 = vmatpush1.msra.mxu0 0.0
        %1288 = vmatprep.subr.mxu0 0.0
        %1289 = vmatpush1.msra.mxu0 0.0
        %1290 = vmatprep.subr.mxu0 0.0
        %1291 = vmatpush1.msra.mxu0 0.0
        %1292 = vmatprep.subr.mxu0 0.0
        %1293 = vmatpush1.msra.mxu0 0.0
        %1294 = vmatprep.subr.mxu0 0.0
        %1295 = vmatpush1.msra.mxu0 0.0
        %1296 = vmatprep.subr.mxu0 0.0
        %1297 = vmatpush1.msra.mxu0 0.0
        %1298 = vmatprep.subr.mxu0 0.0
        %1299 = vmatpush1.msra.mxu0 0.0
        %1300 = vmatprep.subr.mxu0 0.0
        %1301 = vmatpush1.msra.mxu0 0.0
        %1302 = vmatprep.subr.mxu0 0.0
        %1303 = vmatpush1.msra.mxu0 0.0
        %1304 = vmatprep.subr.mxu0 0.0
        %1305 = vmatpush1.msra.mxu0 0.0
        %1306 = vmatprep.subr.mxu0 0.0
        %1307 = vmatpush1.msra.mxu0 0.0
        %v1308 = vand.u32 %v1201, 4294901760
        %v1309 = vsub.f32 %v1201, %v1308
        %v1310 = vand.u32 %v1309, 4294901760
        %v1311 = vsub.f32 %v1309, %v1310
        %v1312 = vand.u32 %v1311, 4294901760
        %1313 = vmatprep.mubr.f32.mxu0 %v1312
        %v1314 = vand.u32 %v1184, 4294901760
        %v1315 = vsub.f32 %v1184, %v1314
        %v1316 = vand.u32 %v1315, 4294901760
        %v1317 = vsub.f32 %v1315, %v1316
        %v1318 = vand.u32 %v1317, 4294901760
        %1319 = vmatmul.mubr.f32.gmra.mrb[0].mxu0 %v1318
        %v1320 = vpop.f32.mrb[0].mxu0
        %v1321 = vadd.f32 0.0, %v1320
        %v1322 = vpop.f32.mrb[0].mxu0
        %v1323 = vand.u32 %v1204, 4294901760
        %v1324 = vsub.f32 %v1204, %v1323
        %v1325 = vand.u32 %v1324, 4294901760
        %v1326 = vsub.f32 %v1324, %v1325
        %v1327 = vand.u32 %v1326, 4294901760
        %1328 = vmatprep.mubr.f32.mxu0 %v1327
        %v1329 = vand.u32 %v1186, 4294901760
        %v1330 = vsub.f32 %v1186, %v1329
        %v1331 = vand.u32 %v1330, 4294901760
        %v1332 = vsub.f32 %v1330, %v1331
        %v1333 = vand.u32 %v1332, 4294901760
        %1334 = vmatmul.mubr.f32.gmra.mrb[0].mxu0 %v1333
        %v1335 = vpop.f32.mrb[0].mxu0
        %v1336 = vadd.f32 0.0, %v1335
        %v1337 = vpop.f32.mrb[0].mxu0
        %v1338 = vand.u32 %v1207, 4294901760
        %v1339 = vsub.f32 %v1207, %v1338
        %v1340 = vand.u32 %v1339, 4294901760
        %v1341 = vsub.f32 %v1339, %v1340
        %v1342 = vand.u32 %v1341, 4294901760
        %1343 = vmatprep.mubr.f32.mxu0 %v1342
        %v1344 = vand.u32 %v1188, 4294901760
        %v1345 = vsub.f32 %v1188, %v1344
        %v1346 = vand.u32 %v1345, 4294901760
        %v1347 = vsub.f32 %v1345, %v1346
        %v1348 = vand.u32 %v1347, 4294901760
        %1349 = vmatmul.mubr.f32.gmra.mrb[0].mxu0 %v1348
        %v1350 = vpop.f32.mrb[0].mxu0
        %v1351 = vadd.f32 0.0, %v1350
        %v1352 = vpop.f32.mrb[0].mxu0
        %v1353 = vand.u32 %v1210, 4294901760
        %v1354 = vsub.f32 %v1210, %v1353
        %v1355 = vand.u32 %v1354, 4294901760
        %v1356 = vsub.f32 %v1354, %v1355
        %v1357 = vand.u32 %v1356, 4294901760
        %1358 = vmatprep.mubr.f32.mxu0 %v1357
        %v1359 = vand.u32 %v1190, 4294901760
        %v1360 = vsub.f32 %v1190, %v1359
        %v1361 = vand.u32 %v1360, 4294901760
        %v1362 = vsub.f32 %v1360, %v1361
        %v1363 = vand.u32 %v1362, 4294901760
        %1364 = vmatmul.mubr.f32.gmra.mrb[0].mxu0 %v1363
        %v1365 = vpop.f32.mrb[0].mxu0
        %v1366 = vadd.f32 0.0, %v1365
        %v1367 = vpop.f32.mrb[0].mxu0
        %v1368 = vand.u32 %v1213, 4294901760
        %v1369 = vsub.f32 %v1213, %v1368
        %v1370 = vand.u32 %v1369, 4294901760
        %v1371 = vsub.f32 %v1369, %v1370
        %v1372 = vand.u32 %v1371, 4294901760
        %1373 = vmatprep.mubr.f32.mxu0 %v1372
        %v1374 = vand.u32 %v1192, 4294901760
        %v1375 = vsub.f32 %v1192, %v1374
        %v1376 = vand.u32 %v1375, 4294901760
        %v1377 = vsub.f32 %v1375, %v1376
        %v1378 = vand.u32 %v1377, 4294901760
        %1379 = vmatmul.mubr.f32.gmra.mrb[0].mxu0 %v1378
        %v1380 = vpop.f32.mrb[0].mxu0
        %v1381 = vadd.f32 0.0, %v1380
        %v1382 = vpop.f32.mrb[0].mxu0
        %v1383 = vand.u32 %v1216, 4294901760
        %v1384 = vsub.f32 %v1216, %v1383
        %v1385 = vand.u32 %v1384, 4294901760
        %v1386 = vsub.f32 %v1384, %v1385
        %v1387 = vand.u32 %v1386, 4294901760
        %1388 = vmatprep.mubr.f32.mxu0 %v1387
        %v1389 = vand.u32 %v1194, 4294901760
        %v1390 = vsub.f32 %v1194, %v1389
        %v1391 = vand.u32 %v1390, 4294901760
        %v1392 = vsub.f32 %v1390, %v1391
        %v1393 = vand.u32 %v1392, 4294901760
        %1394 = vmatmul.mubr.f32.gmra.mrb[0].mxu0 %v1393
        %v1395 = vpop.f32.mrb[0].mxu0
        %v1396 = vadd.f32 0.0, %v1395
        %v1397 = vpop.f32.mrb[0].mxu0
        %v1398 = vand.u32 %v1219, 4294901760
        %v1399 = vsub.f32 %v1219, %v1398
        %v1400 = vand.u32 %v1399, 4294901760
        %v1401 = vsub.f32 %v1399, %v1400
        %v1402 = vand.u32 %v1401, 4294901760
        %1403 = vmatprep.mubr.f32.mxu0 %v1402
        %v1404 = vand.u32 %v1196, 4294901760
        %v1405 = vsub.f32 %v1196, %v1404
        %v1406 = vand.u32 %v1405, 4294901760
        %v1407 = vsub.f32 %v1405, %v1406
        %v1408 = vand.u32 %v1407, 4294901760
        %1409 = vmatmul.mubr.f32.gmra.mrb[0].mxu0 %v1408
        %v1410 = vpop.f32.mrb[0].mxu0
        %v1411 = vadd.f32 0.0, %v1410
        %v1412 = vpop.f32.mrb[0].mxu0
        %v1413 = vand.u32 %v1222, 4294901760
        %v1414 = vsub.f32 %v1222, %v1413
        %v1415 = vand.u32 %v1414, 4294901760
        %v1416 = vsub.f32 %v1414, %v1415
        %v1417 = vand.u32 %v1416, 4294901760
        %1418 = vmatprep.mubr.f32.mxu0 %v1417
        %v1419 = vand.u32 %v1198, 4294901760
        %v1420 = vsub.f32 %v1198, %v1419
        %v1421 = vand.u32 %v1420, 4294901760
        %v1422 = vsub.f32 %v1420, %v1421
        %v1423 = vand.u32 %v1422, 4294901760
        %1424 = vmatmul.mubr.f32.gmra.mrb[0].mxu0 %v1423
        %v1425 = vpop.f32.mrb[0].mxu0
        %v1426 = vadd.f32 0.0, %v1425
        %v1427 = vpop.f32.mrb[0].mxu0
        %1428 = vdwg.mxu0
        %1429 = vmatprep.subr.mxu0 0.0
        %v1430 = vand.u32 %v265, 4294901760
        %v1431 = vsub.f32 %v265, %v1430
        %v1432 = vand.u32 %v1431, 4294901760
        %v1433 = vsub.f32 %v1431, %v1432
        %v1434 = vand.u32 %v1433, 4294901760
        %1435 = vmatpush1.msra.mxu0 %v1434
        %1436 = vmatprep.subr.mxu0 0.0
        %v1437 = vand.u32 %v266, 4294901760
        %v1438 = vsub.f32 %v266, %v1437
        %v1439 = vand.u32 %v1438, 4294901760
        %v1440 = vsub.f32 %v1438, %v1439
        %v1441 = vand.u32 %v1440, 4294901760
        %1442 = vmatpush1.msra.mxu0 %v1441
        %1443 = vmatprep.subr.mxu0 0.0
        %v1444 = vand.u32 %v267, 4294901760
        %v1445 = vsub.f32 %v267, %v1444
        %v1446 = vand.u32 %v1445, 4294901760
        %v1447 = vsub.f32 %v1445, %v1446
        %v1448 = vand.u32 %v1447, 4294901760
        %1449 = vmatpush1.msra.mxu0 %v1448
        %1450 = vmatprep.subr.mxu0 0.0
        %v1451 = vand.u32 %v268, 4294901760
        %v1452 = vsub.f32 %v268, %v1451
        %v1453 = vand.u32 %v1452, 4294901760
        %v1454 = vsub.f32 %v1452, %v1453
        %v1455 = vand.u32 %v1454, 4294901760
        %1456 = vmatpush1.msra.mxu0 %v1455
        %1457 = vmatprep.subr.mxu0 0.0
        %v1458 = vand.u32 %v269, 4294901760
        %v1459 = vsub.f32 %v269, %v1458
        %v1460 = vand.u32 %v1459, 4294901760
        %v1461 = vsub.f32 %v1459, %v1460
        %v1462 = vand.u32 %v1461, 4294901760
        %1463 = vmatpush1.msra.mxu0 %v1462
        %1464 = vmatprep.subr.mxu0 0.0
        %v1465 = vand.u32 %v270, 4294901760
        %v1466 = vsub.f32 %v270, %v1465
        %v1467 = vand.u32 %v1466, 4294901760
        %v1468 = vsub.f32 %v1466, %v1467
        %v1469 = vand.u32 %v1468, 4294901760
        %1470 = vmatpush1.msra.mxu0 %v1469
        %1471 = vmatprep.subr.mxu0 0.0
        %v1472 = vand.u32 %v271, 4294901760
        %v1473 = vsub.f32 %v271, %v1472
        %v1474 = vand.u32 %v1473, 4294901760
        %v1475 = vsub.f32 %v1473, %v1474
        %v1476 = vand.u32 %v1475, 4294901760
        %1477 = vmatpush1.msra.mxu0 %v1476
        %1478 = vmatprep.subr.mxu0 0.0
        %v1479 = vand.u32 %v272, 4294901760
        %v1480 = vsub.f32 %v272, %v1479
        %v1481 = vand.u32 %v1480, 4294901760
        %v1482 = vsub.f32 %v1480, %v1481
        %v1483 = vand.u32 %v1482, 4294901760
        %1484 = vmatpush1.msra.mxu0 %v1483
        %1485 = vmatprep.subr.mxu0 0.0
        %v1486 = vand.u32 %v273, 4294901760
        %v1487 = vsub.f32 %v273, %v1486
        %v1488 = vand.u32 %v1487, 4294901760
        %v1489 = vsub.f32 %v1487, %v1488
        %v1490 = vand.u32 %v1489, 4294901760
        %1491 = vmatpush1.msra.mxu0 %v1490
        %1492 = vmatprep.subr.mxu0 0.0
        %v1493 = vand.u32 %v274, 4294901760
        %v1494 = vsub.f32 %v274, %v1493
        %v1495 = vand.u32 %v1494, 4294901760
        %v1496 = vsub.f32 %v1494, %v1495
        %v1497 = vand.u32 %v1496, 4294901760
        %1498 = vmatpush1.msra.mxu0 %v1497
        %1499 = vmatprep.subr.mxu0 0.0
        %v1500 = vand.u32 %v275, 4294901760
        %v1501 = vsub.f32 %v275, %v1500
        %v1502 = vand.u32 %v1501, 4294901760
        %v1503 = vsub.f32 %v1501, %v1502
        %v1504 = vand.u32 %v1503, 4294901760
        %1505 = vmatpush1.msra.mxu0 %v1504
        %1506 = vmatprep.subr.mxu0 0.0
        %v1507 = vand.u32 %v276, 4294901760
        %v1508 = vsub.f32 %v276, %v1507
        %v1509 = vand.u32 %v1508, 4294901760
        %v1510 = vsub.f32 %v1508, %v1509
        %v1511 = vand.u32 %v1510, 4294901760
        %1512 = vmatpush1.msra.mxu0 %v1511
        %1513 = vmatprep.subr.mxu0 0.0
        %v1514 = vand.u32 %v277, 4294901760
        %v1515 = vsub.f32 %v277, %v1514
        %v1516 = vand.u32 %v1515, 4294901760
        %v1517 = vsub.f32 %v1515, %v1516
        %v1518 = vand.u32 %v1517, 4294901760
        %1519 = vmatpush1.msra.mxu0 %v1518
        %1520 = vmatprep.subr.mxu0 0.0
        %v1521 = vand.u32 %v278, 4294901760
        %v1522 = vsub.f32 %v278, %v1521
        %v1523 = vand.u32 %v1522, 4294901760
        %v1524 = vsub.f32 %v1522, %v1523
        %v1525 = vand.u32 %v1524, 4294901760
        %1526 = vmatpush1.msra.mxu0 %v1525
        %1527 = vmatprep.subr.mxu0 0.0
        %v1528 = vand.u32 %v279, 4294901760
        %v1529 = vsub.f32 %v279, %v1528
        %v1530 = vand.u32 %v1529, 4294901760
        %v1531 = vsub.f32 %v1529, %v1530
        %v1532 = vand.u32 %v1531, 4294901760
        %1533 = vmatpush1.msra.mxu0 %v1532
        %1534 = vmatprep.subr.mxu0 0.0
        %v1535 = vand.u32 %v280, 4294901760
        %v1536 = vsub.f32 %v280, %v1535
        %v1537 = vand.u32 %v1536, 4294901760
        %v1538 = vsub.f32 %v1536, %v1537
        %v1539 = vand.u32 %v1538, 4294901760
        %1540 = vmatpush1.msra.mxu0 %v1539
        %1541 = vmatprep.subr.mxu0 0.0
        %v1542 = vand.u32 %v281, 4294901760
        %v1543 = vsub.f32 %v281, %v1542
        %v1544 = vand.u32 %v1543, 4294901760
        %v1545 = vsub.f32 %v1543, %v1544
        %v1546 = vand.u32 %v1545, 4294901760
        %1547 = vmatpush1.msra.mxu0 %v1546
        %1548 = vmatprep.subr.mxu0 0.0
        %v1549 = vand.u32 %v282, 4294901760
        %v1550 = vsub.f32 %v282, %v1549
        %v1551 = vand.u32 %v1550, 4294901760
        %v1552 = vsub.f32 %v1550, %v1551
        %v1553 = vand.u32 %v1552, 4294901760
        %1554 = vmatpush1.msra.mxu0 %v1553
        %1555 = vmatprep.subr.mxu0 0.0
        %v1556 = vand.u32 %v283, 4294901760
        %v1557 = vsub.f32 %v283, %v1556
        %v1558 = vand.u32 %v1557, 4294901760
        %v1559 = vsub.f32 %v1557, %v1558
        %v1560 = vand.u32 %v1559, 4294901760
        %1561 = vmatpush1.msra.mxu0 %v1560
        %1562 = vmatprep.subr.mxu0 0.0
        %v1563 = vand.u32 %v284, 4294901760
        %v1564 = vsub.f32 %v284, %v1563
        %v1565 = vand.u32 %v1564, 4294901760
        %v1566 = vsub.f32 %v1564, %v1565
        %v1567 = vand.u32 %v1566, 4294901760
        %1568 = vmatpush1.msra.mxu0 %v1567
        %1569 = vmatprep.subr.mxu0 0.0
        %1570 = vmatpush1.msra.mxu0 0.0
        %1571 = vmatprep.subr.mxu0 0.0
        %1572 = vmatpush1.msra.mxu0 0.0
        %1573 = vmatprep.subr.mxu0 0.0
        %1574 = vmatpush1.msra.mxu0 0.0
        %1575 = vmatprep.subr.mxu0 0.0
        %1576 = vmatpush1.msra.mxu0 0.0
        %1577 = vmatprep.subr.mxu0 0.0
        %1578 = vmatpush1.msra.mxu0 0.0
        %1579 = vmatprep.subr.mxu0 0.0
        %1580 = vmatpush1.msra.mxu0 0.0
        %1581 = vmatprep.subr.mxu0 0.0
        %1582 = vmatpush1.msra.mxu0 0.0
        %1583 = vmatprep.subr.mxu0 0.0
        %1584 = vmatpush1.msra.mxu0 0.0
        %1585 = vmatprep.subr.mxu0 0.0
        %1586 = vmatpush1.msra.mxu0 0.0
        %1587 = vmatprep.subr.mxu0 0.0
        %1588 = vmatpush1.msra.mxu0 0.0
        %1589 = vmatprep.subr.mxu0 0.0
        %1590 = vmatpush1.msra.mxu0 0.0
        %1591 = vmatprep.subr.mxu0 0.0
        %1592 = vmatpush1.msra.mxu0 0.0
        %v1593 = vand.u32 %v1201, 4294901760
        %1594 = vmatprep.mubr.f32.mxu0 %v1593
        %v1595 = vand.u32 %v1184, 4294901760
        %1596 = vmatmul.mubr.f32.gmra.mrb[0].mxu0 %v1595
        %v1597 = vpop.f32.mrb[0].mxu0
        %v1598 = vadd.f32 %v1321, %v1597
        %v1599 = vpop.f32.mrb[0].mxu0
        %v1600 = vand.u32 %v1204, 4294901760
        %1601 = vmatprep.mubr.f32.mxu0 %v1600
        %v1602 = vand.u32 %v1186, 4294901760
        %1603 = vmatmul.mubr.f32.gmra.mrb[0].mxu0 %v1602
        %v1604 = vpop.f32.mrb[0].mxu0
        %v1605 = vadd.f32 %v1336, %v1604
        %v1606 = vpop.f32.mrb[0].mxu0
        %v1607 = vand.u32 %v1207, 4294901760
        %1608 = vmatprep.mubr.f32.mxu0 %v1607
        %v1609 = vand.u32 %v1188, 4294901760
        %1610 = vmatmul.mubr.f32.gmra.mrb[0].mxu0 %v1609
        %v1611 = vpop.f32.mrb[0].mxu0
        %v1612 = vadd.f32 %v1351, %v1611
        %v1613 = vpop.f32.mrb[0].mxu0
        %v1614 = vand.u32 %v1210, 4294901760
        %1615 = vmatprep.mubr.f32.mxu0 %v1614
        %v1616 = vand.u32 %v1190, 4294901760
        %1617 = vmatmul.mubr.f32.gmra.mrb[0].mxu0 %v1616
        %v1618 = vpop.f32.mrb[0].mxu0
        %v1619 = vadd.f32 %v1366, %v1618
        %v1620 = vpop.f32.mrb[0].mxu0
        %v1621 = vand.u32 %v1213, 4294901760
        %1622 = vmatprep.mubr.f32.mxu0 %v1621
        %v1623 = vand.u32 %v1192, 4294901760
        %1624 = vmatmul.mubr.f32.gmra.mrb[0].mxu0 %v1623
        %v1625 = vpop.f32.mrb[0].mxu0
        %v1626 = vadd.f32 %v1381, %v1625
        %v1627 = vpop.f32.mrb[0].mxu0
        %v1628 = vand.u32 %v1216, 4294901760
        %1629 = vmatprep.mubr.f32.mxu0 %v1628
        %v1630 = vand.u32 %v1194, 4294901760
        %1631 = vmatmul.mubr.f32.gmra.mrb[0].mxu0 %v1630
        %v1632 = vpop.f32.mrb[0].mxu0
        %v1633 = vadd.f32 %v1396, %v1632
        %v1634 = vpop.f32.mrb[0].mxu0
        %v1635 = vand.u32 %v1219, 4294901760
        %1636 = vmatprep.mubr.f32.mxu0 %v1635
        %v1637 = vand.u32 %v1196, 4294901760
        %1638 = vmatmul.mubr.f32.gmra.mrb[0].mxu0 %v1637
        %v1639 = vpop.f32.mrb[0].mxu0
        %v1640 = vadd.f32 %v1411, %v1639
        %v1641 = vpop.f32.mrb[0].mxu0
        %v1642 = vand.u32 %v1222, 4294901760
        %1643 = vmatprep.mubr.f32.mxu0 %v1642
        %v1644 = vand.u32 %v1198, 4294901760
        %1645 = vmatmul.mubr.f32.gmra.mrb[0].mxu0 %v1644
        %v1646 = vpop.f32.mrb[0].mxu0
        %v1647 = vadd.f32 %v1426, %v1646
        %v1648 = vpop.f32.mrb[0].mxu0
        %1649 = vdwg.mxu0
        %1650 = vmatprep.subr.mxu0 0.0
        %v1651 = vand.u32 %v265, 4294901760
        %v1652 = vsub.f32 %v265, %v1651
        %1653 = vmatpush1.msra.mxu0 %v1652
        %1654 = vmatprep.subr.mxu0 0.0
        %v1655 = vand.u32 %v266, 4294901760
        %v1656 = vsub.f32 %v266, %v1655
        %1657 = vmatpush1.msra.mxu0 %v1656
        %1658 = vmatprep.subr.mxu0 0.0
        %v1659 = vand.u32 %v267, 4294901760
        %v1660 = vsub.f32 %v267, %v1659
        %1661 = vmatpush1.msra.mxu0 %v1660
        %1662 = vmatprep.subr.mxu0 0.0
        %v1663 = vand.u32 %v268, 4294901760
        %v1664 = vsub.f32 %v268, %v1663
        %1665 = vmatpush1.msra.mxu0 %v1664
        %1666 = vmatprep.subr.mxu0 0.0
        %v1667 = vand.u32 %v269, 4294901760
        %v1668 = vsub.f32 %v269, %v1667
        %1669 = vmatpush1.msra.mxu0 %v1668
        %1670 = vmatprep.subr.mxu0 0.0
        %v1671 = vand.u32 %v270, 4294901760
        %v1672 = vsub.f32 %v270, %v1671
        %1673 = vmatpush1.msra.mxu0 %v1672
        %1674 = vmatprep.subr.mxu0 0.0
        %v1675 = vand.u32 %v271, 4294901760
        %v1676 = vsub.f32 %v271, %v1675
        %1677 = vmatpush1.msra.mxu0 %v1676
        %1678 = vmatprep.subr.mxu0 0.0
        %v1679 = vand.u32 %v272, 4294901760
        %v1680 = vsub.f32 %v272, %v1679
        %1681 = vmatpush1.msra.mxu0 %v1680
        %1682 = vmatprep.subr.mxu0 0.0
        %v1683 = vand.u32 %v273, 4294901760
        %v1684 = vsub.f32 %v273, %v1683
        %1685 = vmatpush1.msra.mxu0 %v1684
        %1686 = vmatprep.subr.mxu0 0.0
        %v1687 = vand.u32 %v274, 4294901760
        %v1688 = vsub.f32 %v274, %v1687
        %1689 = vmatpush1.msra.mxu0 %v1688
        %1690 = vmatprep.subr.mxu0 0.0
        %v1691 = vand.u32 %v275, 4294901760
        %v1692 = vsub.f32 %v275, %v1691
        %1693 = vmatpush1.msra.mxu0 %v1692
        %1694 = vmatprep.subr.mxu0 0.0
        %v1695 = vand.u32 %v276, 4294901760
        %v1696 = vsub.f32 %v276, %v1695
        %1697 = vmatpush1.msra.mxu0 %v1696
        %1698 = vmatprep.subr.mxu0 0.0
        %v1699 = vand.u32 %v277, 4294901760
        %v1700 = vsub.f32 %v277, %v1699
        %1701 = vmatpush1.msra.mxu0 %v1700
        %1702 = vmatprep.subr.mxu0 0.0
        %v1703 = vand.u32 %v278, 4294901760
        %v1704 = vsub.f32 %v278, %v1703
        %1705 = vmatpush1.msra.mxu0 %v1704
        %1706 = vmatprep.subr.mxu0 0.0
        %v1707 = vand.u32 %v279, 4294901760
        %v1708 = vsub.f32 %v279, %v1707
        %1709 = vmatpush1.msra.mxu0 %v1708
        %1710 = vmatprep.subr.mxu0 0.0
        %v1711 = vand.u32 %v280, 4294901760
        %v1712 = vsub.f32 %v280, %v1711
        %1713 = vmatpush1.msra.mxu0 %v1712
        %1714 = vmatprep.subr.mxu0 0.0
        %v1715 = vand.u32 %v281, 4294901760
        %v1716 = vsub.f32 %v281, %v1715
        %1717 = vmatpush1.msra.mxu0 %v1716
        %1718 = vmatprep.subr.mxu0 0.0
        %v1719 = vand.u32 %v282, 4294901760
        %v1720 = vsub.f32 %v282, %v1719
        %1721 = vmatpush1.msra.mxu0 %v1720
        %1722 = vmatprep.subr.mxu0 0.0
        %v1723 = vand.u32 %v283, 4294901760
        %v1724 = vsub.f32 %v283, %v1723
        %1725 = vmatpush1.msra.mxu0 %v1724
        %1726 = vmatprep.subr.mxu0 0.0
        %v1727 = vand.u32 %v284, 4294901760
        %v1728 = vsub.f32 %v284, %v1727
        %1729 = vmatpush1.msra.mxu0 %v1728
        %1730 = vmatprep.subr.mxu0 0.0
        %1731 = vmatpush1.msra.mxu0 0.0
        %1732 = vmatprep.subr.mxu0 0.0
        %1733 = vmatpush1.msra.mxu0 0.0
        %1734 = vmatprep.subr.mxu0 0.0
        %1735 = vmatpush1.msra.mxu0 0.0
        %1736 = vmatprep.subr.mxu0 0.0
        %1737 = vmatpush1.msra.mxu0 0.0
        %1738 = vmatprep.subr.mxu0 0.0
        %1739 = vmatpush1.msra.mxu0 0.0
        %1740 = vmatprep.subr.mxu0 0.0
        %1741 = vmatpush1.msra.mxu0 0.0
        %1742 = vmatprep.subr.mxu0 0.0
        %1743 = vmatpush1.msra.mxu0 0.0
        %1744 = vmatprep.subr.mxu0 0.0
        %1745 = vmatpush1.msra.mxu0 0.0
        %1746 = vmatprep.subr.mxu0 0.0
        %1747 = vmatpush1.msra.mxu0 0.0
        %1748 = vmatprep.subr.mxu0 0.0
        %1749 = vmatpush1.msra.mxu0 0.0
        %1750 = vmatprep.subr.mxu0 0.0
        %1751 = vmatpush1.msra.mxu0 0.0
        %1752 = vmatprep.subr.mxu0 0.0
        %1753 = vmatpush1.msra.mxu0 0.0
        %v1754 = vand.u32 %v1201, 4294901760
        %v1755 = vsub.f32 %v1201, %v1754
        %1756 = vmatprep.mubr.f32.mxu0 %v1755
        %v1757 = vand.u32 %v1184, 4294901760
        %v1758 = vsub.f32 %v1184, %v1757
        %1759 = vmatmul.mubr.f32.gmra.mrb[0].mxu0 %v1758
        %v1760 = vpop.f32.mrb[0].mxu0
        %v1761 = vadd.f32 %v1598, %v1760
        %v1762 = vpop.f32.mrb[0].mxu0
        %v1763 = vand.u32 %v1204, 4294901760
        %v1764 = vsub.f32 %v1204, %v1763
        %1765 = vmatprep.mubr.f32.mxu0 %v1764
        %v1766 = vand.u32 %v1186, 4294901760
        %v1767 = vsub.f32 %v1186, %v1766
        %1768 = vmatmul.mubr.f32.gmra.mrb[0].mxu0 %v1767
        %v1769 = vpop.f32.mrb[0].mxu0
        %v1770 = vadd.f32 %v1605, %v1769
        %v1771 = vpop.f32.mrb[0].mxu0
        %v1772 = vand.u32 %v1207, 4294901760
        %v1773 = vsub.f32 %v1207, %v1772
        %1774 = vmatprep.mubr.f32.mxu0 %v1773
        %v1775 = vand.u32 %v1188, 4294901760
        %v1776 = vsub.f32 %v1188, %v1775
        %1777 = vmatmul.mubr.f32.gmra.mrb[0].mxu0 %v1776
        %v1778 = vpop.f32.mrb[0].mxu0
        %v1779 = vadd.f32 %v1612, %v1778
        %v1780 = vpop.f32.mrb[0].mxu0
        %v1781 = vand.u32 %v1210, 4294901760
        %v1782 = vsub.f32 %v1210, %v1781
        %1783 = vmatprep.mubr.f32.mxu0 %v1782
        %v1784 = vand.u32 %v1190, 4294901760
        %v1785 = vsub.f32 %v1190, %v1784
        %1786 = vmatmul.mubr.f32.gmra.mrb[0].mxu0 %v1785
        %v1787 = vpop.f32.mrb[0].mxu0
        %v1788 = vadd.f32 %v1619, %v1787
        %v1789 = vpop.f32.mrb[0].mxu0
        %v1790 = vand.u32 %v1213, 4294901760
        %v1791 = vsub.f32 %v1213, %v1790
        %1792 = vmatprep.mubr.f32.mxu0 %v1791
        %v1793 = vand.u32 %v1192, 4294901760
        %v1794 = vsub.f32 %v1192, %v1793
        %1795 = vmatmul.mubr.f32.gmra.mrb[0].mxu0 %v1794
        %v1796 = vpop.f32.mrb[0].mxu0
        %v1797 = vadd.f32 %v1626, %v1796
        %v1798 = vpop.f32.mrb[0].mxu0
        %v1799 = vand.u32 %v1216, 4294901760
        %v1800 = vsub.f32 %v1216, %v1799
        %1801 = vmatprep.mubr.f32.mxu0 %v1800
        %v1802 = vand.u32 %v1194, 4294901760
        %v1803 = vsub.f32 %v1194, %v1802
        %1804 = vmatmul.mubr.f32.gmra.mrb[0].mxu0 %v1803
        %v1805 = vpop.f32.mrb[0].mxu0
        %v1806 = vadd.f32 %v1633, %v1805
        %v1807 = vpop.f32.mrb[0].mxu0
        %v1808 = vand.u32 %v1219, 4294901760
        %v1809 = vsub.f32 %v1219, %v1808
        %1810 = vmatprep.mubr.f32.mxu0 %v1809
        %v1811 = vand.u32 %v1196, 4294901760
        %v1812 = vsub.f32 %v1196, %v1811
        %1813 = vmatmul.mubr.f32.gmra.mrb[0].mxu0 %v1812
        %v1814 = vpop.f32.mrb[0].mxu0
        %v1815 = vadd.f32 %v1640, %v1814
        %v1816 = vpop.f32.mrb[0].mxu0
        %v1817 = vand.u32 %v1222, 4294901760
        %v1818 = vsub.f32 %v1222, %v1817
        %1819 = vmatprep.mubr.f32.mxu0 %v1818
        %v1820 = vand.u32 %v1198, 4294901760
        %v1821 = vsub.f32 %v1198, %v1820
        %1822 = vmatmul.mubr.f32.gmra.mrb[0].mxu0 %v1821
        %v1823 = vpop.f32.mrb[0].mxu0
        %v1824 = vadd.f32 %v1647, %v1823
        %v1825 = vpop.f32.mrb[0].mxu0
        %1826 = vdwg.mxu0
        %1827 = vmatprep.subr.mxu0 0.0
        %v1828 = vand.u32 %v265, 4294901760
        %1829 = vmatpush1.msra.mxu0 %v1828
        %1830 = vmatprep.subr.mxu0 0.0
        %v1831 = vand.u32 %v266, 4294901760
        %1832 = vmatpush1.msra.mxu0 %v1831
        %1833 = vmatprep.subr.mxu0 0.0
        %v1834 = vand.u32 %v267, 4294901760
        %1835 = vmatpush1.msra.mxu0 %v1834
        %1836 = vmatprep.subr.mxu0 0.0
        %v1837 = vand.u32 %v268, 4294901760
        %1838 = vmatpush1.msra.mxu0 %v1837
        %1839 = vmatprep.subr.mxu0 0.0
        %v1840 = vand.u32 %v269, 4294901760
        %1841 = vmatpush1.msra.mxu0 %v1840
        %1842 = vmatprep.subr.mxu0 0.0
        %v1843 = vand.u32 %v270, 4294901760
        %1844 = vmatpush1.msra.mxu0 %v1843
        %1845 = vmatprep.subr.mxu0 0.0
        %v1846 = vand.u32 %v271, 4294901760
        %1847 = vmatpush1.msra.mxu0 %v1846
        %1848 = vmatprep.subr.mxu0 0.0
        %v1849 = vand.u32 %v272, 4294901760
        %1850 = vmatpush1.msra.mxu0 %v1849
        %1851 = vmatprep.subr.mxu0 0.0
        %v1852 = vand.u32 %v273, 4294901760
        %1853 = vmatpush1.msra.mxu0 %v1852
        %1854 = vmatprep.subr.mxu0 0.0
        %v1855 = vand.u32 %v274, 4294901760
        %1856 = vmatpush1.msra.mxu0 %v1855
        %1857 = vmatprep.subr.mxu0 0.0
        %v1858 = vand.u32 %v275, 4294901760
        %1859 = vmatpush1.msra.mxu0 %v1858
        %1860 = vmatprep.subr.mxu0 0.0
        %v1861 = vand.u32 %v276, 4294901760
        %1862 = vmatpush1.msra.mxu0 %v1861
        %1863 = vmatprep.subr.mxu0 0.0
        %v1864 = vand.u32 %v277, 4294901760
        %1865 = vmatpush1.msra.mxu0 %v1864
        %1866 = vmatprep.subr.mxu0 0.0
        %v1867 = vand.u32 %v278, 4294901760
        %1868 = vmatpush1.msra.mxu0 %v1867
        %1869 = vmatprep.subr.mxu0 0.0
        %v1870 = vand.u32 %v279, 4294901760
        %1871 = vmatpush1.msra.mxu0 %v1870
        %1872 = vmatprep.subr.mxu0 0.0
        %v1873 = vand.u32 %v280, 4294901760
        %1874 = vmatpush1.msra.mxu0 %v1873
        %1875 = vmatprep.subr.mxu0 0.0
        %v1876 = vand.u32 %v281, 4294901760
        %1877 = vmatpush1.msra.mxu0 %v1876
        %1878 = vmatprep.subr.mxu0 0.0
        %v1879 = vand.u32 %v282, 4294901760
        %1880 = vmatpush1.msra.mxu0 %v1879
        %1881 = vmatprep.subr.mxu0 0.0
        %v1882 = vand.u32 %v283, 4294901760
        %1883 = vmatpush1.msra.mxu0 %v1882
        %1884 = vmatprep.subr.mxu0 0.0
        %v1885 = vand.u32 %v284, 4294901760
        %1886 = vmatpush1.msra.mxu0 %v1885
        %1887 = vmatprep.subr.mxu0 0.0
        %1888 = vmatpush1.msra.mxu0 0.0
        %1889 = vmatprep.subr.mxu0 0.0
        %1890 = vmatpush1.msra.mxu0 0.0
        %1891 = vmatprep.subr.mxu0 0.0
        %1892 = vmatpush1.msra.mxu0 0.0
        %1893 = vmatprep.subr.mxu0 0.0
        %1894 = vmatpush1.msra.mxu0 0.0
        %1895 = vmatprep.subr.mxu0 0.0
        %1896 = vmatpush1.msra.mxu0 0.0
        %1897 = vmatprep.subr.mxu0 0.0
        %1898 = vmatpush1.msra.mxu0 0.0
        %1899 = vmatprep.subr.mxu0 0.0
        %1900 = vmatpush1.msra.mxu0 0.0
        %1901 = vmatprep.subr.mxu0 0.0
        %1902 = vmatpush1.msra.mxu0 0.0
        %1903 = vmatprep.subr.mxu0 0.0
        %1904 = vmatpush1.msra.mxu0 0.0
        %1905 = vmatprep.subr.mxu0 0.0
        %1906 = vmatpush1.msra.mxu0 0.0
        %1907 = vmatprep.subr.mxu0 0.0
        %1908 = vmatpush1.msra.mxu0 0.0
        %1909 = vmatprep.subr.mxu0 0.0
        %1910 = vmatpush1.msra.mxu0 0.0
        %v1911 = vand.u32 %v1201, 4294901760
        %v1912 = vsub.f32 %v1201, %v1911
        %v1913 = vand.u32 %v1912, 4294901760
        %1914 = vmatprep.mubr.f32.mxu0 %v1913
        %v1915 = vand.u32 %v1184, 4294901760
        %v1916 = vsub.f32 %v1184, %v1915
        %v1917 = vand.u32 %v1916, 4294901760
        %1918 = vmatmul.mubr.f32.gmra.mrb[0].mxu0 %v1917
        %v1919 = vpop.f32.mrb[0].mxu0
        %v1920 = vadd.f32 %v1761, %v1919
        %v1921 = vpop.f32.mrb[0].mxu0
        %v1922 = vand.u32 %v1204, 4294901760
        %v1923 = vsub.f32 %v1204, %v1922
        %v1924 = vand.u32 %v1923, 4294901760
        %1925 = vmatprep.mubr.f32.mxu0 %v1924
        %v1926 = vand.u32 %v1186, 4294901760
        %v1927 = vsub.f32 %v1186, %v1926
        %v1928 = vand.u32 %v1927, 4294901760
        %1929 = vmatmul.mubr.f32.gmra.mrb[0].mxu0 %v1928
        %v1930 = vpop.f32.mrb[0].mxu0
        %v1931 = vadd.f32 %v1770, %v1930
        %v1932 = vpop.f32.mrb[0].mxu0
        %v1933 = vand.u32 %v1207, 4294901760
        %v1934 = vsub.f32 %v1207, %v1933
        %v1935 = vand.u32 %v1934, 4294901760
        %1936 = vmatprep.mubr.f32.mxu0 %v1935
        %v1937 = vand.u32 %v1188, 4294901760
        %v1938 = vsub.f32 %v1188, %v1937
        %v1939 = vand.u32 %v1938, 4294901760
        %1940 = vmatmul.mubr.f32.gmra.mrb[0].mxu0 %v1939
        %v1941 = vpop.f32.mrb[0].mxu0
        %v1942 = vadd.f32 %v1779, %v1941
        %v1943 = vpop.f32.mrb[0].mxu0
        %v1944 = vand.u32 %v1210, 4294901760
        %v1945 = vsub.f32 %v1210, %v1944
        %v1946 = vand.u32 %v1945, 4294901760
        %1947 = vmatprep.mubr.f32.mxu0 %v1946
        %v1948 = vand.u32 %v1190, 4294901760
        %v1949 = vsub.f32 %v1190, %v1948
        %v1950 = vand.u32 %v1949, 4294901760
        %1951 = vmatmul.mubr.f32.gmra.mrb[0].mxu0 %v1950
        %v1952 = vpop.f32.mrb[0].mxu0
        %v1953 = vadd.f32 %v1788, %v1952
        %v1954 = vpop.f32.mrb[0].mxu0
        %v1955 = vand.u32 %v1213, 4294901760
        %v1956 = vsub.f32 %v1213, %v1955
        %v1957 = vand.u32 %v1956, 4294901760
        %1958 = vmatprep.mubr.f32.mxu0 %v1957
        %v1959 = vand.u32 %v1192, 4294901760
        %v1960 = vsub.f32 %v1192, %v1959
        %v1961 = vand.u32 %v1960, 4294901760
        %1962 = vmatmul.mubr.f32.gmra.mrb[0].mxu0 %v1961
        %v1963 = vpop.f32.mrb[0].mxu0
        %v1964 = vadd.f32 %v1797, %v1963
        %v1965 = vpop.f32.mrb[0].mxu0
        %v1966 = vand.u32 %v1216, 4294901760
        %v1967 = vsub.f32 %v1216, %v1966
        %v1968 = vand.u32 %v1967, 4294901760
        %1969 = vmatprep.mubr.f32.mxu0 %v1968
        %v1970 = vand.u32 %v1194, 4294901760
        %v1971 = vsub.f32 %v1194, %v1970
        %v1972 = vand.u32 %v1971, 4294901760
        %1973 = vmatmul.mubr.f32.gmra.mrb[0].mxu0 %v1972
        %v1974 = vpop.f32.mrb[0].mxu0
        %v1975 = vadd.f32 %v1806, %v1974
        %v1976 = vpop.f32.mrb[0].mxu0
        %v1977 = vand.u32 %v1219, 4294901760
        %v1978 = vsub.f32 %v1219, %v1977
        %v1979 = vand.u32 %v1978, 4294901760
        %1980 = vmatprep.mubr.f32.mxu0 %v1979
        %v1981 = vand.u32 %v1196, 4294901760
        %v1982 = vsub.f32 %v1196, %v1981
        %v1983 = vand.u32 %v1982, 4294901760
        %1984 = vmatmul.mubr.f32.gmra.mrb[0].mxu0 %v1983
        %v1985 = vpop.f32.mrb[0].mxu0
        %v1986 = vadd.f32 %v1815, %v1985
        %v1987 = vpop.f32.mrb[0].mxu0
        %v1988 = vand.u32 %v1222, 4294901760
        %v1989 = vsub.f32 %v1222, %v1988
        %v1990 = vand.u32 %v1989, 4294901760
        %1991 = vmatprep.mubr.f32.mxu0 %v1990
        %v1992 = vand.u32 %v1198, 4294901760
        %v1993 = vsub.f32 %v1198, %v1992
        %v1994 = vand.u32 %v1993, 4294901760
        %1995 = vmatmul.mubr.f32.gmra.mrb[0].mxu0 %v1994
        %v1996 = vpop.f32.mrb[0].mxu0
        %v1997 = vadd.f32 %v1824, %v1996
        %v1998 = vpop.f32.mrb[0].mxu0
        %1999 = vdwg.mxu0
        %2000 = vmatprep.subr.mxu0 0.0
        %v2001 = vand.u32 %v265, 4294901760
        %v2002 = vsub.f32 %v265, %v2001
        %v2003 = vand.u32 %v2002, 4294901760
        %2004 = vmatpush1.msra.mxu0 %v2003
        %2005 = vmatprep.subr.mxu0 0.0
        %v2006 = vand.u32 %v266, 4294901760
        %v2007 = vsub.f32 %v266, %v2006
        %v2008 = vand.u32 %v2007, 4294901760
        %2009 = vmatpush1.msra.mxu0 %v2008
        %2010 = vmatprep.subr.mxu0 0.0
        %v2011 = vand.u32 %v267, 4294901760
        %v2012 = vsub.f32 %v267, %v2011
        %v2013 = vand.u32 %v2012, 4294901760
        %2014 = vmatpush1.msra.mxu0 %v2013
        %2015 = vmatprep.subr.mxu0 0.0
        %v2016 = vand.u32 %v268, 4294901760
        %v2017 = vsub.f32 %v268, %v2016
        %v2018 = vand.u32 %v2017, 4294901760
        %2019 = vmatpush1.msra.mxu0 %v2018
        %2020 = vmatprep.subr.mxu0 0.0
        %v2021 = vand.u32 %v269, 4294901760
        %v2022 = vsub.f32 %v269, %v2021
        %v2023 = vand.u32 %v2022, 4294901760
        %2024 = vmatpush1.msra.mxu0 %v2023
        %2025 = vmatprep.subr.mxu0 0.0
        %v2026 = vand.u32 %v270, 4294901760
        %v2027 = vsub.f32 %v270, %v2026
        %v2028 = vand.u32 %v2027, 4294901760
        %2029 = vmatpush1.msra.mxu0 %v2028
        %2030 = vmatprep.subr.mxu0 0.0
        %v2031 = vand.u32 %v271, 4294901760
        %v2032 = vsub.f32 %v271, %v2031
        %v2033 = vand.u32 %v2032, 4294901760
        %2034 = vmatpush1.msra.mxu0 %v2033
        %2035 = vmatprep.subr.mxu0 0.0
        %v2036 = vand.u32 %v272, 4294901760
        %v2037 = vsub.f32 %v272, %v2036
        %v2038 = vand.u32 %v2037, 4294901760
        %2039 = vmatpush1.msra.mxu0 %v2038
        %2040 = vmatprep.subr.mxu0 0.0
        %v2041 = vand.u32 %v273, 4294901760
        %v2042 = vsub.f32 %v273, %v2041
        %v2043 = vand.u32 %v2042, 4294901760
        %2044 = vmatpush1.msra.mxu0 %v2043
        %2045 = vmatprep.subr.mxu0 0.0
        %v2046 = vand.u32 %v274, 4294901760
        %v2047 = vsub.f32 %v274, %v2046
        %v2048 = vand.u32 %v2047, 4294901760
        %2049 = vmatpush1.msra.mxu0 %v2048
        %2050 = vmatprep.subr.mxu0 0.0
        %v2051 = vand.u32 %v275, 4294901760
        %v2052 = vsub.f32 %v275, %v2051
        %v2053 = vand.u32 %v2052, 4294901760
        %2054 = vmatpush1.msra.mxu0 %v2053
        %2055 = vmatprep.subr.mxu0 0.0
        %v2056 = vand.u32 %v276, 4294901760
        %v2057 = vsub.f32 %v276, %v2056
        %v2058 = vand.u32 %v2057, 4294901760
        %2059 = vmatpush1.msra.mxu0 %v2058
        %2060 = vmatprep.subr.mxu0 0.0
        %v2061 = vand.u32 %v277, 4294901760
        %v2062 = vsub.f32 %v277, %v2061
        %v2063 = vand.u32 %v2062, 4294901760
        %2064 = vmatpush1.msra.mxu0 %v2063
        %2065 = vmatprep.subr.mxu0 0.0
        %v2066 = vand.u32 %v278, 4294901760
        %v2067 = vsub.f32 %v278, %v2066
        %v2068 = vand.u32 %v2067, 4294901760
        %2069 = vmatpush1.msra.mxu0 %v2068
        %2070 = vmatprep.subr.mxu0 0.0
        %v2071 = vand.u32 %v279, 4294901760
        %v2072 = vsub.f32 %v279, %v2071
        %v2073 = vand.u32 %v2072, 4294901760
        %2074 = vmatpush1.msra.mxu0 %v2073
        %2075 = vmatprep.subr.mxu0 0.0
        %v2076 = vand.u32 %v280, 4294901760
        %v2077 = vsub.f32 %v280, %v2076
        %v2078 = vand.u32 %v2077, 4294901760
        %2079 = vmatpush1.msra.mxu0 %v2078
        %2080 = vmatprep.subr.mxu0 0.0
        %v2081 = vand.u32 %v281, 4294901760
        %v2082 = vsub.f32 %v281, %v2081
        %v2083 = vand.u32 %v2082, 4294901760
        %2084 = vmatpush1.msra.mxu0 %v2083
        %2085 = vmatprep.subr.mxu0 0.0
        %v2086 = vand.u32 %v282, 4294901760
        %v2087 = vsub.f32 %v282, %v2086
        %v2088 = vand.u32 %v2087, 4294901760
        %2089 = vmatpush1.msra.mxu0 %v2088
        %2090 = vmatprep.subr.mxu0 0.0
        %v2091 = vand.u32 %v283, 4294901760
        %v2092 = vsub.f32 %v283, %v2091
        %v2093 = vand.u32 %v2092, 4294901760
        %2094 = vmatpush1.msra.mxu0 %v2093
        %2095 = vmatprep.subr.mxu0 0.0
        %v2096 = vand.u32 %v284, 4294901760
        %v2097 = vsub.f32 %v284, %v2096
        %v2098 = vand.u32 %v2097, 4294901760
        %2099 = vmatpush1.msra.mxu0 %v2098
        %2100 = vmatprep.subr.mxu0 0.0
        %2101 = vmatpush1.msra.mxu0 0.0
        %2102 = vmatprep.subr.mxu0 0.0
        %2103 = vmatpush1.msra.mxu0 0.0
        %2104 = vmatprep.subr.mxu0 0.0
        %2105 = vmatpush1.msra.mxu0 0.0
        %2106 = vmatprep.subr.mxu0 0.0
        %2107 = vmatpush1.msra.mxu0 0.0
        %2108 = vmatprep.subr.mxu0 0.0
        %2109 = vmatpush1.msra.mxu0 0.0
        %2110 = vmatprep.subr.mxu0 0.0
        %2111 = vmatpush1.msra.mxu0 0.0
        %2112 = vmatprep.subr.mxu0 0.0
        %2113 = vmatpush1.msra.mxu0 0.0
        %2114 = vmatprep.subr.mxu0 0.0
        %2115 = vmatpush1.msra.mxu0 0.0
        %2116 = vmatprep.subr.mxu0 0.0
        %2117 = vmatpush1.msra.mxu0 0.0
        %2118 = vmatprep.subr.mxu0 0.0
        %2119 = vmatpush1.msra.mxu0 0.0
        %2120 = vmatprep.subr.mxu0 0.0
        %2121 = vmatpush1.msra.mxu0 0.0
        %2122 = vmatprep.subr.mxu0 0.0
        %2123 = vmatpush1.msra.mxu0 0.0
        %v2124 = vand.u32 %v1201, 4294901760
        %2125 = vmatprep.mubr.f32.mxu0 %v2124
        %v2126 = vand.u32 %v1184, 4294901760
        %2127 = vmatmul.mubr.f32.gmra.mrb[0].mxu0 %v2126
        %v2128 = vpop.f32.mrb[0].mxu0
        %v2129 = vadd.f32 %v1920, %v2128
        %v2130 = vpop.f32.mrb[0].mxu0
        %v2131 = vand.u32 %v1204, 4294901760
        %2132 = vmatprep.mubr.f32.mxu0 %v2131
        %v2133 = vand.u32 %v1186, 4294901760
        %2134 = vmatmul.mubr.f32.gmra.mrb[0].mxu0 %v2133
        %v2135 = vpop.f32.mrb[0].mxu0
        %v2136 = vadd.f32 %v1931, %v2135
        %v2137 = vpop.f32.mrb[0].mxu0
        %v2138 = vand.u32 %v1207, 4294901760
        %2139 = vmatprep.mubr.f32.mxu0 %v2138
        %v2140 = vand.u32 %v1188, 4294901760
        %2141 = vmatmul.mubr.f32.gmra.mrb[0].mxu0 %v2140
        %v2142 = vpop.f32.mrb[0].mxu0
        %v2143 = vadd.f32 %v1942, %v2142
        %v2144 = vpop.f32.mrb[0].mxu0
        %v2145 = vand.u32 %v1210, 4294901760
        %2146 = vmatprep.mubr.f32.mxu0 %v2145
        %v2147 = vand.u32 %v1190, 4294901760
        %2148 = vmatmul.mubr.f32.gmra.mrb[0].mxu0 %v2147
        %v2149 = vpop.f32.mrb[0].mxu0
        %v2150 = vadd.f32 %v1953, %v2149
        %v2151 = vpop.f32.mrb[0].mxu0
        %v2152 = vand.u32 %v1213, 4294901760
        %2153 = vmatprep.mubr.f32.mxu0 %v2152
        %v2154 = vand.u32 %v1192, 4294901760
        %2155 = vmatmul.mubr.f32.gmra.mrb[0].mxu0 %v2154
        %v2156 = vpop.f32.mrb[0].mxu0
        %v2157 = vadd.f32 %v1964, %v2156
        %v2158 = vpop.f32.mrb[0].mxu0
        %v2159 = vand.u32 %v1216, 4294901760
        %2160 = vmatprep.mubr.f32.mxu0 %v2159
        %v2161 = vand.u32 %v1194, 4294901760
        %2162 = vmatmul.mubr.f32.gmra.mrb[0].mxu0 %v2161
        %v2163 = vpop.f32.mrb[0].mxu0
        %v2164 = vadd.f32 %v1975, %v2163
        %v2165 = vpop.f32.mrb[0].mxu0
        %v2166 = vand.u32 %v1219, 4294901760
        %2167 = vmatprep.mubr.f32.mxu0 %v2166
        %v2168 = vand.u32 %v1196, 4294901760
        %2169 = vmatmul.mubr.f32.gmra.mrb[0].mxu0 %v2168
        %v2170 = vpop.f32.mrb[0].mxu0
        %v2171 = vadd.f32 %v1986, %v2170
        %v2172 = vpop.f32.mrb[0].mxu0
        %v2173 = vand.u32 %v1222, 4294901760
        %2174 = vmatprep.mubr.f32.mxu0 %v2173
        %v2175 = vand.u32 %v1198, 4294901760
        %2176 = vmatmul.mubr.f32.gmra.mrb[0].mxu0 %v2175
        %v2177 = vpop.f32.mrb[0].mxu0
        %v2178 = vadd.f32 %v1997, %v2177
        %v2179 = vpop.f32.mrb[0].mxu0
        %2180 = vdwg.mxu0
        %2181 = vmatprep.subr.mxu0 0.0
        %v2182 = vand.u32 %v265, 4294901760
        %2183 = vmatpush1.msra.mxu0 %v2182
        %2184 = vmatprep.subr.mxu0 0.0
        %v2185 = vand.u32 %v266, 4294901760
        %2186 = vmatpush1.msra.mxu0 %v2185
        %2187 = vmatprep.subr.mxu0 0.0
        %v2188 = vand.u32 %v267, 4294901760
        %2189 = vmatpush1.msra.mxu0 %v2188
        %2190 = vmatprep.subr.mxu0 0.0
        %v2191 = vand.u32 %v268, 4294901760
        %2192 = vmatpush1.msra.mxu0 %v2191
        %2193 = vmatprep.subr.mxu0 0.0
        %v2194 = vand.u32 %v269, 4294901760
        %2195 = vmatpush1.msra.mxu0 %v2194
        %2196 = vmatprep.subr.mxu0 0.0
        %v2197 = vand.u32 %v270, 4294901760
        %2198 = vmatpush1.msra.mxu0 %v2197
        %2199 = vmatprep.subr.mxu0 0.0
        %v2200 = vand.u32 %v271, 4294901760
        %2201 = vmatpush1.msra.mxu0 %v2200
        %2202 = vmatprep.subr.mxu0 0.0
        %v2203 = vand.u32 %v272, 4294901760
        %2204 = vmatpush1.msra.mxu0 %v2203
        %2205 = vmatprep.subr.mxu0 0.0
        %v2206 = vand.u32 %v273, 4294901760
        %2207 = vmatpush1.msra.mxu0 %v2206
        %2208 = vmatprep.subr.mxu0 0.0
        %v2209 = vand.u32 %v274, 4294901760
        %2210 = vmatpush1.msra.mxu0 %v2209
        %2211 = vmatprep.subr.mxu0 0.0
        %v2212 = vand.u32 %v275, 4294901760
        %2213 = vmatpush1.msra.mxu0 %v2212
        %2214 = vmatprep.subr.mxu0 0.0
        %v2215 = vand.u32 %v276, 4294901760
        %2216 = vmatpush1.msra.mxu0 %v2215
        %2217 = vmatprep.subr.mxu0 0.0
        %v2218 = vand.u32 %v277, 4294901760
        %2219 = vmatpush1.msra.mxu0 %v2218
        %2220 = vmatprep.subr.mxu0 0.0
        %v2221 = vand.u32 %v278, 4294901760
        %2222 = vmatpush1.msra.mxu0 %v2221
        %2223 = vmatprep.subr.mxu0 0.0
        %v2224 = vand.u32 %v279, 4294901760
        %2225 = vmatpush1.msra.mxu0 %v2224
        %2226 = vmatprep.subr.mxu0 0.0
        %v2227 = vand.u32 %v280, 4294901760
        %2228 = vmatpush1.msra.mxu0 %v2227
        %2229 = vmatprep.subr.mxu0 0.0
        %v2230 = vand.u32 %v281, 4294901760
        %2231 = vmatpush1.msra.mxu0 %v2230
        %2232 = vmatprep.subr.mxu0 0.0
        %v2233 = vand.u32 %v282, 4294901760
        %2234 = vmatpush1.msra.mxu0 %v2233
        %2235 = vmatprep.subr.mxu0 0.0
        %v2236 = vand.u32 %v283, 4294901760
        %2237 = vmatpush1.msra.mxu0 %v2236
        %2238 = vmatprep.subr.mxu0 0.0
        %v2239 = vand.u32 %v284, 4294901760
        %2240 = vmatpush1.msra.mxu0 %v2239
        %2241 = vmatprep.subr.mxu0 0.0
        %2242 = vmatpush1.msra.mxu0 0.0
        %2243 = vmatprep.subr.mxu0 0.0
        %2244 = vmatpush1.msra.mxu0 0.0
        %2245 = vmatprep.subr.mxu0 0.0
        %2246 = vmatpush1.msra.mxu0 0.0
        %2247 = vmatprep.subr.mxu0 0.0
        %2248 = vmatpush1.msra.mxu0 0.0
        %2249 = vmatprep.subr.mxu0 0.0
        %2250 = vmatpush1.msra.mxu0 0.0
        %2251 = vmatprep.subr.mxu0 0.0
        %2252 = vmatpush1.msra.mxu0 0.0
        %2253 = vmatprep.subr.mxu0 0.0
        %2254 = vmatpush1.msra.mxu0 0.0
        %2255 = vmatprep.subr.mxu0 0.0
        %2256 = vmatpush1.msra.mxu0 0.0
        %2257 = vmatprep.subr.mxu0 0.0
        %2258 = vmatpush1.msra.mxu0 0.0
        %2259 = vmatprep.subr.mxu0 0.0
        %2260 = vmatpush1.msra.mxu0 0.0
        %2261 = vmatprep.subr.mxu0 0.0
        %2262 = vmatpush1.msra.mxu0 0.0
        %2263 = vmatprep.subr.mxu0 0.0
        %2264 = vmatpush1.msra.mxu0 0.0
        %v2265 = vand.u32 %v1201, 4294901760
        %2266 = vmatprep.mubr.f32.mxu0 %v2265
        %v2267 = vand.u32 %v1184, 4294901760
        %2268 = vmatmul.mubr.f32.gmra.mrb[0].mxu0 %v2267
        %v2269 = vpop.f32.mrb[0].mxu0
        %v2270 = vadd.f32 %v2129, %v2269
        %v2271 = vpop.f32.mrb[0].mxu0
        %v2272 = vand.u32 %v1204, 4294901760
        %2273 = vmatprep.mubr.f32.mxu0 %v2272
        %v2274 = vand.u32 %v1186, 4294901760
        %2275 = vmatmul.mubr.f32.gmra.mrb[0].mxu0 %v2274
        %v2276 = vpop.f32.mrb[0].mxu0
        %v2277 = vadd.f32 %v2136, %v2276
        %v2278 = vpop.f32.mrb[0].mxu0
        %v2279 = vand.u32 %v1207, 4294901760
        %2280 = vmatprep.mubr.f32.mxu0 %v2279
        %v2281 = vand.u32 %v1188, 4294901760
        %2282 = vmatmul.mubr.f32.gmra.mrb[0].mxu0 %v2281
        %v2283 = vpop.f32.mrb[0].mxu0
        %v2284 = vadd.f32 %v2143, %v2283
        %v2285 = vpop.f32.mrb[0].mxu0
        %v2286 = vand.u32 %v1210, 4294901760
        %2287 = vmatprep.mubr.f32.mxu0 %v2286
        %v2288 = vand.u32 %v1190, 4294901760
        %2289 = vmatmul.mubr.f32.gmra.mrb[0].mxu0 %v2288
        %v2290 = vpop.f32.mrb[0].mxu0
        %v2291 = vadd.f32 %v2150, %v2290
        %v2292 = vpop.f32.mrb[0].mxu0
        %v2293 = vand.u32 %v1213, 4294901760
        %2294 = vmatprep.mubr.f32.mxu0 %v2293
        %v2295 = vand.u32 %v1192, 4294901760
        %2296 = vmatmul.mubr.f32.gmra.mrb[0].mxu0 %v2295
        %v2297 = vpop.f32.mrb[0].mxu0
        %v2298 = vadd.f32 %v2157, %v2297
        %v2299 = vpop.f32.mrb[0].mxu0
        %v2300 = vand.u32 %v1216, 4294901760
        %2301 = vmatprep.mubr.f32.mxu0 %v2300
        %v2302 = vand.u32 %v1194, 4294901760
        %2303 = vmatmul.mubr.f32.gmra.mrb[0].mxu0 %v2302
        %v2304 = vpop.f32.mrb[0].mxu0
        %v2305 = vadd.f32 %v2164, %v2304
        %v2306 = vpop.f32.mrb[0].mxu0
        %v2307 = vand.u32 %v1219, 4294901760
        %2308 = vmatprep.mubr.f32.mxu0 %v2307
        %v2309 = vand.u32 %v1196, 4294901760
        %2310 = vmatmul.mubr.f32.gmra.mrb[0].mxu0 %v2309
        %v2311 = vpop.f32.mrb[0].mxu0
        %v2312 = vadd.f32 %v2171, %v2311
        %v2313 = vpop.f32.mrb[0].mxu0
        %v2314 = vand.u32 %v1222, 4294901760
        %2315 = vmatprep.mubr.f32.mxu0 %v2314
        %v2316 = vand.u32 %v1198, 4294901760
        %2317 = vmatmul.mubr.f32.gmra.mrb[0].mxu0 %v2316
        %v2318 = vpop.f32.mrb[0].mxu0
        %v2319 = vadd.f32 %v2178, %v2318
        %v2320 = vpop.f32.mrb[0].mxu0
        %2321 = vdwg.mxu0
        %v2323 = vcombine.high %v1182, %v1182
        %v2325 = vunpack.c.l.s4 1966171168
        %v2326 = vunpack.c.0.s8 %v2325
        %v2327 = vlaneseq
        %v2328 = vshrl.u32 %v2327, 7
        %v2329 = vsub.s32 %v2326, %v2328
        %v2330 = vrot.slane %v1182, %v2329
        %v2332 = vunpack.c.l.s4 1966171168
        %v2333 = vunpack.c.0.s8 %v2332
        %v2334 = vlaneseq
        %v2335 = vshrl.u32 %v2334, 7
        %v2336 = vsub.s32 %v2333, %v2335
        %v2337 = vrot.slane %v2323, %v2336
        %v2338 = vcombine.high %v2330, %v2330
        %v2339 = vcombine.high %v2337, %v2337
        %v2341 = vunpack.c.l.s4 1966171168
        %v2342 = vunpack.c.0.s8 %v2341
        %v2343 = vlaneseq
        %v2344 = vshrl.u32 %v2343, 7
        %v2345 = vsub.s32 %v2342, %v2344
        %v2346 = vrot.slane %v2330, %v2345
        %v2348 = vunpack.c.l.s4 1966171168
        %v2349 = vunpack.c.0.s8 %v2348
        %v2350 = vlaneseq
        %v2351 = vshrl.u32 %v2350, 7
        %v2352 = vsub.s32 %v2349, %v2351
        %v2353 = vrot.slane %v2337, %v2352
        %v2355 = vunpack.c.l.s4 1966171168
        %v2356 = vunpack.c.0.s8 %v2355
        %v2357 = vlaneseq
        %v2358 = vshrl.u32 %v2357, 7
        %v2359 = vsub.s32 %v2356, %v2358
        %v2360 = vrot.slane %v2338, %v2359
        %v2362 = vunpack.c.l.s4 1966171168
        %v2363 = vunpack.c.0.s8 %v2362
        %v2364 = vlaneseq
        %v2365 = vshrl.u32 %v2364, 7
        %v2366 = vsub.s32 %v2363, %v2365
        %v2367 = vrot.slane %v2339, %v2366
        %v2368 = vcombine.high %v2346, %v2346
        %v2369 = vcombine.high %v2353, %v2353
        %v2370 = vcombine.high %v2360, %v2360
        %v2371 = vcombine.high %v2367, %v2367
        %v2372 = vlaneseq
        %v2373 = vshrl.u32 %v2372, 7
        %v2374 = vsub.s32 0, %v2373
        %v2375 = vrot.slane %v2346, %v2374
        %v2376 = vlaneseq
        %v2377 = vshrl.u32 %v2376, 7
        %v2378 = vsub.s32 0, %v2377
        %v2379 = vrot.slane %v2360, %v2378
        %v2380 = vlaneseq
        %v2381 = vshrl.u32 %v2380, 7
        %v2382 = vsub.s32 0, %v2381
        %v2383 = vrot.slane %v2368, %v2382
        %v2384 = vlaneseq
        %v2385 = vshrl.u32 %v2384, 7
        %v2386 = vsub.s32 0, %v2385
        %v2387 = vrot.slane %v2370, %v2386
        %v2388 = vlaneseq
        %v2389 = vshrl.u32 %v2388, 7
        %v2390 = vsub.s32 0, %v2389
        %v2391 = vrot.slane %v2353, %v2390
        %v2392 = vlaneseq
        %v2393 = vshrl.u32 %v2392, 7
        %v2394 = vsub.s32 0, %v2393
        %v2395 = vrot.slane %v2367, %v2394
        %v2396 = vlaneseq
        %v2397 = vshrl.u32 %v2396, 7
        %v2398 = vsub.s32 0, %v2397
        %v2399 = vrot.slane %v2369, %v2398
        %v2400 = vlaneseq
        %v2401 = vshrl.u32 %v2400, 7
        %v2402 = vsub.s32 0, %v2401
        %v2403 = vrot.slane %v2371, %v2402
        %v2412 = vmul.f32 %v2270, %v2375
        %v2413 = vmul.f32 %v2277, %v2379
        %v2414 = vmul.f32 %v2284, %v2383
        %v2415 = vmul.f32 %v2291, %v2387
        %v2416 = vmul.f32 %v2298, %v2391
        %v2417 = vmul.f32 %v2305, %v2395
        %v2418 = vmul.f32 %v2312, %v2399
        %v2419 = vmul.f32 %v2319, %v2403
        %v2420 = vadd.f32 %v1183, %v2412
        %v2421 = vadd.f32 %v1183, %v2413
        %v2422 = vadd.f32 %v1183, %v2414
        %v2423 = vadd.f32 %v1183, %v2415
        %v2424 = vadd.f32 %v1183, %v2416
        %v2425 = vadd.f32 %v1183, %v2417
        %v2426 = vadd.f32 %v1183, %v2418
        %v2427 = vadd.f32 %v1183, %v2419
        %vm2428 = vcmask 80896
        %v2429 = vsel %vm2428, %v2420, -inf
        %2430 = vmax.xlane.f32.xlu0 %v2429
        %v2431 = vpop.xlane.xlu0 %2430
        %v2432 = vsel %vm2428, %v2421, -inf
        %2433 = vmax.xlane.f32.xlu0 %v2432
        %v2434 = vpop.xlane.xlu0 %2433
        %v2435 = vsel %vm2428, %v2422, -inf
        %2436 = vmax.xlane.f32.xlu0 %v2435
        %v2437 = vpop.xlane.xlu0 %2436
        %v2438 = vsel %vm2428, %v2423, -inf
        %2439 = vmax.xlane.f32.xlu0 %v2438
        %v2440 = vpop.xlane.xlu0 %2439
        %v2441 = vsel %vm2428, %v2424, -inf
        %2442 = vmax.xlane.f32.xlu0 %v2441
        %v2443 = vpop.xlane.xlu0 %2442
        %v2444 = vsel %vm2428, %v2425, -inf
        %2445 = vmax.xlane.f32.xlu0 %v2444
        %v2446 = vpop.xlane.xlu0 %2445
        %v2447 = vsel %vm2428, %v2426, -inf
        %2448 = vmax.xlane.f32.xlu0 %v2447
        %v2449 = vpop.xlane.xlu0 %2448
        %v2450 = vsel %vm2428, %v2427, -inf
        %2451 = vmax.xlane.f32.xlu0 %v2450
        %v2452 = vpop.xlane.xlu0 %2451
        %v2453 = vsub.f32 %v2420, %v2431
        %v2454 = vsub.f32 %v2421, %v2434
        %v2455 = vsub.f32 %v2422, %v2437
        %v2456 = vsub.f32 %v2423, %v2440
        %v2457 = vsub.f32 %v2424, %v2443
        %v2458 = vsub.f32 %v2425, %v2446
        %v2459 = vsub.f32 %v2426, %v2449
        %v2460 = vsub.f32 %v2427, %v2452
        %v2461 = vmul.f32 %v2453, 1.442695
        %v2462 = vpow.pop %v2461
        %v2463 = vmul.f32 %v2454, 1.442695
        %v2464 = vpow.pop %v2463
        %v2465 = vmul.f32 %v2455, 1.442695
        %v2466 = vpow.pop %v2465
        %v2467 = vmul.f32 %v2456, 1.442695
        %v2468 = vpow.pop %v2467
        %v2469 = vmul.f32 %v2457, 1.442695
        %v2470 = vpow.pop %v2469
        %v2471 = vmul.f32 %v2458, 1.442695
        %v2472 = vpow.pop %v2471
        %v2473 = vmul.f32 %v2459, 1.442695
        %v2474 = vpow.pop %v2473
        %v2475 = vmul.f32 %v2460, 1.442695
        %v2476 = vpow.pop %v2475
        %v2477 = vsel %vm2428, %v2462, 0.0
        %2478 = vadd.xlane.f32.xlu0 %v2477
        %v2479 = vpop.xlane.xlu0 %2478
        %v2480 = vsel %vm2428, %v2464, 0.0
        %2481 = vadd.xlane.f32.xlu0 %v2480
        %v2482 = vpop.xlane.xlu0 %2481
        %v2483 = vsel %vm2428, %v2466, 0.0
        %2484 = vadd.xlane.f32.xlu0 %v2483
        %v2485 = vpop.xlane.xlu0 %2484
        %v2486 = vsel %vm2428, %v2468, 0.0
        %2487 = vadd.xlane.f32.xlu0 %v2486
        %v2488 = vpop.xlane.xlu0 %2487
        %v2489 = vsel %vm2428, %v2470, 0.0
        %2490 = vadd.xlane.f32.xlu0 %v2489
        %v2491 = vpop.xlane.xlu0 %2490
        %v2492 = vsel %vm2428, %v2472, 0.0
        %2493 = vadd.xlane.f32.xlu0 %v2492
        %v2494 = vpop.xlane.xlu0 %2493
        %v2495 = vsel %vm2428, %v2474, 0.0
        %2496 = vadd.xlane.f32.xlu0 %v2495
        %v2497 = vpop.xlane.xlu0 %2496
        %v2498 = vsel %vm2428, %v2476, 0.0
        %2499 = vadd.xlane.f32.xlu0 %v2498
        %v2500 = vpop.xlane.xlu0 %2499
        %v2501 = vrcp.pop %v2479
        %v2502 = vrcp.pop %v2482
        %v2503 = vrcp.pop %v2485
        %v2504 = vrcp.pop %v2488
        %v2505 = vrcp.pop %v2491
        %v2506 = vrcp.pop %v2494
        %v2507 = vrcp.pop %v2497
        %v2508 = vrcp.pop %v2500
        %v2509 = vmul.f32 %v2479, %v2501
        %v2510 = vmul.f32 %v2482, %v2502
        %v2511 = vmul.f32 %v2485, %v2503
        %v2512 = vmul.f32 %v2488, %v2504
        %v2513 = vmul.f32 %v2491, %v2505
        %v2514 = vmul.f32 %v2494, %v2506
        %v2515 = vmul.f32 %v2497, %v2507
        %v2516 = vmul.f32 %v2500, %v2508
        %v2517 = vsub.f32 2.0, %v2509
        %v2518 = vsub.f32 2.0, %v2510
        %v2519 = vsub.f32 2.0, %v2511
        %v2520 = vsub.f32 2.0, %v2512
        %v2521 = vsub.f32 2.0, %v2513
        %v2522 = vsub.f32 2.0, %v2514
        %v2523 = vsub.f32 2.0, %v2515
        %v2524 = vsub.f32 2.0, %v2516
        %v2525 = vmul.f32 %v2501, %v2517
        %v2526 = vmul.f32 %v2502, %v2518
        %v2527 = vmul.f32 %v2503, %v2519
        %v2528 = vmul.f32 %v2504, %v2520
        %v2529 = vmul.f32 %v2505, %v2521
        %v2530 = vmul.f32 %v2506, %v2522
        %v2531 = vmul.f32 %v2507, %v2523
        %v2532 = vmul.f32 %v2508, %v2524
        %v2533 = vmul.f32 %v2462, %v2525
        %v2534 = vmul.f32 %v2464, %v2526
        %v2535 = vmul.f32 %v2466, %v2527
        %v2536 = vmul.f32 %v2468, %v2528
        %v2537 = vmul.f32 %v2470, %v2529
        %v2538 = vmul.f32 %v2472, %v2530
        %v2539 = vmul.f32 %v2474, %v2531
        %v2540 = vmul.f32 %v2476, %v2532
        %v2542 = vsel %vm2428, %v2533, 0
        %v2545 = vsel %vm2428, %v2534, 0
        %v2548 = vsel %vm2428, %v2535, 0
        %v2551 = vsel %vm2428, %v2536, 0
        %v2554 = vsel %vm2428, %v2537, 0
        %v2557 = vsel %vm2428, %v2538, 0
        %v2560 = vsel %vm2428, %v2539, 0
        %v2563 = vsel %vm2428, %v2540, 0
        %vm2565 = vcmask 1041408
        %v2567 = vsel %vm2565, %v263, 0
        %v2570 = vsel %vm2565, %v264, 0
        %v2572 = vand.u32 %v262, 4294901760
        %2573 = vmatprep.subr.mxu0 %v2572
        %v2574 = vand.u32 %v261, 4294901760
        %2575 = vmatpush1.msra.mxu0 %v2574
        %v2576 = vand.u32 %v2570, 4294901760
        %2577 = vmatprep.subr.mxu0 %v2576
        %v2578 = vand.u32 %v2567, 4294901760
        %2579 = vmatpush1.msra.mxu0 %v2578
        %2580 = vmatprep.subr.mxu0 0.0
        %2581 = vmatpush1.msra.mxu0 0.0
        %2582 = vmatprep.subr.mxu0 0.0
        %2583 = vmatpush1.msra.mxu0 0.0
        %2584 = vmatprep.subr.mxu0 0.0
        %2585 = vmatpush1.msra.mxu0 0.0
        %2586 = vmatprep.subr.mxu0 0.0
        %2587 = vmatpush1.msra.mxu0 0.0
        %2588 = vmatprep.subr.mxu0 0.0
        %2589 = vmatpush1.msra.mxu0 0.0
        %2590 = vmatprep.subr.mxu0 0.0
        %2591 = vmatpush1.msra.mxu0 0.0
        %2592 = vmatprep.subr.mxu0 0.0
        %2593 = vmatpush1.msra.mxu0 0.0
        %2594 = vmatprep.subr.mxu0 0.0
        %2595 = vmatpush1.msra.mxu0 0.0
        %2596 = vmatprep.subr.mxu0 0.0
        %2597 = vmatpush1.msra.mxu0 0.0
        %2598 = vmatprep.subr.mxu0 0.0
        %2599 = vmatpush1.msra.mxu0 0.0
        %2600 = vmatprep.subr.mxu0 0.0
        %2601 = vmatpush1.msra.mxu0 0.0
        %2602 = vmatprep.subr.mxu0 0.0
        %2603 = vmatpush1.msra.mxu0 0.0
        %2604 = vmatprep.subr.mxu0 0.0
        %2605 = vmatpush1.msra.mxu0 0.0
        %2606 = vmatprep.subr.mxu0 0.0
        %2607 = vmatpush1.msra.mxu0 0.0
        %2608 = vmatprep.subr.mxu0 0.0
        %2609 = vmatpush1.msra.mxu0 0.0
        %2610 = vmatprep.subr.mxu0 0.0
        %2611 = vmatpush1.msra.mxu0 0.0
        %2612 = vmatprep.subr.mxu0 0.0
        %2613 = vmatpush1.msra.mxu0 0.0
        %2614 = vmatprep.subr.mxu0 0.0
        %2615 = vmatpush1.msra.mxu0 0.0
        %2616 = vmatprep.subr.mxu0 0.0
        %2617 = vmatpush1.msra.mxu0 0.0
        %2618 = vmatprep.subr.mxu0 0.0
        %2619 = vmatpush1.msra.mxu0 0.0
        %2620 = vmatprep.subr.mxu0 0.0
        %2621 = vmatpush1.msra.mxu0 0.0
        %2622 = vmatprep.subr.mxu0 0.0
        %2623 = vmatpush1.msra.mxu0 0.0
        %2624 = vmatprep.subr.mxu0 0.0
        %2625 = vmatpush1.msra.mxu0 0.0
        %2626 = vmatprep.subr.mxu0 0.0
        %2627 = vmatpush1.msra.mxu0 0.0
        %2628 = vmatprep.subr.mxu0 0.0
        %2629 = vmatpush1.msra.mxu0 0.0
        %2630 = vmatprep.subr.mxu0 0.0
        %2631 = vmatpush1.msra.mxu0 0.0
        %2632 = vmatprep.subr.mxu0 0.0
        %2633 = vmatpush1.msra.mxu0 0.0
        %2634 = vmatprep.subr.mxu0 0.0
        %2635 = vmatpush1.msra.mxu0 0.0
        %2636 = vmatprep.subr.mxu0 0.0
        %2637 = vmatpush1.msra.mxu0 0.0
        %2638 = vmatprep.subr.mxu0 0.0
        %2639 = vmatpush1.msra.mxu0 0.0
        %2640 = vmatprep.mubr.f32.mxu0 0.0
        %v2641 = vand.u32 %v2542, 4294901760
        %v2642 = vsub.f32 %v2542, %v2641
        %v2643 = vand.u32 %v2642, 4294901760
        %v2644 = vsub.f32 %v2642, %v2643
        %v2645 = vand.u32 %v2644, 4294901760
        %2646 = vmatmul.mubr.f32.gmra.mrb[0].mxu0 %v2645
        %v2647 = vpop.f32.mrb[0].mxu0
        %v2648 = vadd.f32 0.0, %v2647
        %v2649 = vpop.f32.mrb[0].mxu0
        %v2650 = vadd.f32 0.0, %v2649
        %2651 = vmatprep.mubr.f32.mxu0 0.0
        %v2652 = vand.u32 %v2545, 4294901760
        %v2653 = vsub.f32 %v2545, %v2652
        %v2654 = vand.u32 %v2653, 4294901760
        %v2655 = vsub.f32 %v2653, %v2654
        %v2656 = vand.u32 %v2655, 4294901760
        %2657 = vmatmul.mubr.f32.gmra.mrb[0].mxu0 %v2656
        %v2658 = vpop.f32.mrb[0].mxu0
        %v2659 = vadd.f32 0.0, %v2658
        %v2660 = vpop.f32.mrb[0].mxu0
        %v2661 = vadd.f32 0.0, %v2660
        %2662 = vmatprep.mubr.f32.mxu0 0.0
        %v2663 = vand.u32 %v2548, 4294901760
        %v2664 = vsub.f32 %v2548, %v2663
        %v2665 = vand.u32 %v2664, 4294901760
        %v2666 = vsub.f32 %v2664, %v2665
        %v2667 = vand.u32 %v2666, 4294901760
        %2668 = vmatmul.mubr.f32.gmra.mrb[0].mxu0 %v2667
        %v2669 = vpop.f32.mrb[0].mxu0
        %v2670 = vadd.f32 0.0, %v2669
        %v2671 = vpop.f32.mrb[0].mxu0
        %v2672 = vadd.f32 0.0, %v2671
        %2673 = vmatprep.mubr.f32.mxu0 0.0
        %v2674 = vand.u32 %v2551, 4294901760
        %v2675 = vsub.f32 %v2551, %v2674
        %v2676 = vand.u32 %v2675, 4294901760
        %v2677 = vsub.f32 %v2675, %v2676
        %v2678 = vand.u32 %v2677, 4294901760
        %2679 = vmatmul.mubr.f32.gmra.mrb[0].mxu0 %v2678
        %v2680 = vpop.f32.mrb[0].mxu0
        %v2681 = vadd.f32 0.0, %v2680
        %v2682 = vpop.f32.mrb[0].mxu0
        %v2683 = vadd.f32 0.0, %v2682
        %2684 = vmatprep.mubr.f32.mxu0 0.0
        %v2685 = vand.u32 %v2554, 4294901760
        %v2686 = vsub.f32 %v2554, %v2685
        %v2687 = vand.u32 %v2686, 4294901760
        %v2688 = vsub.f32 %v2686, %v2687
        %v2689 = vand.u32 %v2688, 4294901760
        %2690 = vmatmul.mubr.f32.gmra.mrb[0].mxu0 %v2689
        %v2691 = vpop.f32.mrb[0].mxu0
        %v2692 = vadd.f32 0.0, %v2691
        %v2693 = vpop.f32.mrb[0].mxu0
        %v2694 = vadd.f32 0.0, %v2693
        %2695 = vmatprep.mubr.f32.mxu0 0.0
        %v2696 = vand.u32 %v2557, 4294901760
        %v2697 = vsub.f32 %v2557, %v2696
        %v2698 = vand.u32 %v2697, 4294901760
        %v2699 = vsub.f32 %v2697, %v2698
        %v2700 = vand.u32 %v2699, 4294901760
        %2701 = vmatmul.mubr.f32.gmra.mrb[0].mxu0 %v2700
        %v2702 = vpop.f32.mrb[0].mxu0
        %v2703 = vadd.f32 0.0, %v2702
        %v2704 = vpop.f32.mrb[0].mxu0
        %v2705 = vadd.f32 0.0, %v2704
        %2706 = vmatprep.mubr.f32.mxu0 0.0
        %v2707 = vand.u32 %v2560, 4294901760
        %v2708 = vsub.f32 %v2560, %v2707
        %v2709 = vand.u32 %v2708, 4294901760
        %v2710 = vsub.f32 %v2708, %v2709
        %v2711 = vand.u32 %v2710, 4294901760
        %2712 = vmatmul.mubr.f32.gmra.mrb[0].mxu0 %v2711
        %v2713 = vpop.f32.mrb[0].mxu0
        %v2714 = vadd.f32 0.0, %v2713
        %v2715 = vpop.f32.mrb[0].mxu0
        %v2716 = vadd.f32 0.0, %v2715
        %2717 = vmatprep.mubr.f32.mxu0 0.0
        %v2718 = vand.u32 %v2563, 4294901760
        %v2719 = vsub.f32 %v2563, %v2718
        %v2720 = vand.u32 %v2719, 4294901760
        %v2721 = vsub.f32 %v2719, %v2720
        %v2722 = vand.u32 %v2721, 4294901760
        %2723 = vmatmul.mubr.f32.gmra.mrb[0].mxu0 %v2722
        %v2724 = vpop.f32.mrb[0].mxu0
        %v2725 = vadd.f32 0.0, %v2724
        %v2726 = vpop.f32.mrb[0].mxu0
        %v2727 = vadd.f32 0.0, %v2726
        %2728 = vdwg.mxu0
        %v2729 = vand.u32 %v262, 4294901760
        %v2730 = vsub.f32 %v262, %v2729
        %v2731 = vand.u32 %v2730, 4294901760
        %v2732 = vsub.f32 %v2730, %v2731
        %v2733 = vand.u32 %v2732, 4294901760
        %2734 = vmatprep.subr.mxu0 %v2733
        %v2735 = vand.u32 %v261, 4294901760
        %v2736 = vsub.f32 %v261, %v2735
        %v2737 = vand.u32 %v2736, 4294901760
        %v2738 = vsub.f32 %v2736, %v2737
        %v2739 = vand.u32 %v2738, 4294901760
        %2740 = vmatpush1.msra.mxu0 %v2739
        %v2741 = vand.u32 %v2570, 4294901760
        %v2742 = vsub.f32 %v2570, %v2741
        %v2743 = vand.u32 %v2742, 4294901760
        %v2744 = vsub.f32 %v2742, %v2743
        %v2745 = vand.u32 %v2744, 4294901760
        %2746 = vmatprep.subr.mxu0 %v2745
        %v2747 = vand.u32 %v2567, 4294901760
        %v2748 = vsub.f32 %v2567, %v2747
        %v2749 = vand.u32 %v2748, 4294901760
        %v2750 = vsub.f32 %v2748, %v2749
        %v2751 = vand.u32 %v2750, 4294901760
        %2752 = vmatpush1.msra.mxu0 %v2751
        %2753 = vmatprep.subr.mxu0 0.0
        %2754 = vmatpush1.msra.mxu0 0.0
        %2755 = vmatprep.subr.mxu0 0.0
        %2756 = vmatpush1.msra.mxu0 0.0
        %2757 = vmatprep.subr.mxu0 0.0
        %2758 = vmatpush1.msra.mxu0 0.0
        %2759 = vmatprep.subr.mxu0 0.0
        %2760 = vmatpush1.msra.mxu0 0.0
        %2761 = vmatprep.subr.mxu0 0.0
        %2762 = vmatpush1.msra.mxu0 0.0
        %2763 = vmatprep.subr.mxu0 0.0
        %2764 = vmatpush1.msra.mxu0 0.0
        %2765 = vmatprep.subr.mxu0 0.0
        %2766 = vmatpush1.msra.mxu0 0.0
        %2767 = vmatprep.subr.mxu0 0.0
        %2768 = vmatpush1.msra.mxu0 0.0
        %2769 = vmatprep.subr.mxu0 0.0
        %2770 = vmatpush1.msra.mxu0 0.0
        %2771 = vmatprep.subr.mxu0 0.0
        %2772 = vmatpush1.msra.mxu0 0.0
        %2773 = vmatprep.subr.mxu0 0.0
        %2774 = vmatpush1.msra.mxu0 0.0
        %2775 = vmatprep.subr.mxu0 0.0
        %2776 = vmatpush1.msra.mxu0 0.0
        %2777 = vmatprep.subr.mxu0 0.0
        %2778 = vmatpush1.msra.mxu0 0.0
        %2779 = vmatprep.subr.mxu0 0.0
        %2780 = vmatpush1.msra.mxu0 0.0
        %2781 = vmatprep.subr.mxu0 0.0
        %2782 = vmatpush1.msra.mxu0 0.0
        %2783 = vmatprep.subr.mxu0 0.0
        %2784 = vmatpush1.msra.mxu0 0.0
        %2785 = vmatprep.subr.mxu0 0.0
        %2786 = vmatpush1.msra.mxu0 0.0
        %2787 = vmatprep.subr.mxu0 0.0
        %2788 = vmatpush1.msra.mxu0 0.0
        %2789 = vmatprep.subr.mxu0 0.0
        %2790 = vmatpush1.msra.mxu0 0.0
        %2791 = vmatprep.subr.mxu0 0.0
        %2792 = vmatpush1.msra.mxu0 0.0
        %2793 = vmatprep.subr.mxu0 0.0
        %2794 = vmatpush1.msra.mxu0 0.0
        %2795 = vmatprep.subr.mxu0 0.0
        %2796 = vmatpush1.msra.mxu0 0.0
        %2797 = vmatprep.subr.mxu0 0.0
        %2798 = vmatpush1.msra.mxu0 0.0
        %2799 = vmatprep.subr.mxu0 0.0
        %2800 = vmatpush1.msra.mxu0 0.0
        %2801 = vmatprep.subr.mxu0 0.0
        %2802 = vmatpush1.msra.mxu0 0.0
        %2803 = vmatprep.subr.mxu0 0.0
        %2804 = vmatpush1.msra.mxu0 0.0
        %2805 = vmatprep.subr.mxu0 0.0
        %2806 = vmatpush1.msra.mxu0 0.0
        %2807 = vmatprep.subr.mxu0 0.0
        %2808 = vmatpush1.msra.mxu0 0.0
        %2809 = vmatprep.subr.mxu0 0.0
        %2810 = vmatpush1.msra.mxu0 0.0
        %2811 = vmatprep.subr.mxu0 0.0
        %2812 = vmatpush1.msra.mxu0 0.0
        %2813 = vmatprep.mubr.f32.mxu0 0.0
        %v2814 = vand.u32 %v2542, 4294901760
        %2815 = vmatmul.mubr.f32.gmra.mrb[0].mxu0 %v2814
        %v2816 = vpop.f32.mrb[0].mxu0
        %v2817 = vadd.f32 %v2648, %v2816
        %v2818 = vpop.f32.mrb[0].mxu0
        %v2819 = vadd.f32 %v2650, %v2818
        %2820 = vmatprep.mubr.f32.mxu0 0.0
        %v2821 = vand.u32 %v2545, 4294901760
        %2822 = vmatmul.mubr.f32.gmra.mrb[0].mxu0 %v2821
        %v2823 = vpop.f32.mrb[0].mxu0
        %v2824 = vadd.f32 %v2659, %v2823
        %v2825 = vpop.f32.mrb[0].mxu0
        %v2826 = vadd.f32 %v2661, %v2825
        %2827 = vmatprep.mubr.f32.mxu0 0.0
        %v2828 = vand.u32 %v2548, 4294901760
        %2829 = vmatmul.mubr.f32.gmra.mrb[0].mxu0 %v2828
        %v2830 = vpop.f32.mrb[0].mxu0
        %v2831 = vadd.f32 %v2670, %v2830
        %v2832 = vpop.f32.mrb[0].mxu0
        %v2833 = vadd.f32 %v2672, %v2832
        %2834 = vmatprep.mubr.f32.mxu0 0.0
        %v2835 = vand.u32 %v2551, 4294901760
        %2836 = vmatmul.mubr.f32.gmra.mrb[0].mxu0 %v2835
        %v2837 = vpop.f32.mrb[0].mxu0
        %v2838 = vadd.f32 %v2681, %v2837
        %v2839 = vpop.f32.mrb[0].mxu0
        %v2840 = vadd.f32 %v2683, %v2839
        %2841 = vmatprep.mubr.f32.mxu0 0.0
        %v2842 = vand.u32 %v2554, 4294901760
        %2843 = vmatmul.mubr.f32.gmra.mrb[0].mxu0 %v2842
        %v2844 = vpop.f32.mrb[0].mxu0
        %v2845 = vadd.f32 %v2692, %v2844
        %v2846 = vpop.f32.mrb[0].mxu0
        %v2847 = vadd.f32 %v2694, %v2846
        %2848 = vmatprep.mubr.f32.mxu0 0.0
        %v2849 = vand.u32 %v2557, 4294901760
        %2850 = vmatmul.mubr.f32.gmra.mrb[0].mxu0 %v2849
        %v2851 = vpop.f32.mrb[0].mxu0
        %v2852 = vadd.f32 %v2703, %v2851
        %v2853 = vpop.f32.mrb[0].mxu0
        %v2854 = vadd.f32 %v2705, %v2853
        %2855 = vmatprep.mubr.f32.mxu0 0.0
        %v2856 = vand.u32 %v2560, 4294901760
        %2857 = vmatmul.mubr.f32.gmra.mrb[0].mxu0 %v2856
        %v2858 = vpop.f32.mrb[0].mxu0
        %v2859 = vadd.f32 %v2714, %v2858
        %v2860 = vpop.f32.mrb[0].mxu0
        %v2861 = vadd.f32 %v2716, %v2860
        %2862 = vmatprep.mubr.f32.mxu0 0.0
        %v2863 = vand.u32 %v2563, 4294901760
        %2864 = vmatmul.mubr.f32.gmra.mrb[0].mxu0 %v2863
        %v2865 = vpop.f32.mrb[0].mxu0
        %v2866 = vadd.f32 %v2725, %v2865
        %v2867 = vpop.f32.mrb[0].mxu0
        %v2868 = vadd.f32 %v2727, %v2867
        %2869 = vdwg.mxu0
        %v2870 = vand.u32 %v262, 4294901760
        %v2871 = vsub.f32 %v262, %v2870
        %2872 = vmatprep.subr.mxu0 %v2871
        %v2873 = vand.u32 %v261, 4294901760
        %v2874 = vsub.f32 %v261, %v2873
        %2875 = vmatpush1.msra.mxu0 %v2874
        %v2876 = vand.u32 %v2570, 4294901760
        %v2877 = vsub.f32 %v2570, %v2876
        %2878 = vmatprep.subr.mxu0 %v2877
        %v2879 = vand.u32 %v2567, 4294901760
        %v2880 = vsub.f32 %v2567, %v2879
        %2881 = vmatpush1.msra.mxu0 %v2880
        %2882 = vmatprep.subr.mxu0 0.0
        %2883 = vmatpush1.msra.mxu0 0.0
        %2884 = vmatprep.subr.mxu0 0.0
        %2885 = vmatpush1.msra.mxu0 0.0
        %2886 = vmatprep.subr.mxu0 0.0
        %2887 = vmatpush1.msra.mxu0 0.0
        %2888 = vmatprep.subr.mxu0 0.0
        %2889 = vmatpush1.msra.mxu0 0.0
        %2890 = vmatprep.subr.mxu0 0.0
        %2891 = vmatpush1.msra.mxu0 0.0
        %2892 = vmatprep.subr.mxu0 0.0
        %2893 = vmatpush1.msra.mxu0 0.0
        %2894 = vmatprep.subr.mxu0 0.0
        %2895 = vmatpush1.msra.mxu0 0.0
        %2896 = vmatprep.subr.mxu0 0.0
        %2897 = vmatpush1.msra.mxu0 0.0
        %2898 = vmatprep.subr.mxu0 0.0
        %2899 = vmatpush1.msra.mxu0 0.0
        %2900 = vmatprep.subr.mxu0 0.0
        %2901 = vmatpush1.msra.mxu0 0.0
        %2902 = vmatprep.subr.mxu0 0.0
        %2903 = vmatpush1.msra.mxu0 0.0
        %2904 = vmatprep.subr.mxu0 0.0
        %2905 = vmatpush1.msra.mxu0 0.0
        %2906 = vmatprep.subr.mxu0 0.0
        %2907 = vmatpush1.msra.mxu0 0.0
        %2908 = vmatprep.subr.mxu0 0.0
        %2909 = vmatpush1.msra.mxu0 0.0
        %2910 = vmatprep.subr.mxu0 0.0
        %2911 = vmatpush1.msra.mxu0 0.0
        %2912 = vmatprep.subr.mxu0 0.0
        %2913 = vmatpush1.msra.mxu0 0.0
        %2914 = vmatprep.subr.mxu0 0.0
        %2915 = vmatpush1.msra.mxu0 0.0
        %2916 = vmatprep.subr.mxu0 0.0
        %2917 = vmatpush1.msra.mxu0 0.0
        %2918 = vmatprep.subr.mxu0 0.0
        %2919 = vmatpush1.msra.mxu0 0.0
        %2920 = vmatprep.subr.mxu0 0.0
        %2921 = vmatpush1.msra.mxu0 0.0
        %2922 = vmatprep.subr.mxu0 0.0
        %2923 = vmatpush1.msra.mxu0 0.0
        %2924 = vmatprep.subr.mxu0 0.0
        %2925 = vmatpush1.msra.mxu0 0.0
        %2926 = vmatprep.subr.mxu0 0.0
        %2927 = vmatpush1.msra.mxu0 0.0
        %2928 = vmatprep.subr.mxu0 0.0
        %2929 = vmatpush1.msra.mxu0 0.0
        %2930 = vmatprep.subr.mxu0 0.0
        %2931 = vmatpush1.msra.mxu0 0.0
        %2932 = vmatprep.subr.mxu0 0.0
        %2933 = vmatpush1.msra.mxu0 0.0
        %2934 = vmatprep.subr.mxu0 0.0
        %2935 = vmatpush1.msra.mxu0 0.0
        %2936 = vmatprep.subr.mxu0 0.0
        %2937 = vmatpush1.msra.mxu0 0.0
        %2938 = vmatprep.subr.mxu0 0.0
        %2939 = vmatpush1.msra.mxu0 0.0
        %2940 = vmatprep.subr.mxu0 0.0
        %2941 = vmatpush1.msra.mxu0 0.0
        %2942 = vmatprep.mubr.f32.mxu0 0.0
        %v2943 = vand.u32 %v2542, 4294901760
        %v2944 = vsub.f32 %v2542, %v2943
        %2945 = vmatmul.mubr.f32.gmra.mrb[0].mxu0 %v2944
        %v2946 = vpop.f32.mrb[0].mxu0
        %v2947 = vadd.f32 %v2817, %v2946
        %v2948 = vpop.f32.mrb[0].mxu0
        %v2949 = vadd.f32 %v2819, %v2948
        %2950 = vmatprep.mubr.f32.mxu0 0.0
        %v2951 = vand.u32 %v2545, 4294901760
        %v2952 = vsub.f32 %v2545, %v2951
        %2953 = vmatmul.mubr.f32.gmra.mrb[0].mxu0 %v2952
        %v2954 = vpop.f32.mrb[0].mxu0
        %v2955 = vadd.f32 %v2824, %v2954
        %v2956 = vpop.f32.mrb[0].mxu0
        %v2957 = vadd.f32 %v2826, %v2956
        %2958 = vmatprep.mubr.f32.mxu0 0.0
        %v2959 = vand.u32 %v2548, 4294901760
        %v2960 = vsub.f32 %v2548, %v2959
        %2961 = vmatmul.mubr.f32.gmra.mrb[0].mxu0 %v2960
        %v2962 = vpop.f32.mrb[0].mxu0
        %v2963 = vadd.f32 %v2831, %v2962
        %v2964 = vpop.f32.mrb[0].mxu0
        %v2965 = vadd.f32 %v2833, %v2964
        %2966 = vmatprep.mubr.f32.mxu0 0.0
        %v2967 = vand.u32 %v2551, 4294901760
        %v2968 = vsub.f32 %v2551, %v2967
        %2969 = vmatmul.mubr.f32.gmra.mrb[0].mxu0 %v2968
        %v2970 = vpop.f32.mrb[0].mxu0
        %v2971 = vadd.f32 %v2838, %v2970
        %v2972 = vpop.f32.mrb[0].mxu0
        %v2973 = vadd.f32 %v2840, %v2972
        %2974 = vmatprep.mubr.f32.mxu0 0.0
        %v2975 = vand.u32 %v2554, 4294901760
        %v2976 = vsub.f32 %v2554, %v2975
        %2977 = vmatmul.mubr.f32.gmra.mrb[0].mxu0 %v2976
        %v2978 = vpop.f32.mrb[0].mxu0
        %v2979 = vadd.f32 %v2845, %v2978
        %v2980 = vpop.f32.mrb[0].mxu0
        %v2981 = vadd.f32 %v2847, %v2980
        %2982 = vmatprep.mubr.f32.mxu0 0.0
        %v2983 = vand.u32 %v2557, 4294901760
        %v2984 = vsub.f32 %v2557, %v2983
        %2985 = vmatmul.mubr.f32.gmra.mrb[0].mxu0 %v2984
        %v2986 = vpop.f32.mrb[0].mxu0
        %v2987 = vadd.f32 %v2852, %v2986
        %v2988 = vpop.f32.mrb[0].mxu0
        %v2989 = vadd.f32 %v2854, %v2988
        %2990 = vmatprep.mubr.f32.mxu0 0.0
        %v2991 = vand.u32 %v2560, 4294901760
        %v2992 = vsub.f32 %v2560, %v2991
        %2993 = vmatmul.mubr.f32.gmra.mrb[0].mxu0 %v2992
        %v2994 = vpop.f32.mrb[0].mxu0
        %v2995 = vadd.f32 %v2859, %v2994
        %v2996 = vpop.f32.mrb[0].mxu0
        %v2997 = vadd.f32 %v2861, %v2996
        %2998 = vmatprep.mubr.f32.mxu0 0.0
        %v2999 = vand.u32 %v2563, 4294901760
        %v3000 = vsub.f32 %v2563, %v2999
        %3001 = vmatmul.mubr.f32.gmra.mrb[0].mxu0 %v3000
        %v3002 = vpop.f32.mrb[0].mxu0
        %v3003 = vadd.f32 %v2866, %v3002
        %v3004 = vpop.f32.mrb[0].mxu0
        %v3005 = vadd.f32 %v2868, %v3004
        %3006 = vdwg.mxu0
        %v3007 = vand.u32 %v262, 4294901760
        %3008 = vmatprep.subr.mxu0 %v3007
        %v3009 = vand.u32 %v261, 4294901760
        %3010 = vmatpush1.msra.mxu0 %v3009
        %v3011 = vand.u32 %v2570, 4294901760
        %3012 = vmatprep.subr.mxu0 %v3011
        %v3013 = vand.u32 %v2567, 4294901760
        %3014 = vmatpush1.msra.mxu0 %v3013
        %3015 = vmatprep.subr.mxu0 0.0
        %3016 = vmatpush1.msra.mxu0 0.0
        %3017 = vmatprep.subr.mxu0 0.0
        %3018 = vmatpush1.msra.mxu0 0.0
        %3019 = vmatprep.subr.mxu0 0.0
        %3020 = vmatpush1.msra.mxu0 0.0
        %3021 = vmatprep.subr.mxu0 0.0
        %3022 = vmatpush1.msra.mxu0 0.0
        %3023 = vmatprep.subr.mxu0 0.0
        %3024 = vmatpush1.msra.mxu0 0.0
        %3025 = vmatprep.subr.mxu0 0.0
        %3026 = vmatpush1.msra.mxu0 0.0
        %3027 = vmatprep.subr.mxu0 0.0
        %3028 = vmatpush1.msra.mxu0 0.0
        %3029 = vmatprep.subr.mxu0 0.0
        %3030 = vmatpush1.msra.mxu0 0.0
        %3031 = vmatprep.subr.mxu0 0.0
        %3032 = vmatpush1.msra.mxu0 0.0
        %3033 = vmatprep.subr.mxu0 0.0
        %3034 = vmatpush1.msra.mxu0 0.0
        %3035 = vmatprep.subr.mxu0 0.0
        %3036 = vmatpush1.msra.mxu0 0.0
        %3037 = vmatprep.subr.mxu0 0.0
        %3038 = vmatpush1.msra.mxu0 0.0
        %3039 = vmatprep.subr.mxu0 0.0
        %3040 = vmatpush1.msra.mxu0 0.0
        %3041 = vmatprep.subr.mxu0 0.0
        %3042 = vmatpush1.msra.mxu0 0.0
        %3043 = vmatprep.subr.mxu0 0.0
        %3044 = vmatpush1.msra.mxu0 0.0
        %3045 = vmatprep.subr.mxu0 0.0
        %3046 = vmatpush1.msra.mxu0 0.0
        %3047 = vmatprep.subr.mxu0 0.0
        %3048 = vmatpush1.msra.mxu0 0.0
        %3049 = vmatprep.subr.mxu0 0.0
        %3050 = vmatpush1.msra.mxu0 0.0
        %3051 = vmatprep.subr.mxu0 0.0
        %3052 = vmatpush1.msra.mxu0 0.0
        %3053 = vmatprep.subr.mxu0 0.0
        %3054 = vmatpush1.msra.mxu0 0.0
        %3055 = vmatprep.subr.mxu0 0.0
        %3056 = vmatpush1.msra.mxu0 0.0
        %3057 = vmatprep.subr.mxu0 0.0
        %3058 = vmatpush1.msra.mxu0 0.0
        %3059 = vmatprep.subr.mxu0 0.0
        %3060 = vmatpush1.msra.mxu0 0.0
        %3061 = vmatprep.subr.mxu0 0.0
        %3062 = vmatpush1.msra.mxu0 0.0
        %3063 = vmatprep.subr.mxu0 0.0
        %3064 = vmatpush1.msra.mxu0 0.0
        %3065 = vmatprep.subr.mxu0 0.0
        %3066 = vmatpush1.msra.mxu0 0.0
        %3067 = vmatprep.subr.mxu0 0.0
        %3068 = vmatpush1.msra.mxu0 0.0
        %3069 = vmatprep.subr.mxu0 0.0
        %3070 = vmatpush1.msra.mxu0 0.0
        %3071 = vmatprep.subr.mxu0 0.0
        %3072 = vmatpush1.msra.mxu0 0.0
        %3073 = vmatprep.subr.mxu0 0.0
        %3074 = vmatpush1.msra.mxu0 0.0
        %3075 = vmatprep.mubr.f32.mxu0 0.0
        %v3076 = vand.u32 %v2542, 4294901760
        %v3077 = vsub.f32 %v2542, %v3076
        %v3078 = vand.u32 %v3077, 4294901760
        %3079 = vmatmul.mubr.f32.gmra.mrb[0].mxu0 %v3078
        %v3080 = vpop.f32.mrb[0].mxu0
        %v3081 = vadd.f32 %v2947, %v3080
        %v3082 = vpop.f32.mrb[0].mxu0
        %v3083 = vadd.f32 %v2949, %v3082
        %3084 = vmatprep.mubr.f32.mxu0 0.0
        %v3085 = vand.u32 %v2545, 4294901760
        %v3086 = vsub.f32 %v2545, %v3085
        %v3087 = vand.u32 %v3086, 4294901760
        %3088 = vmatmul.mubr.f32.gmra.mrb[0].mxu0 %v3087
        %v3089 = vpop.f32.mrb[0].mxu0
        %v3090 = vadd.f32 %v2955, %v3089
        %v3091 = vpop.f32.mrb[0].mxu0
        %v3092 = vadd.f32 %v2957, %v3091
        %3093 = vmatprep.mubr.f32.mxu0 0.0
        %v3094 = vand.u32 %v2548, 4294901760
        %v3095 = vsub.f32 %v2548, %v3094
        %v3096 = vand.u32 %v3095, 4294901760
        %3097 = vmatmul.mubr.f32.gmra.mrb[0].mxu0 %v3096
        %v3098 = vpop.f32.mrb[0].mxu0
        %v3099 = vadd.f32 %v2963, %v3098
        %v3100 = vpop.f32.mrb[0].mxu0
        %v3101 = vadd.f32 %v2965, %v3100
        %3102 = vmatprep.mubr.f32.mxu0 0.0
        %v3103 = vand.u32 %v2551, 4294901760
        %v3104 = vsub.f32 %v2551, %v3103
        %v3105 = vand.u32 %v3104, 4294901760
        %3106 = vmatmul.mubr.f32.gmra.mrb[0].mxu0 %v3105
        %v3107 = vpop.f32.mrb[0].mxu0
        %v3108 = vadd.f32 %v2971, %v3107
        %v3109 = vpop.f32.mrb[0].mxu0
        %v3110 = vadd.f32 %v2973, %v3109
        %3111 = vmatprep.mubr.f32.mxu0 0.0
        %v3112 = vand.u32 %v2554, 4294901760
        %v3113 = vsub.f32 %v2554, %v3112
        %v3114 = vand.u32 %v3113, 4294901760
        %3115 = vmatmul.mubr.f32.gmra.mrb[0].mxu0 %v3114
        %v3116 = vpop.f32.mrb[0].mxu0
        %v3117 = vadd.f32 %v2979, %v3116
        %v3118 = vpop.f32.mrb[0].mxu0
        %v3119 = vadd.f32 %v2981, %v3118
        %3120 = vmatprep.mubr.f32.mxu0 0.0
        %v3121 = vand.u32 %v2557, 4294901760
        %v3122 = vsub.f32 %v2557, %v3121
        %v3123 = vand.u32 %v3122, 4294901760
        %3124 = vmatmul.mubr.f32.gmra.mrb[0].mxu0 %v3123
        %v3125 = vpop.f32.mrb[0].mxu0
        %v3126 = vadd.f32 %v2987, %v3125
        %v3127 = vpop.f32.mrb[0].mxu0
        %v3128 = vadd.f32 %v2989, %v3127
        %3129 = vmatprep.mubr.f32.mxu0 0.0
        %v3130 = vand.u32 %v2560, 4294901760
        %v3131 = vsub.f32 %v2560, %v3130
        %v3132 = vand.u32 %v3131, 4294901760
        %3133 = vmatmul.mubr.f32.gmra.mrb[0].mxu0 %v3132
        %v3134 = vpop.f32.mrb[0].mxu0
        %v3135 = vadd.f32 %v2995, %v3134
        %v3136 = vpop.f32.mrb[0].mxu0
        %v3137 = vadd.f32 %v2997, %v3136
        %3138 = vmatprep.mubr.f32.mxu0 0.0
        %v3139 = vand.u32 %v2563, 4294901760
        %v3140 = vsub.f32 %v2563, %v3139
        %v3141 = vand.u32 %v3140, 4294901760
        %3142 = vmatmul.mubr.f32.gmra.mrb[0].mxu0 %v3141
        %v3143 = vpop.f32.mrb[0].mxu0
        %v3144 = vadd.f32 %v3003, %v3143
        %v3145 = vpop.f32.mrb[0].mxu0
        %v3146 = vadd.f32 %v3005, %v3145
        %3147 = vdwg.mxu0
        %v3148 = vand.u32 %v262, 4294901760
        %v3149 = vsub.f32 %v262, %v3148
        %v3150 = vand.u32 %v3149, 4294901760
        %3151 = vmatprep.subr.mxu0 %v3150
        %v3152 = vand.u32 %v261, 4294901760
        %v3153 = vsub.f32 %v261, %v3152
        %v3154 = vand.u32 %v3153, 4294901760
        %3155 = vmatpush1.msra.mxu0 %v3154
        %v3156 = vand.u32 %v2570, 4294901760
        %v3157 = vsub.f32 %v2570, %v3156
        %v3158 = vand.u32 %v3157, 4294901760
        %3159 = vmatprep.subr.mxu0 %v3158
        %v3160 = vand.u32 %v2567, 4294901760
        %v3161 = vsub.f32 %v2567, %v3160
        %v3162 = vand.u32 %v3161, 4294901760
        %3163 = vmatpush1.msra.mxu0 %v3162
        %3164 = vmatprep.subr.mxu0 0.0
        %3165 = vmatpush1.msra.mxu0 0.0
        %3166 = vmatprep.subr.mxu0 0.0
        %3167 = vmatpush1.msra.mxu0 0.0
        %3168 = vmatprep.subr.mxu0 0.0
        %3169 = vmatpush1.msra.mxu0 0.0
        %3170 = vmatprep.subr.mxu0 0.0
        %3171 = vmatpush1.msra.mxu0 0.0
        %3172 = vmatprep.subr.mxu0 0.0
        %3173 = vmatpush1.msra.mxu0 0.0
        %3174 = vmatprep.subr.mxu0 0.0
        %3175 = vmatpush1.msra.mxu0 0.0
        %3176 = vmatprep.subr.mxu0 0.0
        %3177 = vmatpush1.msra.mxu0 0.0
        %3178 = vmatprep.subr.mxu0 0.0
        %3179 = vmatpush1.msra.mxu0 0.0
        %3180 = vmatprep.subr.mxu0 0.0
        %3181 = vmatpush1.msra.mxu0 0.0
        %3182 = vmatprep.subr.mxu0 0.0
        %3183 = vmatpush1.msra.mxu0 0.0
        %3184 = vmatprep.subr.mxu0 0.0
        %3185 = vmatpush1.msra.mxu0 0.0
        %3186 = vmatprep.subr.mxu0 0.0
        %3187 = vmatpush1.msra.mxu0 0.0
        %3188 = vmatprep.subr.mxu0 0.0
        %3189 = vmatpush1.msra.mxu0 0.0
        %3190 = vmatprep.subr.mxu0 0.0
        %3191 = vmatpush1.msra.mxu0 0.0
        %3192 = vmatprep.subr.mxu0 0.0
        %3193 = vmatpush1.msra.mxu0 0.0
        %3194 = vmatprep.subr.mxu0 0.0
        %3195 = vmatpush1.msra.mxu0 0.0
        %3196 = vmatprep.subr.mxu0 0.0
        %3197 = vmatpush1.msra.mxu0 0.0
        %3198 = vmatprep.subr.mxu0 0.0
        %3199 = vmatpush1.msra.mxu0 0.0
        %3200 = vmatprep.subr.mxu0 0.0
        %3201 = vmatpush1.msra.mxu0 0.0
        %3202 = vmatprep.subr.mxu0 0.0
        %3203 = vmatpush1.msra.mxu0 0.0
        %3204 = vmatprep.subr.mxu0 0.0
        %3205 = vmatpush1.msra.mxu0 0.0
        %3206 = vmatprep.subr.mxu0 0.0
        %3207 = vmatpush1.msra.mxu0 0.0
        %3208 = vmatprep.subr.mxu0 0.0
        %3209 = vmatpush1.msra.mxu0 0.0
        %3210 = vmatprep.subr.mxu0 0.0
        %3211 = vmatpush1.msra.mxu0 0.0
        %3212 = vmatprep.subr.mxu0 0.0
        %3213 = vmatpush1.msra.mxu0 0.0
        %3214 = vmatprep.subr.mxu0 0.0
        %3215 = vmatpush1.msra.mxu0 0.0
        %3216 = vmatprep.subr.mxu0 0.0
        %3217 = vmatpush1.msra.mxu0 0.0
        %3218 = vmatprep.subr.mxu0 0.0
        %3219 = vmatpush1.msra.mxu0 0.0
        %3220 = vmatprep.subr.mxu0 0.0
        %3221 = vmatpush1.msra.mxu0 0.0
        %3222 = vmatprep.subr.mxu0 0.0
        %3223 = vmatpush1.msra.mxu0 0.0
        %3224 = vmatprep.mubr.f32.mxu0 0.0
        %v3225 = vand.u32 %v2542, 4294901760
        %3226 = vmatmul.mubr.f32.gmra.mrb[0].mxu0 %v3225
        %v3227 = vpop.f32.mrb[0].mxu0
        %v3228 = vadd.f32 %v3081, %v3227
        %v3229 = vpop.f32.mrb[0].mxu0
        %v3230 = vadd.f32 %v3083, %v3229
        %3231 = vmatprep.mubr.f32.mxu0 0.0
        %v3232 = vand.u32 %v2545, 4294901760
        %3233 = vmatmul.mubr.f32.gmra.mrb[0].mxu0 %v3232
        %v3234 = vpop.f32.mrb[0].mxu0
        %v3235 = vadd.f32 %v3090, %v3234
        %v3236 = vpop.f32.mrb[0].mxu0
        %v3237 = vadd.f32 %v3092, %v3236
        %3238 = vmatprep.mubr.f32.mxu0 0.0
        %v3239 = vand.u32 %v2548, 4294901760
        %3240 = vmatmul.mubr.f32.gmra.mrb[0].mxu0 %v3239
        %v3241 = vpop.f32.mrb[0].mxu0
        %v3242 = vadd.f32 %v3099, %v3241
        %v3243 = vpop.f32.mrb[0].mxu0
        %v3244 = vadd.f32 %v3101, %v3243
        %3245 = vmatprep.mubr.f32.mxu0 0.0
        %v3246 = vand.u32 %v2551, 4294901760
        %3247 = vmatmul.mubr.f32.gmra.mrb[0].mxu0 %v3246
        %v3248 = vpop.f32.mrb[0].mxu0
        %v3249 = vadd.f32 %v3108, %v3248
        %v3250 = vpop.f32.mrb[0].mxu0
        %v3251 = vadd.f32 %v3110, %v3250
        %3252 = vmatprep.mubr.f32.mxu0 0.0
        %v3253 = vand.u32 %v2554, 4294901760
        %3254 = vmatmul.mubr.f32.gmra.mrb[0].mxu0 %v3253
        %v3255 = vpop.f32.mrb[0].mxu0
        %v3256 = vadd.f32 %v3117, %v3255
        %v3257 = vpop.f32.mrb[0].mxu0
        %v3258 = vadd.f32 %v3119, %v3257
        %3259 = vmatprep.mubr.f32.mxu0 0.0
        %v3260 = vand.u32 %v2557, 4294901760
        %3261 = vmatmul.mubr.f32.gmra.mrb[0].mxu0 %v3260
        %v3262 = vpop.f32.mrb[0].mxu0
        %v3263 = vadd.f32 %v3126, %v3262
        %v3264 = vpop.f32.mrb[0].mxu0
        %v3265 = vadd.f32 %v3128, %v3264
        %3266 = vmatprep.mubr.f32.mxu0 0.0
        %v3267 = vand.u32 %v2560, 4294901760
        %3268 = vmatmul.mubr.f32.gmra.mrb[0].mxu0 %v3267
        %v3269 = vpop.f32.mrb[0].mxu0
        %v3270 = vadd.f32 %v3135, %v3269
        %v3271 = vpop.f32.mrb[0].mxu0
        %v3272 = vadd.f32 %v3137, %v3271
        %3273 = vmatprep.mubr.f32.mxu0 0.0
        %v3274 = vand.u32 %v2563, 4294901760
        %3275 = vmatmul.mubr.f32.gmra.mrb[0].mxu0 %v3274
        %v3276 = vpop.f32.mrb[0].mxu0
        %v3277 = vadd.f32 %v3144, %v3276
        %v3278 = vpop.f32.mrb[0].mxu0
        %v3279 = vadd.f32 %v3146, %v3278
        %3280 = vdwg.mxu0
        %v3281 = vand.u32 %v262, 4294901760
        %3282 = vmatprep.subr.mxu0 %v3281
        %v3283 = vand.u32 %v261, 4294901760
        %3284 = vmatpush1.msra.mxu0 %v3283
        %v3285 = vand.u32 %v2570, 4294901760
        %3286 = vmatprep.subr.mxu0 %v3285
        %v3287 = vand.u32 %v2567, 4294901760
        %3288 = vmatpush1.msra.mxu0 %v3287
        %3289 = vmatprep.subr.mxu0 0.0
        %3290 = vmatpush1.msra.mxu0 0.0
        %3291 = vmatprep.subr.mxu0 0.0
        %3292 = vmatpush1.msra.mxu0 0.0
        %3293 = vmatprep.subr.mxu0 0.0
        %3294 = vmatpush1.msra.mxu0 0.0
        %3295 = vmatprep.subr.mxu0 0.0
        %3296 = vmatpush1.msra.mxu0 0.0
        %3297 = vmatprep.subr.mxu0 0.0
        %3298 = vmatpush1.msra.mxu0 0.0
        %3299 = vmatprep.subr.mxu0 0.0
        %3300 = vmatpush1.msra.mxu0 0.0
        %3301 = vmatprep.subr.mxu0 0.0
        %3302 = vmatpush1.msra.mxu0 0.0
        %3303 = vmatprep.subr.mxu0 0.0
        %3304 = vmatpush1.msra.mxu0 0.0
        %3305 = vmatprep.subr.mxu0 0.0
        %3306 = vmatpush1.msra.mxu0 0.0
        %3307 = vmatprep.subr.mxu0 0.0
        %3308 = vmatpush1.msra.mxu0 0.0
        %3309 = vmatprep.subr.mxu0 0.0
        %3310 = vmatpush1.msra.mxu0 0.0
        %3311 = vmatprep.subr.mxu0 0.0
        %3312 = vmatpush1.msra.mxu0 0.0
        %3313 = vmatprep.subr.mxu0 0.0
        %3314 = vmatpush1.msra.mxu0 0.0
        %3315 = vmatprep.subr.mxu0 0.0
        %3316 = vmatpush1.msra.mxu0 0.0
        %3317 = vmatprep.subr.mxu0 0.0
        %3318 = vmatpush1.msra.mxu0 0.0
        %3319 = vmatprep.subr.mxu0 0.0
        %3320 = vmatpush1.msra.mxu0 0.0
        %3321 = vmatprep.subr.mxu0 0.0
        %3322 = vmatpush1.msra.mxu0 0.0
        %3323 = vmatprep.subr.mxu0 0.0
        %3324 = vmatpush1.msra.mxu0 0.0
        %3325 = vmatprep.subr.mxu0 0.0
        %3326 = vmatpush1.msra.mxu0 0.0
        %3327 = vmatprep.subr.mxu0 0.0
        %3328 = vmatpush1.msra.mxu0 0.0
        %3329 = vmatprep.subr.mxu0 0.0
        %3330 = vmatpush1.msra.mxu0 0.0
        %3331 = vmatprep.subr.mxu0 0.0
        %3332 = vmatpush1.msra.mxu0 0.0
        %3333 = vmatprep.subr.mxu0 0.0
        %3334 = vmatpush1.msra.mxu0 0.0
        %3335 = vmatprep.subr.mxu0 0.0
        %3336 = vmatpush1.msra.mxu0 0.0
        %3337 = vmatprep.subr.mxu0 0.0
        %3338 = vmatpush1.msra.mxu0 0.0
        %3339 = vmatprep.subr.mxu0 0.0
        %3340 = vmatpush1.msra.mxu0 0.0
        %3341 = vmatprep.subr.mxu0 0.0
        %3342 = vmatpush1.msra.mxu0 0.0
        %3343 = vmatprep.subr.mxu0 0.0
        %3344 = vmatpush1.msra.mxu0 0.0
        %3345 = vmatprep.subr.mxu0 0.0
        %3346 = vmatpush1.msra.mxu0 0.0
        %3347 = vmatprep.subr.mxu0 0.0
        %3348 = vmatpush1.msra.mxu0 0.0
        %3349 = vmatprep.mubr.f32.mxu0 0.0
        %v3350 = vand.u32 %v2542, 4294901760
        %3351 = vmatmul.mubr.f32.gmra.mrb[0].mxu0 %v3350
        %v3352 = vpop.f32.mrb[0].mxu0
        %v3353 = vadd.f32 %v3228, %v3352
        %v3354 = vpop.f32.mrb[0].mxu0
        %v3355 = vadd.f32 %v3230, %v3354
        %3356 = vmatprep.mubr.f32.mxu0 0.0
        %v3357 = vand.u32 %v2545, 4294901760
        %3358 = vmatmul.mubr.f32.gmra.mrb[0].mxu0 %v3357
        %v3359 = vpop.f32.mrb[0].mxu0
        %v3360 = vadd.f32 %v3235, %v3359
        %v3361 = vpop.f32.mrb[0].mxu0
        %v3362 = vadd.f32 %v3237, %v3361
        %3363 = vmatprep.mubr.f32.mxu0 0.0
        %v3364 = vand.u32 %v2548, 4294901760
        %3365 = vmatmul.mubr.f32.gmra.mrb[0].mxu0 %v3364
        %v3366 = vpop.f32.mrb[0].mxu0
        %v3367 = vadd.f32 %v3242, %v3366
        %v3368 = vpop.f32.mrb[0].mxu0
        %v3369 = vadd.f32 %v3244, %v3368
        %3370 = vmatprep.mubr.f32.mxu0 0.0
        %v3371 = vand.u32 %v2551, 4294901760
        %3372 = vmatmul.mubr.f32.gmra.mrb[0].mxu0 %v3371
        %v3373 = vpop.f32.mrb[0].mxu0
        %v3374 = vadd.f32 %v3249, %v3373
        %v3375 = vpop.f32.mrb[0].mxu0
        %v3376 = vadd.f32 %v3251, %v3375
        %3377 = vmatprep.mubr.f32.mxu0 0.0
        %v3378 = vand.u32 %v2554, 4294901760
        %3379 = vmatmul.mubr.f32.gmra.mrb[0].mxu0 %v3378
        %v3380 = vpop.f32.mrb[0].mxu0
        %v3381 = vadd.f32 %v3256, %v3380
        %v3382 = vpop.f32.mrb[0].mxu0
        %v3383 = vadd.f32 %v3258, %v3382
        %3384 = vmatprep.mubr.f32.mxu0 0.0
        %v3385 = vand.u32 %v2557, 4294901760
        %3386 = vmatmul.mubr.f32.gmra.mrb[0].mxu0 %v3385
        %v3387 = vpop.f32.mrb[0].mxu0
        %v3388 = vadd.f32 %v3263, %v3387
        %v3389 = vpop.f32.mrb[0].mxu0
        %v3390 = vadd.f32 %v3265, %v3389
        %3391 = vmatprep.mubr.f32.mxu0 0.0
        %v3392 = vand.u32 %v2560, 4294901760
        %3393 = vmatmul.mubr.f32.gmra.mrb[0].mxu0 %v3392
        %v3394 = vpop.f32.mrb[0].mxu0
        %v3395 = vadd.f32 %v3270, %v3394
        %v3396 = vpop.f32.mrb[0].mxu0
        %v3397 = vadd.f32 %v3272, %v3396
        %3398 = vmatprep.mubr.f32.mxu0 0.0
        %v3399 = vand.u32 %v2563, 4294901760
        %3400 = vmatmul.mubr.f32.gmra.mrb[0].mxu0 %v3399
        %v3401 = vpop.f32.mrb[0].mxu0
        %v3402 = vadd.f32 %v3277, %v3401
        %v3403 = vpop.f32.mrb[0].mxu0
        %v3404 = vadd.f32 %v3279, %v3403
        %3405 = vdwg.mxu0
        %v3406 = vmul.f32 %v3353, %v245
        %v3407 = vmul.f32 %v3355, %v246
        %v3408 = vmul.f32 %v3360, %v247
        %v3409 = vmul.f32 %v3362, %v248
        %v3410 = vmul.f32 %v3367, %v249
        %v3411 = vmul.f32 %v3369, %v250
        %v3412 = vmul.f32 %v3374, %v251
        %v3413 = vmul.f32 %v3376, %v252
        %v3414 = vmul.f32 %v3381, %v253
        %v3415 = vmul.f32 %v3383, %v254
        %v3416 = vmul.f32 %v3388, %v255
        %v3417 = vmul.f32 %v3390, %v256
        %v3418 = vmul.f32 %v3395, %v257
        %v3419 = vmul.f32 %v3397, %v258
        %v3420 = vmul.f32 %v3402, %v259
        %v3421 = vmul.f32 %v3404, %v260
        %v3422 = vrot.slane %v3406, 4
        %v3423 = vadd.f32 %v3406, %v3422
        %v3424 = vrot.slane %v3423, 2
        %v3425 = vadd.f32 %v3423, %v3424
        %v3426 = vrot.slane %v3425, 1
        %v3427 = vadd.f32 %v3425, %v3426
        %v3428 = vsel %vm309, %v3407, 0.0
        %v3429 = vrot.slane %v3428, 4
        %v3430 = vadd.f32 %v3428, %v3429
        %v3431 = vrot.slane %v3430, 2
        %v3432 = vadd.f32 %v3430, %v3431
        %v3433 = vrot.slane %v3432, 1
        %v3434 = vadd.f32 %v3432, %v3433
        %v3435 = vrot.slane %v3408, 4
        %v3436 = vadd.f32 %v3408, %v3435
        %v3437 = vrot.slane %v3436, 2
        %v3438 = vadd.f32 %v3436, %v3437
        %v3439 = vrot.slane %v3438, 1
        %v3440 = vadd.f32 %v3438, %v3439
        %v3441 = vsel %vm309, %v3409, 0.0
        %v3442 = vrot.slane %v3441, 4
        %v3443 = vadd.f32 %v3441, %v3442
        %v3444 = vrot.slane %v3443, 2
        %v3445 = vadd.f32 %v3443, %v3444
        %v3446 = vrot.slane %v3445, 1
        %v3447 = vadd.f32 %v3445, %v3446
        %v3448 = vrot.slane %v3410, 4
        %v3449 = vadd.f32 %v3410, %v3448
        %v3450 = vrot.slane %v3449, 2
        %v3451 = vadd.f32 %v3449, %v3450
        %v3452 = vrot.slane %v3451, 1
        %v3453 = vadd.f32 %v3451, %v3452
        %v3454 = vsel %vm309, %v3411, 0.0
        %v3455 = vrot.slane %v3454, 4
        %v3456 = vadd.f32 %v3454, %v3455
        %v3457 = vrot.slane %v3456, 2
        %v3458 = vadd.f32 %v3456, %v3457
        %v3459 = vrot.slane %v3458, 1
        %v3460 = vadd.f32 %v3458, %v3459
        %v3461 = vrot.slane %v3412, 4
        %v3462 = vadd.f32 %v3412, %v3461
        %v3463 = vrot.slane %v3462, 2
        %v3464 = vadd.f32 %v3462, %v3463
        %v3465 = vrot.slane %v3464, 1
        %v3466 = vadd.f32 %v3464, %v3465
        %v3467 = vsel %vm309, %v3413, 0.0
        %v3468 = vrot.slane %v3467, 4
        %v3469 = vadd.f32 %v3467, %v3468
        %v3470 = vrot.slane %v3469, 2
        %v3471 = vadd.f32 %v3469, %v3470
        %v3472 = vrot.slane %v3471, 1
        %v3473 = vadd.f32 %v3471, %v3472
        %v3474 = vrot.slane %v3414, 4
        %v3475 = vadd.f32 %v3414, %v3474
        %v3476 = vrot.slane %v3475, 2
        %v3477 = vadd.f32 %v3475, %v3476
        %v3478 = vrot.slane %v3477, 1
        %v3479 = vadd.f32 %v3477, %v3478
        %v3480 = vsel %vm309, %v3415, 0.0
        %v3481 = vrot.slane %v3480, 4
        %v3482 = vadd.f32 %v3480, %v3481
        %v3483 = vrot.slane %v3482, 2
        %v3484 = vadd.f32 %v3482, %v3483
        %v3485 = vrot.slane %v3484, 1
        %v3486 = vadd.f32 %v3484, %v3485
        %v3487 = vrot.slane %v3416, 4
        %v3488 = vadd.f32 %v3416, %v3487
        %v3489 = vrot.slane %v3488, 2
        %v3490 = vadd.f32 %v3488, %v3489
        %v3491 = vrot.slane %v3490, 1
        %v3492 = vadd.f32 %v3490, %v3491
        %v3493 = vsel %vm309, %v3417, 0.0
        %v3494 = vrot.slane %v3493, 4
        %v3495 = vadd.f32 %v3493, %v3494
        %v3496 = vrot.slane %v3495, 2
        %v3497 = vadd.f32 %v3495, %v3496
        %v3498 = vrot.slane %v3497, 1
        %v3499 = vadd.f32 %v3497, %v3498
        %v3500 = vrot.slane %v3418, 4
        %v3501 = vadd.f32 %v3418, %v3500
        %v3502 = vrot.slane %v3501, 2
        %v3503 = vadd.f32 %v3501, %v3502
        %v3504 = vrot.slane %v3503, 1
        %v3505 = vadd.f32 %v3503, %v3504
        %v3506 = vsel %vm309, %v3419, 0.0
        %v3507 = vrot.slane %v3506, 4
        %v3508 = vadd.f32 %v3506, %v3507
        %v3509 = vrot.slane %v3508, 2
        %v3510 = vadd.f32 %v3508, %v3509
        %v3511 = vrot.slane %v3510, 1
        %v3512 = vadd.f32 %v3510, %v3511
        %v3513 = vrot.slane %v3420, 4
        %v3514 = vadd.f32 %v3420, %v3513
        %v3515 = vrot.slane %v3514, 2
        %v3516 = vadd.f32 %v3514, %v3515
        %v3517 = vrot.slane %v3516, 1
        %v3518 = vadd.f32 %v3516, %v3517
        %v3519 = vsel %vm309, %v3421, 0.0
        %v3520 = vrot.slane %v3519, 4
        %v3521 = vadd.f32 %v3519, %v3520
        %v3522 = vrot.slane %v3521, 2
        %v3523 = vadd.f32 %v3521, %v3522
        %v3524 = vrot.slane %v3523, 1
        %v3525 = vadd.f32 %v3523, %v3524
        %v3526 = vmul.f32 %v3427, %v3427
        %v3527 = vmul.f32 %v3434, %v3434
        %v3528 = vmul.f32 %v3440, %v3440
        %v3529 = vmul.f32 %v3447, %v3447
        %v3530 = vmul.f32 %v3453, %v3453
        %v3531 = vmul.f32 %v3460, %v3460
        %v3532 = vmul.f32 %v3466, %v3466
        %v3533 = vmul.f32 %v3473, %v3473
        %v3534 = vmul.f32 %v3479, %v3479
        %v3535 = vmul.f32 %v3486, %v3486
        %v3536 = vmul.f32 %v3492, %v3492
        %v3537 = vmul.f32 %v3499, %v3499
        %v3538 = vmul.f32 %v3505, %v3505
        %v3539 = vmul.f32 %v3512, %v3512
        %v3540 = vmul.f32 %v3518, %v3518
        %v3541 = vmul.f32 %v3525, %v3525
        %v3558 = vsel %vm440, %v3528, %v3526
        %v3559 = vsel %vm442, %v3530, %v3558
        %v3560 = vsel %vm444, %v3532, %v3559
        %v3561 = vsel %vm446, %v3534, %v3560
        %v3562 = vsel %vm448, %v3536, %v3561
        %v3563 = vsel %vm450, %v3538, %v3562
        %v3564 = vsel %vm452, %v3540, %v3563
        %v3565 = vsel %vm440, %v3529, %v3527
        %v3566 = vsel %vm442, %v3531, %v3565
        %v3567 = vsel %vm444, %v3533, %v3566
        %v3568 = vsel %vm446, %v3535, %v3567
        %v3569 = vsel %vm448, %v3537, %v3568
        %v3570 = vsel %vm450, %v3539, %v3569
        %v3571 = vsel %vm452, %v3541, %v3570
        %v3573 = vsel %vm309, %v3571, 0
        %3575 = vmatprep.subr.mxu0 0.0
        %v3576 = vand.u32 %v265, 4294901760
        %3577 = vmatpush1.msra.mxu0 %v3576
        %3578 = vmatprep.subr.mxu0 0.0
        %v3579 = vand.u32 %v266, 4294901760
        %3580 = vmatpush1.msra.mxu0 %v3579
        %3581 = vmatprep.subr.mxu0 0.0
        %v3582 = vand.u32 %v267, 4294901760
        %3583 = vmatpush1.msra.mxu0 %v3582
        %3584 = vmatprep.subr.mxu0 0.0
        %v3585 = vand.u32 %v268, 4294901760
        %3586 = vmatpush1.msra.mxu0 %v3585
        %3587 = vmatprep.subr.mxu0 0.0
        %v3588 = vand.u32 %v269, 4294901760
        %3589 = vmatpush1.msra.mxu0 %v3588
        %3590 = vmatprep.subr.mxu0 0.0
        %v3591 = vand.u32 %v270, 4294901760
        %3592 = vmatpush1.msra.mxu0 %v3591
        %3593 = vmatprep.subr.mxu0 0.0
        %v3594 = vand.u32 %v271, 4294901760
        %3595 = vmatpush1.msra.mxu0 %v3594
        %3596 = vmatprep.subr.mxu0 0.0
        %v3597 = vand.u32 %v272, 4294901760
        %3598 = vmatpush1.msra.mxu0 %v3597
        %3599 = vmatprep.subr.mxu0 0.0
        %v3600 = vand.u32 %v273, 4294901760
        %3601 = vmatpush1.msra.mxu0 %v3600
        %3602 = vmatprep.subr.mxu0 0.0
        %v3603 = vand.u32 %v274, 4294901760
        %3604 = vmatpush1.msra.mxu0 %v3603
        %3605 = vmatprep.subr.mxu0 0.0
        %v3606 = vand.u32 %v275, 4294901760
        %3607 = vmatpush1.msra.mxu0 %v3606
        %3608 = vmatprep.subr.mxu0 0.0
        %v3609 = vand.u32 %v276, 4294901760
        %3610 = vmatpush1.msra.mxu0 %v3609
        %3611 = vmatprep.subr.mxu0 0.0
        %v3612 = vand.u32 %v277, 4294901760
        %3613 = vmatpush1.msra.mxu0 %v3612
        %3614 = vmatprep.subr.mxu0 0.0
        %v3615 = vand.u32 %v278, 4294901760
        %3616 = vmatpush1.msra.mxu0 %v3615
        %3617 = vmatprep.subr.mxu0 0.0
        %v3618 = vand.u32 %v279, 4294901760
        %3619 = vmatpush1.msra.mxu0 %v3618
        %3620 = vmatprep.subr.mxu0 0.0
        %v3621 = vand.u32 %v280, 4294901760
        %3622 = vmatpush1.msra.mxu0 %v3621
        %3623 = vmatprep.subr.mxu0 0.0
        %v3624 = vand.u32 %v281, 4294901760
        %3625 = vmatpush1.msra.mxu0 %v3624
        %3626 = vmatprep.subr.mxu0 0.0
        %v3627 = vand.u32 %v282, 4294901760
        %3628 = vmatpush1.msra.mxu0 %v3627
        %3629 = vmatprep.subr.mxu0 0.0
        %v3630 = vand.u32 %v283, 4294901760
        %3631 = vmatpush1.msra.mxu0 %v3630
        %3632 = vmatprep.subr.mxu0 0.0
        %v3633 = vand.u32 %v284, 4294901760
        %3634 = vmatpush1.msra.mxu0 %v3633
        %3635 = vmatprep.subr.mxu0 0.0
        %3636 = vmatpush1.msra.mxu0 0.0
        %3637 = vmatprep.subr.mxu0 0.0
        %3638 = vmatpush1.msra.mxu0 0.0
        %3639 = vmatprep.subr.mxu0 0.0
        %3640 = vmatpush1.msra.mxu0 0.0
        %3641 = vmatprep.subr.mxu0 0.0
        %3642 = vmatpush1.msra.mxu0 0.0
        %3643 = vmatprep.subr.mxu0 0.0
        %3644 = vmatpush1.msra.mxu0 0.0
        %3645 = vmatprep.subr.mxu0 0.0
        %3646 = vmatpush1.msra.mxu0 0.0
        %3647 = vmatprep.subr.mxu0 0.0
        %3648 = vmatpush1.msra.mxu0 0.0
        %3649 = vmatprep.subr.mxu0 0.0
        %3650 = vmatpush1.msra.mxu0 0.0
        %3651 = vmatprep.subr.mxu0 0.0
        %3652 = vmatpush1.msra.mxu0 0.0
        %3653 = vmatprep.subr.mxu0 0.0
        %3654 = vmatpush1.msra.mxu0 0.0
        %3655 = vmatprep.subr.mxu0 0.0
        %3656 = vmatpush1.msra.mxu0 0.0
        %3657 = vmatprep.subr.mxu0 0.0
        %3658 = vmatpush1.msra.mxu0 0.0
        %v3659 = vand.u32 %v3573, 4294901760
        %v3660 = vsub.f32 %v3573, %v3659
        %v3661 = vand.u32 %v3660, 4294901760
        %v3662 = vsub.f32 %v3660, %v3661
        %v3663 = vand.u32 %v3662, 4294901760
        %3664 = vmatprep.mubr.f32.mxu0 %v3663
        %v3665 = vand.u32 %v3564, 4294901760
        %v3666 = vsub.f32 %v3564, %v3665
        %v3667 = vand.u32 %v3666, 4294901760
        %v3668 = vsub.f32 %v3666, %v3667
        %v3669 = vand.u32 %v3668, 4294901760
        %3670 = vmatmul.mubr.f32.gmra.mrb[0].mxu0 %v3669
        %v3671 = vpop.f32.mrb[0].mxu0
        %v3672 = vadd.f32 0.0, %v3671
        %v3673 = vpop.f32.mrb[0].mxu0
        %3674 = vdwg.mxu0
        %3675 = vmatprep.subr.mxu0 0.0
        %v3676 = vand.u32 %v265, 4294901760
        %v3677 = vsub.f32 %v265, %v3676
        %v3678 = vand.u32 %v3677, 4294901760
        %v3679 = vsub.f32 %v3677, %v3678
        %v3680 = vand.u32 %v3679, 4294901760
        %3681 = vmatpush1.msra.mxu0 %v3680
        %3682 = vmatprep.subr.mxu0 0.0
        %v3683 = vand.u32 %v266, 4294901760
        %v3684 = vsub.f32 %v266, %v3683
        %v3685 = vand.u32 %v3684, 4294901760
        %v3686 = vsub.f32 %v3684, %v3685
        %v3687 = vand.u32 %v3686, 4294901760
        %3688 = vmatpush1.msra.mxu0 %v3687
        %3689 = vmatprep.subr.mxu0 0.0
        %v3690 = vand.u32 %v267, 4294901760
        %v3691 = vsub.f32 %v267, %v3690
        %v3692 = vand.u32 %v3691, 4294901760
        %v3693 = vsub.f32 %v3691, %v3692
        %v3694 = vand.u32 %v3693, 4294901760
        %3695 = vmatpush1.msra.mxu0 %v3694
        %3696 = vmatprep.subr.mxu0 0.0
        %v3697 = vand.u32 %v268, 4294901760
        %v3698 = vsub.f32 %v268, %v3697
        %v3699 = vand.u32 %v3698, 4294901760
        %v3700 = vsub.f32 %v3698, %v3699
        %v3701 = vand.u32 %v3700, 4294901760
        %3702 = vmatpush1.msra.mxu0 %v3701
        %3703 = vmatprep.subr.mxu0 0.0
        %v3704 = vand.u32 %v269, 4294901760
        %v3705 = vsub.f32 %v269, %v3704
        %v3706 = vand.u32 %v3705, 4294901760
        %v3707 = vsub.f32 %v3705, %v3706
        %v3708 = vand.u32 %v3707, 4294901760
        %3709 = vmatpush1.msra.mxu0 %v3708
        %3710 = vmatprep.subr.mxu0 0.0
        %v3711 = vand.u32 %v270, 4294901760
        %v3712 = vsub.f32 %v270, %v3711
        %v3713 = vand.u32 %v3712, 4294901760
        %v3714 = vsub.f32 %v3712, %v3713
        %v3715 = vand.u32 %v3714, 4294901760
        %3716 = vmatpush1.msra.mxu0 %v3715
        %3717 = vmatprep.subr.mxu0 0.0
        %v3718 = vand.u32 %v271, 4294901760
        %v3719 = vsub.f32 %v271, %v3718
        %v3720 = vand.u32 %v3719, 4294901760
        %v3721 = vsub.f32 %v3719, %v3720
        %v3722 = vand.u32 %v3721, 4294901760
        %3723 = vmatpush1.msra.mxu0 %v3722
        %3724 = vmatprep.subr.mxu0 0.0
        %v3725 = vand.u32 %v272, 4294901760
        %v3726 = vsub.f32 %v272, %v3725
        %v3727 = vand.u32 %v3726, 4294901760
        %v3728 = vsub.f32 %v3726, %v3727
        %v3729 = vand.u32 %v3728, 4294901760
        %3730 = vmatpush1.msra.mxu0 %v3729
        %3731 = vmatprep.subr.mxu0 0.0
        %v3732 = vand.u32 %v273, 4294901760
        %v3733 = vsub.f32 %v273, %v3732
        %v3734 = vand.u32 %v3733, 4294901760
        %v3735 = vsub.f32 %v3733, %v3734
        %v3736 = vand.u32 %v3735, 4294901760
        %3737 = vmatpush1.msra.mxu0 %v3736
        %3738 = vmatprep.subr.mxu0 0.0
        %v3739 = vand.u32 %v274, 4294901760
        %v3740 = vsub.f32 %v274, %v3739
        %v3741 = vand.u32 %v3740, 4294901760
        %v3742 = vsub.f32 %v3740, %v3741
        %v3743 = vand.u32 %v3742, 4294901760
        %3744 = vmatpush1.msra.mxu0 %v3743
        %3745 = vmatprep.subr.mxu0 0.0
        %v3746 = vand.u32 %v275, 4294901760
        %v3747 = vsub.f32 %v275, %v3746
        %v3748 = vand.u32 %v3747, 4294901760
        %v3749 = vsub.f32 %v3747, %v3748
        %v3750 = vand.u32 %v3749, 4294901760
        %3751 = vmatpush1.msra.mxu0 %v3750
        %3752 = vmatprep.subr.mxu0 0.0
        %v3753 = vand.u32 %v276, 4294901760
        %v3754 = vsub.f32 %v276, %v3753
        %v3755 = vand.u32 %v3754, 4294901760
        %v3756 = vsub.f32 %v3754, %v3755
        %v3757 = vand.u32 %v3756, 4294901760
        %3758 = vmatpush1.msra.mxu0 %v3757
        %3759 = vmatprep.subr.mxu0 0.0
        %v3760 = vand.u32 %v277, 4294901760
        %v3761 = vsub.f32 %v277, %v3760
        %v3762 = vand.u32 %v3761, 4294901760
        %v3763 = vsub.f32 %v3761, %v3762
        %v3764 = vand.u32 %v3763, 4294901760
        %3765 = vmatpush1.msra.mxu0 %v3764
        %3766 = vmatprep.subr.mxu0 0.0
        %v3767 = vand.u32 %v278, 4294901760
        %v3768 = vsub.f32 %v278, %v3767
        %v3769 = vand.u32 %v3768, 4294901760
        %v3770 = vsub.f32 %v3768, %v3769
        %v3771 = vand.u32 %v3770, 4294901760
        %3772 = vmatpush1.msra.mxu0 %v3771
        %3773 = vmatprep.subr.mxu0 0.0
        %v3774 = vand.u32 %v279, 4294901760
        %v3775 = vsub.f32 %v279, %v3774
        %v3776 = vand.u32 %v3775, 4294901760
        %v3777 = vsub.f32 %v3775, %v3776
        %v3778 = vand.u32 %v3777, 4294901760
        %3779 = vmatpush1.msra.mxu0 %v3778
        %3780 = vmatprep.subr.mxu0 0.0
        %v3781 = vand.u32 %v280, 4294901760
        %v3782 = vsub.f32 %v280, %v3781
        %v3783 = vand.u32 %v3782, 4294901760
        %v3784 = vsub.f32 %v3782, %v3783
        %v3785 = vand.u32 %v3784, 4294901760
        %3786 = vmatpush1.msra.mxu0 %v3785
        %3787 = vmatprep.subr.mxu0 0.0
        %v3788 = vand.u32 %v281, 4294901760
        %v3789 = vsub.f32 %v281, %v3788
        %v3790 = vand.u32 %v3789, 4294901760
        %v3791 = vsub.f32 %v3789, %v3790
        %v3792 = vand.u32 %v3791, 4294901760
        %3793 = vmatpush1.msra.mxu0 %v3792
        %3794 = vmatprep.subr.mxu0 0.0
        %v3795 = vand.u32 %v282, 4294901760
        %v3796 = vsub.f32 %v282, %v3795
        %v3797 = vand.u32 %v3796, 4294901760
        %v3798 = vsub.f32 %v3796, %v3797
        %v3799 = vand.u32 %v3798, 4294901760
        %3800 = vmatpush1.msra.mxu0 %v3799
        %3801 = vmatprep.subr.mxu0 0.0
        %v3802 = vand.u32 %v283, 4294901760
        %v3803 = vsub.f32 %v283, %v3802
        %v3804 = vand.u32 %v3803, 4294901760
        %v3805 = vsub.f32 %v3803, %v3804
        %v3806 = vand.u32 %v3805, 4294901760
        %3807 = vmatpush1.msra.mxu0 %v3806
        %3808 = vmatprep.subr.mxu0 0.0
        %v3809 = vand.u32 %v284, 4294901760
        %v3810 = vsub.f32 %v284, %v3809
        %v3811 = vand.u32 %v3810, 4294901760
        %v3812 = vsub.f32 %v3810, %v3811
        %v3813 = vand.u32 %v3812, 4294901760
        %3814 = vmatpush1.msra.mxu0 %v3813
        %3815 = vmatprep.subr.mxu0 0.0
        %3816 = vmatpush1.msra.mxu0 0.0
        %3817 = vmatprep.subr.mxu0 0.0
        %3818 = vmatpush1.msra.mxu0 0.0
        %3819 = vmatprep.subr.mxu0 0.0
        %3820 = vmatpush1.msra.mxu0 0.0
        %3821 = vmatprep.subr.mxu0 0.0
        %3822 = vmatpush1.msra.mxu0 0.0
        %3823 = vmatprep.subr.mxu0 0.0
        %3824 = vmatpush1.msra.mxu0 0.0
        %3825 = vmatprep.subr.mxu0 0.0
        %3826 = vmatpush1.msra.mxu0 0.0
        %3827 = vmatprep.subr.mxu0 0.0
        %3828 = vmatpush1.msra.mxu0 0.0
        %3829 = vmatprep.subr.mxu0 0.0
        %3830 = vmatpush1.msra.mxu0 0.0
        %3831 = vmatprep.subr.mxu0 0.0
        %3832 = vmatpush1.msra.mxu0 0.0
        %3833 = vmatprep.subr.mxu0 0.0
        %3834 = vmatpush1.msra.mxu0 0.0
        %3835 = vmatprep.subr.mxu0 0.0
        %3836 = vmatpush1.msra.mxu0 0.0
        %3837 = vmatprep.subr.mxu0 0.0
        %3838 = vmatpush1.msra.mxu0 0.0
        %v3839 = vand.u32 %v3573, 4294901760
        %3840 = vmatprep.mubr.f32.mxu0 %v3839
        %v3841 = vand.u32 %v3564, 4294901760
        %3842 = vmatmul.mubr.f32.gmra.mrb[0].mxu0 %v3841
        %v3843 = vpop.f32.mrb[0].mxu0
        %v3844 = vadd.f32 %v3672, %v3843
        %v3845 = vpop.f32.mrb[0].mxu0
        %3846 = vdwg.mxu0
        %3847 = vmatprep.subr.mxu0 0.0
        %v3848 = vand.u32 %v265, 4294901760
        %v3849 = vsub.f32 %v265, %v3848
        %3850 = vmatpush1.msra.mxu0 %v3849
        %3851 = vmatprep.subr.mxu0 0.0
        %v3852 = vand.u32 %v266, 4294901760
        %v3853 = vsub.f32 %v266, %v3852
        %3854 = vmatpush1.msra.mxu0 %v3853
        %3855 = vmatprep.subr.mxu0 0.0
        %v3856 = vand.u32 %v267, 4294901760
        %v3857 = vsub.f32 %v267, %v3856
        %3858 = vmatpush1.msra.mxu0 %v3857
        %3859 = vmatprep.subr.mxu0 0.0
        %v3860 = vand.u32 %v268, 4294901760
        %v3861 = vsub.f32 %v268, %v3860
        %3862 = vmatpush1.msra.mxu0 %v3861
        %3863 = vmatprep.subr.mxu0 0.0
        %v3864 = vand.u32 %v269, 4294901760
        %v3865 = vsub.f32 %v269, %v3864
        %3866 = vmatpush1.msra.mxu0 %v3865
        %3867 = vmatprep.subr.mxu0 0.0
        %v3868 = vand.u32 %v270, 4294901760
        %v3869 = vsub.f32 %v270, %v3868
        %3870 = vmatpush1.msra.mxu0 %v3869
        %3871 = vmatprep.subr.mxu0 0.0
        %v3872 = vand.u32 %v271, 4294901760
        %v3873 = vsub.f32 %v271, %v3872
        %3874 = vmatpush1.msra.mxu0 %v3873
        %3875 = vmatprep.subr.mxu0 0.0
        %v3876 = vand.u32 %v272, 4294901760
        %v3877 = vsub.f32 %v272, %v3876
        %3878 = vmatpush1.msra.mxu0 %v3877
        %3879 = vmatprep.subr.mxu0 0.0
        %v3880 = vand.u32 %v273, 4294901760
        %v3881 = vsub.f32 %v273, %v3880
        %3882 = vmatpush1.msra.mxu0 %v3881
        %3883 = vmatprep.subr.mxu0 0.0
        %v3884 = vand.u32 %v274, 4294901760
        %v3885 = vsub.f32 %v274, %v3884
        %3886 = vmatpush1.msra.mxu0 %v3885
        %3887 = vmatprep.subr.mxu0 0.0
        %v3888 = vand.u32 %v275, 4294901760
        %v3889 = vsub.f32 %v275, %v3888
        %3890 = vmatpush1.msra.mxu0 %v3889
        %3891 = vmatprep.subr.mxu0 0.0
        %v3892 = vand.u32 %v276, 4294901760
        %v3893 = vsub.f32 %v276, %v3892
        %3894 = vmatpush1.msra.mxu0 %v3893
        %3895 = vmatprep.subr.mxu0 0.0
        %v3896 = vand.u32 %v277, 4294901760
        %v3897 = vsub.f32 %v277, %v3896
        %3898 = vmatpush1.msra.mxu0 %v3897
        %3899 = vmatprep.subr.mxu0 0.0
        %v3900 = vand.u32 %v278, 4294901760
        %v3901 = vsub.f32 %v278, %v3900
        %3902 = vmatpush1.msra.mxu0 %v3901
        %3903 = vmatprep.subr.mxu0 0.0
        %v3904 = vand.u32 %v279, 4294901760
        %v3905 = vsub.f32 %v279, %v3904
        %3906 = vmatpush1.msra.mxu0 %v3905
        %3907 = vmatprep.subr.mxu0 0.0
        %v3908 = vand.u32 %v280, 4294901760
        %v3909 = vsub.f32 %v280, %v3908
        %3910 = vmatpush1.msra.mxu0 %v3909
        %3911 = vmatprep.subr.mxu0 0.0
        %v3912 = vand.u32 %v281, 4294901760
        %v3913 = vsub.f32 %v281, %v3912
        %3914 = vmatpush1.msra.mxu0 %v3913
        %3915 = vmatprep.subr.mxu0 0.0
        %v3916 = vand.u32 %v282, 4294901760
        %v3917 = vsub.f32 %v282, %v3916
        %3918 = vmatpush1.msra.mxu0 %v3917
        %3919 = vmatprep.subr.mxu0 0.0
        %v3920 = vand.u32 %v283, 4294901760
        %v3921 = vsub.f32 %v283, %v3920
        %3922 = vmatpush1.msra.mxu0 %v3921
        %3923 = vmatprep.subr.mxu0 0.0
        %v3924 = vand.u32 %v284, 4294901760
        %v3925 = vsub.f32 %v284, %v3924
        %3926 = vmatpush1.msra.mxu0 %v3925
        %3927 = vmatprep.subr.mxu0 0.0
        %3928 = vmatpush1.msra.mxu0 0.0
        %3929 = vmatprep.subr.mxu0 0.0
        %3930 = vmatpush1.msra.mxu0 0.0
        %3931 = vmatprep.subr.mxu0 0.0
        %3932 = vmatpush1.msra.mxu0 0.0
        %3933 = vmatprep.subr.mxu0 0.0
        %3934 = vmatpush1.msra.mxu0 0.0
        %3935 = vmatprep.subr.mxu0 0.0
        %3936 = vmatpush1.msra.mxu0 0.0
        %3937 = vmatprep.subr.mxu0 0.0
        %3938 = vmatpush1.msra.mxu0 0.0
        %3939 = vmatprep.subr.mxu0 0.0
        %3940 = vmatpush1.msra.mxu0 0.0
        %3941 = vmatprep.subr.mxu0 0.0
        %3942 = vmatpush1.msra.mxu0 0.0
        %3943 = vmatprep.subr.mxu0 0.0
        %3944 = vmatpush1.msra.mxu0 0.0
        %3945 = vmatprep.subr.mxu0 0.0
        %3946 = vmatpush1.msra.mxu0 0.0
        %3947 = vmatprep.subr.mxu0 0.0
        %3948 = vmatpush1.msra.mxu0 0.0
        %3949 = vmatprep.subr.mxu0 0.0
        %3950 = vmatpush1.msra.mxu0 0.0
        %v3951 = vand.u32 %v3573, 4294901760
        %v3952 = vsub.f32 %v3573, %v3951
        %3953 = vmatprep.mubr.f32.mxu0 %v3952
        %v3954 = vand.u32 %v3564, 4294901760
        %v3955 = vsub.f32 %v3564, %v3954
        %3956 = vmatmul.mubr.f32.gmra.mrb[0].mxu0 %v3955
        %v3957 = vpop.f32.mrb[0].mxu0
        %v3958 = vadd.f32 %v3844, %v3957
        %v3959 = vpop.f32.mrb[0].mxu0
        %3960 = vdwg.mxu0
        %3961 = vmatprep.subr.mxu0 0.0
        %v3962 = vand.u32 %v265, 4294901760
        %3963 = vmatpush1.msra.mxu0 %v3962
        %3964 = vmatprep.subr.mxu0 0.0
        %v3965 = vand.u32 %v266, 4294901760
        %3966 = vmatpush1.msra.mxu0 %v3965
        %3967 = vmatprep.subr.mxu0 0.0
        %v3968 = vand.u32 %v267, 4294901760
        %3969 = vmatpush1.msra.mxu0 %v3968
        %3970 = vmatprep.subr.mxu0 0.0
        %v3971 = vand.u32 %v268, 4294901760
        %3972 = vmatpush1.msra.mxu0 %v3971
        %3973 = vmatprep.subr.mxu0 0.0
        %v3974 = vand.u32 %v269, 4294901760
        %3975 = vmatpush1.msra.mxu0 %v3974
        %3976 = vmatprep.subr.mxu0 0.0
        %v3977 = vand.u32 %v270, 4294901760
        %3978 = vmatpush1.msra.mxu0 %v3977
        %3979 = vmatprep.subr.mxu0 0.0
        %v3980 = vand.u32 %v271, 4294901760
        %3981 = vmatpush1.msra.mxu0 %v3980
        %3982 = vmatprep.subr.mxu0 0.0
        %v3983 = vand.u32 %v272, 4294901760
        %3984 = vmatpush1.msra.mxu0 %v3983
        %3985 = vmatprep.subr.mxu0 0.0
        %v3986 = vand.u32 %v273, 4294901760
        %3987 = vmatpush1.msra.mxu0 %v3986
        %3988 = vmatprep.subr.mxu0 0.0
        %v3989 = vand.u32 %v274, 4294901760
        %3990 = vmatpush1.msra.mxu0 %v3989
        %3991 = vmatprep.subr.mxu0 0.0
        %v3992 = vand.u32 %v275, 4294901760
        %3993 = vmatpush1.msra.mxu0 %v3992
        %3994 = vmatprep.subr.mxu0 0.0
        %v3995 = vand.u32 %v276, 4294901760
        %3996 = vmatpush1.msra.mxu0 %v3995
        %3997 = vmatprep.subr.mxu0 0.0
        %v3998 = vand.u32 %v277, 4294901760
        %3999 = vmatpush1.msra.mxu0 %v3998
        %4000 = vmatprep.subr.mxu0 0.0
        %v4001 = vand.u32 %v278, 4294901760
        %4002 = vmatpush1.msra.mxu0 %v4001
        %4003 = vmatprep.subr.mxu0 0.0
        %v4004 = vand.u32 %v279, 4294901760
        %4005 = vmatpush1.msra.mxu0 %v4004
        %4006 = vmatprep.subr.mxu0 0.0
        %v4007 = vand.u32 %v280, 4294901760
        %4008 = vmatpush1.msra.mxu0 %v4007
        %4009 = vmatprep.subr.mxu0 0.0
        %v4010 = vand.u32 %v281, 4294901760
        %4011 = vmatpush1.msra.mxu0 %v4010
        %4012 = vmatprep.subr.mxu0 0.0
        %v4013 = vand.u32 %v282, 4294901760
        %4014 = vmatpush1.msra.mxu0 %v4013
        %4015 = vmatprep.subr.mxu0 0.0
        %v4016 = vand.u32 %v283, 4294901760
        %4017 = vmatpush1.msra.mxu0 %v4016
        %4018 = vmatprep.subr.mxu0 0.0
        %v4019 = vand.u32 %v284, 4294901760
        %4020 = vmatpush1.msra.mxu0 %v4019
        %4021 = vmatprep.subr.mxu0 0.0
        %4022 = vmatpush1.msra.mxu0 0.0
        %4023 = vmatprep.subr.mxu0 0.0
        %4024 = vmatpush1.msra.mxu0 0.0
        %4025 = vmatprep.subr.mxu0 0.0
        %4026 = vmatpush1.msra.mxu0 0.0
        %4027 = vmatprep.subr.mxu0 0.0
        %4028 = vmatpush1.msra.mxu0 0.0
        %4029 = vmatprep.subr.mxu0 0.0
        %4030 = vmatpush1.msra.mxu0 0.0
        %4031 = vmatprep.subr.mxu0 0.0
        %4032 = vmatpush1.msra.mxu0 0.0
        %4033 = vmatprep.subr.mxu0 0.0
        %4034 = vmatpush1.msra.mxu0 0.0
        %4035 = vmatprep.subr.mxu0 0.0
        %4036 = vmatpush1.msra.mxu0 0.0
        %4037 = vmatprep.subr.mxu0 0.0
        %4038 = vmatpush1.msra.mxu0 0.0
        %4039 = vmatprep.subr.mxu0 0.0
        %4040 = vmatpush1.msra.mxu0 0.0
        %4041 = vmatprep.subr.mxu0 0.0
        %4042 = vmatpush1.msra.mxu0 0.0
        %4043 = vmatprep.subr.mxu0 0.0
        %4044 = vmatpush1.msra.mxu0 0.0
        %v4045 = vand.u32 %v3573, 4294901760
        %v4046 = vsub.f32 %v3573, %v4045
        %v4047 = vand.u32 %v4046, 4294901760
        %4048 = vmatprep.mubr.f32.mxu0 %v4047
        %v4049 = vand.u32 %v3564, 4294901760
        %v4050 = vsub.f32 %v3564, %v4049
        %v4051 = vand.u32 %v4050, 4294901760
        %4052 = vmatmul.mubr.f32.gmra.mrb[0].mxu0 %v4051
        %v4053 = vpop.f32.mrb[0].mxu0
        %v4054 = vadd.f32 %v3958, %v4053
        %v4055 = vpop.f32.mrb[0].mxu0
        %4056 = vdwg.mxu0
        %4057 = vmatprep.subr.mxu0 0.0
        %v4058 = vand.u32 %v265, 4294901760
        %v4059 = vsub.f32 %v265, %v4058
        %v4060 = vand.u32 %v4059, 4294901760
        %4061 = vmatpush1.msra.mxu0 %v4060
        %4062 = vmatprep.subr.mxu0 0.0
        %v4063 = vand.u32 %v266, 4294901760
        %v4064 = vsub.f32 %v266, %v4063
        %v4065 = vand.u32 %v4064, 4294901760
        %4066 = vmatpush1.msra.mxu0 %v4065
        %4067 = vmatprep.subr.mxu0 0.0
        %v4068 = vand.u32 %v267, 4294901760
        %v4069 = vsub.f32 %v267, %v4068
        %v4070 = vand.u32 %v4069, 4294901760
        %4071 = vmatpush1.msra.mxu0 %v4070
        %4072 = vmatprep.subr.mxu0 0.0
        %v4073 = vand.u32 %v268, 4294901760
        %v4074 = vsub.f32 %v268, %v4073
        %v4075 = vand.u32 %v4074, 4294901760
        %4076 = vmatpush1.msra.mxu0 %v4075
        %4077 = vmatprep.subr.mxu0 0.0
        %v4078 = vand.u32 %v269, 4294901760
        %v4079 = vsub.f32 %v269, %v4078
        %v4080 = vand.u32 %v4079, 4294901760
        %4081 = vmatpush1.msra.mxu0 %v4080
        %4082 = vmatprep.subr.mxu0 0.0
        %v4083 = vand.u32 %v270, 4294901760
        %v4084 = vsub.f32 %v270, %v4083
        %v4085 = vand.u32 %v4084, 4294901760
        %4086 = vmatpush1.msra.mxu0 %v4085
        %4087 = vmatprep.subr.mxu0 0.0
        %v4088 = vand.u32 %v271, 4294901760
        %v4089 = vsub.f32 %v271, %v4088
        %v4090 = vand.u32 %v4089, 4294901760
        %4091 = vmatpush1.msra.mxu0 %v4090
        %4092 = vmatprep.subr.mxu0 0.0
        %v4093 = vand.u32 %v272, 4294901760
        %v4094 = vsub.f32 %v272, %v4093
        %v4095 = vand.u32 %v4094, 4294901760
        %4096 = vmatpush1.msra.mxu0 %v4095
        %4097 = vmatprep.subr.mxu0 0.0
        %v4098 = vand.u32 %v273, 4294901760
        %v4099 = vsub.f32 %v273, %v4098
        %v4100 = vand.u32 %v4099, 4294901760
        %4101 = vmatpush1.msra.mxu0 %v4100
        %4102 = vmatprep.subr.mxu0 0.0
        %v4103 = vand.u32 %v274, 4294901760
        %v4104 = vsub.f32 %v274, %v4103
        %v4105 = vand.u32 %v4104, 4294901760
        %4106 = vmatpush1.msra.mxu0 %v4105
        %4107 = vmatprep.subr.mxu0 0.0
        %v4108 = vand.u32 %v275, 4294901760
        %v4109 = vsub.f32 %v275, %v4108
        %v4110 = vand.u32 %v4109, 4294901760
        %4111 = vmatpush1.msra.mxu0 %v4110
        %4112 = vmatprep.subr.mxu0 0.0
        %v4113 = vand.u32 %v276, 4294901760
        %v4114 = vsub.f32 %v276, %v4113
        %v4115 = vand.u32 %v4114, 4294901760
        %4116 = vmatpush1.msra.mxu0 %v4115
        %4117 = vmatprep.subr.mxu0 0.0
        %v4118 = vand.u32 %v277, 4294901760
        %v4119 = vsub.f32 %v277, %v4118
        %v4120 = vand.u32 %v4119, 4294901760
        %4121 = vmatpush1.msra.mxu0 %v4120
        %4122 = vmatprep.subr.mxu0 0.0
        %v4123 = vand.u32 %v278, 4294901760
        %v4124 = vsub.f32 %v278, %v4123
        %v4125 = vand.u32 %v4124, 4294901760
        %4126 = vmatpush1.msra.mxu0 %v4125
        %4127 = vmatprep.subr.mxu0 0.0
        %v4128 = vand.u32 %v279, 4294901760
        %v4129 = vsub.f32 %v279, %v4128
        %v4130 = vand.u32 %v4129, 4294901760
        %4131 = vmatpush1.msra.mxu0 %v4130
        %4132 = vmatprep.subr.mxu0 0.0
        %v4133 = vand.u32 %v280, 4294901760
        %v4134 = vsub.f32 %v280, %v4133
        %v4135 = vand.u32 %v4134, 4294901760
        %4136 = vmatpush1.msra.mxu0 %v4135
        %4137 = vmatprep.subr.mxu0 0.0
        %v4138 = vand.u32 %v281, 4294901760
        %v4139 = vsub.f32 %v281, %v4138
        %v4140 = vand.u32 %v4139, 4294901760
        %4141 = vmatpush1.msra.mxu0 %v4140
        %4142 = vmatprep.subr.mxu0 0.0
        %v4143 = vand.u32 %v282, 4294901760
        %v4144 = vsub.f32 %v282, %v4143
        %v4145 = vand.u32 %v4144, 4294901760
        %4146 = vmatpush1.msra.mxu0 %v4145
        %4147 = vmatprep.subr.mxu0 0.0
        %v4148 = vand.u32 %v283, 4294901760
        %v4149 = vsub.f32 %v283, %v4148
        %v4150 = vand.u32 %v4149, 4294901760
        %4151 = vmatpush1.msra.mxu0 %v4150
        %4152 = vmatprep.subr.mxu0 0.0
        %v4153 = vand.u32 %v284, 4294901760
        %v4154 = vsub.f32 %v284, %v4153
        %v4155 = vand.u32 %v4154, 4294901760
        %4156 = vmatpush1.msra.mxu0 %v4155
        %4157 = vmatprep.subr.mxu0 0.0
        %4158 = vmatpush1.msra.mxu0 0.0
        %4159 = vmatprep.subr.mxu0 0.0
        %4160 = vmatpush1.msra.mxu0 0.0
        %4161 = vmatprep.subr.mxu0 0.0
        %4162 = vmatpush1.msra.mxu0 0.0
        %4163 = vmatprep.subr.mxu0 0.0
        %4164 = vmatpush1.msra.mxu0 0.0
        %4165 = vmatprep.subr.mxu0 0.0
        %4166 = vmatpush1.msra.mxu0 0.0
        %4167 = vmatprep.subr.mxu0 0.0
        %4168 = vmatpush1.msra.mxu0 0.0
        %4169 = vmatprep.subr.mxu0 0.0
        %4170 = vmatpush1.msra.mxu0 0.0
        %4171 = vmatprep.subr.mxu0 0.0
        %4172 = vmatpush1.msra.mxu0 0.0
        %4173 = vmatprep.subr.mxu0 0.0
        %4174 = vmatpush1.msra.mxu0 0.0
        %4175 = vmatprep.subr.mxu0 0.0
        %4176 = vmatpush1.msra.mxu0 0.0
        %4177 = vmatprep.subr.mxu0 0.0
        %4178 = vmatpush1.msra.mxu0 0.0
        %4179 = vmatprep.subr.mxu0 0.0
        %4180 = vmatpush1.msra.mxu0 0.0
        %v4181 = vand.u32 %v3573, 4294901760
        %4182 = vmatprep.mubr.f32.mxu0 %v4181
        %v4183 = vand.u32 %v3564, 4294901760
        %4184 = vmatmul.mubr.f32.gmra.mrb[0].mxu0 %v4183
        %v4185 = vpop.f32.mrb[0].mxu0
        %v4186 = vadd.f32 %v4054, %v4185
        %v4187 = vpop.f32.mrb[0].mxu0
        %4188 = vdwg.mxu0
        %4189 = vmatprep.subr.mxu0 0.0
        %v4190 = vand.u32 %v265, 4294901760
        %4191 = vmatpush1.msra.mxu0 %v4190
        %4192 = vmatprep.subr.mxu0 0.0
        %v4193 = vand.u32 %v266, 4294901760
        %4194 = vmatpush1.msra.mxu0 %v4193
        %4195 = vmatprep.subr.mxu0 0.0
        %v4196 = vand.u32 %v267, 4294901760
        %4197 = vmatpush1.msra.mxu0 %v4196
        %4198 = vmatprep.subr.mxu0 0.0
        %v4199 = vand.u32 %v268, 4294901760
        %4200 = vmatpush1.msra.mxu0 %v4199
        %4201 = vmatprep.subr.mxu0 0.0
        %v4202 = vand.u32 %v269, 4294901760
        %4203 = vmatpush1.msra.mxu0 %v4202
        %4204 = vmatprep.subr.mxu0 0.0
        %v4205 = vand.u32 %v270, 4294901760
        %4206 = vmatpush1.msra.mxu0 %v4205
        %4207 = vmatprep.subr.mxu0 0.0
        %v4208 = vand.u32 %v271, 4294901760
        %4209 = vmatpush1.msra.mxu0 %v4208
        %4210 = vmatprep.subr.mxu0 0.0
        %v4211 = vand.u32 %v272, 4294901760
        %4212 = vmatpush1.msra.mxu0 %v4211
        %4213 = vmatprep.subr.mxu0 0.0
        %v4214 = vand.u32 %v273, 4294901760
        %4215 = vmatpush1.msra.mxu0 %v4214
        %4216 = vmatprep.subr.mxu0 0.0
        %v4217 = vand.u32 %v274, 4294901760
        %4218 = vmatpush1.msra.mxu0 %v4217
        %4219 = vmatprep.subr.mxu0 0.0
        %v4220 = vand.u32 %v275, 4294901760
        %4221 = vmatpush1.msra.mxu0 %v4220
        %4222 = vmatprep.subr.mxu0 0.0
        %v4223 = vand.u32 %v276, 4294901760
        %4224 = vmatpush1.msra.mxu0 %v4223
        %4225 = vmatprep.subr.mxu0 0.0
        %v4226 = vand.u32 %v277, 4294901760
        %4227 = vmatpush1.msra.mxu0 %v4226
        %4228 = vmatprep.subr.mxu0 0.0
        %v4229 = vand.u32 %v278, 4294901760
        %4230 = vmatpush1.msra.mxu0 %v4229
        %4231 = vmatprep.subr.mxu0 0.0
        %v4232 = vand.u32 %v279, 4294901760
        %4233 = vmatpush1.msra.mxu0 %v4232
        %4234 = vmatprep.subr.mxu0 0.0
        %v4235 = vand.u32 %v280, 4294901760
        %4236 = vmatpush1.msra.mxu0 %v4235
        %4237 = vmatprep.subr.mxu0 0.0
        %v4238 = vand.u32 %v281, 4294901760
        %4239 = vmatpush1.msra.mxu0 %v4238
        %4240 = vmatprep.subr.mxu0 0.0
        %v4241 = vand.u32 %v282, 4294901760
        %4242 = vmatpush1.msra.mxu0 %v4241
        %4243 = vmatprep.subr.mxu0 0.0
        %v4244 = vand.u32 %v283, 4294901760
        %4245 = vmatpush1.msra.mxu0 %v4244
        %4246 = vmatprep.subr.mxu0 0.0
        %v4247 = vand.u32 %v284, 4294901760
        %4248 = vmatpush1.msra.mxu0 %v4247
        %4249 = vmatprep.subr.mxu0 0.0
        %4250 = vmatpush1.msra.mxu0 0.0
        %4251 = vmatprep.subr.mxu0 0.0
        %4252 = vmatpush1.msra.mxu0 0.0
        %4253 = vmatprep.subr.mxu0 0.0
        %4254 = vmatpush1.msra.mxu0 0.0
        %4255 = vmatprep.subr.mxu0 0.0
        %4256 = vmatpush1.msra.mxu0 0.0
        %4257 = vmatprep.subr.mxu0 0.0
        %4258 = vmatpush1.msra.mxu0 0.0
        %4259 = vmatprep.subr.mxu0 0.0
        %4260 = vmatpush1.msra.mxu0 0.0
        %4261 = vmatprep.subr.mxu0 0.0
        %4262 = vmatpush1.msra.mxu0 0.0
        %4263 = vmatprep.subr.mxu0 0.0
        %4264 = vmatpush1.msra.mxu0 0.0
        %4265 = vmatprep.subr.mxu0 0.0
        %4266 = vmatpush1.msra.mxu0 0.0
        %4267 = vmatprep.subr.mxu0 0.0
        %4268 = vmatpush1.msra.mxu0 0.0
        %4269 = vmatprep.subr.mxu0 0.0
        %4270 = vmatpush1.msra.mxu0 0.0
        %4271 = vmatprep.subr.mxu0 0.0
        %4272 = vmatpush1.msra.mxu0 0.0
        %v4273 = vand.u32 %v3573, 4294901760
        %4274 = vmatprep.mubr.f32.mxu0 %v4273
        %v4275 = vand.u32 %v3564, 4294901760
        %4276 = vmatmul.mubr.f32.gmra.mrb[0].mxu0 %v4275
        %v4277 = vpop.f32.mrb[0].mxu0
        %v4278 = vadd.f32 %v4186, %v4277
        %v4279 = vpop.f32.mrb[0].mxu0
        %4280 = vdwg.mxu0
        %v4281 = vrsqrt.pop %v4278
        %v4282 = vmul.f32 %v4278, %v4281
        %vm4283 = vcmp.eq.f32.partialorder %v4278, inf
        %v4284 = vsel %vm4283, %v4278, %v4282
        %vm4285 = vcmp.eq.f32.partialorder %v4278, 0.0
        %v4286 = vand.u32 %v4278, 2147483648
        %v4287 = vsel %vm4285, %v4286, %v4284
        %v4288 = vadd.f32 %v4278, 1.0
        %v4289 = vrcp.pop %v4288
        %v4290 = vmul.f32 %v4288, %v4289
        %v4291 = vsub.f32 2.0, %v4290
        %v4292 = vmul.f32 %v4289, %v4291
        %v4293 = vmul.f32 %v4287, %v4292
        %v4294 = vmul.f32 %v245, %v3427
        %v4295 = vmul.f32 %v246, %v3434
        %v4296 = vmul.f32 %v247, %v3440
        %v4297 = vmul.f32 %v248, %v3447
        %v4298 = vmul.f32 %v249, %v3453
        %v4299 = vmul.f32 %v250, %v3460
        %v4300 = vmul.f32 %v251, %v3466
        %v4301 = vmul.f32 %v252, %v3473
        %v4302 = vmul.f32 %v253, %v3479
        %v4303 = vmul.f32 %v254, %v3486
        %v4304 = vmul.f32 %v255, %v3492
        %v4305 = vmul.f32 %v256, %v3499
        %v4306 = vmul.f32 %v257, %v3505
        %v4307 = vmul.f32 %v258, %v3512
        %v4308 = vmul.f32 %v259, %v3518
        %v4309 = vmul.f32 %v260, %v3525
        %v4311 = vsel %vm309, %v4295, 0
        %v4314 = vsel %vm309, %v4297, 0
        %v4317 = vsel %vm309, %v4299, 0
        %v4320 = vsel %vm309, %v4301, 0
        %v4323 = vsel %vm309, %v4303, 0
        %v4326 = vsel %vm309, %v4305, 0
        %v4329 = vsel %vm309, %v4307, 0
        %v4332 = vsel %vm309, %v4309, 0
        %4334 = vmatprep.subr.mxu0 0.0
        %v4335 = vand.u32 %v265, 4294901760
        %4336 = vmatpush1.msra.mxu0 %v4335
        %4337 = vmatprep.subr.mxu0 0.0
        %v4338 = vand.u32 %v266, 4294901760
        %4339 = vmatpush1.msra.mxu0 %v4338
        %4340 = vmatprep.subr.mxu0 0.0
        %v4341 = vand.u32 %v267, 4294901760
        %4342 = vmatpush1.msra.mxu0 %v4341
        %4343 = vmatprep.subr.mxu0 0.0
        %v4344 = vand.u32 %v268, 4294901760
        %4345 = vmatpush1.msra.mxu0 %v4344
        %4346 = vmatprep.subr.mxu0 0.0
        %v4347 = vand.u32 %v269, 4294901760
        %4348 = vmatpush1.msra.mxu0 %v4347
        %4349 = vmatprep.subr.mxu0 0.0
        %v4350 = vand.u32 %v270, 4294901760
        %4351 = vmatpush1.msra.mxu0 %v4350
        %4352 = vmatprep.subr.mxu0 0.0
        %v4353 = vand.u32 %v271, 4294901760
        %4354 = vmatpush1.msra.mxu0 %v4353
        %4355 = vmatprep.subr.mxu0 0.0
        %v4356 = vand.u32 %v272, 4294901760
        %4357 = vmatpush1.msra.mxu0 %v4356
        %4358 = vmatprep.subr.mxu0 0.0
        %v4359 = vand.u32 %v273, 4294901760
        %4360 = vmatpush1.msra.mxu0 %v4359
        %4361 = vmatprep.subr.mxu0 0.0
        %v4362 = vand.u32 %v274, 4294901760
        %4363 = vmatpush1.msra.mxu0 %v4362
        %4364 = vmatprep.subr.mxu0 0.0
        %v4365 = vand.u32 %v275, 4294901760
        %4366 = vmatpush1.msra.mxu0 %v4365
        %4367 = vmatprep.subr.mxu0 0.0
        %v4368 = vand.u32 %v276, 4294901760
        %4369 = vmatpush1.msra.mxu0 %v4368
        %4370 = vmatprep.subr.mxu0 0.0
        %v4371 = vand.u32 %v277, 4294901760
        %4372 = vmatpush1.msra.mxu0 %v4371
        %4373 = vmatprep.subr.mxu0 0.0
        %v4374 = vand.u32 %v278, 4294901760
        %4375 = vmatpush1.msra.mxu0 %v4374
        %4376 = vmatprep.subr.mxu0 0.0
        %v4377 = vand.u32 %v279, 4294901760
        %4378 = vmatpush1.msra.mxu0 %v4377
        %4379 = vmatprep.subr.mxu0 0.0
        %v4380 = vand.u32 %v280, 4294901760
        %4381 = vmatpush1.msra.mxu0 %v4380
        %4382 = vmatprep.subr.mxu0 0.0
        %v4383 = vand.u32 %v281, 4294901760
        %4384 = vmatpush1.msra.mxu0 %v4383
        %4385 = vmatprep.subr.mxu0 0.0
        %v4386 = vand.u32 %v282, 4294901760
        %4387 = vmatpush1.msra.mxu0 %v4386
        %4388 = vmatprep.subr.mxu0 0.0
        %v4389 = vand.u32 %v283, 4294901760
        %4390 = vmatpush1.msra.mxu0 %v4389
        %4391 = vmatprep.subr.mxu0 0.0
        %v4392 = vand.u32 %v284, 4294901760
        %4393 = vmatpush1.msra.mxu0 %v4392
        %4394 = vmatprep.subr.mxu0 0.0
        %4395 = vmatpush1.msra.mxu0 0.0
        %4396 = vmatprep.subr.mxu0 0.0
        %4397 = vmatpush1.msra.mxu0 0.0
        %4398 = vmatprep.subr.mxu0 0.0
        %4399 = vmatpush1.msra.mxu0 0.0
        %4400 = vmatprep.subr.mxu0 0.0
        %4401 = vmatpush1.msra.mxu0 0.0
        %4402 = vmatprep.subr.mxu0 0.0
        %4403 = vmatpush1.msra.mxu0 0.0
        %4404 = vmatprep.subr.mxu0 0.0
        %4405 = vmatpush1.msra.mxu0 0.0
        %4406 = vmatprep.subr.mxu0 0.0
        %4407 = vmatpush1.msra.mxu0 0.0
        %4408 = vmatprep.subr.mxu0 0.0
        %4409 = vmatpush1.msra.mxu0 0.0
        %4410 = vmatprep.subr.mxu0 0.0
        %4411 = vmatpush1.msra.mxu0 0.0
        %4412 = vmatprep.subr.mxu0 0.0
        %4413 = vmatpush1.msra.mxu0 0.0
        %4414 = vmatprep.subr.mxu0 0.0
        %4415 = vmatpush1.msra.mxu0 0.0
        %4416 = vmatprep.subr.mxu0 0.0
        %4417 = vmatpush1.msra.mxu0 0.0
        %v4418 = vand.u32 %v4311, 4294901760
        %v4419 = vsub.f32 %v4311, %v4418
        %v4420 = vand.u32 %v4419, 4294901760
        %v4421 = vsub.f32 %v4419, %v4420
        %v4422 = vand.u32 %v4421, 4294901760
        %4423 = vmatprep.mubr.f32.mxu0 %v4422
        %v4424 = vand.u32 %v4294, 4294901760
        %v4425 = vsub.f32 %v4294, %v4424
        %v4426 = vand.u32 %v4425, 4294901760
        %v4427 = vsub.f32 %v4425, %v4426
        %v4428 = vand.u32 %v4427, 4294901760
        %4429 = vmatmul.mubr.f32.gmra.mrb[0].mxu0 %v4428
        %v4430 = vpop.f32.mrb[0].mxu0
        %v4431 = vadd.f32 0.0, %v4430
        %v4432 = vpop.f32.mrb[0].mxu0
        %v4433 = vand.u32 %v4314, 4294901760
        %v4434 = vsub.f32 %v4314, %v4433
        %v4435 = vand.u32 %v4434, 4294901760
        %v4436 = vsub.f32 %v4434, %v4435
        %v4437 = vand.u32 %v4436, 4294901760
        %4438 = vmatprep.mubr.f32.mxu0 %v4437
        %v4439 = vand.u32 %v4296, 4294901760
        %v4440 = vsub.f32 %v4296, %v4439
        %v4441 = vand.u32 %v4440, 4294901760
        %v4442 = vsub.f32 %v4440, %v4441
        %v4443 = vand.u32 %v4442, 4294901760
        %4444 = vmatmul.mubr.f32.gmra.mrb[0].mxu0 %v4443
        %v4445 = vpop.f32.mrb[0].mxu0
        %v4446 = vadd.f32 0.0, %v4445
        %v4447 = vpop.f32.mrb[0].mxu0
        %v4448 = vand.u32 %v4317, 4294901760
        %v4449 = vsub.f32 %v4317, %v4448
        %v4450 = vand.u32 %v4449, 4294901760
        %v4451 = vsub.f32 %v4449, %v4450
        %v4452 = vand.u32 %v4451, 4294901760
        %4453 = vmatprep.mubr.f32.mxu0 %v4452
        %v4454 = vand.u32 %v4298, 4294901760
        %v4455 = vsub.f32 %v4298, %v4454
        %v4456 = vand.u32 %v4455, 4294901760
        %v4457 = vsub.f32 %v4455, %v4456
        %v4458 = vand.u32 %v4457, 4294901760
        %4459 = vmatmul.mubr.f32.gmra.mrb[0].mxu0 %v4458
        %v4460 = vpop.f32.mrb[0].mxu0
        %v4461 = vadd.f32 0.0, %v4460
        %v4462 = vpop.f32.mrb[0].mxu0
        %v4463 = vand.u32 %v4320, 4294901760
        %v4464 = vsub.f32 %v4320, %v4463
        %v4465 = vand.u32 %v4464, 4294901760
        %v4466 = vsub.f32 %v4464, %v4465
        %v4467 = vand.u32 %v4466, 4294901760
        %4468 = vmatprep.mubr.f32.mxu0 %v4467
        %v4469 = vand.u32 %v4300, 4294901760
        %v4470 = vsub.f32 %v4300, %v4469
        %v4471 = vand.u32 %v4470, 4294901760
        %v4472 = vsub.f32 %v4470, %v4471
        %v4473 = vand.u32 %v4472, 4294901760
        %4474 = vmatmul.mubr.f32.gmra.mrb[0].mxu0 %v4473
        %v4475 = vpop.f32.mrb[0].mxu0
        %v4476 = vadd.f32 0.0, %v4475
        %v4477 = vpop.f32.mrb[0].mxu0
        %v4478 = vand.u32 %v4323, 4294901760
        %v4479 = vsub.f32 %v4323, %v4478
        %v4480 = vand.u32 %v4479, 4294901760
        %v4481 = vsub.f32 %v4479, %v4480
        %v4482 = vand.u32 %v4481, 4294901760
        %4483 = vmatprep.mubr.f32.mxu0 %v4482
        %v4484 = vand.u32 %v4302, 4294901760
        %v4485 = vsub.f32 %v4302, %v4484
        %v4486 = vand.u32 %v4485, 4294901760
        %v4487 = vsub.f32 %v4485, %v4486
        %v4488 = vand.u32 %v4487, 4294901760
        %4489 = vmatmul.mubr.f32.gmra.mrb[0].mxu0 %v4488
        %v4490 = vpop.f32.mrb[0].mxu0
        %v4491 = vadd.f32 0.0, %v4490
        %v4492 = vpop.f32.mrb[0].mxu0
        %v4493 = vand.u32 %v4326, 4294901760
        %v4494 = vsub.f32 %v4326, %v4493
        %v4495 = vand.u32 %v4494, 4294901760
        %v4496 = vsub.f32 %v4494, %v4495
        %v4497 = vand.u32 %v4496, 4294901760
        %4498 = vmatprep.mubr.f32.mxu0 %v4497
        %v4499 = vand.u32 %v4304, 4294901760
        %v4500 = vsub.f32 %v4304, %v4499
        %v4501 = vand.u32 %v4500, 4294901760
        %v4502 = vsub.f32 %v4500, %v4501
        %v4503 = vand.u32 %v4502, 4294901760
        %4504 = vmatmul.mubr.f32.gmra.mrb[0].mxu0 %v4503
        %v4505 = vpop.f32.mrb[0].mxu0
        %v4506 = vadd.f32 0.0, %v4505
        %v4507 = vpop.f32.mrb[0].mxu0
        %v4508 = vand.u32 %v4329, 4294901760
        %v4509 = vsub.f32 %v4329, %v4508
        %v4510 = vand.u32 %v4509, 4294901760
        %v4511 = vsub.f32 %v4509, %v4510
        %v4512 = vand.u32 %v4511, 4294901760
        %4513 = vmatprep.mubr.f32.mxu0 %v4512
        %v4514 = vand.u32 %v4306, 4294901760
        %v4515 = vsub.f32 %v4306, %v4514
        %v4516 = vand.u32 %v4515, 4294901760
        %v4517 = vsub.f32 %v4515, %v4516
        %v4518 = vand.u32 %v4517, 4294901760
        %4519 = vmatmul.mubr.f32.gmra.mrb[0].mxu0 %v4518
        %v4520 = vpop.f32.mrb[0].mxu0
        %v4521 = vadd.f32 0.0, %v4520
        %v4522 = vpop.f32.mrb[0].mxu0
        %v4523 = vand.u32 %v4332, 4294901760
        %v4524 = vsub.f32 %v4332, %v4523
        %v4525 = vand.u32 %v4524, 4294901760
        %v4526 = vsub.f32 %v4524, %v4525
        %v4527 = vand.u32 %v4526, 4294901760
        %4528 = vmatprep.mubr.f32.mxu0 %v4527
        %v4529 = vand.u32 %v4308, 4294901760
        %v4530 = vsub.f32 %v4308, %v4529
        %v4531 = vand.u32 %v4530, 4294901760
        %v4532 = vsub.f32 %v4530, %v4531
        %v4533 = vand.u32 %v4532, 4294901760
        %4534 = vmatmul.mubr.f32.gmra.mrb[0].mxu0 %v4533
        %v4535 = vpop.f32.mrb[0].mxu0
        %v4536 = vadd.f32 0.0, %v4535
        %v4537 = vpop.f32.mrb[0].mxu0
        %4538 = vdwg.mxu0
        %4539 = vmatprep.subr.mxu0 0.0
        %v4540 = vand.u32 %v265, 4294901760
        %v4541 = vsub.f32 %v265, %v4540
        %v4542 = vand.u32 %v4541, 4294901760
        %v4543 = vsub.f32 %v4541, %v4542
        %v4544 = vand.u32 %v4543, 4294901760
        %4545 = vmatpush1.msra.mxu0 %v4544
        %4546 = vmatprep.subr.mxu0 0.0
        %v4547 = vand.u32 %v266, 4294901760
        %v4548 = vsub.f32 %v266, %v4547
        %v4549 = vand.u32 %v4548, 4294901760
        %v4550 = vsub.f32 %v4548, %v4549
        %v4551 = vand.u32 %v4550, 4294901760
        %4552 = vmatpush1.msra.mxu0 %v4551
        %4553 = vmatprep.subr.mxu0 0.0
        %v4554 = vand.u32 %v267, 4294901760
        %v4555 = vsub.f32 %v267, %v4554
        %v4556 = vand.u32 %v4555, 4294901760
        %v4557 = vsub.f32 %v4555, %v4556
        %v4558 = vand.u32 %v4557, 4294901760
        %4559 = vmatpush1.msra.mxu0 %v4558
        %4560 = vmatprep.subr.mxu0 0.0
        %v4561 = vand.u32 %v268, 4294901760
        %v4562 = vsub.f32 %v268, %v4561
        %v4563 = vand.u32 %v4562, 4294901760
        %v4564 = vsub.f32 %v4562, %v4563
        %v4565 = vand.u32 %v4564, 4294901760
        %4566 = vmatpush1.msra.mxu0 %v4565
        %4567 = vmatprep.subr.mxu0 0.0
        %v4568 = vand.u32 %v269, 4294901760
        %v4569 = vsub.f32 %v269, %v4568
        %v4570 = vand.u32 %v4569, 4294901760
        %v4571 = vsub.f32 %v4569, %v4570
        %v4572 = vand.u32 %v4571, 4294901760
        %4573 = vmatpush1.msra.mxu0 %v4572
        %4574 = vmatprep.subr.mxu0 0.0
        %v4575 = vand.u32 %v270, 4294901760
        %v4576 = vsub.f32 %v270, %v4575
        %v4577 = vand.u32 %v4576, 4294901760
        %v4578 = vsub.f32 %v4576, %v4577
        %v4579 = vand.u32 %v4578, 4294901760
        %4580 = vmatpush1.msra.mxu0 %v4579
        %4581 = vmatprep.subr.mxu0 0.0
        %v4582 = vand.u32 %v271, 4294901760
        %v4583 = vsub.f32 %v271, %v4582
        %v4584 = vand.u32 %v4583, 4294901760
        %v4585 = vsub.f32 %v4583, %v4584
        %v4586 = vand.u32 %v4585, 4294901760
        %4587 = vmatpush1.msra.mxu0 %v4586
        %4588 = vmatprep.subr.mxu0 0.0
        %v4589 = vand.u32 %v272, 4294901760
        %v4590 = vsub.f32 %v272, %v4589
        %v4591 = vand.u32 %v4590, 4294901760
        %v4592 = vsub.f32 %v4590, %v4591
        %v4593 = vand.u32 %v4592, 4294901760
        %4594 = vmatpush1.msra.mxu0 %v4593
        %4595 = vmatprep.subr.mxu0 0.0
        %v4596 = vand.u32 %v273, 4294901760
        %v4597 = vsub.f32 %v273, %v4596
        %v4598 = vand.u32 %v4597, 4294901760
        %v4599 = vsub.f32 %v4597, %v4598
        %v4600 = vand.u32 %v4599, 4294901760
        %4601 = vmatpush1.msra.mxu0 %v4600
        %4602 = vmatprep.subr.mxu0 0.0
        %v4603 = vand.u32 %v274, 4294901760
        %v4604 = vsub.f32 %v274, %v4603
        %v4605 = vand.u32 %v4604, 4294901760
        %v4606 = vsub.f32 %v4604, %v4605
        %v4607 = vand.u32 %v4606, 4294901760
        %4608 = vmatpush1.msra.mxu0 %v4607
        %4609 = vmatprep.subr.mxu0 0.0
        %v4610 = vand.u32 %v275, 4294901760
        %v4611 = vsub.f32 %v275, %v4610
        %v4612 = vand.u32 %v4611, 4294901760
        %v4613 = vsub.f32 %v4611, %v4612
        %v4614 = vand.u32 %v4613, 4294901760
        %4615 = vmatpush1.msra.mxu0 %v4614
        %4616 = vmatprep.subr.mxu0 0.0
        %v4617 = vand.u32 %v276, 4294901760
        %v4618 = vsub.f32 %v276, %v4617
        %v4619 = vand.u32 %v4618, 4294901760
        %v4620 = vsub.f32 %v4618, %v4619
        %v4621 = vand.u32 %v4620, 4294901760
        %4622 = vmatpush1.msra.mxu0 %v4621
        %4623 = vmatprep.subr.mxu0 0.0
        %v4624 = vand.u32 %v277, 4294901760
        %v4625 = vsub.f32 %v277, %v4624
        %v4626 = vand.u32 %v4625, 4294901760
        %v4627 = vsub.f32 %v4625, %v4626
        %v4628 = vand.u32 %v4627, 4294901760
        %4629 = vmatpush1.msra.mxu0 %v4628
        %4630 = vmatprep.subr.mxu0 0.0
        %v4631 = vand.u32 %v278, 4294901760
        %v4632 = vsub.f32 %v278, %v4631
        %v4633 = vand.u32 %v4632, 4294901760
        %v4634 = vsub.f32 %v4632, %v4633
        %v4635 = vand.u32 %v4634, 4294901760
        %4636 = vmatpush1.msra.mxu0 %v4635
        %4637 = vmatprep.subr.mxu0 0.0
        %v4638 = vand.u32 %v279, 4294901760
        %v4639 = vsub.f32 %v279, %v4638
        %v4640 = vand.u32 %v4639, 4294901760
        %v4641 = vsub.f32 %v4639, %v4640
        %v4642 = vand.u32 %v4641, 4294901760
        %4643 = vmatpush1.msra.mxu0 %v4642
        %4644 = vmatprep.subr.mxu0 0.0
        %v4645 = vand.u32 %v280, 4294901760
        %v4646 = vsub.f32 %v280, %v4645
        %v4647 = vand.u32 %v4646, 4294901760
        %v4648 = vsub.f32 %v4646, %v4647
        %v4649 = vand.u32 %v4648, 4294901760
        %4650 = vmatpush1.msra.mxu0 %v4649
        %4651 = vmatprep.subr.mxu0 0.0
        %v4652 = vand.u32 %v281, 4294901760
        %v4653 = vsub.f32 %v281, %v4652
        %v4654 = vand.u32 %v4653, 4294901760
        %v4655 = vsub.f32 %v4653, %v4654
        %v4656 = vand.u32 %v4655, 4294901760
        %4657 = vmatpush1.msra.mxu0 %v4656
        %4658 = vmatprep.subr.mxu0 0.0
        %v4659 = vand.u32 %v282, 4294901760
        %v4660 = vsub.f32 %v282, %v4659
        %v4661 = vand.u32 %v4660, 4294901760
        %v4662 = vsub.f32 %v4660, %v4661
        %v4663 = vand.u32 %v4662, 4294901760
        %4664 = vmatpush1.msra.mxu0 %v4663
        %4665 = vmatprep.subr.mxu0 0.0
        %v4666 = vand.u32 %v283, 4294901760
        %v4667 = vsub.f32 %v283, %v4666
        %v4668 = vand.u32 %v4667, 4294901760
        %v4669 = vsub.f32 %v4667, %v4668
        %v4670 = vand.u32 %v4669, 4294901760
        %4671 = vmatpush1.msra.mxu0 %v4670
        %4672 = vmatprep.subr.mxu0 0.0
        %v4673 = vand.u32 %v284, 4294901760
        %v4674 = vsub.f32 %v284, %v4673
        %v4675 = vand.u32 %v4674, 4294901760
        %v4676 = vsub.f32 %v4674, %v4675
        %v4677 = vand.u32 %v4676, 4294901760
        %4678 = vmatpush1.msra.mxu0 %v4677
        %4679 = vmatprep.subr.mxu0 0.0
        %4680 = vmatpush1.msra.mxu0 0.0
        %4681 = vmatprep.subr.mxu0 0.0
        %4682 = vmatpush1.msra.mxu0 0.0
        %4683 = vmatprep.subr.mxu0 0.0
        %4684 = vmatpush1.msra.mxu0 0.0
        %4685 = vmatprep.subr.mxu0 0.0
        %4686 = vmatpush1.msra.mxu0 0.0
        %4687 = vmatprep.subr.mxu0 0.0
        %4688 = vmatpush1.msra.mxu0 0.0
        %4689 = vmatprep.subr.mxu0 0.0
        %4690 = vmatpush1.msra.mxu0 0.0
        %4691 = vmatprep.subr.mxu0 0.0
        %4692 = vmatpush1.msra.mxu0 0.0
        %4693 = vmatprep.subr.mxu0 0.0
        %4694 = vmatpush1.msra.mxu0 0.0
        %4695 = vmatprep.subr.mxu0 0.0
        %4696 = vmatpush1.msra.mxu0 0.0
        %4697 = vmatprep.subr.mxu0 0.0
        %4698 = vmatpush1.msra.mxu0 0.0
        %4699 = vmatprep.subr.mxu0 0.0
        %4700 = vmatpush1.msra.mxu0 0.0
        %4701 = vmatprep.subr.mxu0 0.0
        %4702 = vmatpush1.msra.mxu0 0.0
        %v4703 = vand.u32 %v4311, 4294901760
        %4704 = vmatprep.mubr.f32.mxu0 %v4703
        %v4705 = vand.u32 %v4294, 4294901760
        %4706 = vmatmul.mubr.f32.gmra.mrb[0].mxu0 %v4705
        %v4707 = vpop.f32.mrb[0].mxu0
        %v4708 = vadd.f32 %v4431, %v4707
        %v4709 = vpop.f32.mrb[0].mxu0
        %v4710 = vand.u32 %v4314, 4294901760
        %4711 = vmatprep.mubr.f32.mxu0 %v4710
        %v4712 = vand.u32 %v4296, 4294901760
        %4713 = vmatmul.mubr.f32.gmra.mrb[0].mxu0 %v4712
        %v4714 = vpop.f32.mrb[0].mxu0
        %v4715 = vadd.f32 %v4446, %v4714
        %v4716 = vpop.f32.mrb[0].mxu0
        %v4717 = vand.u32 %v4317, 4294901760
        %4718 = vmatprep.mubr.f32.mxu0 %v4717
        %v4719 = vand.u32 %v4298, 4294901760
        %4720 = vmatmul.mubr.f32.gmra.mrb[0].mxu0 %v4719
        %v4721 = vpop.f32.mrb[0].mxu0
        %v4722 = vadd.f32 %v4461, %v4721
        %v4723 = vpop.f32.mrb[0].mxu0
        %v4724 = vand.u32 %v4320, 4294901760
        %4725 = vmatprep.mubr.f32.mxu0 %v4724
        %v4726 = vand.u32 %v4300, 4294901760
        %4727 = vmatmul.mubr.f32.gmra.mrb[0].mxu0 %v4726
        %v4728 = vpop.f32.mrb[0].mxu0
        %v4729 = vadd.f32 %v4476, %v4728
        %v4730 = vpop.f32.mrb[0].mxu0
        %v4731 = vand.u32 %v4323, 4294901760
        %4732 = vmatprep.mubr.f32.mxu0 %v4731
        %v4733 = vand.u32 %v4302, 4294901760
        %4734 = vmatmul.mubr.f32.gmra.mrb[0].mxu0 %v4733
        %v4735 = vpop.f32.mrb[0].mxu0
        %v4736 = vadd.f32 %v4491, %v4735
        %v4737 = vpop.f32.mrb[0].mxu0
        %v4738 = vand.u32 %v4326, 4294901760
        %4739 = vmatprep.mubr.f32.mxu0 %v4738
        %v4740 = vand.u32 %v4304, 4294901760
        %4741 = vmatmul.mubr.f32.gmra.mrb[0].mxu0 %v4740
        %v4742 = vpop.f32.mrb[0].mxu0
        %v4743 = vadd.f32 %v4506, %v4742
        %v4744 = vpop.f32.mrb[0].mxu0
        %v4745 = vand.u32 %v4329, 4294901760
        %4746 = vmatprep.mubr.f32.mxu0 %v4745
        %v4747 = vand.u32 %v4306, 4294901760
        %4748 = vmatmul.mubr.f32.gmra.mrb[0].mxu0 %v4747
        %v4749 = vpop.f32.mrb[0].mxu0
        %v4750 = vadd.f32 %v4521, %v4749
        %v4751 = vpop.f32.mrb[0].mxu0
        %v4752 = vand.u32 %v4332, 4294901760
        %4753 = vmatprep.mubr.f32.mxu0 %v4752
        %v4754 = vand.u32 %v4308, 4294901760
        %4755 = vmatmul.mubr.f32.gmra.mrb[0].mxu0 %v4754
        %v4756 = vpop.f32.mrb[0].mxu0
        %v4757 = vadd.f32 %v4536, %v4756
        %v4758 = vpop.f32.mrb[0].mxu0
        %4759 = vdwg.mxu0
        %4760 = vmatprep.subr.mxu0 0.0
        %v4761 = vand.u32 %v265, 4294901760
        %v4762 = vsub.f32 %v265, %v4761
        %4763 = vmatpush1.msra.mxu0 %v4762
        %4764 = vmatprep.subr.mxu0 0.0
        %v4765 = vand.u32 %v266, 4294901760
        %v4766 = vsub.f32 %v266, %v4765
        %4767 = vmatpush1.msra.mxu0 %v4766
        %4768 = vmatprep.subr.mxu0 0.0
        %v4769 = vand.u32 %v267, 4294901760
        %v4770 = vsub.f32 %v267, %v4769
        %4771 = vmatpush1.msra.mxu0 %v4770
        %4772 = vmatprep.subr.mxu0 0.0
        %v4773 = vand.u32 %v268, 4294901760
        %v4774 = vsub.f32 %v268, %v4773
        %4775 = vmatpush1.msra.mxu0 %v4774
        %4776 = vmatprep.subr.mxu0 0.0
        %v4777 = vand.u32 %v269, 4294901760
        %v4778 = vsub.f32 %v269, %v4777
        %4779 = vmatpush1.msra.mxu0 %v4778
        %4780 = vmatprep.subr.mxu0 0.0
        %v4781 = vand.u32 %v270, 4294901760
        %v4782 = vsub.f32 %v270, %v4781
        %4783 = vmatpush1.msra.mxu0 %v4782
        %4784 = vmatprep.subr.mxu0 0.0
        %v4785 = vand.u32 %v271, 4294901760
        %v4786 = vsub.f32 %v271, %v4785
        %4787 = vmatpush1.msra.mxu0 %v4786
        %4788 = vmatprep.subr.mxu0 0.0
        %v4789 = vand.u32 %v272, 4294901760
        %v4790 = vsub.f32 %v272, %v4789
        %4791 = vmatpush1.msra.mxu0 %v4790
        %4792 = vmatprep.subr.mxu0 0.0
        %v4793 = vand.u32 %v273, 4294901760
        %v4794 = vsub.f32 %v273, %v4793
        %4795 = vmatpush1.msra.mxu0 %v4794
        %4796 = vmatprep.subr.mxu0 0.0
        %v4797 = vand.u32 %v274, 4294901760
        %v4798 = vsub.f32 %v274, %v4797
        %4799 = vmatpush1.msra.mxu0 %v4798
        %4800 = vmatprep.subr.mxu0 0.0
        %v4801 = vand.u32 %v275, 4294901760
        %v4802 = vsub.f32 %v275, %v4801
        %4803 = vmatpush1.msra.mxu0 %v4802
        %4804 = vmatprep.subr.mxu0 0.0
        %v4805 = vand.u32 %v276, 4294901760
        %v4806 = vsub.f32 %v276, %v4805
        %4807 = vmatpush1.msra.mxu0 %v4806
        %4808 = vmatprep.subr.mxu0 0.0
        %v4809 = vand.u32 %v277, 4294901760
        %v4810 = vsub.f32 %v277, %v4809
        %4811 = vmatpush1.msra.mxu0 %v4810
        %4812 = vmatprep.subr.mxu0 0.0
        %v4813 = vand.u32 %v278, 4294901760
        %v4814 = vsub.f32 %v278, %v4813
        %4815 = vmatpush1.msra.mxu0 %v4814
        %4816 = vmatprep.subr.mxu0 0.0
        %v4817 = vand.u32 %v279, 4294901760
        %v4818 = vsub.f32 %v279, %v4817
        %4819 = vmatpush1.msra.mxu0 %v4818
        %4820 = vmatprep.subr.mxu0 0.0
        %v4821 = vand.u32 %v280, 4294901760
        %v4822 = vsub.f32 %v280, %v4821
        %4823 = vmatpush1.msra.mxu0 %v4822
        %4824 = vmatprep.subr.mxu0 0.0
        %v4825 = vand.u32 %v281, 4294901760
        %v4826 = vsub.f32 %v281, %v4825
        %4827 = vmatpush1.msra.mxu0 %v4826
        %4828 = vmatprep.subr.mxu0 0.0
        %v4829 = vand.u32 %v282, 4294901760
        %v4830 = vsub.f32 %v282, %v4829
        %4831 = vmatpush1.msra.mxu0 %v4830
        %4832 = vmatprep.subr.mxu0 0.0
        %v4833 = vand.u32 %v283, 4294901760
        %v4834 = vsub.f32 %v283, %v4833
        %4835 = vmatpush1.msra.mxu0 %v4834
        %4836 = vmatprep.subr.mxu0 0.0
        %v4837 = vand.u32 %v284, 4294901760
        %v4838 = vsub.f32 %v284, %v4837
        %4839 = vmatpush1.msra.mxu0 %v4838
        %4840 = vmatprep.subr.mxu0 0.0
        %4841 = vmatpush1.msra.mxu0 0.0
        %4842 = vmatprep.subr.mxu0 0.0
        %4843 = vmatpush1.msra.mxu0 0.0
        %4844 = vmatprep.subr.mxu0 0.0
        %4845 = vmatpush1.msra.mxu0 0.0
        %4846 = vmatprep.subr.mxu0 0.0
        %4847 = vmatpush1.msra.mxu0 0.0
        %4848 = vmatprep.subr.mxu0 0.0
        %4849 = vmatpush1.msra.mxu0 0.0
        %4850 = vmatprep.subr.mxu0 0.0
        %4851 = vmatpush1.msra.mxu0 0.0
        %4852 = vmatprep.subr.mxu0 0.0
        %4853 = vmatpush1.msra.mxu0 0.0
        %4854 = vmatprep.subr.mxu0 0.0
        %4855 = vmatpush1.msra.mxu0 0.0
        %4856 = vmatprep.subr.mxu0 0.0
        %4857 = vmatpush1.msra.mxu0 0.0
        %4858 = vmatprep.subr.mxu0 0.0
        %4859 = vmatpush1.msra.mxu0 0.0
        %4860 = vmatprep.subr.mxu0 0.0
        %4861 = vmatpush1.msra.mxu0 0.0
        %4862 = vmatprep.subr.mxu0 0.0
        %4863 = vmatpush1.msra.mxu0 0.0
        %v4864 = vand.u32 %v4311, 4294901760
        %v4865 = vsub.f32 %v4311, %v4864
        %4866 = vmatprep.mubr.f32.mxu0 %v4865
        %v4867 = vand.u32 %v4294, 4294901760
        %v4868 = vsub.f32 %v4294, %v4867
        %4869 = vmatmul.mubr.f32.gmra.mrb[0].mxu0 %v4868
        %v4870 = vpop.f32.mrb[0].mxu0
        %v4871 = vadd.f32 %v4708, %v4870
        %v4872 = vpop.f32.mrb[0].mxu0
        %v4873 = vand.u32 %v4314, 4294901760
        %v4874 = vsub.f32 %v4314, %v4873
        %4875 = vmatprep.mubr.f32.mxu0 %v4874
        %v4876 = vand.u32 %v4296, 4294901760
        %v4877 = vsub.f32 %v4296, %v4876
        %4878 = vmatmul.mubr.f32.gmra.mrb[0].mxu0 %v4877
        %v4879 = vpop.f32.mrb[0].mxu0
        %v4880 = vadd.f32 %v4715, %v4879
        %v4881 = vpop.f32.mrb[0].mxu0
        %v4882 = vand.u32 %v4317, 4294901760
        %v4883 = vsub.f32 %v4317, %v4882
        %4884 = vmatprep.mubr.f32.mxu0 %v4883
        %v4885 = vand.u32 %v4298, 4294901760
        %v4886 = vsub.f32 %v4298, %v4885
        %4887 = vmatmul.mubr.f32.gmra.mrb[0].mxu0 %v4886
        %v4888 = vpop.f32.mrb[0].mxu0
        %v4889 = vadd.f32 %v4722, %v4888
        %v4890 = vpop.f32.mrb[0].mxu0
        %v4891 = vand.u32 %v4320, 4294901760
        %v4892 = vsub.f32 %v4320, %v4891
        %4893 = vmatprep.mubr.f32.mxu0 %v4892
        %v4894 = vand.u32 %v4300, 4294901760
        %v4895 = vsub.f32 %v4300, %v4894
        %4896 = vmatmul.mubr.f32.gmra.mrb[0].mxu0 %v4895
        %v4897 = vpop.f32.mrb[0].mxu0
        %v4898 = vadd.f32 %v4729, %v4897
        %v4899 = vpop.f32.mrb[0].mxu0
        %v4900 = vand.u32 %v4323, 4294901760
        %v4901 = vsub.f32 %v4323, %v4900
        %4902 = vmatprep.mubr.f32.mxu0 %v4901
        %v4903 = vand.u32 %v4302, 4294901760
        %v4904 = vsub.f32 %v4302, %v4903
        %4905 = vmatmul.mubr.f32.gmra.mrb[0].mxu0 %v4904
        %v4906 = vpop.f32.mrb[0].mxu0
        %v4907 = vadd.f32 %v4736, %v4906
        %v4908 = vpop.f32.mrb[0].mxu0
        %v4909 = vand.u32 %v4326, 4294901760
        %v4910 = vsub.f32 %v4326, %v4909
        %4911 = vmatprep.mubr.f32.mxu0 %v4910
        %v4912 = vand.u32 %v4304, 4294901760
        %v4913 = vsub.f32 %v4304, %v4912
        %4914 = vmatmul.mubr.f32.gmra.mrb[0].mxu0 %v4913
        %v4915 = vpop.f32.mrb[0].mxu0
        %v4916 = vadd.f32 %v4743, %v4915
        %v4917 = vpop.f32.mrb[0].mxu0
        %v4918 = vand.u32 %v4329, 4294901760
        %v4919 = vsub.f32 %v4329, %v4918
        %4920 = vmatprep.mubr.f32.mxu0 %v4919
        %v4921 = vand.u32 %v4306, 4294901760
        %v4922 = vsub.f32 %v4306, %v4921
        %4923 = vmatmul.mubr.f32.gmra.mrb[0].mxu0 %v4922
        %v4924 = vpop.f32.mrb[0].mxu0
        %v4925 = vadd.f32 %v4750, %v4924
        %v4926 = vpop.f32.mrb[0].mxu0
        %v4927 = vand.u32 %v4332, 4294901760
        %v4928 = vsub.f32 %v4332, %v4927
        %4929 = vmatprep.mubr.f32.mxu0 %v4928
        %v4930 = vand.u32 %v4308, 4294901760
        %v4931 = vsub.f32 %v4308, %v4930
        %4932 = vmatmul.mubr.f32.gmra.mrb[0].mxu0 %v4931
        %v4933 = vpop.f32.mrb[0].mxu0
        %v4934 = vadd.f32 %v4757, %v4933
        %v4935 = vpop.f32.mrb[0].mxu0
        %4936 = vdwg.mxu0
        %4937 = vmatprep.subr.mxu0 0.0
        %v4938 = vand.u32 %v265, 4294901760
        %4939 = vmatpush1.msra.mxu0 %v4938
        %4940 = vmatprep.subr.mxu0 0.0
        %v4941 = vand.u32 %v266, 4294901760
        %4942 = vmatpush1.msra.mxu0 %v4941
        %4943 = vmatprep.subr.mxu0 0.0
        %v4944 = vand.u32 %v267, 4294901760
        %4945 = vmatpush1.msra.mxu0 %v4944
        %4946 = vmatprep.subr.mxu0 0.0
        %v4947 = vand.u32 %v268, 4294901760
        %4948 = vmatpush1.msra.mxu0 %v4947
        %4949 = vmatprep.subr.mxu0 0.0
        %v4950 = vand.u32 %v269, 4294901760
        %4951 = vmatpush1.msra.mxu0 %v4950
        %4952 = vmatprep.subr.mxu0 0.0
        %v4953 = vand.u32 %v270, 4294901760
        %4954 = vmatpush1.msra.mxu0 %v4953
        %4955 = vmatprep.subr.mxu0 0.0
        %v4956 = vand.u32 %v271, 4294901760
        %4957 = vmatpush1.msra.mxu0 %v4956
        %4958 = vmatprep.subr.mxu0 0.0
        %v4959 = vand.u32 %v272, 4294901760
        %4960 = vmatpush1.msra.mxu0 %v4959
        %4961 = vmatprep.subr.mxu0 0.0
        %v4962 = vand.u32 %v273, 4294901760
        %4963 = vmatpush1.msra.mxu0 %v4962
        %4964 = vmatprep.subr.mxu0 0.0
        %v4965 = vand.u32 %v274, 4294901760
        %4966 = vmatpush1.msra.mxu0 %v4965
        %4967 = vmatprep.subr.mxu0 0.0
        %v4968 = vand.u32 %v275, 4294901760
        %4969 = vmatpush1.msra.mxu0 %v4968
        %4970 = vmatprep.subr.mxu0 0.0
        %v4971 = vand.u32 %v276, 4294901760
        %4972 = vmatpush1.msra.mxu0 %v4971
        %4973 = vmatprep.subr.mxu0 0.0
        %v4974 = vand.u32 %v277, 4294901760
        %4975 = vmatpush1.msra.mxu0 %v4974
        %4976 = vmatprep.subr.mxu0 0.0
        %v4977 = vand.u32 %v278, 4294901760
        %4978 = vmatpush1.msra.mxu0 %v4977
        %4979 = vmatprep.subr.mxu0 0.0
        %v4980 = vand.u32 %v279, 4294901760
        %4981 = vmatpush1.msra.mxu0 %v4980
        %4982 = vmatprep.subr.mxu0 0.0
        %v4983 = vand.u32 %v280, 4294901760
        %4984 = vmatpush1.msra.mxu0 %v4983
        %4985 = vmatprep.subr.mxu0 0.0
        %v4986 = vand.u32 %v281, 4294901760
        %4987 = vmatpush1.msra.mxu0 %v4986
        %4988 = vmatprep.subr.mxu0 0.0
        %v4989 = vand.u32 %v282, 4294901760
        %4990 = vmatpush1.msra.mxu0 %v4989
        %4991 = vmatprep.subr.mxu0 0.0
        %v4992 = vand.u32 %v283, 4294901760
        %4993 = vmatpush1.msra.mxu0 %v4992
        %4994 = vmatprep.subr.mxu0 0.0
        %v4995 = vand.u32 %v284, 4294901760
        %4996 = vmatpush1.msra.mxu0 %v4995
        %4997 = vmatprep.subr.mxu0 0.0
        %4998 = vmatpush1.msra.mxu0 0.0
        %4999 = vmatprep.subr.mxu0 0.0
        %5000 = vmatpush1.msra.mxu0 0.0
        %5001 = vmatprep.subr.mxu0 0.0
        %5002 = vmatpush1.msra.mxu0 0.0
        %5003 = vmatprep.subr.mxu0 0.0
        %5004 = vmatpush1.msra.mxu0 0.0
        %5005 = vmatprep.subr.mxu0 0.0
        %5006 = vmatpush1.msra.mxu0 0.0
        %5007 = vmatprep.subr.mxu0 0.0
        %5008 = vmatpush1.msra.mxu0 0.0
        %5009 = vmatprep.subr.mxu0 0.0
        %5010 = vmatpush1.msra.mxu0 0.0
        %5011 = vmatprep.subr.mxu0 0.0
        %5012 = vmatpush1.msra.mxu0 0.0
        %5013 = vmatprep.subr.mxu0 0.0
        %5014 = vmatpush1.msra.mxu0 0.0
        %5015 = vmatprep.subr.mxu0 0.0
        %5016 = vmatpush1.msra.mxu0 0.0
        %5017 = vmatprep.subr.mxu0 0.0
        %5018 = vmatpush1.msra.mxu0 0.0
        %5019 = vmatprep.subr.mxu0 0.0
        %5020 = vmatpush1.msra.mxu0 0.0
        %v5021 = vand.u32 %v4311, 4294901760
        %v5022 = vsub.f32 %v4311, %v5021
        %v5023 = vand.u32 %v5022, 4294901760
        %5024 = vmatprep.mubr.f32.mxu0 %v5023
        %v5025 = vand.u32 %v4294, 4294901760
        %v5026 = vsub.f32 %v4294, %v5025
        %v5027 = vand.u32 %v5026, 4294901760
        %5028 = vmatmul.mubr.f32.gmra.mrb[0].mxu0 %v5027
        %v5029 = vpop.f32.mrb[0].mxu0
        %v5030 = vadd.f32 %v4871, %v5029
        %v5031 = vpop.f32.mrb[0].mxu0
        %v5032 = vand.u32 %v4314, 4294901760
        %v5033 = vsub.f32 %v4314, %v5032
        %v5034 = vand.u32 %v5033, 4294901760
        %5035 = vmatprep.mubr.f32.mxu0 %v5034
        %v5036 = vand.u32 %v4296, 4294901760
        %v5037 = vsub.f32 %v4296, %v5036
        %v5038 = vand.u32 %v5037, 4294901760
        %5039 = vmatmul.mubr.f32.gmra.mrb[0].mxu0 %v5038
        %v5040 = vpop.f32.mrb[0].mxu0
        %v5041 = vadd.f32 %v4880, %v5040
        %v5042 = vpop.f32.mrb[0].mxu0
        %v5043 = vand.u32 %v4317, 4294901760
        %v5044 = vsub.f32 %v4317, %v5043
        %v5045 = vand.u32 %v5044, 4294901760
        %5046 = vmatprep.mubr.f32.mxu0 %v5045
        %v5047 = vand.u32 %v4298, 4294901760
        %v5048 = vsub.f32 %v4298, %v5047
        %v5049 = vand.u32 %v5048, 4294901760
        %5050 = vmatmul.mubr.f32.gmra.mrb[0].mxu0 %v5049
        %v5051 = vpop.f32.mrb[0].mxu0
        %v5052 = vadd.f32 %v4889, %v5051
        %v5053 = vpop.f32.mrb[0].mxu0
        %v5054 = vand.u32 %v4320, 4294901760
        %v5055 = vsub.f32 %v4320, %v5054
        %v5056 = vand.u32 %v5055, 4294901760
        %5057 = vmatprep.mubr.f32.mxu0 %v5056
        %v5058 = vand.u32 %v4300, 4294901760
        %v5059 = vsub.f32 %v4300, %v5058
        %v5060 = vand.u32 %v5059, 4294901760
        %5061 = vmatmul.mubr.f32.gmra.mrb[0].mxu0 %v5060
        %v5062 = vpop.f32.mrb[0].mxu0
        %v5063 = vadd.f32 %v4898, %v5062
        %v5064 = vpop.f32.mrb[0].mxu0
        %v5065 = vand.u32 %v4323, 4294901760
        %v5066 = vsub.f32 %v4323, %v5065
        %v5067 = vand.u32 %v5066, 4294901760
        %5068 = vmatprep.mubr.f32.mxu0 %v5067
        %v5069 = vand.u32 %v4302, 4294901760
        %v5070 = vsub.f32 %v4302, %v5069
        %v5071 = vand.u32 %v5070, 4294901760
        %5072 = vmatmul.mubr.f32.gmra.mrb[0].mxu0 %v5071
        %v5073 = vpop.f32.mrb[0].mxu0
        %v5074 = vadd.f32 %v4907, %v5073
        %v5075 = vpop.f32.mrb[0].mxu0
        %v5076 = vand.u32 %v4326, 4294901760
        %v5077 = vsub.f32 %v4326, %v5076
        %v5078 = vand.u32 %v5077, 4294901760
        %5079 = vmatprep.mubr.f32.mxu0 %v5078
        %v5080 = vand.u32 %v4304, 4294901760
        %v5081 = vsub.f32 %v4304, %v5080
        %v5082 = vand.u32 %v5081, 4294901760
        %5083 = vmatmul.mubr.f32.gmra.mrb[0].mxu0 %v5082
        %v5084 = vpop.f32.mrb[0].mxu0
        %v5085 = vadd.f32 %v4916, %v5084
        %v5086 = vpop.f32.mrb[0].mxu0
        %v5087 = vand.u32 %v4329, 4294901760
        %v5088 = vsub.f32 %v4329, %v5087
        %v5089 = vand.u32 %v5088, 4294901760
        %5090 = vmatprep.mubr.f32.mxu0 %v5089
        %v5091 = vand.u32 %v4306, 4294901760
        %v5092 = vsub.f32 %v4306, %v5091
        %v5093 = vand.u32 %v5092, 4294901760
        %5094 = vmatmul.mubr.f32.gmra.mrb[0].mxu0 %v5093
        %v5095 = vpop.f32.mrb[0].mxu0
        %v5096 = vadd.f32 %v4925, %v5095
        %v5097 = vpop.f32.mrb[0].mxu0
        %v5098 = vand.u32 %v4332, 4294901760
        %v5099 = vsub.f32 %v4332, %v5098
        %v5100 = vand.u32 %v5099, 4294901760
        %5101 = vmatprep.mubr.f32.mxu0 %v5100
        %v5102 = vand.u32 %v4308, 4294901760
        %v5103 = vsub.f32 %v4308, %v5102
        %v5104 = vand.u32 %v5103, 4294901760
        %5105 = vmatmul.mubr.f32.gmra.mrb[0].mxu0 %v5104
        %v5106 = vpop.f32.mrb[0].mxu0
        %v5107 = vadd.f32 %v4934, %v5106
        %v5108 = vpop.f32.mrb[0].mxu0
        %5109 = vdwg.mxu0
        %5110 = vmatprep.subr.mxu0 0.0
        %v5111 = vand.u32 %v265, 4294901760
        %v5112 = vsub.f32 %v265, %v5111
        %v5113 = vand.u32 %v5112, 4294901760
        %5114 = vmatpush1.msra.mxu0 %v5113
        %5115 = vmatprep.subr.mxu0 0.0
        %v5116 = vand.u32 %v266, 4294901760
        %v5117 = vsub.f32 %v266, %v5116
        %v5118 = vand.u32 %v5117, 4294901760
        %5119 = vmatpush1.msra.mxu0 %v5118
        %5120 = vmatprep.subr.mxu0 0.0
        %v5121 = vand.u32 %v267, 4294901760
        %v5122 = vsub.f32 %v267, %v5121
        %v5123 = vand.u32 %v5122, 4294901760
        %5124 = vmatpush1.msra.mxu0 %v5123
        %5125 = vmatprep.subr.mxu0 0.0
        %v5126 = vand.u32 %v268, 4294901760
        %v5127 = vsub.f32 %v268, %v5126
        %v5128 = vand.u32 %v5127, 4294901760
        %5129 = vmatpush1.msra.mxu0 %v5128
        %5130 = vmatprep.subr.mxu0 0.0
        %v5131 = vand.u32 %v269, 4294901760
        %v5132 = vsub.f32 %v269, %v5131
        %v5133 = vand.u32 %v5132, 4294901760
        %5134 = vmatpush1.msra.mxu0 %v5133
        %5135 = vmatprep.subr.mxu0 0.0
        %v5136 = vand.u32 %v270, 4294901760
        %v5137 = vsub.f32 %v270, %v5136
        %v5138 = vand.u32 %v5137, 4294901760
        %5139 = vmatpush1.msra.mxu0 %v5138
        %5140 = vmatprep.subr.mxu0 0.0
        %v5141 = vand.u32 %v271, 4294901760
        %v5142 = vsub.f32 %v271, %v5141
        %v5143 = vand.u32 %v5142, 4294901760
        %5144 = vmatpush1.msra.mxu0 %v5143
        %5145 = vmatprep.subr.mxu0 0.0
        %v5146 = vand.u32 %v272, 4294901760
        %v5147 = vsub.f32 %v272, %v5146
        %v5148 = vand.u32 %v5147, 4294901760
        %5149 = vmatpush1.msra.mxu0 %v5148
        %5150 = vmatprep.subr.mxu0 0.0
        %v5151 = vand.u32 %v273, 4294901760
        %v5152 = vsub.f32 %v273, %v5151
        %v5153 = vand.u32 %v5152, 4294901760
        %5154 = vmatpush1.msra.mxu0 %v5153
        %5155 = vmatprep.subr.mxu0 0.0
        %v5156 = vand.u32 %v274, 4294901760
        %v5157 = vsub.f32 %v274, %v5156
        %v5158 = vand.u32 %v5157, 4294901760
        %5159 = vmatpush1.msra.mxu0 %v5158
        %5160 = vmatprep.subr.mxu0 0.0
        %v5161 = vand.u32 %v275, 4294901760
        %v5162 = vsub.f32 %v275, %v5161
        %v5163 = vand.u32 %v5162, 4294901760
        %5164 = vmatpush1.msra.mxu0 %v5163
        %5165 = vmatprep.subr.mxu0 0.0
        %v5166 = vand.u32 %v276, 4294901760
        %v5167 = vsub.f32 %v276, %v5166
        %v5168 = vand.u32 %v5167, 4294901760
        %5169 = vmatpush1.msra.mxu0 %v5168
        %5170 = vmatprep.subr.mxu0 0.0
        %v5171 = vand.u32 %v277, 4294901760
        %v5172 = vsub.f32 %v277, %v5171
        %v5173 = vand.u32 %v5172, 4294901760
        %5174 = vmatpush1.msra.mxu0 %v5173
        %5175 = vmatprep.subr.mxu0 0.0
        %v5176 = vand.u32 %v278, 4294901760
        %v5177 = vsub.f32 %v278, %v5176
        %v5178 = vand.u32 %v5177, 4294901760
        %5179 = vmatpush1.msra.mxu0 %v5178
        %5180 = vmatprep.subr.mxu0 0.0
        %v5181 = vand.u32 %v279, 4294901760
        %v5182 = vsub.f32 %v279, %v5181
        %v5183 = vand.u32 %v5182, 4294901760
        %5184 = vmatpush1.msra.mxu0 %v5183
        %5185 = vmatprep.subr.mxu0 0.0
        %v5186 = vand.u32 %v280, 4294901760
        %v5187 = vsub.f32 %v280, %v5186
        %v5188 = vand.u32 %v5187, 4294901760
        %5189 = vmatpush1.msra.mxu0 %v5188
        %5190 = vmatprep.subr.mxu0 0.0
        %v5191 = vand.u32 %v281, 4294901760
        %v5192 = vsub.f32 %v281, %v5191
        %v5193 = vand.u32 %v5192, 4294901760
        %5194 = vmatpush1.msra.mxu0 %v5193
        %5195 = vmatprep.subr.mxu0 0.0
        %v5196 = vand.u32 %v282, 4294901760
        %v5197 = vsub.f32 %v282, %v5196
        %v5198 = vand.u32 %v5197, 4294901760
        %5199 = vmatpush1.msra.mxu0 %v5198
        %5200 = vmatprep.subr.mxu0 0.0
        %v5201 = vand.u32 %v283, 4294901760
        %v5202 = vsub.f32 %v283, %v5201
        %v5203 = vand.u32 %v5202, 4294901760
        %5204 = vmatpush1.msra.mxu0 %v5203
        %5205 = vmatprep.subr.mxu0 0.0
        %v5206 = vand.u32 %v284, 4294901760
        %v5207 = vsub.f32 %v284, %v5206
        %v5208 = vand.u32 %v5207, 4294901760
        %5209 = vmatpush1.msra.mxu0 %v5208
        %5210 = vmatprep.subr.mxu0 0.0
        %5211 = vmatpush1.msra.mxu0 0.0
        %5212 = vmatprep.subr.mxu0 0.0
        %5213 = vmatpush1.msra.mxu0 0.0
        %5214 = vmatprep.subr.mxu0 0.0
        %5215 = vmatpush1.msra.mxu0 0.0
        %5216 = vmatprep.subr.mxu0 0.0
        %5217 = vmatpush1.msra.mxu0 0.0
        %5218 = vmatprep.subr.mxu0 0.0
        %5219 = vmatpush1.msra.mxu0 0.0
        %5220 = vmatprep.subr.mxu0 0.0
        %5221 = vmatpush1.msra.mxu0 0.0
        %5222 = vmatprep.subr.mxu0 0.0
        %5223 = vmatpush1.msra.mxu0 0.0
        %5224 = vmatprep.subr.mxu0 0.0
        %5225 = vmatpush1.msra.mxu0 0.0
        %5226 = vmatprep.subr.mxu0 0.0
        %5227 = vmatpush1.msra.mxu0 0.0
        %5228 = vmatprep.subr.mxu0 0.0
        %5229 = vmatpush1.msra.mxu0 0.0
        %5230 = vmatprep.subr.mxu0 0.0
        %5231 = vmatpush1.msra.mxu0 0.0
        %5232 = vmatprep.subr.mxu0 0.0
        %5233 = vmatpush1.msra.mxu0 0.0
        %v5234 = vand.u32 %v4311, 4294901760
        %5235 = vmatprep.mubr.f32.mxu0 %v5234
        %v5236 = vand.u32 %v4294, 4294901760
        %5237 = vmatmul.mubr.f32.gmra.mrb[0].mxu0 %v5236
        %v5238 = vpop.f32.mrb[0].mxu0
        %v5239 = vadd.f32 %v5030, %v5238
        %v5240 = vpop.f32.mrb[0].mxu0
        %v5241 = vand.u32 %v4314, 4294901760
        %5242 = vmatprep.mubr.f32.mxu0 %v5241
        %v5243 = vand.u32 %v4296, 4294901760
        %5244 = vmatmul.mubr.f32.gmra.mrb[0].mxu0 %v5243
        %v5245 = vpop.f32.mrb[0].mxu0
        %v5246 = vadd.f32 %v5041, %v5245
        %v5247 = vpop.f32.mrb[0].mxu0
        %v5248 = vand.u32 %v4317, 4294901760
        %5249 = vmatprep.mubr.f32.mxu0 %v5248
        %v5250 = vand.u32 %v4298, 4294901760
        %5251 = vmatmul.mubr.f32.gmra.mrb[0].mxu0 %v5250
        %v5252 = vpop.f32.mrb[0].mxu0
        %v5253 = vadd.f32 %v5052, %v5252
        %v5254 = vpop.f32.mrb[0].mxu0
        %v5255 = vand.u32 %v4320, 4294901760
        %5256 = vmatprep.mubr.f32.mxu0 %v5255
        %v5257 = vand.u32 %v4300, 4294901760
        %5258 = vmatmul.mubr.f32.gmra.mrb[0].mxu0 %v5257
        %v5259 = vpop.f32.mrb[0].mxu0
        %v5260 = vadd.f32 %v5063, %v5259
        %v5261 = vpop.f32.mrb[0].mxu0
        %v5262 = vand.u32 %v4323, 4294901760
        %5263 = vmatprep.mubr.f32.mxu0 %v5262
        %v5264 = vand.u32 %v4302, 4294901760
        %5265 = vmatmul.mubr.f32.gmra.mrb[0].mxu0 %v5264
        %v5266 = vpop.f32.mrb[0].mxu0
        %v5267 = vadd.f32 %v5074, %v5266
        %v5268 = vpop.f32.mrb[0].mxu0
        %v5269 = vand.u32 %v4326, 4294901760
        %5270 = vmatprep.mubr.f32.mxu0 %v5269
        %v5271 = vand.u32 %v4304, 4294901760
        %5272 = vmatmul.mubr.f32.gmra.mrb[0].mxu0 %v5271
        %v5273 = vpop.f32.mrb[0].mxu0
        %v5274 = vadd.f32 %v5085, %v5273
        %v5275 = vpop.f32.mrb[0].mxu0
        %v5276 = vand.u32 %v4329, 4294901760
        %5277 = vmatprep.mubr.f32.mxu0 %v5276
        %v5278 = vand.u32 %v4306, 4294901760
        %5279 = vmatmul.mubr.f32.gmra.mrb[0].mxu0 %v5278
        %v5280 = vpop.f32.mrb[0].mxu0
        %v5281 = vadd.f32 %v5096, %v5280
        %v5282 = vpop.f32.mrb[0].mxu0
        %v5283 = vand.u32 %v4332, 4294901760
        %5284 = vmatprep.mubr.f32.mxu0 %v5283
        %v5285 = vand.u32 %v4308, 4294901760
        %5286 = vmatmul.mubr.f32.gmra.mrb[0].mxu0 %v5285
        %v5287 = vpop.f32.mrb[0].mxu0
        %v5288 = vadd.f32 %v5107, %v5287
        %v5289 = vpop.f32.mrb[0].mxu0
        %5290 = vdwg.mxu0
        %5291 = vmatprep.subr.mxu0 0.0
        %v5292 = vand.u32 %v265, 4294901760
        %5293 = vmatpush1.msra.mxu0 %v5292
        %5294 = vmatprep.subr.mxu0 0.0
        %v5295 = vand.u32 %v266, 4294901760
        %5296 = vmatpush1.msra.mxu0 %v5295
        %5297 = vmatprep.subr.mxu0 0.0
        %v5298 = vand.u32 %v267, 4294901760
        %5299 = vmatpush1.msra.mxu0 %v5298
        %5300 = vmatprep.subr.mxu0 0.0
        %v5301 = vand.u32 %v268, 4294901760
        %5302 = vmatpush1.msra.mxu0 %v5301
        %5303 = vmatprep.subr.mxu0 0.0
        %v5304 = vand.u32 %v269, 4294901760
        %5305 = vmatpush1.msra.mxu0 %v5304
        %5306 = vmatprep.subr.mxu0 0.0
        %v5307 = vand.u32 %v270, 4294901760
        %5308 = vmatpush1.msra.mxu0 %v5307
        %5309 = vmatprep.subr.mxu0 0.0
        %v5310 = vand.u32 %v271, 4294901760
        %5311 = vmatpush1.msra.mxu0 %v5310
        %5312 = vmatprep.subr.mxu0 0.0
        %v5313 = vand.u32 %v272, 4294901760
        %5314 = vmatpush1.msra.mxu0 %v5313
        %5315 = vmatprep.subr.mxu0 0.0
        %v5316 = vand.u32 %v273, 4294901760
        %5317 = vmatpush1.msra.mxu0 %v5316
        %5318 = vmatprep.subr.mxu0 0.0
        %v5319 = vand.u32 %v274, 4294901760
        %5320 = vmatpush1.msra.mxu0 %v5319
        %5321 = vmatprep.subr.mxu0 0.0
        %v5322 = vand.u32 %v275, 4294901760
        %5323 = vmatpush1.msra.mxu0 %v5322
        %5324 = vmatprep.subr.mxu0 0.0
        %v5325 = vand.u32 %v276, 4294901760
        %5326 = vmatpush1.msra.mxu0 %v5325
        %5327 = vmatprep.subr.mxu0 0.0
        %v5328 = vand.u32 %v277, 4294901760
        %5329 = vmatpush1.msra.mxu0 %v5328
        %5330 = vmatprep.subr.mxu0 0.0
        %v5331 = vand.u32 %v278, 4294901760
        %5332 = vmatpush1.msra.mxu0 %v5331
        %5333 = vmatprep.subr.mxu0 0.0
        %v5334 = vand.u32 %v279, 4294901760
        %5335 = vmatpush1.msra.mxu0 %v5334
        %5336 = vmatprep.subr.mxu0 0.0
        %v5337 = vand.u32 %v280, 4294901760
        %5338 = vmatpush1.msra.mxu0 %v5337
        %5339 = vmatprep.subr.mxu0 0.0
        %v5340 = vand.u32 %v281, 4294901760
        %5341 = vmatpush1.msra.mxu0 %v5340
        %5342 = vmatprep.subr.mxu0 0.0
        %v5343 = vand.u32 %v282, 4294901760
        %5344 = vmatpush1.msra.mxu0 %v5343
        %5345 = vmatprep.subr.mxu0 0.0
        %v5346 = vand.u32 %v283, 4294901760
        %5347 = vmatpush1.msra.mxu0 %v5346
        %5348 = vmatprep.subr.mxu0 0.0
        %v5349 = vand.u32 %v284, 4294901760
        %5350 = vmatpush1.msra.mxu0 %v5349
        %5351 = vmatprep.subr.mxu0 0.0
        %5352 = vmatpush1.msra.mxu0 0.0
        %5353 = vmatprep.subr.mxu0 0.0
        %5354 = vmatpush1.msra.mxu0 0.0
        %5355 = vmatprep.subr.mxu0 0.0
        %5356 = vmatpush1.msra.mxu0 0.0
        %5357 = vmatprep.subr.mxu0 0.0
        %5358 = vmatpush1.msra.mxu0 0.0
        %5359 = vmatprep.subr.mxu0 0.0
        %5360 = vmatpush1.msra.mxu0 0.0
        %5361 = vmatprep.subr.mxu0 0.0
        %5362 = vmatpush1.msra.mxu0 0.0
        %5363 = vmatprep.subr.mxu0 0.0
        %5364 = vmatpush1.msra.mxu0 0.0
        %5365 = vmatprep.subr.mxu0 0.0
        %5366 = vmatpush1.msra.mxu0 0.0
        %5367 = vmatprep.subr.mxu0 0.0
        %5368 = vmatpush1.msra.mxu0 0.0
        %5369 = vmatprep.subr.mxu0 0.0
        %5370 = vmatpush1.msra.mxu0 0.0
        %5371 = vmatprep.subr.mxu0 0.0
        %5372 = vmatpush1.msra.mxu0 0.0
        %5373 = vmatprep.subr.mxu0 0.0
        %5374 = vmatpush1.msra.mxu0 0.0
        %v5375 = vand.u32 %v4311, 4294901760
        %5376 = vmatprep.mubr.f32.mxu0 %v5375
        %v5377 = vand.u32 %v4294, 4294901760
        %5378 = vmatmul.mubr.f32.gmra.mrb[0].mxu0 %v5377
        %v5379 = vpop.f32.mrb[0].mxu0
        %v5380 = vadd.f32 %v5239, %v5379
        %v5381 = vpop.f32.mrb[0].mxu0
        %v5382 = vand.u32 %v4314, 4294901760
        %5383 = vmatprep.mubr.f32.mxu0 %v5382
        %v5384 = vand.u32 %v4296, 4294901760
        %5385 = vmatmul.mubr.f32.gmra.mrb[0].mxu0 %v5384
        %v5386 = vpop.f32.mrb[0].mxu0
        %v5387 = vadd.f32 %v5246, %v5386
        %v5388 = vpop.f32.mrb[0].mxu0
        %v5389 = vand.u32 %v4317, 4294901760
        %5390 = vmatprep.mubr.f32.mxu0 %v5389
        %v5391 = vand.u32 %v4298, 4294901760
        %5392 = vmatmul.mubr.f32.gmra.mrb[0].mxu0 %v5391
        %v5393 = vpop.f32.mrb[0].mxu0
        %v5394 = vadd.f32 %v5253, %v5393
        %v5395 = vpop.f32.mrb[0].mxu0
        %v5396 = vand.u32 %v4320, 4294901760
        %5397 = vmatprep.mubr.f32.mxu0 %v5396
        %v5398 = vand.u32 %v4300, 4294901760
        %5399 = vmatmul.mubr.f32.gmra.mrb[0].mxu0 %v5398
        %v5400 = vpop.f32.mrb[0].mxu0
        %v5401 = vadd.f32 %v5260, %v5400
        %v5402 = vpop.f32.mrb[0].mxu0
        %v5403 = vand.u32 %v4323, 4294901760
        %5404 = vmatprep.mubr.f32.mxu0 %v5403
        %v5405 = vand.u32 %v4302, 4294901760
        %5406 = vmatmul.mubr.f32.gmra.mrb[0].mxu0 %v5405
        %v5407 = vpop.f32.mrb[0].mxu0
        %v5408 = vadd.f32 %v5267, %v5407
        %v5409 = vpop.f32.mrb[0].mxu0
        %v5410 = vand.u32 %v4326, 4294901760
        %5411 = vmatprep.mubr.f32.mxu0 %v5410
        %v5412 = vand.u32 %v4304, 4294901760
        %5413 = vmatmul.mubr.f32.gmra.mrb[0].mxu0 %v5412
        %v5414 = vpop.f32.mrb[0].mxu0
        %v5415 = vadd.f32 %v5274, %v5414
        %v5416 = vpop.f32.mrb[0].mxu0
        %v5417 = vand.u32 %v4329, 4294901760
        %5418 = vmatprep.mubr.f32.mxu0 %v5417
        %v5419 = vand.u32 %v4306, 4294901760
        %5420 = vmatmul.mubr.f32.gmra.mrb[0].mxu0 %v5419
        %v5421 = vpop.f32.mrb[0].mxu0
        %v5422 = vadd.f32 %v5281, %v5421
        %v5423 = vpop.f32.mrb[0].mxu0
        %v5424 = vand.u32 %v4332, 4294901760
        %5425 = vmatprep.mubr.f32.mxu0 %v5424
        %v5426 = vand.u32 %v4308, 4294901760
        %5427 = vmatmul.mubr.f32.gmra.mrb[0].mxu0 %v5426
        %v5428 = vpop.f32.mrb[0].mxu0
        %v5429 = vadd.f32 %v5288, %v5428
        %v5430 = vpop.f32.mrb[0].mxu0
        %5431 = vdwg.mxu0
        %v5433 = vcombine.high %v4293, %v4293
        %v5435 = vunpack.c.l.s4 1966171168
        %v5436 = vunpack.c.0.s8 %v5435
        %v5437 = vlaneseq
        %v5438 = vshrl.u32 %v5437, 7
        %v5439 = vsub.s32 %v5436, %v5438
        %v5440 = vrot.slane %v4293, %v5439
        %v5442 = vunpack.c.l.s4 1966171168
        %v5443 = vunpack.c.0.s8 %v5442
        %v5444 = vlaneseq
        %v5445 = vshrl.u32 %v5444, 7
        %v5446 = vsub.s32 %v5443, %v5445
        %v5447 = vrot.slane %v5433, %v5446
        %v5448 = vcombine.high %v5440, %v5440
        %v5449 = vcombine.high %v5447, %v5447
        %v5451 = vunpack.c.l.s4 1966171168
        %v5452 = vunpack.c.0.s8 %v5451
        %v5453 = vlaneseq
        %v5454 = vshrl.u32 %v5453, 7
        %v5455 = vsub.s32 %v5452, %v5454
        %v5456 = vrot.slane %v5440, %v5455
        %v5458 = vunpack.c.l.s4 1966171168
        %v5459 = vunpack.c.0.s8 %v5458
        %v5460 = vlaneseq
        %v5461 = vshrl.u32 %v5460, 7
        %v5462 = vsub.s32 %v5459, %v5461
        %v5463 = vrot.slane %v5447, %v5462
        %v5465 = vunpack.c.l.s4 1966171168
        %v5466 = vunpack.c.0.s8 %v5465
        %v5467 = vlaneseq
        %v5468 = vshrl.u32 %v5467, 7
        %v5469 = vsub.s32 %v5466, %v5468
        %v5470 = vrot.slane %v5448, %v5469
        %v5472 = vunpack.c.l.s4 1966171168
        %v5473 = vunpack.c.0.s8 %v5472
        %v5474 = vlaneseq
        %v5475 = vshrl.u32 %v5474, 7
        %v5476 = vsub.s32 %v5473, %v5475
        %v5477 = vrot.slane %v5449, %v5476
        %v5478 = vcombine.high %v5456, %v5456
        %v5479 = vcombine.high %v5463, %v5463
        %v5480 = vcombine.high %v5470, %v5470
        %v5481 = vcombine.high %v5477, %v5477
        %v5482 = vlaneseq
        %v5483 = vshrl.u32 %v5482, 7
        %v5484 = vsub.s32 0, %v5483
        %v5485 = vrot.slane %v5456, %v5484
        %v5486 = vlaneseq
        %v5487 = vshrl.u32 %v5486, 7
        %v5488 = vsub.s32 0, %v5487
        %v5489 = vrot.slane %v5470, %v5488
        %v5490 = vlaneseq
        %v5491 = vshrl.u32 %v5490, 7
        %v5492 = vsub.s32 0, %v5491
        %v5493 = vrot.slane %v5478, %v5492
        %v5494 = vlaneseq
        %v5495 = vshrl.u32 %v5494, 7
        %v5496 = vsub.s32 0, %v5495
        %v5497 = vrot.slane %v5480, %v5496
        %v5498 = vlaneseq
        %v5499 = vshrl.u32 %v5498, 7
        %v5500 = vsub.s32 0, %v5499
        %v5501 = vrot.slane %v5463, %v5500
        %v5502 = vlaneseq
        %v5503 = vshrl.u32 %v5502, 7
        %v5504 = vsub.s32 0, %v5503
        %v5505 = vrot.slane %v5477, %v5504
        %v5506 = vlaneseq
        %v5507 = vshrl.u32 %v5506, 7
        %v5508 = vsub.s32 0, %v5507
        %v5509 = vrot.slane %v5479, %v5508
        %v5510 = vlaneseq
        %v5511 = vshrl.u32 %v5510, 7
        %v5512 = vsub.s32 0, %v5511
        %v5513 = vrot.slane %v5481, %v5512
        %v5522 = vmul.f32 %v5380, %v5485
        %v5523 = vmul.f32 %v5387, %v5489
        %v5524 = vmul.f32 %v5394, %v5493
        %v5525 = vmul.f32 %v5401, %v5497
        %v5526 = vmul.f32 %v5408, %v5501
        %v5527 = vmul.f32 %v5415, %v5505
        %v5528 = vmul.f32 %v5422, %v5509
        %v5529 = vmul.f32 %v5429, %v5513
        %v5530 = vadd.f32 %v2420, %v5522
        %v5531 = vadd.f32 %v2421, %v5523
        %v5532 = vadd.f32 %v2422, %v5524
        %v5533 = vadd.f32 %v2423, %v5525
        %v5534 = vadd.f32 %v2424, %v5526
        %v5535 = vadd.f32 %v2425, %v5527
        %v5536 = vadd.f32 %v2426, %v5528
        %v5537 = vadd.f32 %v2427, %v5529
        %v5538 = vsel %vm2428, %v5530, -inf
        %5539 = vmax.xlane.f32.xlu0 %v5538
        %v5540 = vpop.xlane.xlu0 %5539
        %v5541 = vsel %vm2428, %v5531, -inf
        %5542 = vmax.xlane.f32.xlu0 %v5541
        %v5543 = vpop.xlane.xlu0 %5542
        %v5544 = vsel %vm2428, %v5532, -inf
        %5545 = vmax.xlane.f32.xlu0 %v5544
        %v5546 = vpop.xlane.xlu0 %5545
        %v5547 = vsel %vm2428, %v5533, -inf
        %5548 = vmax.xlane.f32.xlu0 %v5547
        %v5549 = vpop.xlane.xlu0 %5548
        %v5550 = vsel %vm2428, %v5534, -inf
        %5551 = vmax.xlane.f32.xlu0 %v5550
        %v5552 = vpop.xlane.xlu0 %5551
        %v5553 = vsel %vm2428, %v5535, -inf
        %5554 = vmax.xlane.f32.xlu0 %v5553
        %v5555 = vpop.xlane.xlu0 %5554
        %v5556 = vsel %vm2428, %v5536, -inf
        %5557 = vmax.xlane.f32.xlu0 %v5556
        %v5558 = vpop.xlane.xlu0 %5557
        %v5559 = vsel %vm2428, %v5537, -inf
        %5560 = vmax.xlane.f32.xlu0 %v5559
        %v5561 = vpop.xlane.xlu0 %5560
        %v5562 = vsub.f32 %v5530, %v5540
        %v5563 = vsub.f32 %v5531, %v5543
        %v5564 = vsub.f32 %v5532, %v5546
        %v5565 = vsub.f32 %v5533, %v5549
        %v5566 = vsub.f32 %v5534, %v5552
        %v5567 = vsub.f32 %v5535, %v5555
        %v5568 = vsub.f32 %v5536, %v5558
        %v5569 = vsub.f32 %v5537, %v5561
        %v5570 = vmul.f32 %v5562, 1.442695
        %v5571 = vpow.pop %v5570
        %v5572 = vmul.f32 %v5563, 1.442695
        %v5573 = vpow.pop %v5572
        %v5574 = vmul.f32 %v5564, 1.442695
        %v5575 = vpow.pop %v5574
        %v5576 = vmul.f32 %v5565, 1.442695
        %v5577 = vpow.pop %v5576
        %v5578 = vmul.f32 %v5566, 1.442695
        %v5579 = vpow.pop %v5578
        %v5580 = vmul.f32 %v5567, 1.442695
        %v5581 = vpow.pop %v5580
        %v5582 = vmul.f32 %v5568, 1.442695
        %v5583 = vpow.pop %v5582
        %v5584 = vmul.f32 %v5569, 1.442695
        %v5585 = vpow.pop %v5584
        %v5586 = vsel %vm2428, %v5571, 0.0
        %5587 = vadd.xlane.f32.xlu0 %v5586
        %v5588 = vpop.xlane.xlu0 %5587
        %v5589 = vsel %vm2428, %v5573, 0.0
        %5590 = vadd.xlane.f32.xlu0 %v5589
        %v5591 = vpop.xlane.xlu0 %5590
        %v5592 = vsel %vm2428, %v5575, 0.0
        %5593 = vadd.xlane.f32.xlu0 %v5592
        %v5594 = vpop.xlane.xlu0 %5593
        %v5595 = vsel %vm2428, %v5577, 0.0
        %5596 = vadd.xlane.f32.xlu0 %v5595
        %v5597 = vpop.xlane.xlu0 %5596
        %v5598 = vsel %vm2428, %v5579, 0.0
        %5599 = vadd.xlane.f32.xlu0 %v5598
        %v5600 = vpop.xlane.xlu0 %5599
        %v5601 = vsel %vm2428, %v5581, 0.0
        %5602 = vadd.xlane.f32.xlu0 %v5601
        %v5603 = vpop.xlane.xlu0 %5602
        %v5604 = vsel %vm2428, %v5583, 0.0
        %5605 = vadd.xlane.f32.xlu0 %v5604
        %v5606 = vpop.xlane.xlu0 %5605
        %v5607 = vsel %vm2428, %v5585, 0.0
        %5608 = vadd.xlane.f32.xlu0 %v5607
        %v5609 = vpop.xlane.xlu0 %5608
        %v5610 = vrcp.pop %v5588
        %v5611 = vrcp.pop %v5591
        %v5612 = vrcp.pop %v5594
        %v5613 = vrcp.pop %v5597
        %v5614 = vrcp.pop %v5600
        %v5615 = vrcp.pop %v5603
        %v5616 = vrcp.pop %v5606
        %v5617 = vrcp.pop %v5609
        %v5618 = vmul.f32 %v5588, %v5610
        %v5619 = vmul.f32 %v5591, %v5611
        %v5620 = vmul.f32 %v5594, %v5612
        %v5621 = vmul.f32 %v5597, %v5613
        %v5622 = vmul.f32 %v5600, %v5614
        %v5623 = vmul.f32 %v5603, %v5615
        %v5624 = vmul.f32 %v5606, %v5616
        %v5625 = vmul.f32 %v5609, %v5617
        %v5626 = vsub.f32 2.0, %v5618
        %v5627 = vsub.f32 2.0, %v5619
        %v5628 = vsub.f32 2.0, %v5620
        %v5629 = vsub.f32 2.0, %v5621
        %v5630 = vsub.f32 2.0, %v5622
        %v5631 = vsub.f32 2.0, %v5623
        %v5632 = vsub.f32 2.0, %v5624
        %v5633 = vsub.f32 2.0, %v5625
        %v5634 = vmul.f32 %v5610, %v5626
        %v5635 = vmul.f32 %v5611, %v5627
        %v5636 = vmul.f32 %v5612, %v5628
        %v5637 = vmul.f32 %v5613, %v5629
        %v5638 = vmul.f32 %v5614, %v5630
        %v5639 = vmul.f32 %v5615, %v5631
        %v5640 = vmul.f32 %v5616, %v5632
        %v5641 = vmul.f32 %v5617, %v5633
        %v5642 = vmul.f32 %v5571, %v5634
        %v5643 = vmul.f32 %v5573, %v5635
        %v5644 = vmul.f32 %v5575, %v5636
        %v5645 = vmul.f32 %v5577, %v5637
        %v5646 = vmul.f32 %v5579, %v5638
        %v5647 = vmul.f32 %v5581, %v5639
        %v5648 = vmul.f32 %v5583, %v5640
        %v5649 = vmul.f32 %v5585, %v5641
        %v5651 = vsel %vm2428, %v5642, 0
        %v5654 = vsel %vm2428, %v5643, 0
        %v5657 = vsel %vm2428, %v5644, 0
        %v5660 = vsel %vm2428, %v5645, 0
        %v5663 = vsel %vm2428, %v5646, 0
        %v5666 = vsel %vm2428, %v5647, 0
        %v5669 = vsel %vm2428, %v5648, 0
        %v5672 = vsel %vm2428, %v5649, 0
        %v5674 = vand.u32 %v262, 4294901760
        %5675 = vmatprep.subr.mxu0 %v5674
        %v5676 = vand.u32 %v261, 4294901760
        %5677 = vmatpush1.msra.mxu0 %v5676
        %v5678 = vand.u32 %v2570, 4294901760
        %5679 = vmatprep.subr.mxu0 %v5678
        %v5680 = vand.u32 %v2567, 4294901760
        %5681 = vmatpush1.msra.mxu0 %v5680
        %5682 = vmatprep.subr.mxu0 0.0
        %5683 = vmatpush1.msra.mxu0 0.0
        %5684 = vmatprep.subr.mxu0 0.0
        %5685 = vmatpush1.msra.mxu0 0.0
        %5686 = vmatprep.subr.mxu0 0.0
        %5687 = vmatpush1.msra.mxu0 0.0
        %5688 = vmatprep.subr.mxu0 0.0
        %5689 = vmatpush1.msra.mxu0 0.0
        %5690 = vmatprep.subr.mxu0 0.0
        %5691 = vmatpush1.msra.mxu0 0.0
        %5692 = vmatprep.subr.mxu0 0.0
        %5693 = vmatpush1.msra.mxu0 0.0
        %5694 = vmatprep.subr.mxu0 0.0
        %5695 = vmatpush1.msra.mxu0 0.0
        %5696 = vmatprep.subr.mxu0 0.0
        %5697 = vmatpush1.msra.mxu0 0.0
        %5698 = vmatprep.subr.mxu0 0.0
        %5699 = vmatpush1.msra.mxu0 0.0
        %5700 = vmatprep.subr.mxu0 0.0
        %5701 = vmatpush1.msra.mxu0 0.0
        %5702 = vmatprep.subr.mxu0 0.0
        %5703 = vmatpush1.msra.mxu0 0.0
        %5704 = vmatprep.subr.mxu0 0.0
        %5705 = vmatpush1.msra.mxu0 0.0
        %5706 = vmatprep.subr.mxu0 0.0
        %5707 = vmatpush1.msra.mxu0 0.0
        %5708 = vmatprep.subr.mxu0 0.0
        %5709 = vmatpush1.msra.mxu0 0.0
        %5710 = vmatprep.subr.mxu0 0.0
        %5711 = vmatpush1.msra.mxu0 0.0
        %5712 = vmatprep.subr.mxu0 0.0
        %5713 = vmatpush1.msra.mxu0 0.0
        %5714 = vmatprep.subr.mxu0 0.0
        %5715 = vmatpush1.msra.mxu0 0.0
        %5716 = vmatprep.subr.mxu0 0.0
        %5717 = vmatpush1.msra.mxu0 0.0
        %5718 = vmatprep.subr.mxu0 0.0
        %5719 = vmatpush1.msra.mxu0 0.0
        %5720 = vmatprep.subr.mxu0 0.0
        %5721 = vmatpush1.msra.mxu0 0.0
        %5722 = vmatprep.subr.mxu0 0.0
        %5723 = vmatpush1.msra.mxu0 0.0
        %5724 = vmatprep.subr.mxu0 0.0
        %5725 = vmatpush1.msra.mxu0 0.0
        %5726 = vmatprep.subr.mxu0 0.0
        %5727 = vmatpush1.msra.mxu0 0.0
        %5728 = vmatprep.subr.mxu0 0.0
        %5729 = vmatpush1.msra.mxu0 0.0
        %5730 = vmatprep.subr.mxu0 0.0
        %5731 = vmatpush1.msra.mxu0 0.0
        %5732 = vmatprep.subr.mxu0 0.0
        %5733 = vmatpush1.msra.mxu0 0.0
        %5734 = vmatprep.subr.mxu0 0.0
        %5735 = vmatpush1.msra.mxu0 0.0
        %5736 = vmatprep.subr.mxu0 0.0
        %5737 = vmatpush1.msra.mxu0 0.0
        %5738 = vmatprep.subr.mxu0 0.0
        %5739 = vmatpush1.msra.mxu0 0.0
        %5740 = vmatprep.subr.mxu0 0.0
        %5741 = vmatpush1.msra.mxu0 0.0
        %5742 = vmatprep.mubr.f32.mxu0 0.0
        %v5743 = vand.u32 %v5651, 4294901760
        %v5744 = vsub.f32 %v5651, %v5743
        %v5745 = vand.u32 %v5744, 4294901760
        %v5746 = vsub.f32 %v5744, %v5745
        %v5747 = vand.u32 %v5746, 4294901760
        %5748 = vmatmul.mubr.f32.gmra.mrb[0].mxu0 %v5747
        %v5749 = vpop.f32.mrb[0].mxu0
        %v5750 = vadd.f32 0.0, %v5749
        %v5751 = vpop.f32.mrb[0].mxu0
        %v5752 = vadd.f32 0.0, %v5751
        %5753 = vmatprep.mubr.f32.mxu0 0.0
        %v5754 = vand.u32 %v5654, 4294901760
        %v5755 = vsub.f32 %v5654, %v5754
        %v5756 = vand.u32 %v5755, 4294901760
        %v5757 = vsub.f32 %v5755, %v5756
        %v5758 = vand.u32 %v5757, 4294901760
        %5759 = vmatmul.mubr.f32.gmra.mrb[0].mxu0 %v5758
        %v5760 = vpop.f32.mrb[0].mxu0
        %v5761 = vadd.f32 0.0, %v5760
        %v5762 = vpop.f32.mrb[0].mxu0
        %v5763 = vadd.f32 0.0, %v5762
        %5764 = vmatprep.mubr.f32.mxu0 0.0
        %v5765 = vand.u32 %v5657, 4294901760
        %v5766 = vsub.f32 %v5657, %v5765
        %v5767 = vand.u32 %v5766, 4294901760
        %v5768 = vsub.f32 %v5766, %v5767
        %v5769 = vand.u32 %v5768, 4294901760
        %5770 = vmatmul.mubr.f32.gmra.mrb[0].mxu0 %v5769
        %v5771 = vpop.f32.mrb[0].mxu0
        %v5772 = vadd.f32 0.0, %v5771
        %v5773 = vpop.f32.mrb[0].mxu0
        %v5774 = vadd.f32 0.0, %v5773
        %5775 = vmatprep.mubr.f32.mxu0 0.0
        %v5776 = vand.u32 %v5660, 4294901760
        %v5777 = vsub.f32 %v5660, %v5776
        %v5778 = vand.u32 %v5777, 4294901760
        %v5779 = vsub.f32 %v5777, %v5778
        %v5780 = vand.u32 %v5779, 4294901760
        %5781 = vmatmul.mubr.f32.gmra.mrb[0].mxu0 %v5780
        %v5782 = vpop.f32.mrb[0].mxu0
        %v5783 = vadd.f32 0.0, %v5782
        %v5784 = vpop.f32.mrb[0].mxu0
        %v5785 = vadd.f32 0.0, %v5784
        %5786 = vmatprep.mubr.f32.mxu0 0.0
        %v5787 = vand.u32 %v5663, 4294901760
        %v5788 = vsub.f32 %v5663, %v5787
        %v5789 = vand.u32 %v5788, 4294901760
        %v5790 = vsub.f32 %v5788, %v5789
        %v5791 = vand.u32 %v5790, 4294901760
        %5792 = vmatmul.mubr.f32.gmra.mrb[0].mxu0 %v5791
        %v5793 = vpop.f32.mrb[0].mxu0
        %v5794 = vadd.f32 0.0, %v5793
        %v5795 = vpop.f32.mrb[0].mxu0
        %v5796 = vadd.f32 0.0, %v5795
        %5797 = vmatprep.mubr.f32.mxu0 0.0
        %v5798 = vand.u32 %v5666, 4294901760
        %v5799 = vsub.f32 %v5666, %v5798
        %v5800 = vand.u32 %v5799, 4294901760
        %v5801 = vsub.f32 %v5799, %v5800
        %v5802 = vand.u32 %v5801, 4294901760
        %5803 = vmatmul.mubr.f32.gmra.mrb[0].mxu0 %v5802
        %v5804 = vpop.f32.mrb[0].mxu0
        %v5805 = vadd.f32 0.0, %v5804
        %v5806 = vpop.f32.mrb[0].mxu0
        %v5807 = vadd.f32 0.0, %v5806
        %5808 = vmatprep.mubr.f32.mxu0 0.0
        %v5809 = vand.u32 %v5669, 4294901760
        %v5810 = vsub.f32 %v5669, %v5809
        %v5811 = vand.u32 %v5810, 4294901760
        %v5812 = vsub.f32 %v5810, %v5811
        %v5813 = vand.u32 %v5812, 4294901760
        %5814 = vmatmul.mubr.f32.gmra.mrb[0].mxu0 %v5813
        %v5815 = vpop.f32.mrb[0].mxu0
        %v5816 = vadd.f32 0.0, %v5815
        %v5817 = vpop.f32.mrb[0].mxu0
        %v5818 = vadd.f32 0.0, %v5817
        %5819 = vmatprep.mubr.f32.mxu0 0.0
        %v5820 = vand.u32 %v5672, 4294901760
        %v5821 = vsub.f32 %v5672, %v5820
        %v5822 = vand.u32 %v5821, 4294901760
        %v5823 = vsub.f32 %v5821, %v5822
        %v5824 = vand.u32 %v5823, 4294901760
        %5825 = vmatmul.mubr.f32.gmra.mrb[0].mxu0 %v5824
        %v5826 = vpop.f32.mrb[0].mxu0
        %v5827 = vadd.f32 0.0, %v5826
        %v5828 = vpop.f32.mrb[0].mxu0
        %v5829 = vadd.f32 0.0, %v5828
        %5830 = vdwg.mxu0
        %v5831 = vand.u32 %v262, 4294901760
        %v5832 = vsub.f32 %v262, %v5831
        %v5833 = vand.u32 %v5832, 4294901760
        %v5834 = vsub.f32 %v5832, %v5833
        %v5835 = vand.u32 %v5834, 4294901760
        %5836 = vmatprep.subr.mxu0 %v5835
        %v5837 = vand.u32 %v261, 4294901760
        %v5838 = vsub.f32 %v261, %v5837
        %v5839 = vand.u32 %v5838, 4294901760
        %v5840 = vsub.f32 %v5838, %v5839
        %v5841 = vand.u32 %v5840, 4294901760
        %5842 = vmatpush1.msra.mxu0 %v5841
        %v5843 = vand.u32 %v2570, 4294901760
        %v5844 = vsub.f32 %v2570, %v5843
        %v5845 = vand.u32 %v5844, 4294901760
        %v5846 = vsub.f32 %v5844, %v5845
        %v5847 = vand.u32 %v5846, 4294901760
        %5848 = vmatprep.subr.mxu0 %v5847
        %v5849 = vand.u32 %v2567, 4294901760
        %v5850 = vsub.f32 %v2567, %v5849
        %v5851 = vand.u32 %v5850, 4294901760
        %v5852 = vsub.f32 %v5850, %v5851
        %v5853 = vand.u32 %v5852, 4294901760
        %5854 = vmatpush1.msra.mxu0 %v5853
        %5855 = vmatprep.subr.mxu0 0.0
        %5856 = vmatpush1.msra.mxu0 0.0
        %5857 = vmatprep.subr.mxu0 0.0
        %5858 = vmatpush1.msra.mxu0 0.0
        %5859 = vmatprep.subr.mxu0 0.0
        %5860 = vmatpush1.msra.mxu0 0.0
        %5861 = vmatprep.subr.mxu0 0.0
        %5862 = vmatpush1.msra.mxu0 0.0
        %5863 = vmatprep.subr.mxu0 0.0
        %5864 = vmatpush1.msra.mxu0 0.0
        %5865 = vmatprep.subr.mxu0 0.0
        %5866 = vmatpush1.msra.mxu0 0.0
        %5867 = vmatprep.subr.mxu0 0.0
        %5868 = vmatpush1.msra.mxu0 0.0
        %5869 = vmatprep.subr.mxu0 0.0
        %5870 = vmatpush1.msra.mxu0 0.0
        %5871 = vmatprep.subr.mxu0 0.0
        %5872 = vmatpush1.msra.mxu0 0.0
        %5873 = vmatprep.subr.mxu0 0.0
        %5874 = vmatpush1.msra.mxu0 0.0
        %5875 = vmatprep.subr.mxu0 0.0
        %5876 = vmatpush1.msra.mxu0 0.0
        %5877 = vmatprep.subr.mxu0 0.0
        %5878 = vmatpush1.msra.mxu0 0.0
        %5879 = vmatprep.subr.mxu0 0.0
        %5880 = vmatpush1.msra.mxu0 0.0
        %5881 = vmatprep.subr.mxu0 0.0
        %5882 = vmatpush1.msra.mxu0 0.0
        %5883 = vmatprep.subr.mxu0 0.0
        %5884 = vmatpush1.msra.mxu0 0.0
        %5885 = vmatprep.subr.mxu0 0.0
        %5886 = vmatpush1.msra.mxu0 0.0
        %5887 = vmatprep.subr.mxu0 0.0
        %5888 = vmatpush1.msra.mxu0 0.0
        %5889 = vmatprep.subr.mxu0 0.0
        %5890 = vmatpush1.msra.mxu0 0.0
        %5891 = vmatprep.subr.mxu0 0.0
        %5892 = vmatpush1.msra.mxu0 0.0
        %5893 = vmatprep.subr.mxu0 0.0
        %5894 = vmatpush1.msra.mxu0 0.0
        %5895 = vmatprep.subr.mxu0 0.0
        %5896 = vmatpush1.msra.mxu0 0.0
        %5897 = vmatprep.subr.mxu0 0.0
        %5898 = vmatpush1.msra.mxu0 0.0
        %5899 = vmatprep.subr.mxu0 0.0
        %5900 = vmatpush1.msra.mxu0 0.0
        %5901 = vmatprep.subr.mxu0 0.0
        %5902 = vmatpush1.msra.mxu0 0.0
        %5903 = vmatprep.subr.mxu0 0.0
        %5904 = vmatpush1.msra.mxu0 0.0
        %5905 = vmatprep.subr.mxu0 0.0
        %5906 = vmatpush1.msra.mxu0 0.0
        %5907 = vmatprep.subr.mxu0 0.0
        %5908 = vmatpush1.msra.mxu0 0.0
        %5909 = vmatprep.subr.mxu0 0.0
        %5910 = vmatpush1.msra.mxu0 0.0
        %5911 = vmatprep.subr.mxu0 0.0
        %5912 = vmatpush1.msra.mxu0 0.0
        %5913 = vmatprep.subr.mxu0 0.0
        %5914 = vmatpush1.msra.mxu0 0.0
        %5915 = vmatprep.mubr.f32.mxu0 0.0
        %v5916 = vand.u32 %v5651, 4294901760
        %5917 = vmatmul.mubr.f32.gmra.mrb[0].mxu0 %v5916
        %v5918 = vpop.f32.mrb[0].mxu0
        %v5919 = vadd.f32 %v5750, %v5918
        %v5920 = vpop.f32.mrb[0].mxu0
        %v5921 = vadd.f32 %v5752, %v5920
        %5922 = vmatprep.mubr.f32.mxu0 0.0
        %v5923 = vand.u32 %v5654, 4294901760
        %5924 = vmatmul.mubr.f32.gmra.mrb[0].mxu0 %v5923
        %v5925 = vpop.f32.mrb[0].mxu0
        %v5926 = vadd.f32 %v5761, %v5925
        %v5927 = vpop.f32.mrb[0].mxu0
        %v5928 = vadd.f32 %v5763, %v5927
        %5929 = vmatprep.mubr.f32.mxu0 0.0
        %v5930 = vand.u32 %v5657, 4294901760
        %5931 = vmatmul.mubr.f32.gmra.mrb[0].mxu0 %v5930
        %v5932 = vpop.f32.mrb[0].mxu0
        %v5933 = vadd.f32 %v5772, %v5932
        %v5934 = vpop.f32.mrb[0].mxu0
        %v5935 = vadd.f32 %v5774, %v5934
        %5936 = vmatprep.mubr.f32.mxu0 0.0
        %v5937 = vand.u32 %v5660, 4294901760
        %5938 = vmatmul.mubr.f32.gmra.mrb[0].mxu0 %v5937
        %v5939 = vpop.f32.mrb[0].mxu0
        %v5940 = vadd.f32 %v5783, %v5939
        %v5941 = vpop.f32.mrb[0].mxu0
        %v5942 = vadd.f32 %v5785, %v5941
        %5943 = vmatprep.mubr.f32.mxu0 0.0
        %v5944 = vand.u32 %v5663, 4294901760
        %5945 = vmatmul.mubr.f32.gmra.mrb[0].mxu0 %v5944
        %v5946 = vpop.f32.mrb[0].mxu0
        %v5947 = vadd.f32 %v5794, %v5946
        %v5948 = vpop.f32.mrb[0].mxu0
        %v5949 = vadd.f32 %v5796, %v5948
        %5950 = vmatprep.mubr.f32.mxu0 0.0
        %v5951 = vand.u32 %v5666, 4294901760
        %5952 = vmatmul.mubr.f32.gmra.mrb[0].mxu0 %v5951
        %v5953 = vpop.f32.mrb[0].mxu0
        %v5954 = vadd.f32 %v5805, %v5953
        %v5955 = vpop.f32.mrb[0].mxu0
        %v5956 = vadd.f32 %v5807, %v5955
        %5957 = vmatprep.mubr.f32.mxu0 0.0
        %v5958 = vand.u32 %v5669, 4294901760
        %5959 = vmatmul.mubr.f32.gmra.mrb[0].mxu0 %v5958
        %v5960 = vpop.f32.mrb[0].mxu0
        %v5961 = vadd.f32 %v5816, %v5960
        %v5962 = vpop.f32.mrb[0].mxu0
        %v5963 = vadd.f32 %v5818, %v5962
        %5964 = vmatprep.mubr.f32.mxu0 0.0
        %v5965 = vand.u32 %v5672, 4294901760
        %5966 = vmatmul.mubr.f32.gmra.mrb[0].mxu0 %v5965
        %v5967 = vpop.f32.mrb[0].mxu0
        %v5968 = vadd.f32 %v5827, %v5967
        %v5969 = vpop.f32.mrb[0].mxu0
        %v5970 = vadd.f32 %v5829, %v5969
        %5971 = vdwg.mxu0
        %v5972 = vand.u32 %v262, 4294901760
        %v5973 = vsub.f32 %v262, %v5972
        %5974 = vmatprep.subr.mxu0 %v5973
        %v5975 = vand.u32 %v261, 4294901760
        %v5976 = vsub.f32 %v261, %v5975
        %5977 = vmatpush1.msra.mxu0 %v5976
        %v5978 = vand.u32 %v2570, 4294901760
        %v5979 = vsub.f32 %v2570, %v5978
        %5980 = vmatprep.subr.mxu0 %v5979
        %v5981 = vand.u32 %v2567, 4294901760
        %v5982 = vsub.f32 %v2567, %v5981
        %5983 = vmatpush1.msra.mxu0 %v5982
        %5984 = vmatprep.subr.mxu0 0.0
        %5985 = vmatpush1.msra.mxu0 0.0
        %5986 = vmatprep.subr.mxu0 0.0
        %5987 = vmatpush1.msra.mxu0 0.0
        %5988 = vmatprep.subr.mxu0 0.0
        %5989 = vmatpush1.msra.mxu0 0.0
        %5990 = vmatprep.subr.mxu0 0.0
        %5991 = vmatpush1.msra.mxu0 0.0
        %5992 = vmatprep.subr.mxu0 0.0
        %5993 = vmatpush1.msra.mxu0 0.0
        %5994 = vmatprep.subr.mxu0 0.0
        %5995 = vmatpush1.msra.mxu0 0.0
        %5996 = vmatprep.subr.mxu0 0.0
        %5997 = vmatpush1.msra.mxu0 0.0
        %5998 = vmatprep.subr.mxu0 0.0
        %5999 = vmatpush1.msra.mxu0 0.0
        %6000 = vmatprep.subr.mxu0 0.0
        %6001 = vmatpush1.msra.mxu0 0.0
        %6002 = vmatprep.subr.mxu0 0.0
        %6003 = vmatpush1.msra.mxu0 0.0
        %6004 = vmatprep.subr.mxu0 0.0
        %6005 = vmatpush1.msra.mxu0 0.0
        %6006 = vmatprep.subr.mxu0 0.0
        %6007 = vmatpush1.msra.mxu0 0.0
        %6008 = vmatprep.subr.mxu0 0.0
        %6009 = vmatpush1.msra.mxu0 0.0
        %6010 = vmatprep.subr.mxu0 0.0
        %6011 = vmatpush1.msra.mxu0 0.0
        %6012 = vmatprep.subr.mxu0 0.0
        %6013 = vmatpush1.msra.mxu0 0.0
        %6014 = vmatprep.subr.mxu0 0.0
        %6015 = vmatpush1.msra.mxu0 0.0
        %6016 = vmatprep.subr.mxu0 0.0
        %6017 = vmatpush1.msra.mxu0 0.0
        %6018 = vmatprep.subr.mxu0 0.0
        %6019 = vmatpush1.msra.mxu0 0.0
        %6020 = vmatprep.subr.mxu0 0.0
        %6021 = vmatpush1.msra.mxu0 0.0
        %6022 = vmatprep.subr.mxu0 0.0
        %6023 = vmatpush1.msra.mxu0 0.0
        %6024 = vmatprep.subr.mxu0 0.0
        %6025 = vmatpush1.msra.mxu0 0.0
        %6026 = vmatprep.subr.mxu0 0.0
        %6027 = vmatpush1.msra.mxu0 0.0
        %6028 = vmatprep.subr.mxu0 0.0
        %6029 = vmatpush1.msra.mxu0 0.0
        %6030 = vmatprep.subr.mxu0 0.0
        %6031 = vmatpush1.msra.mxu0 0.0
        %6032 = vmatprep.subr.mxu0 0.0
        %6033 = vmatpush1.msra.mxu0 0.0
        %6034 = vmatprep.subr.mxu0 0.0
        %6035 = vmatpush1.msra.mxu0 0.0
        %6036 = vmatprep.subr.mxu0 0.0
        %6037 = vmatpush1.msra.mxu0 0.0
        %6038 = vmatprep.subr.mxu0 0.0
        %6039 = vmatpush1.msra.mxu0 0.0
        %6040 = vmatprep.subr.mxu0 0.0
        %6041 = vmatpush1.msra.mxu0 0.0
        %6042 = vmatprep.subr.mxu0 0.0
        %6043 = vmatpush1.msra.mxu0 0.0
        %6044 = vmatprep.mubr.f32.mxu0 0.0
        %v6045 = vand.u32 %v5651, 4294901760
        %v6046 = vsub.f32 %v5651, %v6045
        %6047 = vmatmul.mubr.f32.gmra.mrb[0].mxu0 %v6046
        %v6048 = vpop.f32.mrb[0].mxu0
        %v6049 = vadd.f32 %v5919, %v6048
        %v6050 = vpop.f32.mrb[0].mxu0
        %v6051 = vadd.f32 %v5921, %v6050
        %6052 = vmatprep.mubr.f32.mxu0 0.0
        %v6053 = vand.u32 %v5654, 4294901760
        %v6054 = vsub.f32 %v5654, %v6053
        %6055 = vmatmul.mubr.f32.gmra.mrb[0].mxu0 %v6054
        %v6056 = vpop.f32.mrb[0].mxu0
        %v6057 = vadd.f32 %v5926, %v6056
        %v6058 = vpop.f32.mrb[0].mxu0
        %v6059 = vadd.f32 %v5928, %v6058
        %6060 = vmatprep.mubr.f32.mxu0 0.0
        %v6061 = vand.u32 %v5657, 4294901760
        %v6062 = vsub.f32 %v5657, %v6061
        %6063 = vmatmul.mubr.f32.gmra.mrb[0].mxu0 %v6062
        %v6064 = vpop.f32.mrb[0].mxu0
        %v6065 = vadd.f32 %v5933, %v6064
        %v6066 = vpop.f32.mrb[0].mxu0
        %v6067 = vadd.f32 %v5935, %v6066
        %6068 = vmatprep.mubr.f32.mxu0 0.0
        %v6069 = vand.u32 %v5660, 4294901760
        %v6070 = vsub.f32 %v5660, %v6069
        %6071 = vmatmul.mubr.f32.gmra.mrb[0].mxu0 %v6070
        %v6072 = vpop.f32.mrb[0].mxu0
        %v6073 = vadd.f32 %v5940, %v6072
        %v6074 = vpop.f32.mrb[0].mxu0
        %v6075 = vadd.f32 %v5942, %v6074
        %6076 = vmatprep.mubr.f32.mxu0 0.0
        %v6077 = vand.u32 %v5663, 4294901760
        %v6078 = vsub.f32 %v5663, %v6077
        %6079 = vmatmul.mubr.f32.gmra.mrb[0].mxu0 %v6078
        %v6080 = vpop.f32.mrb[0].mxu0
        %v6081 = vadd.f32 %v5947, %v6080
        %v6082 = vpop.f32.mrb[0].mxu0
        %v6083 = vadd.f32 %v5949, %v6082
        %6084 = vmatprep.mubr.f32.mxu0 0.0
        %v6085 = vand.u32 %v5666, 4294901760
        %v6086 = vsub.f32 %v5666, %v6085
        %6087 = vmatmul.mubr.f32.gmra.mrb[0].mxu0 %v6086
        %v6088 = vpop.f32.mrb[0].mxu0
        %v6089 = vadd.f32 %v5954, %v6088
        %v6090 = vpop.f32.mrb[0].mxu0
        %v6091 = vadd.f32 %v5956, %v6090
        %6092 = vmatprep.mubr.f32.mxu0 0.0
        %v6093 = vand.u32 %v5669, 4294901760
        %v6094 = vsub.f32 %v5669, %v6093
        %6095 = vmatmul.mubr.f32.gmra.mrb[0].mxu0 %v6094
        %v6096 = vpop.f32.mrb[0].mxu0
        %v6097 = vadd.f32 %v5961, %v6096
        %v6098 = vpop.f32.mrb[0].mxu0
        %v6099 = vadd.f32 %v5963, %v6098
        %6100 = vmatprep.mubr.f32.mxu0 0.0
        %v6101 = vand.u32 %v5672, 4294901760
        %v6102 = vsub.f32 %v5672, %v6101
        %6103 = vmatmul.mubr.f32.gmra.mrb[0].mxu0 %v6102
        %v6104 = vpop.f32.mrb[0].mxu0
        %v6105 = vadd.f32 %v5968, %v6104
        %v6106 = vpop.f32.mrb[0].mxu0
        %v6107 = vadd.f32 %v5970, %v6106
        %6108 = vdwg.mxu0
        %v6109 = vand.u32 %v262, 4294901760
        %6110 = vmatprep.subr.mxu0 %v6109
        %v6111 = vand.u32 %v261, 4294901760
        %6112 = vmatpush1.msra.mxu0 %v6111
        %v6113 = vand.u32 %v2570, 4294901760
        %6114 = vmatprep.subr.mxu0 %v6113
        %v6115 = vand.u32 %v2567, 4294901760
        %6116 = vmatpush1.msra.mxu0 %v6115
        %6117 = vmatprep.subr.mxu0 0.0
        %6118 = vmatpush1.msra.mxu0 0.0
        %6119 = vmatprep.subr.mxu0 0.0
        %6120 = vmatpush1.msra.mxu0 0.0
        %6121 = vmatprep.subr.mxu0 0.0
        %6122 = vmatpush1.msra.mxu0 0.0
        %6123 = vmatprep.subr.mxu0 0.0
        %6124 = vmatpush1.msra.mxu0 0.0
        %6125 = vmatprep.subr.mxu0 0.0
        %6126 = vmatpush1.msra.mxu0 0.0
        %6127 = vmatprep.subr.mxu0 0.0
        %6128 = vmatpush1.msra.mxu0 0.0
        %6129 = vmatprep.subr.mxu0 0.0
        %6130 = vmatpush1.msra.mxu0 0.0
        %6131 = vmatprep.subr.mxu0 0.0
        %6132 = vmatpush1.msra.mxu0 0.0
        %6133 = vmatprep.subr.mxu0 0.0
        %6134 = vmatpush1.msra.mxu0 0.0
        %6135 = vmatprep.subr.mxu0 0.0
        %6136 = vmatpush1.msra.mxu0 0.0
        %6137 = vmatprep.subr.mxu0 0.0
        %6138 = vmatpush1.msra.mxu0 0.0
        %6139 = vmatprep.subr.mxu0 0.0
        %6140 = vmatpush1.msra.mxu0 0.0
        %6141 = vmatprep.subr.mxu0 0.0
        %6142 = vmatpush1.msra.mxu0 0.0
        %6143 = vmatprep.subr.mxu0 0.0
        %6144 = vmatpush1.msra.mxu0 0.0
        %6145 = vmatprep.subr.mxu0 0.0
        %6146 = vmatpush1.msra.mxu0 0.0
        %6147 = vmatprep.subr.mxu0 0.0
        %6148 = vmatpush1.msra.mxu0 0.0
        %6149 = vmatprep.subr.mxu0 0.0
        %6150 = vmatpush1.msra.mxu0 0.0
        %6151 = vmatprep.subr.mxu0 0.0
        %6152 = vmatpush1.msra.mxu0 0.0
        %6153 = vmatprep.subr.mxu0 0.0
        %6154 = vmatpush1.msra.mxu0 0.0
        %6155 = vmatprep.subr.mxu0 0.0
        %6156 = vmatpush1.msra.mxu0 0.0
        %6157 = vmatprep.subr.mxu0 0.0
        %6158 = vmatpush1.msra.mxu0 0.0
        %6159 = vmatprep.subr.mxu0 0.0
        %6160 = vmatpush1.msra.mxu0 0.0
        %6161 = vmatprep.subr.mxu0 0.0
        %6162 = vmatpush1.msra.mxu0 0.0
        %6163 = vmatprep.subr.mxu0 0.0
        %6164 = vmatpush1.msra.mxu0 0.0
        %6165 = vmatprep.subr.mxu0 0.0
        %6166 = vmatpush1.msra.mxu0 0.0
        %6167 = vmatprep.subr.mxu0 0.0
        %6168 = vmatpush1.msra.mxu0 0.0
        %6169 = vmatprep.subr.mxu0 0.0
        %6170 = vmatpush1.msra.mxu0 0.0
        %6171 = vmatprep.subr.mxu0 0.0
        %6172 = vmatpush1.msra.mxu0 0.0
        %6173 = vmatprep.subr.mxu0 0.0
        %6174 = vmatpush1.msra.mxu0 0.0
        %6175 = vmatprep.subr.mxu0 0.0
        %6176 = vmatpush1.msra.mxu0 0.0
        %6177 = vmatprep.mubr.f32.mxu0 0.0
        %v6178 = vand.u32 %v5651, 4294901760
        %v6179 = vsub.f32 %v5651, %v6178
        %v6180 = vand.u32 %v6179, 4294901760
        %6181 = vmatmul.mubr.f32.gmra.mrb[0].mxu0 %v6180
        %v6182 = vpop.f32.mrb[0].mxu0
        %v6183 = vadd.f32 %v6049, %v6182
        %v6184 = vpop.f32.mrb[0].mxu0
        %v6185 = vadd.f32 %v6051, %v6184
        %6186 = vmatprep.mubr.f32.mxu0 0.0
        %v6187 = vand.u32 %v5654, 4294901760
        %v6188 = vsub.f32 %v5654, %v6187
        %v6189 = vand.u32 %v6188, 4294901760
        %6190 = vmatmul.mubr.f32.gmra.mrb[0].mxu0 %v6189
        %v6191 = vpop.f32.mrb[0].mxu0
        %v6192 = vadd.f32 %v6057, %v6191
        %v6193 = vpop.f32.mrb[0].mxu0
        %v6194 = vadd.f32 %v6059, %v6193
        %6195 = vmatprep.mubr.f32.mxu0 0.0
        %v6196 = vand.u32 %v5657, 4294901760
        %v6197 = vsub.f32 %v5657, %v6196
        %v6198 = vand.u32 %v6197, 4294901760
        %6199 = vmatmul.mubr.f32.gmra.mrb[0].mxu0 %v6198
        %v6200 = vpop.f32.mrb[0].mxu0
        %v6201 = vadd.f32 %v6065, %v6200
        %v6202 = vpop.f32.mrb[0].mxu0
        %v6203 = vadd.f32 %v6067, %v6202
        %6204 = vmatprep.mubr.f32.mxu0 0.0
        %v6205 = vand.u32 %v5660, 4294901760
        %v6206 = vsub.f32 %v5660, %v6205
        %v6207 = vand.u32 %v6206, 4294901760
        %6208 = vmatmul.mubr.f32.gmra.mrb[0].mxu0 %v6207
        %v6209 = vpop.f32.mrb[0].mxu0
        %v6210 = vadd.f32 %v6073, %v6209
        %v6211 = vpop.f32.mrb[0].mxu0
        %v6212 = vadd.f32 %v6075, %v6211
        %6213 = vmatprep.mubr.f32.mxu0 0.0
        %v6214 = vand.u32 %v5663, 4294901760
        %v6215 = vsub.f32 %v5663, %v6214
        %v6216 = vand.u32 %v6215, 4294901760
        %6217 = vmatmul.mubr.f32.gmra.mrb[0].mxu0 %v6216
        %v6218 = vpop.f32.mrb[0].mxu0
        %v6219 = vadd.f32 %v6081, %v6218
        %v6220 = vpop.f32.mrb[0].mxu0
        %v6221 = vadd.f32 %v6083, %v6220
        %6222 = vmatprep.mubr.f32.mxu0 0.0
        %v6223 = vand.u32 %v5666, 4294901760
        %v6224 = vsub.f32 %v5666, %v6223
        %v6225 = vand.u32 %v6224, 4294901760
        %6226 = vmatmul.mubr.f32.gmra.mrb[0].mxu0 %v6225
        %v6227 = vpop.f32.mrb[0].mxu0
        %v6228 = vadd.f32 %v6089, %v6227
        %v6229 = vpop.f32.mrb[0].mxu0
        %v6230 = vadd.f32 %v6091, %v6229
        %6231 = vmatprep.mubr.f32.mxu0 0.0
        %v6232 = vand.u32 %v5669, 4294901760
        %v6233 = vsub.f32 %v5669, %v6232
        %v6234 = vand.u32 %v6233, 4294901760
        %6235 = vmatmul.mubr.f32.gmra.mrb[0].mxu0 %v6234
        %v6236 = vpop.f32.mrb[0].mxu0
        %v6237 = vadd.f32 %v6097, %v6236
        %v6238 = vpop.f32.mrb[0].mxu0
        %v6239 = vadd.f32 %v6099, %v6238
        %6240 = vmatprep.mubr.f32.mxu0 0.0
        %v6241 = vand.u32 %v5672, 4294901760
        %v6242 = vsub.f32 %v5672, %v6241
        %v6243 = vand.u32 %v6242, 4294901760
        %6244 = vmatmul.mubr.f32.gmra.mrb[0].mxu0 %v6243
        %v6245 = vpop.f32.mrb[0].mxu0
        %v6246 = vadd.f32 %v6105, %v6245
        %v6247 = vpop.f32.mrb[0].mxu0
        %v6248 = vadd.f32 %v6107, %v6247
        %6249 = vdwg.mxu0
        %v6250 = vand.u32 %v262, 4294901760
        %v6251 = vsub.f32 %v262, %v6250
        %v6252 = vand.u32 %v6251, 4294901760
        %6253 = vmatprep.subr.mxu0 %v6252
        %v6254 = vand.u32 %v261, 4294901760
        %v6255 = vsub.f32 %v261, %v6254
        %v6256 = vand.u32 %v6255, 4294901760
        %6257 = vmatpush1.msra.mxu0 %v6256
        %v6258 = vand.u32 %v2570, 4294901760
        %v6259 = vsub.f32 %v2570, %v6258
        %v6260 = vand.u32 %v6259, 4294901760
        %6261 = vmatprep.subr.mxu0 %v6260
        %v6262 = vand.u32 %v2567, 4294901760
        %v6263 = vsub.f32 %v2567, %v6262
        %v6264 = vand.u32 %v6263, 4294901760
        %6265 = vmatpush1.msra.mxu0 %v6264
        %6266 = vmatprep.subr.mxu0 0.0
        %6267 = vmatpush1.msra.mxu0 0.0
        %6268 = vmatprep.subr.mxu0 0.0
        %6269 = vmatpush1.msra.mxu0 0.0
        %6270 = vmatprep.subr.mxu0 0.0
        %6271 = vmatpush1.msra.mxu0 0.0
        %6272 = vmatprep.subr.mxu0 0.0
        %6273 = vmatpush1.msra.mxu0 0.0
        %6274 = vmatprep.subr.mxu0 0.0
        %6275 = vmatpush1.msra.mxu0 0.0
        %6276 = vmatprep.subr.mxu0 0.0
        %6277 = vmatpush1.msra.mxu0 0.0
        %6278 = vmatprep.subr.mxu0 0.0
        %6279 = vmatpush1.msra.mxu0 0.0
        %6280 = vmatprep.subr.mxu0 0.0
        %6281 = vmatpush1.msra.mxu0 0.0
        %6282 = vmatprep.subr.mxu0 0.0
        %6283 = vmatpush1.msra.mxu0 0.0
        %6284 = vmatprep.subr.mxu0 0.0
        %6285 = vmatpush1.msra.mxu0 0.0
        %6286 = vmatprep.subr.mxu0 0.0
        %6287 = vmatpush1.msra.mxu0 0.0
        %6288 = vmatprep.subr.mxu0 0.0
        %6289 = vmatpush1.msra.mxu0 0.0
        %6290 = vmatprep.subr.mxu0 0.0
        %6291 = vmatpush1.msra.mxu0 0.0
        %6292 = vmatprep.subr.mxu0 0.0
        %6293 = vmatpush1.msra.mxu0 0.0
        %6294 = vmatprep.subr.mxu0 0.0
        %6295 = vmatpush1.msra.mxu0 0.0
        %6296 = vmatprep.subr.mxu0 0.0
        %6297 = vmatpush1.msra.mxu0 0.0
        %6298 = vmatprep.subr.mxu0 0.0
        %6299 = vmatpush1.msra.mxu0 0.0
        %6300 = vmatprep.subr.mxu0 0.0
        %6301 = vmatpush1.msra.mxu0 0.0
        %6302 = vmatprep.subr.mxu0 0.0
        %6303 = vmatpush1.msra.mxu0 0.0
        %6304 = vmatprep.subr.mxu0 0.0
        %6305 = vmatpush1.msra.mxu0 0.0
        %6306 = vmatprep.subr.mxu0 0.0
        %6307 = vmatpush1.msra.mxu0 0.0
        %6308 = vmatprep.subr.mxu0 0.0
        %6309 = vmatpush1.msra.mxu0 0.0
        %6310 = vmatprep.subr.mxu0 0.0
        %6311 = vmatpush1.msra.mxu0 0.0
        %6312 = vmatprep.subr.mxu0 0.0
        %6313 = vmatpush1.msra.mxu0 0.0
        %6314 = vmatprep.subr.mxu0 0.0
        %6315 = vmatpush1.msra.mxu0 0.0
        %6316 = vmatprep.subr.mxu0 0.0
        %6317 = vmatpush1.msra.mxu0 0.0
        %6318 = vmatprep.subr.mxu0 0.0
        %6319 = vmatpush1.msra.mxu0 0.0
        %6320 = vmatprep.subr.mxu0 0.0
        %6321 = vmatpush1.msra.mxu0 0.0
        %6322 = vmatprep.subr.mxu0 0.0
        %6323 = vmatpush1.msra.mxu0 0.0
        %6324 = vmatprep.subr.mxu0 0.0
        %6325 = vmatpush1.msra.mxu0 0.0
        %6326 = vmatprep.mubr.f32.mxu0 0.0
        %v6327 = vand.u32 %v5651, 4294901760
        %6328 = vmatmul.mubr.f32.gmra.mrb[0].mxu0 %v6327
        %v6329 = vpop.f32.mrb[0].mxu0
        %v6330 = vadd.f32 %v6183, %v6329
        %v6331 = vpop.f32.mrb[0].mxu0
        %v6332 = vadd.f32 %v6185, %v6331
        %6333 = vmatprep.mubr.f32.mxu0 0.0
        %v6334 = vand.u32 %v5654, 4294901760
        %6335 = vmatmul.mubr.f32.gmra.mrb[0].mxu0 %v6334
        %v6336 = vpop.f32.mrb[0].mxu0
        %v6337 = vadd.f32 %v6192, %v6336
        %v6338 = vpop.f32.mrb[0].mxu0
        %v6339 = vadd.f32 %v6194, %v6338
        %6340 = vmatprep.mubr.f32.mxu0 0.0
        %v6341 = vand.u32 %v5657, 4294901760
        %6342 = vmatmul.mubr.f32.gmra.mrb[0].mxu0 %v6341
        %v6343 = vpop.f32.mrb[0].mxu0
        %v6344 = vadd.f32 %v6201, %v6343
        %v6345 = vpop.f32.mrb[0].mxu0
        %v6346 = vadd.f32 %v6203, %v6345
        %6347 = vmatprep.mubr.f32.mxu0 0.0
        %v6348 = vand.u32 %v5660, 4294901760
        %6349 = vmatmul.mubr.f32.gmra.mrb[0].mxu0 %v6348
        %v6350 = vpop.f32.mrb[0].mxu0
        %v6351 = vadd.f32 %v6210, %v6350
        %v6352 = vpop.f32.mrb[0].mxu0
        %v6353 = vadd.f32 %v6212, %v6352
        %6354 = vmatprep.mubr.f32.mxu0 0.0
        %v6355 = vand.u32 %v5663, 4294901760
        %6356 = vmatmul.mubr.f32.gmra.mrb[0].mxu0 %v6355
        %v6357 = vpop.f32.mrb[0].mxu0
        %v6358 = vadd.f32 %v6219, %v6357
        %v6359 = vpop.f32.mrb[0].mxu0
        %v6360 = vadd.f32 %v6221, %v6359
        %6361 = vmatprep.mubr.f32.mxu0 0.0
        %v6362 = vand.u32 %v5666, 4294901760
        %6363 = vmatmul.mubr.f32.gmra.mrb[0].mxu0 %v6362
        %v6364 = vpop.f32.mrb[0].mxu0
        %v6365 = vadd.f32 %v6228, %v6364
        %v6366 = vpop.f32.mrb[0].mxu0
        %v6367 = vadd.f32 %v6230, %v6366
        %6368 = vmatprep.mubr.f32.mxu0 0.0
        %v6369 = vand.u32 %v5669, 4294901760
        %6370 = vmatmul.mubr.f32.gmra.mrb[0].mxu0 %v6369
        %v6371 = vpop.f32.mrb[0].mxu0
        %v6372 = vadd.f32 %v6237, %v6371
        %v6373 = vpop.f32.mrb[0].mxu0
        %v6374 = vadd.f32 %v6239, %v6373
        %6375 = vmatprep.mubr.f32.mxu0 0.0
        %v6376 = vand.u32 %v5672, 4294901760
        %6377 = vmatmul.mubr.f32.gmra.mrb[0].mxu0 %v6376
        %v6378 = vpop.f32.mrb[0].mxu0
        %v6379 = vadd.f32 %v6246, %v6378
        %v6380 = vpop.f32.mrb[0].mxu0
        %v6381 = vadd.f32 %v6248, %v6380
        %6382 = vdwg.mxu0
        %v6383 = vand.u32 %v262, 4294901760
        %6384 = vmatprep.subr.mxu0 %v6383
        %v6385 = vand.u32 %v261, 4294901760
        %6386 = vmatpush1.msra.mxu0 %v6385
        %v6387 = vand.u32 %v2570, 4294901760
        %6388 = vmatprep.subr.mxu0 %v6387
        %v6389 = vand.u32 %v2567, 4294901760
        %6390 = vmatpush1.msra.mxu0 %v6389
        %6391 = vmatprep.subr.mxu0 0.0
        %6392 = vmatpush1.msra.mxu0 0.0
        %6393 = vmatprep.subr.mxu0 0.0
        %6394 = vmatpush1.msra.mxu0 0.0
        %6395 = vmatprep.subr.mxu0 0.0
        %6396 = vmatpush1.msra.mxu0 0.0
        %6397 = vmatprep.subr.mxu0 0.0
        %6398 = vmatpush1.msra.mxu0 0.0
        %6399 = vmatprep.subr.mxu0 0.0
        %6400 = vmatpush1.msra.mxu0 0.0
        %6401 = vmatprep.subr.mxu0 0.0
        %6402 = vmatpush1.msra.mxu0 0.0
        %6403 = vmatprep.subr.mxu0 0.0
        %6404 = vmatpush1.msra.mxu0 0.0
        %6405 = vmatprep.subr.mxu0 0.0
        %6406 = vmatpush1.msra.mxu0 0.0
        %6407 = vmatprep.subr.mxu0 0.0
        %6408 = vmatpush1.msra.mxu0 0.0
        %6409 = vmatprep.subr.mxu0 0.0
        %6410 = vmatpush1.msra.mxu0 0.0
        %6411 = vmatprep.subr.mxu0 0.0
        %6412 = vmatpush1.msra.mxu0 0.0
        %6413 = vmatprep.subr.mxu0 0.0
        %6414 = vmatpush1.msra.mxu0 0.0
        %6415 = vmatprep.subr.mxu0 0.0
        %6416 = vmatpush1.msra.mxu0 0.0
        %6417 = vmatprep.subr.mxu0 0.0
        %6418 = vmatpush1.msra.mxu0 0.0
        %6419 = vmatprep.subr.mxu0 0.0
        %6420 = vmatpush1.msra.mxu0 0.0
        %6421 = vmatprep.subr.mxu0 0.0
        %6422 = vmatpush1.msra.mxu0 0.0
        %6423 = vmatprep.subr.mxu0 0.0
        %6424 = vmatpush1.msra.mxu0 0.0
        %6425 = vmatprep.subr.mxu0 0.0
        %6426 = vmatpush1.msra.mxu0 0.0
        %6427 = vmatprep.subr.mxu0 0.0
        %6428 = vmatpush1.msra.mxu0 0.0
        %6429 = vmatprep.subr.mxu0 0.0
        %6430 = vmatpush1.msra.mxu0 0.0
        %6431 = vmatprep.subr.mxu0 0.0
        %6432 = vmatpush1.msra.mxu0 0.0
        %6433 = vmatprep.subr.mxu0 0.0
        %6434 = vmatpush1.msra.mxu0 0.0
        %6435 = vmatprep.subr.mxu0 0.0
        %6436 = vmatpush1.msra.mxu0 0.0
        %6437 = vmatprep.subr.mxu0 0.0
        %6438 = vmatpush1.msra.mxu0 0.0
        %6439 = vmatprep.subr.mxu0 0.0
        %6440 = vmatpush1.msra.mxu0 0.0
        %6441 = vmatprep.subr.mxu0 0.0
        %6442 = vmatpush1.msra.mxu0 0.0
        %6443 = vmatprep.subr.mxu0 0.0
        %6444 = vmatpush1.msra.mxu0 0.0
        %6445 = vmatprep.subr.mxu0 0.0
        %6446 = vmatpush1.msra.mxu0 0.0
        %6447 = vmatprep.subr.mxu0 0.0
        %6448 = vmatpush1.msra.mxu0 0.0
        %6449 = vmatprep.subr.mxu0 0.0
        %6450 = vmatpush1.msra.mxu0 0.0
        %6451 = vmatprep.mubr.f32.mxu0 0.0
        %v6452 = vand.u32 %v5651, 4294901760
        %6453 = vmatmul.mubr.f32.gmra.mrb[0].mxu0 %v6452
        %v6454 = vpop.f32.mrb[0].mxu0
        %v6455 = vadd.f32 %v6330, %v6454
        %v6456 = vpop.f32.mrb[0].mxu0
        %v6457 = vadd.f32 %v6332, %v6456
        %6458 = vmatprep.mubr.f32.mxu0 0.0
        %v6459 = vand.u32 %v5654, 4294901760
        %6460 = vmatmul.mubr.f32.gmra.mrb[0].mxu0 %v6459
        %v6461 = vpop.f32.mrb[0].mxu0
        %v6462 = vadd.f32 %v6337, %v6461
        %v6463 = vpop.f32.mrb[0].mxu0
        %v6464 = vadd.f32 %v6339, %v6463
        %6465 = vmatprep.mubr.f32.mxu0 0.0
        %v6466 = vand.u32 %v5657, 4294901760
        %6467 = vmatmul.mubr.f32.gmra.mrb[0].mxu0 %v6466
        %v6468 = vpop.f32.mrb[0].mxu0
        %v6469 = vadd.f32 %v6344, %v6468
        %v6470 = vpop.f32.mrb[0].mxu0
        %v6471 = vadd.f32 %v6346, %v6470
        %6472 = vmatprep.mubr.f32.mxu0 0.0
        %v6473 = vand.u32 %v5660, 4294901760
        %6474 = vmatmul.mubr.f32.gmra.mrb[0].mxu0 %v6473
        %v6475 = vpop.f32.mrb[0].mxu0
        %v6476 = vadd.f32 %v6351, %v6475
        %v6477 = vpop.f32.mrb[0].mxu0
        %v6478 = vadd.f32 %v6353, %v6477
        %6479 = vmatprep.mubr.f32.mxu0 0.0
        %v6480 = vand.u32 %v5663, 4294901760
        %6481 = vmatmul.mubr.f32.gmra.mrb[0].mxu0 %v6480
        %v6482 = vpop.f32.mrb[0].mxu0
        %v6483 = vadd.f32 %v6358, %v6482
        %v6484 = vpop.f32.mrb[0].mxu0
        %v6485 = vadd.f32 %v6360, %v6484
        %6486 = vmatprep.mubr.f32.mxu0 0.0
        %v6487 = vand.u32 %v5666, 4294901760
        %6488 = vmatmul.mubr.f32.gmra.mrb[0].mxu0 %v6487
        %v6489 = vpop.f32.mrb[0].mxu0
        %v6490 = vadd.f32 %v6365, %v6489
        %v6491 = vpop.f32.mrb[0].mxu0
        %v6492 = vadd.f32 %v6367, %v6491
        %6493 = vmatprep.mubr.f32.mxu0 0.0
        %v6494 = vand.u32 %v5669, 4294901760
        %6495 = vmatmul.mubr.f32.gmra.mrb[0].mxu0 %v6494
        %v6496 = vpop.f32.mrb[0].mxu0
        %v6497 = vadd.f32 %v6372, %v6496
        %v6498 = vpop.f32.mrb[0].mxu0
        %v6499 = vadd.f32 %v6374, %v6498
        %6500 = vmatprep.mubr.f32.mxu0 0.0
        %v6501 = vand.u32 %v5672, 4294901760
        %6502 = vmatmul.mubr.f32.gmra.mrb[0].mxu0 %v6501
        %v6503 = vpop.f32.mrb[0].mxu0
        %v6504 = vadd.f32 %v6379, %v6503
        %v6505 = vpop.f32.mrb[0].mxu0
        %v6506 = vadd.f32 %v6381, %v6505
        %6507 = vdwg.mxu0
        %v6508 = vmul.f32 %v6455, %v245
        %v6509 = vmul.f32 %v6457, %v246
        %v6510 = vmul.f32 %v6462, %v247
        %v6511 = vmul.f32 %v6464, %v248
        %v6512 = vmul.f32 %v6469, %v249
        %v6513 = vmul.f32 %v6471, %v250
        %v6514 = vmul.f32 %v6476, %v251
        %v6515 = vmul.f32 %v6478, %v252
        %v6516 = vmul.f32 %v6483, %v253
        %v6517 = vmul.f32 %v6485, %v254
        %v6518 = vmul.f32 %v6490, %v255
        %v6519 = vmul.f32 %v6492, %v256
        %v6520 = vmul.f32 %v6497, %v257
        %v6521 = vmul.f32 %v6499, %v258
        %v6522 = vmul.f32 %v6504, %v259
        %v6523 = vmul.f32 %v6506, %v260
        %v6524 = vrot.slane %v6508, 4
        %v6525 = vadd.f32 %v6508, %v6524
        %v6526 = vrot.slane %v6525, 2
        %v6527 = vadd.f32 %v6525, %v6526
        %v6528 = vrot.slane %v6527, 1
        %v6529 = vadd.f32 %v6527, %v6528
        %v6530 = vsel %vm309, %v6509, 0.0
        %v6531 = vrot.slane %v6530, 4
        %v6532 = vadd.f32 %v6530, %v6531
        %v6533 = vrot.slane %v6532, 2
        %v6534 = vadd.f32 %v6532, %v6533
        %v6535 = vrot.slane %v6534, 1
        %v6536 = vadd.f32 %v6534, %v6535
        %v6537 = vrot.slane %v6510, 4
        %v6538 = vadd.f32 %v6510, %v6537
        %v6539 = vrot.slane %v6538, 2
        %v6540 = vadd.f32 %v6538, %v6539
        %v6541 = vrot.slane %v6540, 1
        %v6542 = vadd.f32 %v6540, %v6541
        %v6543 = vsel %vm309, %v6511, 0.0
        %v6544 = vrot.slane %v6543, 4
        %v6545 = vadd.f32 %v6543, %v6544
        %v6546 = vrot.slane %v6545, 2
        %v6547 = vadd.f32 %v6545, %v6546
        %v6548 = vrot.slane %v6547, 1
        %v6549 = vadd.f32 %v6547, %v6548
        %v6550 = vrot.slane %v6512, 4
        %v6551 = vadd.f32 %v6512, %v6550
        %v6552 = vrot.slane %v6551, 2
        %v6553 = vadd.f32 %v6551, %v6552
        %v6554 = vrot.slane %v6553, 1
        %v6555 = vadd.f32 %v6553, %v6554
        %v6556 = vsel %vm309, %v6513, 0.0
        %v6557 = vrot.slane %v6556, 4
        %v6558 = vadd.f32 %v6556, %v6557
        %v6559 = vrot.slane %v6558, 2
        %v6560 = vadd.f32 %v6558, %v6559
        %v6561 = vrot.slane %v6560, 1
        %v6562 = vadd.f32 %v6560, %v6561
        %v6563 = vrot.slane %v6514, 4
        %v6564 = vadd.f32 %v6514, %v6563
        %v6565 = vrot.slane %v6564, 2
        %v6566 = vadd.f32 %v6564, %v6565
        %v6567 = vrot.slane %v6566, 1
        %v6568 = vadd.f32 %v6566, %v6567
        %v6569 = vsel %vm309, %v6515, 0.0
        %v6570 = vrot.slane %v6569, 4
        %v6571 = vadd.f32 %v6569, %v6570
        %v6572 = vrot.slane %v6571, 2
        %v6573 = vadd.f32 %v6571, %v6572
        %v6574 = vrot.slane %v6573, 1
        %v6575 = vadd.f32 %v6573, %v6574
        %v6576 = vrot.slane %v6516, 4
        %v6577 = vadd.f32 %v6516, %v6576
        %v6578 = vrot.slane %v6577, 2
        %v6579 = vadd.f32 %v6577, %v6578
        %v6580 = vrot.slane %v6579, 1
        %v6581 = vadd.f32 %v6579, %v6580
        %v6582 = vsel %vm309, %v6517, 0.0
        %v6583 = vrot.slane %v6582, 4
        %v6584 = vadd.f32 %v6582, %v6583
        %v6585 = vrot.slane %v6584, 2
        %v6586 = vadd.f32 %v6584, %v6585
        %v6587 = vrot.slane %v6586, 1
        %v6588 = vadd.f32 %v6586, %v6587
        %v6589 = vrot.slane %v6518, 4
        %v6590 = vadd.f32 %v6518, %v6589
        %v6591 = vrot.slane %v6590, 2
        %v6592 = vadd.f32 %v6590, %v6591
        %v6593 = vrot.slane %v6592, 1
        %v6594 = vadd.f32 %v6592, %v6593
        %v6595 = vsel %vm309, %v6519, 0.0
        %v6596 = vrot.slane %v6595, 4
        %v6597 = vadd.f32 %v6595, %v6596
        %v6598 = vrot.slane %v6597, 2
        %v6599 = vadd.f32 %v6597, %v6598
        %v6600 = vrot.slane %v6599, 1
        %v6601 = vadd.f32 %v6599, %v6600
        %v6602 = vrot.slane %v6520, 4
        %v6603 = vadd.f32 %v6520, %v6602
        %v6604 = vrot.slane %v6603, 2
        %v6605 = vadd.f32 %v6603, %v6604
        %v6606 = vrot.slane %v6605, 1
        %v6607 = vadd.f32 %v6605, %v6606
        %v6608 = vsel %vm309, %v6521, 0.0
        %v6609 = vrot.slane %v6608, 4
        %v6610 = vadd.f32 %v6608, %v6609
        %v6611 = vrot.slane %v6610, 2
        %v6612 = vadd.f32 %v6610, %v6611
        %v6613 = vrot.slane %v6612, 1
        %v6614 = vadd.f32 %v6612, %v6613
        %v6615 = vrot.slane %v6522, 4
        %v6616 = vadd.f32 %v6522, %v6615
        %v6617 = vrot.slane %v6616, 2
        %v6618 = vadd.f32 %v6616, %v6617
        %v6619 = vrot.slane %v6618, 1
        %v6620 = vadd.f32 %v6618, %v6619
        %v6621 = vsel %vm309, %v6523, 0.0
        %v6622 = vrot.slane %v6621, 4
        %v6623 = vadd.f32 %v6621, %v6622
        %v6624 = vrot.slane %v6623, 2
        %v6625 = vadd.f32 %v6623, %v6624
        %v6626 = vrot.slane %v6625, 1
        %v6627 = vadd.f32 %v6625, %v6626
        %v6628 = vmul.f32 %v6529, %v6529
        %v6629 = vmul.f32 %v6536, %v6536
        %v6630 = vmul.f32 %v6542, %v6542
        %v6631 = vmul.f32 %v6549, %v6549
        %v6632 = vmul.f32 %v6555, %v6555
        %v6633 = vmul.f32 %v6562, %v6562
        %v6634 = vmul.f32 %v6568, %v6568
        %v6635 = vmul.f32 %v6575, %v6575
        %v6636 = vmul.f32 %v6581, %v6581
        %v6637 = vmul.f32 %v6588, %v6588
        %v6638 = vmul.f32 %v6594, %v6594
        %v6639 = vmul.f32 %v6601, %v6601
        %v6640 = vmul.f32 %v6607, %v6607
        %v6641 = vmul.f32 %v6614, %v6614
        %v6642 = vmul.f32 %v6620, %v6620
        %v6643 = vmul.f32 %v6627, %v6627
        %v6660 = vsel %vm440, %v6630, %v6628
        %v6661 = vsel %vm442, %v6632, %v6660
        %v6662 = vsel %vm444, %v6634, %v6661
        %v6663 = vsel %vm446, %v6636, %v6662
        %v6664 = vsel %vm448, %v6638, %v6663
        %v6665 = vsel %vm450, %v6640, %v6664
        %v6666 = vsel %vm452, %v6642, %v6665
        %v6667 = vsel %vm440, %v6631, %v6629
        %v6668 = vsel %vm442, %v6633, %v6667
        %v6669 = vsel %vm444, %v6635, %v6668
        %v6670 = vsel %vm446, %v6637, %v6669
        %v6671 = vsel %vm448, %v6639, %v6670
        %v6672 = vsel %vm450, %v6641, %v6671
        %v6673 = vsel %vm452, %v6643, %v6672
        %v6675 = vsel %vm309, %v6673, 0
        %6677 = vmatprep.subr.mxu0 0.0
        %v6678 = vand.u32 %v265, 4294901760
        %6679 = vmatpush1.msra.mxu0 %v6678
        %6680 = vmatprep.subr.mxu0 0.0
        %v6681 = vand.u32 %v266, 4294901760
        %6682 = vmatpush1.msra.mxu0 %v6681
        %6683 = vmatprep.subr.mxu0 0.0
        %v6684 = vand.u32 %v267, 4294901760
        %6685 = vmatpush1.msra.mxu0 %v6684
        %6686 = vmatprep.subr.mxu0 0.0
        %v6687 = vand.u32 %v268, 4294901760
        %6688 = vmatpush1.msra.mxu0 %v6687
        %6689 = vmatprep.subr.mxu0 0.0
        %v6690 = vand.u32 %v269, 4294901760
        %6691 = vmatpush1.msra.mxu0 %v6690
        %6692 = vmatprep.subr.mxu0 0.0
        %v6693 = vand.u32 %v270, 4294901760
        %6694 = vmatpush1.msra.mxu0 %v6693
        %6695 = vmatprep.subr.mxu0 0.0
        %v6696 = vand.u32 %v271, 4294901760
        %6697 = vmatpush1.msra.mxu0 %v6696
        %6698 = vmatprep.subr.mxu0 0.0
        %v6699 = vand.u32 %v272, 4294901760
        %6700 = vmatpush1.msra.mxu0 %v6699
        %6701 = vmatprep.subr.mxu0 0.0
        %v6702 = vand.u32 %v273, 4294901760
        %6703 = vmatpush1.msra.mxu0 %v6702
        %6704 = vmatprep.subr.mxu0 0.0
        %v6705 = vand.u32 %v274, 4294901760
        %6706 = vmatpush1.msra.mxu0 %v6705
        %6707 = vmatprep.subr.mxu0 0.0
        %v6708 = vand.u32 %v275, 4294901760
        %6709 = vmatpush1.msra.mxu0 %v6708
        %6710 = vmatprep.subr.mxu0 0.0
        %v6711 = vand.u32 %v276, 4294901760
        %6712 = vmatpush1.msra.mxu0 %v6711
        %6713 = vmatprep.subr.mxu0 0.0
        %v6714 = vand.u32 %v277, 4294901760
        %6715 = vmatpush1.msra.mxu0 %v6714
        %6716 = vmatprep.subr.mxu0 0.0
        %v6717 = vand.u32 %v278, 4294901760
        %6718 = vmatpush1.msra.mxu0 %v6717
        %6719 = vmatprep.subr.mxu0 0.0
        %v6720 = vand.u32 %v279, 4294901760
        %6721 = vmatpush1.msra.mxu0 %v6720
        %6722 = vmatprep.subr.mxu0 0.0
        %v6723 = vand.u32 %v280, 4294901760
        %6724 = vmatpush1.msra.mxu0 %v6723
        %6725 = vmatprep.subr.mxu0 0.0
        %v6726 = vand.u32 %v281, 4294901760
        %6727 = vmatpush1.msra.mxu0 %v6726
        %6728 = vmatprep.subr.mxu0 0.0
        %v6729 = vand.u32 %v282, 4294901760
        %6730 = vmatpush1.msra.mxu0 %v6729
        %6731 = vmatprep.subr.mxu0 0.0
        %v6732 = vand.u32 %v283, 4294901760
        %6733 = vmatpush1.msra.mxu0 %v6732
        %6734 = vmatprep.subr.mxu0 0.0
        %v6735 = vand.u32 %v284, 4294901760
        %6736 = vmatpush1.msra.mxu0 %v6735
        %6737 = vmatprep.subr.mxu0 0.0
        %6738 = vmatpush1.msra.mxu0 0.0
        %6739 = vmatprep.subr.mxu0 0.0
        %6740 = vmatpush1.msra.mxu0 0.0
        %6741 = vmatprep.subr.mxu0 0.0
        %6742 = vmatpush1.msra.mxu0 0.0
        %6743 = vmatprep.subr.mxu0 0.0
        %6744 = vmatpush1.msra.mxu0 0.0
        %6745 = vmatprep.subr.mxu0 0.0
        %6746 = vmatpush1.msra.mxu0 0.0
        %6747 = vmatprep.subr.mxu0 0.0
        %6748 = vmatpush1.msra.mxu0 0.0
        %6749 = vmatprep.subr.mxu0 0.0
        %6750 = vmatpush1.msra.mxu0 0.0
        %6751 = vmatprep.subr.mxu0 0.0
        %6752 = vmatpush1.msra.mxu0 0.0
        %6753 = vmatprep.subr.mxu0 0.0
        %6754 = vmatpush1.msra.mxu0 0.0
        %6755 = vmatprep.subr.mxu0 0.0
        %6756 = vmatpush1.msra.mxu0 0.0
        %6757 = vmatprep.subr.mxu0 0.0
        %6758 = vmatpush1.msra.mxu0 0.0
        %6759 = vmatprep.subr.mxu0 0.0
        %6760 = vmatpush1.msra.mxu0 0.0
        %v6761 = vand.u32 %v6675, 4294901760
        %v6762 = vsub.f32 %v6675, %v6761
        %v6763 = vand.u32 %v6762, 4294901760
        %v6764 = vsub.f32 %v6762, %v6763
        %v6765 = vand.u32 %v6764, 4294901760
        %6766 = vmatprep.mubr.f32.mxu0 %v6765
        %v6767 = vand.u32 %v6666, 4294901760
        %v6768 = vsub.f32 %v6666, %v6767
        %v6769 = vand.u32 %v6768, 4294901760
        %v6770 = vsub.f32 %v6768, %v6769
        %v6771 = vand.u32 %v6770, 4294901760
        %6772 = vmatmul.mubr.f32.gmra.mrb[0].mxu0 %v6771
        %v6773 = vpop.f32.mrb[0].mxu0
        %v6774 = vadd.f32 0.0, %v6773
        %v6775 = vpop.f32.mrb[0].mxu0
        %6776 = vdwg.mxu0
        %6777 = vmatprep.subr.mxu0 0.0
        %v6778 = vand.u32 %v265, 4294901760
        %v6779 = vsub.f32 %v265, %v6778
        %v6780 = vand.u32 %v6779, 4294901760
        %v6781 = vsub.f32 %v6779, %v6780
        %v6782 = vand.u32 %v6781, 4294901760
        %6783 = vmatpush1.msra.mxu0 %v6782
        %6784 = vmatprep.subr.mxu0 0.0
        %v6785 = vand.u32 %v266, 4294901760
        %v6786 = vsub.f32 %v266, %v6785
        %v6787 = vand.u32 %v6786, 4294901760
        %v6788 = vsub.f32 %v6786, %v6787
        %v6789 = vand.u32 %v6788, 4294901760
        %6790 = vmatpush1.msra.mxu0 %v6789
        %6791 = vmatprep.subr.mxu0 0.0
        %v6792 = vand.u32 %v267, 4294901760
        %v6793 = vsub.f32 %v267, %v6792
        %v6794 = vand.u32 %v6793, 4294901760
        %v6795 = vsub.f32 %v6793, %v6794
        %v6796 = vand.u32 %v6795, 4294901760
        %6797 = vmatpush1.msra.mxu0 %v6796
        %6798 = vmatprep.subr.mxu0 0.0
        %v6799 = vand.u32 %v268, 4294901760
        %v6800 = vsub.f32 %v268, %v6799
        %v6801 = vand.u32 %v6800, 4294901760
        %v6802 = vsub.f32 %v6800, %v6801
        %v6803 = vand.u32 %v6802, 4294901760
        %6804 = vmatpush1.msra.mxu0 %v6803
        %6805 = vmatprep.subr.mxu0 0.0
        %v6806 = vand.u32 %v269, 4294901760
        %v6807 = vsub.f32 %v269, %v6806
        %v6808 = vand.u32 %v6807, 4294901760
        %v6809 = vsub.f32 %v6807, %v6808
        %v6810 = vand.u32 %v6809, 4294901760
        %6811 = vmatpush1.msra.mxu0 %v6810
        %6812 = vmatprep.subr.mxu0 0.0
        %v6813 = vand.u32 %v270, 4294901760
        %v6814 = vsub.f32 %v270, %v6813
        %v6815 = vand.u32 %v6814, 4294901760
        %v6816 = vsub.f32 %v6814, %v6815
        %v6817 = vand.u32 %v6816, 4294901760
        %6818 = vmatpush1.msra.mxu0 %v6817
        %6819 = vmatprep.subr.mxu0 0.0
        %v6820 = vand.u32 %v271, 4294901760
        %v6821 = vsub.f32 %v271, %v6820
        %v6822 = vand.u32 %v6821, 4294901760
        %v6823 = vsub.f32 %v6821, %v6822
        %v6824 = vand.u32 %v6823, 4294901760
        %6825 = vmatpush1.msra.mxu0 %v6824
        %6826 = vmatprep.subr.mxu0 0.0
        %v6827 = vand.u32 %v272, 4294901760
        %v6828 = vsub.f32 %v272, %v6827
        %v6829 = vand.u32 %v6828, 4294901760
        %v6830 = vsub.f32 %v6828, %v6829
        %v6831 = vand.u32 %v6830, 4294901760
        %6832 = vmatpush1.msra.mxu0 %v6831
        %6833 = vmatprep.subr.mxu0 0.0
        %v6834 = vand.u32 %v273, 4294901760
        %v6835 = vsub.f32 %v273, %v6834
        %v6836 = vand.u32 %v6835, 4294901760
        %v6837 = vsub.f32 %v6835, %v6836
        %v6838 = vand.u32 %v6837, 4294901760
        %6839 = vmatpush1.msra.mxu0 %v6838
        %6840 = vmatprep.subr.mxu0 0.0
        %v6841 = vand.u32 %v274, 4294901760
        %v6842 = vsub.f32 %v274, %v6841
        %v6843 = vand.u32 %v6842, 4294901760
        %v6844 = vsub.f32 %v6842, %v6843
        %v6845 = vand.u32 %v6844, 4294901760
        %6846 = vmatpush1.msra.mxu0 %v6845
        %6847 = vmatprep.subr.mxu0 0.0
        %v6848 = vand.u32 %v275, 4294901760
        %v6849 = vsub.f32 %v275, %v6848
        %v6850 = vand.u32 %v6849, 4294901760
        %v6851 = vsub.f32 %v6849, %v6850
        %v6852 = vand.u32 %v6851, 4294901760
        %6853 = vmatpush1.msra.mxu0 %v6852
        %6854 = vmatprep.subr.mxu0 0.0
        %v6855 = vand.u32 %v276, 4294901760
        %v6856 = vsub.f32 %v276, %v6855
        %v6857 = vand.u32 %v6856, 4294901760
        %v6858 = vsub.f32 %v6856, %v6857
        %v6859 = vand.u32 %v6858, 4294901760
        %6860 = vmatpush1.msra.mxu0 %v6859
        %6861 = vmatprep.subr.mxu0 0.0
        %v6862 = vand.u32 %v277, 4294901760
        %v6863 = vsub.f32 %v277, %v6862
        %v6864 = vand.u32 %v6863, 4294901760
        %v6865 = vsub.f32 %v6863, %v6864
        %v6866 = vand.u32 %v6865, 4294901760
        %6867 = vmatpush1.msra.mxu0 %v6866
        %6868 = vmatprep.subr.mxu0 0.0
        %v6869 = vand.u32 %v278, 4294901760
        %v6870 = vsub.f32 %v278, %v6869
        %v6871 = vand.u32 %v6870, 4294901760
        %v6872 = vsub.f32 %v6870, %v6871
        %v6873 = vand.u32 %v6872, 4294901760
        %6874 = vmatpush1.msra.mxu0 %v6873
        %6875 = vmatprep.subr.mxu0 0.0
        %v6876 = vand.u32 %v279, 4294901760
        %v6877 = vsub.f32 %v279, %v6876
        %v6878 = vand.u32 %v6877, 4294901760
        %v6879 = vsub.f32 %v6877, %v6878
        %v6880 = vand.u32 %v6879, 4294901760
        %6881 = vmatpush1.msra.mxu0 %v6880
        %6882 = vmatprep.subr.mxu0 0.0
        %v6883 = vand.u32 %v280, 4294901760
        %v6884 = vsub.f32 %v280, %v6883
        %v6885 = vand.u32 %v6884, 4294901760
        %v6886 = vsub.f32 %v6884, %v6885
        %v6887 = vand.u32 %v6886, 4294901760
        %6888 = vmatpush1.msra.mxu0 %v6887
        %6889 = vmatprep.subr.mxu0 0.0
        %v6890 = vand.u32 %v281, 4294901760
        %v6891 = vsub.f32 %v281, %v6890
        %v6892 = vand.u32 %v6891, 4294901760
        %v6893 = vsub.f32 %v6891, %v6892
        %v6894 = vand.u32 %v6893, 4294901760
        %6895 = vmatpush1.msra.mxu0 %v6894
        %6896 = vmatprep.subr.mxu0 0.0
        %v6897 = vand.u32 %v282, 4294901760
        %v6898 = vsub.f32 %v282, %v6897
        %v6899 = vand.u32 %v6898, 4294901760
        %v6900 = vsub.f32 %v6898, %v6899
        %v6901 = vand.u32 %v6900, 4294901760
        %6902 = vmatpush1.msra.mxu0 %v6901
        %6903 = vmatprep.subr.mxu0 0.0
        %v6904 = vand.u32 %v283, 4294901760
        %v6905 = vsub.f32 %v283, %v6904
        %v6906 = vand.u32 %v6905, 4294901760
        %v6907 = vsub.f32 %v6905, %v6906
        %v6908 = vand.u32 %v6907, 4294901760
        %6909 = vmatpush1.msra.mxu0 %v6908
        %6910 = vmatprep.subr.mxu0 0.0
        %v6911 = vand.u32 %v284, 4294901760
        %v6912 = vsub.f32 %v284, %v6911
        %v6913 = vand.u32 %v6912, 4294901760
        %v6914 = vsub.f32 %v6912, %v6913
        %v6915 = vand.u32 %v6914, 4294901760
        %6916 = vmatpush1.msra.mxu0 %v6915
        %6917 = vmatprep.subr.mxu0 0.0
        %6918 = vmatpush1.msra.mxu0 0.0
        %6919 = vmatprep.subr.mxu0 0.0
        %6920 = vmatpush1.msra.mxu0 0.0
        %6921 = vmatprep.subr.mxu0 0.0
        %6922 = vmatpush1.msra.mxu0 0.0
        %6923 = vmatprep.subr.mxu0 0.0
        %6924 = vmatpush1.msra.mxu0 0.0
        %6925 = vmatprep.subr.mxu0 0.0
        %6926 = vmatpush1.msra.mxu0 0.0
        %6927 = vmatprep.subr.mxu0 0.0
        %6928 = vmatpush1.msra.mxu0 0.0
        %6929 = vmatprep.subr.mxu0 0.0
        %6930 = vmatpush1.msra.mxu0 0.0
        %6931 = vmatprep.subr.mxu0 0.0
        %6932 = vmatpush1.msra.mxu0 0.0
        %6933 = vmatprep.subr.mxu0 0.0
        %6934 = vmatpush1.msra.mxu0 0.0
        %6935 = vmatprep.subr.mxu0 0.0
        %6936 = vmatpush1.msra.mxu0 0.0
        %6937 = vmatprep.subr.mxu0 0.0
        %6938 = vmatpush1.msra.mxu0 0.0
        %6939 = vmatprep.subr.mxu0 0.0
        %6940 = vmatpush1.msra.mxu0 0.0
        %v6941 = vand.u32 %v6675, 4294901760
        %6942 = vmatprep.mubr.f32.mxu0 %v6941
        %v6943 = vand.u32 %v6666, 4294901760
        %6944 = vmatmul.mubr.f32.gmra.mrb[0].mxu0 %v6943
        %v6945 = vpop.f32.mrb[0].mxu0
        %v6946 = vadd.f32 %v6774, %v6945
        %v6947 = vpop.f32.mrb[0].mxu0
        %6948 = vdwg.mxu0
        %6949 = vmatprep.subr.mxu0 0.0
        %v6950 = vand.u32 %v265, 4294901760
        %v6951 = vsub.f32 %v265, %v6950
        %6952 = vmatpush1.msra.mxu0 %v6951
        %6953 = vmatprep.subr.mxu0 0.0
        %v6954 = vand.u32 %v266, 4294901760
        %v6955 = vsub.f32 %v266, %v6954
        %6956 = vmatpush1.msra.mxu0 %v6955
        %6957 = vmatprep.subr.mxu0 0.0
        %v6958 = vand.u32 %v267, 4294901760
        %v6959 = vsub.f32 %v267, %v6958
        %6960 = vmatpush1.msra.mxu0 %v6959
        %6961 = vmatprep.subr.mxu0 0.0
        %v6962 = vand.u32 %v268, 4294901760
        %v6963 = vsub.f32 %v268, %v6962
        %6964 = vmatpush1.msra.mxu0 %v6963
        %6965 = vmatprep.subr.mxu0 0.0
        %v6966 = vand.u32 %v269, 4294901760
        %v6967 = vsub.f32 %v269, %v6966
        %6968 = vmatpush1.msra.mxu0 %v6967
        %6969 = vmatprep.subr.mxu0 0.0
        %v6970 = vand.u32 %v270, 4294901760
        %v6971 = vsub.f32 %v270, %v6970
        %6972 = vmatpush1.msra.mxu0 %v6971
        %6973 = vmatprep.subr.mxu0 0.0
        %v6974 = vand.u32 %v271, 4294901760
        %v6975 = vsub.f32 %v271, %v6974
        %6976 = vmatpush1.msra.mxu0 %v6975
        %6977 = vmatprep.subr.mxu0 0.0
        %v6978 = vand.u32 %v272, 4294901760
        %v6979 = vsub.f32 %v272, %v6978
        %6980 = vmatpush1.msra.mxu0 %v6979
        %6981 = vmatprep.subr.mxu0 0.0
        %v6982 = vand.u32 %v273, 4294901760
        %v6983 = vsub.f32 %v273, %v6982
        %6984 = vmatpush1.msra.mxu0 %v6983
        %6985 = vmatprep.subr.mxu0 0.0
        %v6986 = vand.u32 %v274, 4294901760
        %v6987 = vsub.f32 %v274, %v6986
        %6988 = vmatpush1.msra.mxu0 %v6987
        %6989 = vmatprep.subr.mxu0 0.0
        %v6990 = vand.u32 %v275, 4294901760
        %v6991 = vsub.f32 %v275, %v6990
        %6992 = vmatpush1.msra.mxu0 %v6991
        %6993 = vmatprep.subr.mxu0 0.0
        %v6994 = vand.u32 %v276, 4294901760
        %v6995 = vsub.f32 %v276, %v6994
        %6996 = vmatpush1.msra.mxu0 %v6995
        %6997 = vmatprep.subr.mxu0 0.0
        %v6998 = vand.u32 %v277, 4294901760
        %v6999 = vsub.f32 %v277, %v6998
        %7000 = vmatpush1.msra.mxu0 %v6999
        %7001 = vmatprep.subr.mxu0 0.0
        %v7002 = vand.u32 %v278, 4294901760
        %v7003 = vsub.f32 %v278, %v7002
        %7004 = vmatpush1.msra.mxu0 %v7003
        %7005 = vmatprep.subr.mxu0 0.0
        %v7006 = vand.u32 %v279, 4294901760
        %v7007 = vsub.f32 %v279, %v7006
        %7008 = vmatpush1.msra.mxu0 %v7007
        %7009 = vmatprep.subr.mxu0 0.0
        %v7010 = vand.u32 %v280, 4294901760
        %v7011 = vsub.f32 %v280, %v7010
        %7012 = vmatpush1.msra.mxu0 %v7011
        %7013 = vmatprep.subr.mxu0 0.0
        %v7014 = vand.u32 %v281, 4294901760
        %v7015 = vsub.f32 %v281, %v7014
        %7016 = vmatpush1.msra.mxu0 %v7015
        %7017 = vmatprep.subr.mxu0 0.0
        %v7018 = vand.u32 %v282, 4294901760
        %v7019 = vsub.f32 %v282, %v7018
        %7020 = vmatpush1.msra.mxu0 %v7019
        %7021 = vmatprep.subr.mxu0 0.0
        %v7022 = vand.u32 %v283, 4294901760
        %v7023 = vsub.f32 %v283, %v7022
        %7024 = vmatpush1.msra.mxu0 %v7023
        %7025 = vmatprep.subr.mxu0 0.0
        %v7026 = vand.u32 %v284, 4294901760
        %v7027 = vsub.f32 %v284, %v7026
        %7028 = vmatpush1.msra.mxu0 %v7027
        %7029 = vmatprep.subr.mxu0 0.0
        %7030 = vmatpush1.msra.mxu0 0.0
        %7031 = vmatprep.subr.mxu0 0.0
        %7032 = vmatpush1.msra.mxu0 0.0
        %7033 = vmatprep.subr.mxu0 0.0
        %7034 = vmatpush1.msra.mxu0 0.0
        %7035 = vmatprep.subr.mxu0 0.0
        %7036 = vmatpush1.msra.mxu0 0.0
        %7037 = vmatprep.subr.mxu0 0.0
        %7038 = vmatpush1.msra.mxu0 0.0
        %7039 = vmatprep.subr.mxu0 0.0
        %7040 = vmatpush1.msra.mxu0 0.0
        %7041 = vmatprep.subr.mxu0 0.0
        %7042 = vmatpush1.msra.mxu0 0.0
        %7043 = vmatprep.subr.mxu0 0.0
        %7044 = vmatpush1.msra.mxu0 0.0
        %7045 = vmatprep.subr.mxu0 0.0
        %7046 = vmatpush1.msra.mxu0 0.0
        %7047 = vmatprep.subr.mxu0 0.0
        %7048 = vmatpush1.msra.mxu0 0.0
        %7049 = vmatprep.subr.mxu0 0.0
        %7050 = vmatpush1.msra.mxu0 0.0
        %7051 = vmatprep.subr.mxu0 0.0
        %7052 = vmatpush1.msra.mxu0 0.0
        %v7053 = vand.u32 %v6675, 4294901760
        %v7054 = vsub.f32 %v6675, %v7053
        %7055 = vmatprep.mubr.f32.mxu0 %v7054
        %v7056 = vand.u32 %v6666, 4294901760
        %v7057 = vsub.f32 %v6666, %v7056
        %7058 = vmatmul.mubr.f32.gmra.mrb[0].mxu0 %v7057
        %v7059 = vpop.f32.mrb[0].mxu0
        %v7060 = vadd.f32 %v6946, %v7059
        %v7061 = vpop.f32.mrb[0].mxu0
        %7062 = vdwg.mxu0
        %7063 = vmatprep.subr.mxu0 0.0
        %v7064 = vand.u32 %v265, 4294901760
        %7065 = vmatpush1.msra.mxu0 %v7064
        %7066 = vmatprep.subr.mxu0 0.0
        %v7067 = vand.u32 %v266, 4294901760
        %7068 = vmatpush1.msra.mxu0 %v7067
        %7069 = vmatprep.subr.mxu0 0.0
        %v7070 = vand.u32 %v267, 4294901760
        %7071 = vmatpush1.msra.mxu0 %v7070
        %7072 = vmatprep.subr.mxu0 0.0
        %v7073 = vand.u32 %v268, 4294901760
        %7074 = vmatpush1.msra.mxu0 %v7073
        %7075 = vmatprep.subr.mxu0 0.0
        %v7076 = vand.u32 %v269, 4294901760
        %7077 = vmatpush1.msra.mxu0 %v7076
        %7078 = vmatprep.subr.mxu0 0.0
        %v7079 = vand.u32 %v270, 4294901760
        %7080 = vmatpush1.msra.mxu0 %v7079
        %7081 = vmatprep.subr.mxu0 0.0
        %v7082 = vand.u32 %v271, 4294901760
        %7083 = vmatpush1.msra.mxu0 %v7082
        %7084 = vmatprep.subr.mxu0 0.0
        %v7085 = vand.u32 %v272, 4294901760
        %7086 = vmatpush1.msra.mxu0 %v7085
        %7087 = vmatprep.subr.mxu0 0.0
        %v7088 = vand.u32 %v273, 4294901760
        %7089 = vmatpush1.msra.mxu0 %v7088
        %7090 = vmatprep.subr.mxu0 0.0
        %v7091 = vand.u32 %v274, 4294901760
        %7092 = vmatpush1.msra.mxu0 %v7091
        %7093 = vmatprep.subr.mxu0 0.0
        %v7094 = vand.u32 %v275, 4294901760
        %7095 = vmatpush1.msra.mxu0 %v7094
        %7096 = vmatprep.subr.mxu0 0.0
        %v7097 = vand.u32 %v276, 4294901760
        %7098 = vmatpush1.msra.mxu0 %v7097
        %7099 = vmatprep.subr.mxu0 0.0
        %v7100 = vand.u32 %v277, 4294901760
        %7101 = vmatpush1.msra.mxu0 %v7100
        %7102 = vmatprep.subr.mxu0 0.0
        %v7103 = vand.u32 %v278, 4294901760
        %7104 = vmatpush1.msra.mxu0 %v7103
        %7105 = vmatprep.subr.mxu0 0.0
        %v7106 = vand.u32 %v279, 4294901760
        %7107 = vmatpush1.msra.mxu0 %v7106
        %7108 = vmatprep.subr.mxu0 0.0
        %v7109 = vand.u32 %v280, 4294901760
        %7110 = vmatpush1.msra.mxu0 %v7109
        %7111 = vmatprep.subr.mxu0 0.0
        %v7112 = vand.u32 %v281, 4294901760
        %7113 = vmatpush1.msra.mxu0 %v7112
        %7114 = vmatprep.subr.mxu0 0.0
        %v7115 = vand.u32 %v282, 4294901760
        %7116 = vmatpush1.msra.mxu0 %v7115
        %7117 = vmatprep.subr.mxu0 0.0
        %v7118 = vand.u32 %v283, 4294901760
        %7119 = vmatpush1.msra.mxu0 %v7118
        %7120 = vmatprep.subr.mxu0 0.0
        %v7121 = vand.u32 %v284, 4294901760
        %7122 = vmatpush1.msra.mxu0 %v7121
        %7123 = vmatprep.subr.mxu0 0.0
        %7124 = vmatpush1.msra.mxu0 0.0
        %7125 = vmatprep.subr.mxu0 0.0
        %7126 = vmatpush1.msra.mxu0 0.0
        %7127 = vmatprep.subr.mxu0 0.0
        %7128 = vmatpush1.msra.mxu0 0.0
        %7129 = vmatprep.subr.mxu0 0.0
        %7130 = vmatpush1.msra.mxu0 0.0
        %7131 = vmatprep.subr.mxu0 0.0
        %7132 = vmatpush1.msra.mxu0 0.0
        %7133 = vmatprep.subr.mxu0 0.0
        %7134 = vmatpush1.msra.mxu0 0.0
        %7135 = vmatprep.subr.mxu0 0.0
        %7136 = vmatpush1.msra.mxu0 0.0
        %7137 = vmatprep.subr.mxu0 0.0
        %7138 = vmatpush1.msra.mxu0 0.0
        %7139 = vmatprep.subr.mxu0 0.0
        %7140 = vmatpush1.msra.mxu0 0.0
        %7141 = vmatprep.subr.mxu0 0.0
        %7142 = vmatpush1.msra.mxu0 0.0
        %7143 = vmatprep.subr.mxu0 0.0
        %7144 = vmatpush1.msra.mxu0 0.0
        %7145 = vmatprep.subr.mxu0 0.0
        %7146 = vmatpush1.msra.mxu0 0.0
        %v7147 = vand.u32 %v6675, 4294901760
        %v7148 = vsub.f32 %v6675, %v7147
        %v7149 = vand.u32 %v7148, 4294901760
        %7150 = vmatprep.mubr.f32.mxu0 %v7149
        %v7151 = vand.u32 %v6666, 4294901760
        %v7152 = vsub.f32 %v6666, %v7151
        %v7153 = vand.u32 %v7152, 4294901760
        %7154 = vmatmul.mubr.f32.gmra.mrb[0].mxu0 %v7153
        %v7155 = vpop.f32.mrb[0].mxu0
        %v7156 = vadd.f32 %v7060, %v7155
        %v7157 = vpop.f32.mrb[0].mxu0
        %7158 = vdwg.mxu0
        %7159 = vmatprep.subr.mxu0 0.0
        %v7160 = vand.u32 %v265, 4294901760
        %v7161 = vsub.f32 %v265, %v7160
        %v7162 = vand.u32 %v7161, 4294901760
        %7163 = vmatpush1.msra.mxu0 %v7162
        %7164 = vmatprep.subr.mxu0 0.0
        %v7165 = vand.u32 %v266, 4294901760
        %v7166 = vsub.f32 %v266, %v7165
        %v7167 = vand.u32 %v7166, 4294901760
        %7168 = vmatpush1.msra.mxu0 %v7167
        %7169 = vmatprep.subr.mxu0 0.0
        %v7170 = vand.u32 %v267, 4294901760
        %v7171 = vsub.f32 %v267, %v7170
        %v7172 = vand.u32 %v7171, 4294901760
        %7173 = vmatpush1.msra.mxu0 %v7172
        %7174 = vmatprep.subr.mxu0 0.0
        %v7175 = vand.u32 %v268, 4294901760
        %v7176 = vsub.f32 %v268, %v7175
        %v7177 = vand.u32 %v7176, 4294901760
        %7178 = vmatpush1.msra.mxu0 %v7177
        %7179 = vmatprep.subr.mxu0 0.0
        %v7180 = vand.u32 %v269, 4294901760
        %v7181 = vsub.f32 %v269, %v7180
        %v7182 = vand.u32 %v7181, 4294901760
        %7183 = vmatpush1.msra.mxu0 %v7182
        %7184 = vmatprep.subr.mxu0 0.0
        %v7185 = vand.u32 %v270, 4294901760
        %v7186 = vsub.f32 %v270, %v7185
        %v7187 = vand.u32 %v7186, 4294901760
        %7188 = vmatpush1.msra.mxu0 %v7187
        %7189 = vmatprep.subr.mxu0 0.0
        %v7190 = vand.u32 %v271, 4294901760
        %v7191 = vsub.f32 %v271, %v7190
        %v7192 = vand.u32 %v7191, 4294901760
        %7193 = vmatpush1.msra.mxu0 %v7192
        %7194 = vmatprep.subr.mxu0 0.0
        %v7195 = vand.u32 %v272, 4294901760
        %v7196 = vsub.f32 %v272, %v7195
        %v7197 = vand.u32 %v7196, 4294901760
        %7198 = vmatpush1.msra.mxu0 %v7197
        %7199 = vmatprep.subr.mxu0 0.0
        %v7200 = vand.u32 %v273, 4294901760
        %v7201 = vsub.f32 %v273, %v7200
        %v7202 = vand.u32 %v7201, 4294901760
        %7203 = vmatpush1.msra.mxu0 %v7202
        %7204 = vmatprep.subr.mxu0 0.0
        %v7205 = vand.u32 %v274, 4294901760
        %v7206 = vsub.f32 %v274, %v7205
        %v7207 = vand.u32 %v7206, 4294901760
        %7208 = vmatpush1.msra.mxu0 %v7207
        %7209 = vmatprep.subr.mxu0 0.0
        %v7210 = vand.u32 %v275, 4294901760
        %v7211 = vsub.f32 %v275, %v7210
        %v7212 = vand.u32 %v7211, 4294901760
        %7213 = vmatpush1.msra.mxu0 %v7212
        %7214 = vmatprep.subr.mxu0 0.0
        %v7215 = vand.u32 %v276, 4294901760
        %v7216 = vsub.f32 %v276, %v7215
        %v7217 = vand.u32 %v7216, 4294901760
        %7218 = vmatpush1.msra.mxu0 %v7217
        %7219 = vmatprep.subr.mxu0 0.0
        %v7220 = vand.u32 %v277, 4294901760
        %v7221 = vsub.f32 %v277, %v7220
        %v7222 = vand.u32 %v7221, 4294901760
        %7223 = vmatpush1.msra.mxu0 %v7222
        %7224 = vmatprep.subr.mxu0 0.0
        %v7225 = vand.u32 %v278, 4294901760
        %v7226 = vsub.f32 %v278, %v7225
        %v7227 = vand.u32 %v7226, 4294901760
        %7228 = vmatpush1.msra.mxu0 %v7227
        %7229 = vmatprep.subr.mxu0 0.0
        %v7230 = vand.u32 %v279, 4294901760
        %v7231 = vsub.f32 %v279, %v7230
        %v7232 = vand.u32 %v7231, 4294901760
        %7233 = vmatpush1.msra.mxu0 %v7232
        %7234 = vmatprep.subr.mxu0 0.0
        %v7235 = vand.u32 %v280, 4294901760
        %v7236 = vsub.f32 %v280, %v7235
        %v7237 = vand.u32 %v7236, 4294901760
        %7238 = vmatpush1.msra.mxu0 %v7237
        %7239 = vmatprep.subr.mxu0 0.0
        %v7240 = vand.u32 %v281, 4294901760
        %v7241 = vsub.f32 %v281, %v7240
        %v7242 = vand.u32 %v7241, 4294901760
        %7243 = vmatpush1.msra.mxu0 %v7242
        %7244 = vmatprep.subr.mxu0 0.0
        %v7245 = vand.u32 %v282, 4294901760
        %v7246 = vsub.f32 %v282, %v7245
        %v7247 = vand.u32 %v7246, 4294901760
        %7248 = vmatpush1.msra.mxu0 %v7247
        %7249 = vmatprep.subr.mxu0 0.0
        %v7250 = vand.u32 %v283, 4294901760
        %v7251 = vsub.f32 %v283, %v7250
        %v7252 = vand.u32 %v7251, 4294901760
        %7253 = vmatpush1.msra.mxu0 %v7252
        %7254 = vmatprep.subr.mxu0 0.0
        %v7255 = vand.u32 %v284, 4294901760
        %v7256 = vsub.f32 %v284, %v7255
        %v7257 = vand.u32 %v7256, 4294901760
        %7258 = vmatpush1.msra.mxu0 %v7257
        %7259 = vmatprep.subr.mxu0 0.0
        %7260 = vmatpush1.msra.mxu0 0.0
        %7261 = vmatprep.subr.mxu0 0.0
        %7262 = vmatpush1.msra.mxu0 0.0
        %7263 = vmatprep.subr.mxu0 0.0
        %7264 = vmatpush1.msra.mxu0 0.0
        %7265 = vmatprep.subr.mxu0 0.0
        %7266 = vmatpush1.msra.mxu0 0.0
        %7267 = vmatprep.subr.mxu0 0.0
        %7268 = vmatpush1.msra.mxu0 0.0
        %7269 = vmatprep.subr.mxu0 0.0
        %7270 = vmatpush1.msra.mxu0 0.0
        %7271 = vmatprep.subr.mxu0 0.0
        %7272 = vmatpush1.msra.mxu0 0.0
        %7273 = vmatprep.subr.mxu0 0.0
        %7274 = vmatpush1.msra.mxu0 0.0
        %7275 = vmatprep.subr.mxu0 0.0
        %7276 = vmatpush1.msra.mxu0 0.0
        %7277 = vmatprep.subr.mxu0 0.0
        %7278 = vmatpush1.msra.mxu0 0.0
        %7279 = vmatprep.subr.mxu0 0.0
        %7280 = vmatpush1.msra.mxu0 0.0
        %7281 = vmatprep.subr.mxu0 0.0
        %7282 = vmatpush1.msra.mxu0 0.0
        %v7283 = vand.u32 %v6675, 4294901760
        %7284 = vmatprep.mubr.f32.mxu0 %v7283
        %v7285 = vand.u32 %v6666, 4294901760
        %7286 = vmatmul.mubr.f32.gmra.mrb[0].mxu0 %v7285
        %v7287 = vpop.f32.mrb[0].mxu0
        %v7288 = vadd.f32 %v7156, %v7287
        %v7289 = vpop.f32.mrb[0].mxu0
        %7290 = vdwg.mxu0
        %7291 = vmatprep.subr.mxu0 0.0
        %v7292 = vand.u32 %v265, 4294901760
        %7293 = vmatpush1.msra.mxu0 %v7292
        %7294 = vmatprep.subr.mxu0 0.0
        %v7295 = vand.u32 %v266, 4294901760
        %7296 = vmatpush1.msra.mxu0 %v7295
        %7297 = vmatprep.subr.mxu0 0.0
        %v7298 = vand.u32 %v267, 4294901760
        %7299 = vmatpush1.msra.mxu0 %v7298
        %7300 = vmatprep.subr.mxu0 0.0
        %v7301 = vand.u32 %v268, 4294901760
        %7302 = vmatpush1.msra.mxu0 %v7301
        %7303 = vmatprep.subr.mxu0 0.0
        %v7304 = vand.u32 %v269, 4294901760
        %7305 = vmatpush1.msra.mxu0 %v7304
        %7306 = vmatprep.subr.mxu0 0.0
        %v7307 = vand.u32 %v270, 4294901760
        %7308 = vmatpush1.msra.mxu0 %v7307
        %7309 = vmatprep.subr.mxu0 0.0
        %v7310 = vand.u32 %v271, 4294901760
        %7311 = vmatpush1.msra.mxu0 %v7310
        %7312 = vmatprep.subr.mxu0 0.0
        %v7313 = vand.u32 %v272, 4294901760
        %7314 = vmatpush1.msra.mxu0 %v7313
        %7315 = vmatprep.subr.mxu0 0.0
        %v7316 = vand.u32 %v273, 4294901760
        %7317 = vmatpush1.msra.mxu0 %v7316
        %7318 = vmatprep.subr.mxu0 0.0
        %v7319 = vand.u32 %v274, 4294901760
        %7320 = vmatpush1.msra.mxu0 %v7319
        %7321 = vmatprep.subr.mxu0 0.0
        %v7322 = vand.u32 %v275, 4294901760
        %7323 = vmatpush1.msra.mxu0 %v7322
        %7324 = vmatprep.subr.mxu0 0.0
        %v7325 = vand.u32 %v276, 4294901760
        %7326 = vmatpush1.msra.mxu0 %v7325
        %7327 = vmatprep.subr.mxu0 0.0
        %v7328 = vand.u32 %v277, 4294901760
        %7329 = vmatpush1.msra.mxu0 %v7328
        %7330 = vmatprep.subr.mxu0 0.0
        %v7331 = vand.u32 %v278, 4294901760
        %7332 = vmatpush1.msra.mxu0 %v7331
        %7333 = vmatprep.subr.mxu0 0.0
        %v7334 = vand.u32 %v279, 4294901760
        %7335 = vmatpush1.msra.mxu0 %v7334
        %7336 = vmatprep.subr.mxu0 0.0
        %v7337 = vand.u32 %v280, 4294901760
        %7338 = vmatpush1.msra.mxu0 %v7337
        %7339 = vmatprep.subr.mxu0 0.0
        %v7340 = vand.u32 %v281, 4294901760
        %7341 = vmatpush1.msra.mxu0 %v7340
        %7342 = vmatprep.subr.mxu0 0.0
        %v7343 = vand.u32 %v282, 4294901760
        %7344 = vmatpush1.msra.mxu0 %v7343
        %7345 = vmatprep.subr.mxu0 0.0
        %v7346 = vand.u32 %v283, 4294901760
        %7347 = vmatpush1.msra.mxu0 %v7346
        %7348 = vmatprep.subr.mxu0 0.0
        %v7349 = vand.u32 %v284, 4294901760
        %7350 = vmatpush1.msra.mxu0 %v7349
        %7351 = vmatprep.subr.mxu0 0.0
        %7352 = vmatpush1.msra.mxu0 0.0
        %7353 = vmatprep.subr.mxu0 0.0
        %7354 = vmatpush1.msra.mxu0 0.0
        %7355 = vmatprep.subr.mxu0 0.0
        %7356 = vmatpush1.msra.mxu0 0.0
        %7357 = vmatprep.subr.mxu0 0.0
        %7358 = vmatpush1.msra.mxu0 0.0
        %7359 = vmatprep.subr.mxu0 0.0
        %7360 = vmatpush1.msra.mxu0 0.0
        %7361 = vmatprep.subr.mxu0 0.0
        %7362 = vmatpush1.msra.mxu0 0.0
        %7363 = vmatprep.subr.mxu0 0.0
        %7364 = vmatpush1.msra.mxu0 0.0
        %7365 = vmatprep.subr.mxu0 0.0
        %7366 = vmatpush1.msra.mxu0 0.0
        %7367 = vmatprep.subr.mxu0 0.0
        %7368 = vmatpush1.msra.mxu0 0.0
        %7369 = vmatprep.subr.mxu0 0.0
        %7370 = vmatpush1.msra.mxu0 0.0
        %7371 = vmatprep.subr.mxu0 0.0
        %7372 = vmatpush1.msra.mxu0 0.0
        %7373 = vmatprep.subr.mxu0 0.0
        %7374 = vmatpush1.msra.mxu0 0.0
        %v7375 = vand.u32 %v6675, 4294901760
        %7376 = vmatprep.mubr.f32.mxu0 %v7375
        %v7377 = vand.u32 %v6666, 4294901760
        %7378 = vmatmul.mubr.f32.gmra.mrb[0].mxu0 %v7377
        %v7379 = vpop.f32.mrb[0].mxu0
        %v7380 = vadd.f32 %v7288, %v7379
        %v7381 = vpop.f32.mrb[0].mxu0
        %7382 = vdwg.mxu0
        %v7383 = vrsqrt.pop %v7380
        %v7384 = vmul.f32 %v7380, %v7383
        %vm7385 = vcmp.eq.f32.partialorder %v7380, inf
        %v7386 = vsel %vm7385, %v7380, %v7384
        %vm7387 = vcmp.eq.f32.partialorder %v7380, 0.0
        %v7388 = vand.u32 %v7380, 2147483648
        %v7389 = vsel %vm7387, %v7388, %v7386
        %v7390 = vadd.f32 %v7380, 1.0
        %v7391 = vrcp.pop %v7390
        %v7392 = vmul.f32 %v7390, %v7391
        %v7393 = vsub.f32 2.0, %v7392
        %v7394 = vmul.f32 %v7391, %v7393
        %v7395 = vmul.f32 %v7389, %v7394
        %v7396 = vmul.f32 %v245, %v6529
        %v7397 = vmul.f32 %v246, %v6536
        %v7398 = vmul.f32 %v247, %v6542
        %v7399 = vmul.f32 %v248, %v6549
        %v7400 = vmul.f32 %v249, %v6555
        %v7401 = vmul.f32 %v250, %v6562
        %v7402 = vmul.f32 %v251, %v6568
        %v7403 = vmul.f32 %v252, %v6575
        %v7404 = vmul.f32 %v253, %v6581
        %v7405 = vmul.f32 %v254, %v6588
        %v7406 = vmul.f32 %v255, %v6594
        %v7407 = vmul.f32 %v256, %v6601
        %v7408 = vmul.f32 %v257, %v6607
        %v7409 = vmul.f32 %v258, %v6614
        %v7410 = vmul.f32 %v259, %v6620
        %v7411 = vmul.f32 %v260, %v6627
        %v7413 = vsel %vm309, %v7397, 0
        %v7416 = vsel %vm309, %v7399, 0
        %v7419 = vsel %vm309, %v7401, 0
        %v7422 = vsel %vm309, %v7403, 0
        %v7425 = vsel %vm309, %v7405, 0
        %v7428 = vsel %vm309, %v7407, 0
        %v7431 = vsel %vm309, %v7409, 0
        %v7434 = vsel %vm309, %v7411, 0
        %7436 = vmatprep.subr.mxu0 0.0
        %v7437 = vand.u32 %v265, 4294901760
        %7438 = vmatpush1.msra.mxu0 %v7437
        %7439 = vmatprep.subr.mxu0 0.0
        %v7440 = vand.u32 %v266, 4294901760
        %7441 = vmatpush1.msra.mxu0 %v7440
        %7442 = vmatprep.subr.mxu0 0.0
        %v7443 = vand.u32 %v267, 4294901760
        %7444 = vmatpush1.msra.mxu0 %v7443
        %7445 = vmatprep.subr.mxu0 0.0
        %v7446 = vand.u32 %v268, 4294901760
        %7447 = vmatpush1.msra.mxu0 %v7446
        %7448 = vmatprep.subr.mxu0 0.0
        %v7449 = vand.u32 %v269, 4294901760
        %7450 = vmatpush1.msra.mxu0 %v7449
        %7451 = vmatprep.subr.mxu0 0.0
        %v7452 = vand.u32 %v270, 4294901760
        %7453 = vmatpush1.msra.mxu0 %v7452
        %7454 = vmatprep.subr.mxu0 0.0
        %v7455 = vand.u32 %v271, 4294901760
        %7456 = vmatpush1.msra.mxu0 %v7455
        %7457 = vmatprep.subr.mxu0 0.0
        %v7458 = vand.u32 %v272, 4294901760
        %7459 = vmatpush1.msra.mxu0 %v7458
        %7460 = vmatprep.subr.mxu0 0.0
        %v7461 = vand.u32 %v273, 4294901760
        %7462 = vmatpush1.msra.mxu0 %v7461
        %7463 = vmatprep.subr.mxu0 0.0
        %v7464 = vand.u32 %v274, 4294901760
        %7465 = vmatpush1.msra.mxu0 %v7464
        %7466 = vmatprep.subr.mxu0 0.0
        %v7467 = vand.u32 %v275, 4294901760
        %7468 = vmatpush1.msra.mxu0 %v7467
        %7469 = vmatprep.subr.mxu0 0.0
        %v7470 = vand.u32 %v276, 4294901760
        %7471 = vmatpush1.msra.mxu0 %v7470
        %7472 = vmatprep.subr.mxu0 0.0
        %v7473 = vand.u32 %v277, 4294901760
        %7474 = vmatpush1.msra.mxu0 %v7473
        %7475 = vmatprep.subr.mxu0 0.0
        %v7476 = vand.u32 %v278, 4294901760
        %7477 = vmatpush1.msra.mxu0 %v7476
        %7478 = vmatprep.subr.mxu0 0.0
        %v7479 = vand.u32 %v279, 4294901760
        %7480 = vmatpush1.msra.mxu0 %v7479
        %7481 = vmatprep.subr.mxu0 0.0
        %v7482 = vand.u32 %v280, 4294901760
        %7483 = vmatpush1.msra.mxu0 %v7482
        %7484 = vmatprep.subr.mxu0 0.0
        %v7485 = vand.u32 %v281, 4294901760
        %7486 = vmatpush1.msra.mxu0 %v7485
        %7487 = vmatprep.subr.mxu0 0.0
        %v7488 = vand.u32 %v282, 4294901760
        %7489 = vmatpush1.msra.mxu0 %v7488
        %7490 = vmatprep.subr.mxu0 0.0
        %v7491 = vand.u32 %v283, 4294901760
        %7492 = vmatpush1.msra.mxu0 %v7491
        %7493 = vmatprep.subr.mxu0 0.0
        %v7494 = vand.u32 %v284, 4294901760
        %7495 = vmatpush1.msra.mxu0 %v7494
        %7496 = vmatprep.subr.mxu0 0.0
        %7497 = vmatpush1.msra.mxu0 0.0
        %7498 = vmatprep.subr.mxu0 0.0
        %7499 = vmatpush1.msra.mxu0 0.0
        %7500 = vmatprep.subr.mxu0 0.0
        %7501 = vmatpush1.msra.mxu0 0.0
        %7502 = vmatprep.subr.mxu0 0.0
        %7503 = vmatpush1.msra.mxu0 0.0
        %7504 = vmatprep.subr.mxu0 0.0
        %7505 = vmatpush1.msra.mxu0 0.0
        %7506 = vmatprep.subr.mxu0 0.0
        %7507 = vmatpush1.msra.mxu0 0.0
        %7508 = vmatprep.subr.mxu0 0.0
        %7509 = vmatpush1.msra.mxu0 0.0
        %7510 = vmatprep.subr.mxu0 0.0
        %7511 = vmatpush1.msra.mxu0 0.0
        %7512 = vmatprep.subr.mxu0 0.0
        %7513 = vmatpush1.msra.mxu0 0.0
        %7514 = vmatprep.subr.mxu0 0.0
        %7515 = vmatpush1.msra.mxu0 0.0
        %7516 = vmatprep.subr.mxu0 0.0
        %7517 = vmatpush1.msra.mxu0 0.0
        %7518 = vmatprep.subr.mxu0 0.0
        %7519 = vmatpush1.msra.mxu0 0.0
        %v7520 = vand.u32 %v7413, 4294901760
        %v7521 = vsub.f32 %v7413, %v7520
        %v7522 = vand.u32 %v7521, 4294901760
        %v7523 = vsub.f32 %v7521, %v7522
        %v7524 = vand.u32 %v7523, 4294901760
        %7525 = vmatprep.mubr.f32.mxu0 %v7524
        %v7526 = vand.u32 %v7396, 4294901760
        %v7527 = vsub.f32 %v7396, %v7526
        %v7528 = vand.u32 %v7527, 4294901760
        %v7529 = vsub.f32 %v7527, %v7528
        %v7530 = vand.u32 %v7529, 4294901760
        %7531 = vmatmul.mubr.f32.gmra.mrb[0].mxu0 %v7530
        %v7532 = vpop.f32.mrb[0].mxu0
        %v7533 = vadd.f32 0.0, %v7532
        %v7534 = vpop.f32.mrb[0].mxu0
        %v7535 = vand.u32 %v7416, 4294901760
        %v7536 = vsub.f32 %v7416, %v7535
        %v7537 = vand.u32 %v7536, 4294901760
        %v7538 = vsub.f32 %v7536, %v7537
        %v7539 = vand.u32 %v7538, 4294901760
        %7540 = vmatprep.mubr.f32.mxu0 %v7539
        %v7541 = vand.u32 %v7398, 4294901760
        %v7542 = vsub.f32 %v7398, %v7541
        %v7543 = vand.u32 %v7542, 4294901760
        %v7544 = vsub.f32 %v7542, %v7543
        %v7545 = vand.u32 %v7544, 4294901760
        %7546 = vmatmul.mubr.f32.gmra.mrb[0].mxu0 %v7545
        %v7547 = vpop.f32.mrb[0].mxu0
        %v7548 = vadd.f32 0.0, %v7547
        %v7549 = vpop.f32.mrb[0].mxu0
        %v7550 = vand.u32 %v7419, 4294901760
        %v7551 = vsub.f32 %v7419, %v7550
        %v7552 = vand.u32 %v7551, 4294901760
        %v7553 = vsub.f32 %v7551, %v7552
        %v7554 = vand.u32 %v7553, 4294901760
        %7555 = vmatprep.mubr.f32.mxu0 %v7554
        %v7556 = vand.u32 %v7400, 4294901760
        %v7557 = vsub.f32 %v7400, %v7556
        %v7558 = vand.u32 %v7557, 4294901760
        %v7559 = vsub.f32 %v7557, %v7558
        %v7560 = vand.u32 %v7559, 4294901760
        %7561 = vmatmul.mubr.f32.gmra.mrb[0].mxu0 %v7560
        %v7562 = vpop.f32.mrb[0].mxu0
        %v7563 = vadd.f32 0.0, %v7562
        %v7564 = vpop.f32.mrb[0].mxu0
        %v7565 = vand.u32 %v7422, 4294901760
        %v7566 = vsub.f32 %v7422, %v7565
        %v7567 = vand.u32 %v7566, 4294901760
        %v7568 = vsub.f32 %v7566, %v7567
        %v7569 = vand.u32 %v7568, 4294901760
        %7570 = vmatprep.mubr.f32.mxu0 %v7569
        %v7571 = vand.u32 %v7402, 4294901760
        %v7572 = vsub.f32 %v7402, %v7571
        %v7573 = vand.u32 %v7572, 4294901760
        %v7574 = vsub.f32 %v7572, %v7573
        %v7575 = vand.u32 %v7574, 4294901760
        %7576 = vmatmul.mubr.f32.gmra.mrb[0].mxu0 %v7575
        %v7577 = vpop.f32.mrb[0].mxu0
        %v7578 = vadd.f32 0.0, %v7577
        %v7579 = vpop.f32.mrb[0].mxu0
        %v7580 = vand.u32 %v7425, 4294901760
        %v7581 = vsub.f32 %v7425, %v7580
        %v7582 = vand.u32 %v7581, 4294901760
        %v7583 = vsub.f32 %v7581, %v7582
        %v7584 = vand.u32 %v7583, 4294901760
        %7585 = vmatprep.mubr.f32.mxu0 %v7584
        %v7586 = vand.u32 %v7404, 4294901760
        %v7587 = vsub.f32 %v7404, %v7586
        %v7588 = vand.u32 %v7587, 4294901760
        %v7589 = vsub.f32 %v7587, %v7588
        %v7590 = vand.u32 %v7589, 4294901760
        %7591 = vmatmul.mubr.f32.gmra.mrb[0].mxu0 %v7590
        %v7592 = vpop.f32.mrb[0].mxu0
        %v7593 = vadd.f32 0.0, %v7592
        %v7594 = vpop.f32.mrb[0].mxu0
        %v7595 = vand.u32 %v7428, 4294901760
        %v7596 = vsub.f32 %v7428, %v7595
        %v7597 = vand.u32 %v7596, 4294901760
        %v7598 = vsub.f32 %v7596, %v7597
        %v7599 = vand.u32 %v7598, 4294901760
        %7600 = vmatprep.mubr.f32.mxu0 %v7599
        %v7601 = vand.u32 %v7406, 4294901760
        %v7602 = vsub.f32 %v7406, %v7601
        %v7603 = vand.u32 %v7602, 4294901760
        %v7604 = vsub.f32 %v7602, %v7603
        %v7605 = vand.u32 %v7604, 4294901760
        %7606 = vmatmul.mubr.f32.gmra.mrb[0].mxu0 %v7605
        %v7607 = vpop.f32.mrb[0].mxu0
        %v7608 = vadd.f32 0.0, %v7607
        %v7609 = vpop.f32.mrb[0].mxu0
        %v7610 = vand.u32 %v7431, 4294901760
        %v7611 = vsub.f32 %v7431, %v7610
        %v7612 = vand.u32 %v7611, 4294901760
        %v7613 = vsub.f32 %v7611, %v7612
        %v7614 = vand.u32 %v7613, 4294901760
        %7615 = vmatprep.mubr.f32.mxu0 %v7614
        %v7616 = vand.u32 %v7408, 4294901760
        %v7617 = vsub.f32 %v7408, %v7616
        %v7618 = vand.u32 %v7617, 4294901760
        %v7619 = vsub.f32 %v7617, %v7618
        %v7620 = vand.u32 %v7619, 4294901760
        %7621 = vmatmul.mubr.f32.gmra.mrb[0].mxu0 %v7620
        %v7622 = vpop.f32.mrb[0].mxu0
        %v7623 = vadd.f32 0.0, %v7622
        %v7624 = vpop.f32.mrb[0].mxu0
        %v7625 = vand.u32 %v7434, 4294901760
        %v7626 = vsub.f32 %v7434, %v7625
        %v7627 = vand.u32 %v7626, 4294901760
        %v7628 = vsub.f32 %v7626, %v7627
        %v7629 = vand.u32 %v7628, 4294901760
        %7630 = vmatprep.mubr.f32.mxu0 %v7629
        %v7631 = vand.u32 %v7410, 4294901760
        %v7632 = vsub.f32 %v7410, %v7631
        %v7633 = vand.u32 %v7632, 4294901760
        %v7634 = vsub.f32 %v7632, %v7633
        %v7635 = vand.u32 %v7634, 4294901760
        %7636 = vmatmul.mubr.f32.gmra.mrb[0].mxu0 %v7635
        %v7637 = vpop.f32.mrb[0].mxu0
        %v7638 = vadd.f32 0.0, %v7637
        %v7639 = vpop.f32.mrb[0].mxu0
        %7640 = vdwg.mxu0
        %7641 = vmatprep.subr.mxu0 0.0
        %v7642 = vand.u32 %v265, 4294901760
        %v7643 = vsub.f32 %v265, %v7642
        %v7644 = vand.u32 %v7643, 4294901760
        %v7645 = vsub.f32 %v7643, %v7644
        %v7646 = vand.u32 %v7645, 4294901760
        %7647 = vmatpush1.msra.mxu0 %v7646
        %7648 = vmatprep.subr.mxu0 0.0
        %v7649 = vand.u32 %v266, 4294901760
        %v7650 = vsub.f32 %v266, %v7649
        %v7651 = vand.u32 %v7650, 4294901760
        %v7652 = vsub.f32 %v7650, %v7651
        %v7653 = vand.u32 %v7652, 4294901760
        %7654 = vmatpush1.msra.mxu0 %v7653
        %7655 = vmatprep.subr.mxu0 0.0
        %v7656 = vand.u32 %v267, 4294901760
        %v7657 = vsub.f32 %v267, %v7656
        %v7658 = vand.u32 %v7657, 4294901760
        %v7659 = vsub.f32 %v7657, %v7658
        %v7660 = vand.u32 %v7659, 4294901760
        %7661 = vmatpush1.msra.mxu0 %v7660
        %7662 = vmatprep.subr.mxu0 0.0
        %v7663 = vand.u32 %v268, 4294901760
        %v7664 = vsub.f32 %v268, %v7663
        %v7665 = vand.u32 %v7664, 4294901760
        %v7666 = vsub.f32 %v7664, %v7665
        %v7667 = vand.u32 %v7666, 4294901760
        %7668 = vmatpush1.msra.mxu0 %v7667
        %7669 = vmatprep.subr.mxu0 0.0
        %v7670 = vand.u32 %v269, 4294901760
        %v7671 = vsub.f32 %v269, %v7670
        %v7672 = vand.u32 %v7671, 4294901760
        %v7673 = vsub.f32 %v7671, %v7672
        %v7674 = vand.u32 %v7673, 4294901760
        %7675 = vmatpush1.msra.mxu0 %v7674
        %7676 = vmatprep.subr.mxu0 0.0
        %v7677 = vand.u32 %v270, 4294901760
        %v7678 = vsub.f32 %v270, %v7677
        %v7679 = vand.u32 %v7678, 4294901760
        %v7680 = vsub.f32 %v7678, %v7679
        %v7681 = vand.u32 %v7680, 4294901760
        %7682 = vmatpush1.msra.mxu0 %v7681
        %7683 = vmatprep.subr.mxu0 0.0
        %v7684 = vand.u32 %v271, 4294901760
        %v7685 = vsub.f32 %v271, %v7684
        %v7686 = vand.u32 %v7685, 4294901760
        %v7687 = vsub.f32 %v7685, %v7686
        %v7688 = vand.u32 %v7687, 4294901760
        %7689 = vmatpush1.msra.mxu0 %v7688
        %7690 = vmatprep.subr.mxu0 0.0
        %v7691 = vand.u32 %v272, 4294901760
        %v7692 = vsub.f32 %v272, %v7691
        %v7693 = vand.u32 %v7692, 4294901760
        %v7694 = vsub.f32 %v7692, %v7693
        %v7695 = vand.u32 %v7694, 4294901760
        %7696 = vmatpush1.msra.mxu0 %v7695
        %7697 = vmatprep.subr.mxu0 0.0
        %v7698 = vand.u32 %v273, 4294901760
        %v7699 = vsub.f32 %v273, %v7698
        %v7700 = vand.u32 %v7699, 4294901760
        %v7701 = vsub.f32 %v7699, %v7700
        %v7702 = vand.u32 %v7701, 4294901760
        %7703 = vmatpush1.msra.mxu0 %v7702
        %7704 = vmatprep.subr.mxu0 0.0
        %v7705 = vand.u32 %v274, 4294901760
        %v7706 = vsub.f32 %v274, %v7705
        %v7707 = vand.u32 %v7706, 4294901760
        %v7708 = vsub.f32 %v7706, %v7707
        %v7709 = vand.u32 %v7708, 4294901760
        %7710 = vmatpush1.msra.mxu0 %v7709
        %7711 = vmatprep.subr.mxu0 0.0
        %v7712 = vand.u32 %v275, 4294901760
        %v7713 = vsub.f32 %v275, %v7712
        %v7714 = vand.u32 %v7713, 4294901760
        %v7715 = vsub.f32 %v7713, %v7714
        %v7716 = vand.u32 %v7715, 4294901760
        %7717 = vmatpush1.msra.mxu0 %v7716
        %7718 = vmatprep.subr.mxu0 0.0
        %v7719 = vand.u32 %v276, 4294901760
        %v7720 = vsub.f32 %v276, %v7719
        %v7721 = vand.u32 %v7720, 4294901760
        %v7722 = vsub.f32 %v7720, %v7721
        %v7723 = vand.u32 %v7722, 4294901760
        %7724 = vmatpush1.msra.mxu0 %v7723
        %7725 = vmatprep.subr.mxu0 0.0
        %v7726 = vand.u32 %v277, 4294901760
        %v7727 = vsub.f32 %v277, %v7726
        %v7728 = vand.u32 %v7727, 4294901760
        %v7729 = vsub.f32 %v7727, %v7728
        %v7730 = vand.u32 %v7729, 4294901760
        %7731 = vmatpush1.msra.mxu0 %v7730
        %7732 = vmatprep.subr.mxu0 0.0
        %v7733 = vand.u32 %v278, 4294901760
        %v7734 = vsub.f32 %v278, %v7733
        %v7735 = vand.u32 %v7734, 4294901760
        %v7736 = vsub.f32 %v7734, %v7735
        %v7737 = vand.u32 %v7736, 4294901760
        %7738 = vmatpush1.msra.mxu0 %v7737
        %7739 = vmatprep.subr.mxu0 0.0
        %v7740 = vand.u32 %v279, 4294901760
        %v7741 = vsub.f32 %v279, %v7740
        %v7742 = vand.u32 %v7741, 4294901760
        %v7743 = vsub.f32 %v7741, %v7742
        %v7744 = vand.u32 %v7743, 4294901760
        %7745 = vmatpush1.msra.mxu0 %v7744
        %7746 = vmatprep.subr.mxu0 0.0
        %v7747 = vand.u32 %v280, 4294901760
        %v7748 = vsub.f32 %v280, %v7747
        %v7749 = vand.u32 %v7748, 4294901760
        %v7750 = vsub.f32 %v7748, %v7749
        %v7751 = vand.u32 %v7750, 4294901760
        %7752 = vmatpush1.msra.mxu0 %v7751
        %7753 = vmatprep.subr.mxu0 0.0
        %v7754 = vand.u32 %v281, 4294901760
        %v7755 = vsub.f32 %v281, %v7754
        %v7756 = vand.u32 %v7755, 4294901760
        %v7757 = vsub.f32 %v7755, %v7756
        %v7758 = vand.u32 %v7757, 4294901760
        %7759 = vmatpush1.msra.mxu0 %v7758
        %7760 = vmatprep.subr.mxu0 0.0
        %v7761 = vand.u32 %v282, 4294901760
        %v7762 = vsub.f32 %v282, %v7761
        %v7763 = vand.u32 %v7762, 4294901760
        %v7764 = vsub.f32 %v7762, %v7763
        %v7765 = vand.u32 %v7764, 4294901760
        %7766 = vmatpush1.msra.mxu0 %v7765
        %7767 = vmatprep.subr.mxu0 0.0
        %v7768 = vand.u32 %v283, 4294901760
        %v7769 = vsub.f32 %v283, %v7768
        %v7770 = vand.u32 %v7769, 4294901760
        %v7771 = vsub.f32 %v7769, %v7770
        %v7772 = vand.u32 %v7771, 4294901760
        %7773 = vmatpush1.msra.mxu0 %v7772
        %7774 = vmatprep.subr.mxu0 0.0
        %v7775 = vand.u32 %v284, 4294901760
        %v7776 = vsub.f32 %v284, %v7775
        %v7777 = vand.u32 %v7776, 4294901760
        %v7778 = vsub.f32 %v7776, %v7777
        %v7779 = vand.u32 %v7778, 4294901760
        %7780 = vmatpush1.msra.mxu0 %v7779
        %7781 = vmatprep.subr.mxu0 0.0
        %7782 = vmatpush1.msra.mxu0 0.0
        %7783 = vmatprep.subr.mxu0 0.0
        %7784 = vmatpush1.msra.mxu0 0.0
        %7785 = vmatprep.subr.mxu0 0.0
        %7786 = vmatpush1.msra.mxu0 0.0
        %7787 = vmatprep.subr.mxu0 0.0
        %7788 = vmatpush1.msra.mxu0 0.0
        %7789 = vmatprep.subr.mxu0 0.0
        %7790 = vmatpush1.msra.mxu0 0.0
        %7791 = vmatprep.subr.mxu0 0.0
        %7792 = vmatpush1.msra.mxu0 0.0
        %7793 = vmatprep.subr.mxu0 0.0
        %7794 = vmatpush1.msra.mxu0 0.0
        %7795 = vmatprep.subr.mxu0 0.0
        %7796 = vmatpush1.msra.mxu0 0.0
        %7797 = vmatprep.subr.mxu0 0.0
        %7798 = vmatpush1.msra.mxu0 0.0
        %7799 = vmatprep.subr.mxu0 0.0
        %7800 = vmatpush1.msra.mxu0 0.0
        %7801 = vmatprep.subr.mxu0 0.0
        %7802 = vmatpush1.msra.mxu0 0.0
        %7803 = vmatprep.subr.mxu0 0.0
        %7804 = vmatpush1.msra.mxu0 0.0
        %v7805 = vand.u32 %v7413, 4294901760
        %7806 = vmatprep.mubr.f32.mxu0 %v7805
        %v7807 = vand.u32 %v7396, 4294901760
        %7808 = vmatmul.mubr.f32.gmra.mrb[0].mxu0 %v7807
        %v7809 = vpop.f32.mrb[0].mxu0
        %v7810 = vadd.f32 %v7533, %v7809
        %v7811 = vpop.f32.mrb[0].mxu0
        %v7812 = vand.u32 %v7416, 4294901760
        %7813 = vmatprep.mubr.f32.mxu0 %v7812
        %v7814 = vand.u32 %v7398, 4294901760
        %7815 = vmatmul.mubr.f32.gmra.mrb[0].mxu0 %v7814
        %v7816 = vpop.f32.mrb[0].mxu0
        %v7817 = vadd.f32 %v7548, %v7816
        %v7818 = vpop.f32.mrb[0].mxu0
        %v7819 = vand.u32 %v7419, 4294901760
        %7820 = vmatprep.mubr.f32.mxu0 %v7819
        %v7821 = vand.u32 %v7400, 4294901760
        %7822 = vmatmul.mubr.f32.gmra.mrb[0].mxu0 %v7821
        %v7823 = vpop.f32.mrb[0].mxu0
        %v7824 = vadd.f32 %v7563, %v7823
        %v7825 = vpop.f32.mrb[0].mxu0
        %v7826 = vand.u32 %v7422, 4294901760
        %7827 = vmatprep.mubr.f32.mxu0 %v7826
        %v7828 = vand.u32 %v7402, 4294901760
        %7829 = vmatmul.mubr.f32.gmra.mrb[0].mxu0 %v7828
        %v7830 = vpop.f32.mrb[0].mxu0
        %v7831 = vadd.f32 %v7578, %v7830
        %v7832 = vpop.f32.mrb[0].mxu0
        %v7833 = vand.u32 %v7425, 4294901760
        %7834 = vmatprep.mubr.f32.mxu0 %v7833
        %v7835 = vand.u32 %v7404, 4294901760
        %7836 = vmatmul.mubr.f32.gmra.mrb[0].mxu0 %v7835
        %v7837 = vpop.f32.mrb[0].mxu0
        %v7838 = vadd.f32 %v7593, %v7837
        %v7839 = vpop.f32.mrb[0].mxu0
        %v7840 = vand.u32 %v7428, 4294901760
        %7841 = vmatprep.mubr.f32.mxu0 %v7840
        %v7842 = vand.u32 %v7406, 4294901760
        %7843 = vmatmul.mubr.f32.gmra.mrb[0].mxu0 %v7842
        %v7844 = vpop.f32.mrb[0].mxu0
        %v7845 = vadd.f32 %v7608, %v7844
        %v7846 = vpop.f32.mrb[0].mxu0
        %v7847 = vand.u32 %v7431, 4294901760
        %7848 = vmatprep.mubr.f32.mxu0 %v7847
        %v7849 = vand.u32 %v7408, 4294901760
        %7850 = vmatmul.mubr.f32.gmra.mrb[0].mxu0 %v7849
        %v7851 = vpop.f32.mrb[0].mxu0
        %v7852 = vadd.f32 %v7623, %v7851
        %v7853 = vpop.f32.mrb[0].mxu0
        %v7854 = vand.u32 %v7434, 4294901760
        %7855 = vmatprep.mubr.f32.mxu0 %v7854
        %v7856 = vand.u32 %v7410, 4294901760
        %7857 = vmatmul.mubr.f32.gmra.mrb[0].mxu0 %v7856
        %v7858 = vpop.f32.mrb[0].mxu0
        %v7859 = vadd.f32 %v7638, %v7858
        %v7860 = vpop.f32.mrb[0].mxu0
        %7861 = vdwg.mxu0
        %7862 = vmatprep.subr.mxu0 0.0
        %v7863 = vand.u32 %v265, 4294901760
        %v7864 = vsub.f32 %v265, %v7863
        %7865 = vmatpush1.msra.mxu0 %v7864
        %7866 = vmatprep.subr.mxu0 0.0
        %v7867 = vand.u32 %v266, 4294901760
        %v7868 = vsub.f32 %v266, %v7867
        %7869 = vmatpush1.msra.mxu0 %v7868
        %7870 = vmatprep.subr.mxu0 0.0
        %v7871 = vand.u32 %v267, 4294901760
        %v7872 = vsub.f32 %v267, %v7871
        %7873 = vmatpush1.msra.mxu0 %v7872
        %7874 = vmatprep.subr.mxu0 0.0
        %v7875 = vand.u32 %v268, 4294901760
        %v7876 = vsub.f32 %v268, %v7875
        %7877 = vmatpush1.msra.mxu0 %v7876
        %7878 = vmatprep.subr.mxu0 0.0
        %v7879 = vand.u32 %v269, 4294901760
        %v7880 = vsub.f32 %v269, %v7879
        %7881 = vmatpush1.msra.mxu0 %v7880
        %7882 = vmatprep.subr.mxu0 0.0
        %v7883 = vand.u32 %v270, 4294901760
        %v7884 = vsub.f32 %v270, %v7883
        %7885 = vmatpush1.msra.mxu0 %v7884
        %7886 = vmatprep.subr.mxu0 0.0
        %v7887 = vand.u32 %v271, 4294901760
        %v7888 = vsub.f32 %v271, %v7887
        %7889 = vmatpush1.msra.mxu0 %v7888
        %7890 = vmatprep.subr.mxu0 0.0
        %v7891 = vand.u32 %v272, 4294901760
        %v7892 = vsub.f32 %v272, %v7891
        %7893 = vmatpush1.msra.mxu0 %v7892
        %7894 = vmatprep.subr.mxu0 0.0
        %v7895 = vand.u32 %v273, 4294901760
        %v7896 = vsub.f32 %v273, %v7895
        %7897 = vmatpush1.msra.mxu0 %v7896
        %7898 = vmatprep.subr.mxu0 0.0
        %v7899 = vand.u32 %v274, 4294901760
        %v7900 = vsub.f32 %v274, %v7899
        %7901 = vmatpush1.msra.mxu0 %v7900
        %7902 = vmatprep.subr.mxu0 0.0
        %v7903 = vand.u32 %v275, 4294901760
        %v7904 = vsub.f32 %v275, %v7903
        %7905 = vmatpush1.msra.mxu0 %v7904
        %7906 = vmatprep.subr.mxu0 0.0
        %v7907 = vand.u32 %v276, 4294901760
        %v7908 = vsub.f32 %v276, %v7907
        %7909 = vmatpush1.msra.mxu0 %v7908
        %7910 = vmatprep.subr.mxu0 0.0
        %v7911 = vand.u32 %v277, 4294901760
        %v7912 = vsub.f32 %v277, %v7911
        %7913 = vmatpush1.msra.mxu0 %v7912
        %7914 = vmatprep.subr.mxu0 0.0
        %v7915 = vand.u32 %v278, 4294901760
        %v7916 = vsub.f32 %v278, %v7915
        %7917 = vmatpush1.msra.mxu0 %v7916
        %7918 = vmatprep.subr.mxu0 0.0
        %v7919 = vand.u32 %v279, 4294901760
        %v7920 = vsub.f32 %v279, %v7919
        %7921 = vmatpush1.msra.mxu0 %v7920
        %7922 = vmatprep.subr.mxu0 0.0
        %v7923 = vand.u32 %v280, 4294901760
        %v7924 = vsub.f32 %v280, %v7923
        %7925 = vmatpush1.msra.mxu0 %v7924
        %7926 = vmatprep.subr.mxu0 0.0
        %v7927 = vand.u32 %v281, 4294901760
        %v7928 = vsub.f32 %v281, %v7927
        %7929 = vmatpush1.msra.mxu0 %v7928
        %7930 = vmatprep.subr.mxu0 0.0
        %v7931 = vand.u32 %v282, 4294901760
        %v7932 = vsub.f32 %v282, %v7931
        %7933 = vmatpush1.msra.mxu0 %v7932
        %7934 = vmatprep.subr.mxu0 0.0
        %v7935 = vand.u32 %v283, 4294901760
        %v7936 = vsub.f32 %v283, %v7935
        %7937 = vmatpush1.msra.mxu0 %v7936
        %7938 = vmatprep.subr.mxu0 0.0
        %v7939 = vand.u32 %v284, 4294901760
        %v7940 = vsub.f32 %v284, %v7939
        %7941 = vmatpush1.msra.mxu0 %v7940
        %7942 = vmatprep.subr.mxu0 0.0
        %7943 = vmatpush1.msra.mxu0 0.0
        %7944 = vmatprep.subr.mxu0 0.0
        %7945 = vmatpush1.msra.mxu0 0.0
        %7946 = vmatprep.subr.mxu0 0.0
        %7947 = vmatpush1.msra.mxu0 0.0
        %7948 = vmatprep.subr.mxu0 0.0
        %7949 = vmatpush1.msra.mxu0 0.0
        %7950 = vmatprep.subr.mxu0 0.0
        %7951 = vmatpush1.msra.mxu0 0.0
        %7952 = vmatprep.subr.mxu0 0.0
        %7953 = vmatpush1.msra.mxu0 0.0
        %7954 = vmatprep.subr.mxu0 0.0
        %7955 = vmatpush1.msra.mxu0 0.0
        %7956 = vmatprep.subr.mxu0 0.0
        %7957 = vmatpush1.msra.mxu0 0.0
        %7958 = vmatprep.subr.mxu0 0.0
        %7959 = vmatpush1.msra.mxu0 0.0
        %7960 = vmatprep.subr.mxu0 0.0
        %7961 = vmatpush1.msra.mxu0 0.0
        %7962 = vmatprep.subr.mxu0 0.0
        %7963 = vmatpush1.msra.mxu0 0.0
        %7964 = vmatprep.subr.mxu0 0.0
        %7965 = vmatpush1.msra.mxu0 0.0
        %v7966 = vand.u32 %v7413, 4294901760
        %v7967 = vsub.f32 %v7413, %v7966
        %7968 = vmatprep.mubr.f32.mxu0 %v7967
        %v7969 = vand.u32 %v7396, 4294901760
        %v7970 = vsub.f32 %v7396, %v7969
        %7971 = vmatmul.mubr.f32.gmra.mrb[0].mxu0 %v7970
        %v7972 = vpop.f32.mrb[0].mxu0
        %v7973 = vadd.f32 %v7810, %v7972
        %v7974 = vpop.f32.mrb[0].mxu0
        %v7975 = vand.u32 %v7416, 4294901760
        %v7976 = vsub.f32 %v7416, %v7975
        %7977 = vmatprep.mubr.f32.mxu0 %v7976
        %v7978 = vand.u32 %v7398, 4294901760
        %v7979 = vsub.f32 %v7398, %v7978
        %7980 = vmatmul.mubr.f32.gmra.mrb[0].mxu0 %v7979
        %v7981 = vpop.f32.mrb[0].mxu0
        %v7982 = vadd.f32 %v7817, %v7981
        %v7983 = vpop.f32.mrb[0].mxu0
        %v7984 = vand.u32 %v7419, 4294901760
        %v7985 = vsub.f32 %v7419, %v7984
        %7986 = vmatprep.mubr.f32.mxu0 %v7985
        %v7987 = vand.u32 %v7400, 4294901760
        %v7988 = vsub.f32 %v7400, %v7987
        %7989 = vmatmul.mubr.f32.gmra.mrb[0].mxu0 %v7988
        %v7990 = vpop.f32.mrb[0].mxu0
        %v7991 = vadd.f32 %v7824, %v7990
        %v7992 = vpop.f32.mrb[0].mxu0
        %v7993 = vand.u32 %v7422, 4294901760
        %v7994 = vsub.f32 %v7422, %v7993
        %7995 = vmatprep.mubr.f32.mxu0 %v7994
        %v7996 = vand.u32 %v7402, 4294901760
        %v7997 = vsub.f32 %v7402, %v7996
        %7998 = vmatmul.mubr.f32.gmra.mrb[0].mxu0 %v7997
        %v7999 = vpop.f32.mrb[0].mxu0
        %v8000 = vadd.f32 %v7831, %v7999
        %v8001 = vpop.f32.mrb[0].mxu0
        %v8002 = vand.u32 %v7425, 4294901760
        %v8003 = vsub.f32 %v7425, %v8002
        %8004 = vmatprep.mubr.f32.mxu0 %v8003
        %v8005 = vand.u32 %v7404, 4294901760
        %v8006 = vsub.f32 %v7404, %v8005
        %8007 = vmatmul.mubr.f32.gmra.mrb[0].mxu0 %v8006
        %v8008 = vpop.f32.mrb[0].mxu0
        %v8009 = vadd.f32 %v7838, %v8008
        %v8010 = vpop.f32.mrb[0].mxu0
        %v8011 = vand.u32 %v7428, 4294901760
        %v8012 = vsub.f32 %v7428, %v8011
        %8013 = vmatprep.mubr.f32.mxu0 %v8012
        %v8014 = vand.u32 %v7406, 4294901760
        %v8015 = vsub.f32 %v7406, %v8014
        %8016 = vmatmul.mubr.f32.gmra.mrb[0].mxu0 %v8015
        %v8017 = vpop.f32.mrb[0].mxu0
        %v8018 = vadd.f32 %v7845, %v8017
        %v8019 = vpop.f32.mrb[0].mxu0
        %v8020 = vand.u32 %v7431, 4294901760
        %v8021 = vsub.f32 %v7431, %v8020
        %8022 = vmatprep.mubr.f32.mxu0 %v8021
        %v8023 = vand.u32 %v7408, 4294901760
        %v8024 = vsub.f32 %v7408, %v8023
        %8025 = vmatmul.mubr.f32.gmra.mrb[0].mxu0 %v8024
        %v8026 = vpop.f32.mrb[0].mxu0
        %v8027 = vadd.f32 %v7852, %v8026
        %v8028 = vpop.f32.mrb[0].mxu0
        %v8029 = vand.u32 %v7434, 4294901760
        %v8030 = vsub.f32 %v7434, %v8029
        %8031 = vmatprep.mubr.f32.mxu0 %v8030
        %v8032 = vand.u32 %v7410, 4294901760
        %v8033 = vsub.f32 %v7410, %v8032
        %8034 = vmatmul.mubr.f32.gmra.mrb[0].mxu0 %v8033
        %v8035 = vpop.f32.mrb[0].mxu0
        %v8036 = vadd.f32 %v7859, %v8035
        %v8037 = vpop.f32.mrb[0].mxu0
        %8038 = vdwg.mxu0
        %8039 = vmatprep.subr.mxu0 0.0
        %v8040 = vand.u32 %v265, 4294901760
        %8041 = vmatpush1.msra.mxu0 %v8040
        %8042 = vmatprep.subr.mxu0 0.0
        %v8043 = vand.u32 %v266, 4294901760
        %8044 = vmatpush1.msra.mxu0 %v8043
        %8045 = vmatprep.subr.mxu0 0.0
        %v8046 = vand.u32 %v267, 4294901760
        %8047 = vmatpush1.msra.mxu0 %v8046
        %8048 = vmatprep.subr.mxu0 0.0
        %v8049 = vand.u32 %v268, 4294901760
        %8050 = vmatpush1.msra.mxu0 %v8049
        %8051 = vmatprep.subr.mxu0 0.0
        %v8052 = vand.u32 %v269, 4294901760
        %8053 = vmatpush1.msra.mxu0 %v8052
        %8054 = vmatprep.subr.mxu0 0.0
        %v8055 = vand.u32 %v270, 4294901760
        %8056 = vmatpush1.msra.mxu0 %v8055
        %8057 = vmatprep.subr.mxu0 0.0
        %v8058 = vand.u32 %v271, 4294901760
        %8059 = vmatpush1.msra.mxu0 %v8058
        %8060 = vmatprep.subr.mxu0 0.0
        %v8061 = vand.u32 %v272, 4294901760
        %8062 = vmatpush1.msra.mxu0 %v8061
        %8063 = vmatprep.subr.mxu0 0.0
        %v8064 = vand.u32 %v273, 4294901760
        %8065 = vmatpush1.msra.mxu0 %v8064
        %8066 = vmatprep.subr.mxu0 0.0
        %v8067 = vand.u32 %v274, 4294901760
        %8068 = vmatpush1.msra.mxu0 %v8067
        %8069 = vmatprep.subr.mxu0 0.0
        %v8070 = vand.u32 %v275, 4294901760
        %8071 = vmatpush1.msra.mxu0 %v8070
        %8072 = vmatprep.subr.mxu0 0.0
        %v8073 = vand.u32 %v276, 4294901760
        %8074 = vmatpush1.msra.mxu0 %v8073
        %8075 = vmatprep.subr.mxu0 0.0
        %v8076 = vand.u32 %v277, 4294901760
        %8077 = vmatpush1.msra.mxu0 %v8076
        %8078 = vmatprep.subr.mxu0 0.0
        %v8079 = vand.u32 %v278, 4294901760
        %8080 = vmatpush1.msra.mxu0 %v8079
        %8081 = vmatprep.subr.mxu0 0.0
        %v8082 = vand.u32 %v279, 4294901760
        %8083 = vmatpush1.msra.mxu0 %v8082
        %8084 = vmatprep.subr.mxu0 0.0
        %v8085 = vand.u32 %v280, 4294901760
        %8086 = vmatpush1.msra.mxu0 %v8085
        %8087 = vmatprep.subr.mxu0 0.0
        %v8088 = vand.u32 %v281, 4294901760
        %8089 = vmatpush1.msra.mxu0 %v8088
        %8090 = vmatprep.subr.mxu0 0.0
        %v8091 = vand.u32 %v282, 4294901760
        %8092 = vmatpush1.msra.mxu0 %v8091
        %8093 = vmatprep.subr.mxu0 0.0
        %v8094 = vand.u32 %v283, 4294901760
        %8095 = vmatpush1.msra.mxu0 %v8094
        %8096 = vmatprep.subr.mxu0 0.0
        %v8097 = vand.u32 %v284, 4294901760
        %8098 = vmatpush1.msra.mxu0 %v8097
        %8099 = vmatprep.subr.mxu0 0.0
        %8100 = vmatpush1.msra.mxu0 0.0
        %8101 = vmatprep.subr.mxu0 0.0
        %8102 = vmatpush1.msra.mxu0 0.0
        %8103 = vmatprep.subr.mxu0 0.0
        %8104 = vmatpush1.msra.mxu0 0.0
        %8105 = vmatprep.subr.mxu0 0.0
        %8106 = vmatpush1.msra.mxu0 0.0
        %8107 = vmatprep.subr.mxu0 0.0
        %8108 = vmatpush1.msra.mxu0 0.0
        %8109 = vmatprep.subr.mxu0 0.0
        %8110 = vmatpush1.msra.mxu0 0.0
        %8111 = vmatprep.subr.mxu0 0.0
        %8112 = vmatpush1.msra.mxu0 0.0
        %8113 = vmatprep.subr.mxu0 0.0
        %8114 = vmatpush1.msra.mxu0 0.0
        %8115 = vmatprep.subr.mxu0 0.0
        %8116 = vmatpush1.msra.mxu0 0.0
        %8117 = vmatprep.subr.mxu0 0.0
        %8118 = vmatpush1.msra.mxu0 0.0
        %8119 = vmatprep.subr.mxu0 0.0
        %8120 = vmatpush1.msra.mxu0 0.0
        %8121 = vmatprep.subr.mxu0 0.0
        %8122 = vmatpush1.msra.mxu0 0.0
        %v8123 = vand.u32 %v7413, 4294901760
        %v8124 = vsub.f32 %v7413, %v8123
        %v8125 = vand.u32 %v8124, 4294901760
        %8126 = vmatprep.mubr.f32.mxu0 %v8125
        %v8127 = vand.u32 %v7396, 4294901760
        %v8128 = vsub.f32 %v7396, %v8127
        %v8129 = vand.u32 %v8128, 4294901760
        %8130 = vmatmul.mubr.f32.gmra.mrb[0].mxu0 %v8129
        %v8131 = vpop.f32.mrb[0].mxu0
        %v8132 = vadd.f32 %v7973, %v8131
        %v8133 = vpop.f32.mrb[0].mxu0
        %v8134 = vand.u32 %v7416, 4294901760
        %v8135 = vsub.f32 %v7416, %v8134
        %v8136 = vand.u32 %v8135, 4294901760
        %8137 = vmatprep.mubr.f32.mxu0 %v8136
        %v8138 = vand.u32 %v7398, 4294901760
        %v8139 = vsub.f32 %v7398, %v8138
        %v8140 = vand.u32 %v8139, 4294901760
        %8141 = vmatmul.mubr.f32.gmra.mrb[0].mxu0 %v8140
        %v8142 = vpop.f32.mrb[0].mxu0
        %v8143 = vadd.f32 %v7982, %v8142
        %v8144 = vpop.f32.mrb[0].mxu0
        %v8145 = vand.u32 %v7419, 4294901760
        %v8146 = vsub.f32 %v7419, %v8145
        %v8147 = vand.u32 %v8146, 4294901760
        %8148 = vmatprep.mubr.f32.mxu0 %v8147
        %v8149 = vand.u32 %v7400, 4294901760
        %v8150 = vsub.f32 %v7400, %v8149
        %v8151 = vand.u32 %v8150, 4294901760
        %8152 = vmatmul.mubr.f32.gmra.mrb[0].mxu0 %v8151
        %v8153 = vpop.f32.mrb[0].mxu0
        %v8154 = vadd.f32 %v7991, %v8153
        %v8155 = vpop.f32.mrb[0].mxu0
        %v8156 = vand.u32 %v7422, 4294901760
        %v8157 = vsub.f32 %v7422, %v8156
        %v8158 = vand.u32 %v8157, 4294901760
        %8159 = vmatprep.mubr.f32.mxu0 %v8158
        %v8160 = vand.u32 %v7402, 4294901760
        %v8161 = vsub.f32 %v7402, %v8160
        %v8162 = vand.u32 %v8161, 4294901760
        %8163 = vmatmul.mubr.f32.gmra.mrb[0].mxu0 %v8162
        %v8164 = vpop.f32.mrb[0].mxu0
        %v8165 = vadd.f32 %v8000, %v8164
        %v8166 = vpop.f32.mrb[0].mxu0
        %v8167 = vand.u32 %v7425, 4294901760
        %v8168 = vsub.f32 %v7425, %v8167
        %v8169 = vand.u32 %v8168, 4294901760
        %8170 = vmatprep.mubr.f32.mxu0 %v8169
        %v8171 = vand.u32 %v7404, 4294901760
        %v8172 = vsub.f32 %v7404, %v8171
        %v8173 = vand.u32 %v8172, 4294901760
        %8174 = vmatmul.mubr.f32.gmra.mrb[0].mxu0 %v8173
        %v8175 = vpop.f32.mrb[0].mxu0
        %v8176 = vadd.f32 %v8009, %v8175
        %v8177 = vpop.f32.mrb[0].mxu0
        %v8178 = vand.u32 %v7428, 4294901760
        %v8179 = vsub.f32 %v7428, %v8178
        %v8180 = vand.u32 %v8179, 4294901760
        %8181 = vmatprep.mubr.f32.mxu0 %v8180
        %v8182 = vand.u32 %v7406, 4294901760
        %v8183 = vsub.f32 %v7406, %v8182
        %v8184 = vand.u32 %v8183, 4294901760
        %8185 = vmatmul.mubr.f32.gmra.mrb[0].mxu0 %v8184
        %v8186 = vpop.f32.mrb[0].mxu0
        %v8187 = vadd.f32 %v8018, %v8186
        %v8188 = vpop.f32.mrb[0].mxu0
        %v8189 = vand.u32 %v7431, 4294901760
        %v8190 = vsub.f32 %v7431, %v8189
        %v8191 = vand.u32 %v8190, 4294901760
        %8192 = vmatprep.mubr.f32.mxu0 %v8191
        %v8193 = vand.u32 %v7408, 4294901760
        %v8194 = vsub.f32 %v7408, %v8193
        %v8195 = vand.u32 %v8194, 4294901760
        %8196 = vmatmul.mubr.f32.gmra.mrb[0].mxu0 %v8195
        %v8197 = vpop.f32.mrb[0].mxu0
        %v8198 = vadd.f32 %v8027, %v8197
        %v8199 = vpop.f32.mrb[0].mxu0
        %v8200 = vand.u32 %v7434, 4294901760
        %v8201 = vsub.f32 %v7434, %v8200
        %v8202 = vand.u32 %v8201, 4294901760
        %8203 = vmatprep.mubr.f32.mxu0 %v8202
        %v8204 = vand.u32 %v7410, 4294901760
        %v8205 = vsub.f32 %v7410, %v8204
        %v8206 = vand.u32 %v8205, 4294901760
        %8207 = vmatmul.mubr.f32.gmra.mrb[0].mxu0 %v8206
        %v8208 = vpop.f32.mrb[0].mxu0
        %v8209 = vadd.f32 %v8036, %v8208
        %v8210 = vpop.f32.mrb[0].mxu0
        %8211 = vdwg.mxu0
        %8212 = vmatprep.subr.mxu0 0.0
        %v8213 = vand.u32 %v265, 4294901760
        %v8214 = vsub.f32 %v265, %v8213
        %v8215 = vand.u32 %v8214, 4294901760
        %8216 = vmatpush1.msra.mxu0 %v8215
        %8217 = vmatprep.subr.mxu0 0.0
        %v8218 = vand.u32 %v266, 4294901760
        %v8219 = vsub.f32 %v266, %v8218
        %v8220 = vand.u32 %v8219, 4294901760
        %8221 = vmatpush1.msra.mxu0 %v8220
        %8222 = vmatprep.subr.mxu0 0.0
        %v8223 = vand.u32 %v267, 4294901760
        %v8224 = vsub.f32 %v267, %v8223
        %v8225 = vand.u32 %v8224, 4294901760
        %8226 = vmatpush1.msra.mxu0 %v8225
        %8227 = vmatprep.subr.mxu0 0.0
        %v8228 = vand.u32 %v268, 4294901760
        %v8229 = vsub.f32 %v268, %v8228
        %v8230 = vand.u32 %v8229, 4294901760
        %8231 = vmatpush1.msra.mxu0 %v8230
        %8232 = vmatprep.subr.mxu0 0.0
        %v8233 = vand.u32 %v269, 4294901760
        %v8234 = vsub.f32 %v269, %v8233
        %v8235 = vand.u32 %v8234, 4294901760
        %8236 = vmatpush1.msra.mxu0 %v8235
        %8237 = vmatprep.subr.mxu0 0.0
        %v8238 = vand.u32 %v270, 4294901760
        %v8239 = vsub.f32 %v270, %v8238
        %v8240 = vand.u32 %v8239, 4294901760
        %8241 = vmatpush1.msra.mxu0 %v8240
        %8242 = vmatprep.subr.mxu0 0.0
        %v8243 = vand.u32 %v271, 4294901760
        %v8244 = vsub.f32 %v271, %v8243
        %v8245 = vand.u32 %v8244, 4294901760
        %8246 = vmatpush1.msra.mxu0 %v8245
        %8247 = vmatprep.subr.mxu0 0.0
        %v8248 = vand.u32 %v272, 4294901760
        %v8249 = vsub.f32 %v272, %v8248
        %v8250 = vand.u32 %v8249, 4294901760
        %8251 = vmatpush1.msra.mxu0 %v8250
        %8252 = vmatprep.subr.mxu0 0.0
        %v8253 = vand.u32 %v273, 4294901760
        %v8254 = vsub.f32 %v273, %v8253
        %v8255 = vand.u32 %v8254, 4294901760
        %8256 = vmatpush1.msra.mxu0 %v8255
        %8257 = vmatprep.subr.mxu0 0.0
        %v8258 = vand.u32 %v274, 4294901760
        %v8259 = vsub.f32 %v274, %v8258
        %v8260 = vand.u32 %v8259, 4294901760
        %8261 = vmatpush1.msra.mxu0 %v8260
        %8262 = vmatprep.subr.mxu0 0.0
        %v8263 = vand.u32 %v275, 4294901760
        %v8264 = vsub.f32 %v275, %v8263
        %v8265 = vand.u32 %v8264, 4294901760
        %8266 = vmatpush1.msra.mxu0 %v8265
        %8267 = vmatprep.subr.mxu0 0.0
        %v8268 = vand.u32 %v276, 4294901760
        %v8269 = vsub.f32 %v276, %v8268
        %v8270 = vand.u32 %v8269, 4294901760
        %8271 = vmatpush1.msra.mxu0 %v8270
        %8272 = vmatprep.subr.mxu0 0.0
        %v8273 = vand.u32 %v277, 4294901760
        %v8274 = vsub.f32 %v277, %v8273
        %v8275 = vand.u32 %v8274, 4294901760
        %8276 = vmatpush1.msra.mxu0 %v8275
        %8277 = vmatprep.subr.mxu0 0.0
        %v8278 = vand.u32 %v278, 4294901760
        %v8279 = vsub.f32 %v278, %v8278
        %v8280 = vand.u32 %v8279, 4294901760
        %8281 = vmatpush1.msra.mxu0 %v8280
        %8282 = vmatprep.subr.mxu0 0.0
        %v8283 = vand.u32 %v279, 4294901760
        %v8284 = vsub.f32 %v279, %v8283
        %v8285 = vand.u32 %v8284, 4294901760
        %8286 = vmatpush1.msra.mxu0 %v8285
        %8287 = vmatprep.subr.mxu0 0.0
        %v8288 = vand.u32 %v280, 4294901760
        %v8289 = vsub.f32 %v280, %v8288
        %v8290 = vand.u32 %v8289, 4294901760
        %8291 = vmatpush1.msra.mxu0 %v8290
        %8292 = vmatprep.subr.mxu0 0.0
        %v8293 = vand.u32 %v281, 4294901760
        %v8294 = vsub.f32 %v281, %v8293
        %v8295 = vand.u32 %v8294, 4294901760
        %8296 = vmatpush1.msra.mxu0 %v8295
        %8297 = vmatprep.subr.mxu0 0.0
        %v8298 = vand.u32 %v282, 4294901760
        %v8299 = vsub.f32 %v282, %v8298
        %v8300 = vand.u32 %v8299, 4294901760
        %8301 = vmatpush1.msra.mxu0 %v8300
        %8302 = vmatprep.subr.mxu0 0.0
        %v8303 = vand.u32 %v283, 4294901760
        %v8304 = vsub.f32 %v283, %v8303
        %v8305 = vand.u32 %v8304, 4294901760
        %8306 = vmatpush1.msra.mxu0 %v8305
        %8307 = vmatprep.subr.mxu0 0.0
        %v8308 = vand.u32 %v284, 4294901760
        %v8309 = vsub.f32 %v284, %v8308
        %v8310 = vand.u32 %v8309, 4294901760
        %8311 = vmatpush1.msra.mxu0 %v8310
        %8312 = vmatprep.subr.mxu0 0.0
        %8313 = vmatpush1.msra.mxu0 0.0
        %8314 = vmatprep.subr.mxu0 0.0
        %8315 = vmatpush1.msra.mxu0 0.0
        %8316 = vmatprep.subr.mxu0 0.0
        %8317 = vmatpush1.msra.mxu0 0.0
        %8318 = vmatprep.subr.mxu0 0.0
        %8319 = vmatpush1.msra.mxu0 0.0
        %8320 = vmatprep.subr.mxu0 0.0
        %8321 = vmatpush1.msra.mxu0 0.0
        %8322 = vmatprep.subr.mxu0 0.0
        %8323 = vmatpush1.msra.mxu0 0.0
        %8324 = vmatprep.subr.mxu0 0.0
        %8325 = vmatpush1.msra.mxu0 0.0
        %8326 = vmatprep.subr.mxu0 0.0
        %8327 = vmatpush1.msra.mxu0 0.0
        %8328 = vmatprep.subr.mxu0 0.0
        %8329 = vmatpush1.msra.mxu0 0.0
        %8330 = vmatprep.subr.mxu0 0.0
        %8331 = vmatpush1.msra.mxu0 0.0
        %8332 = vmatprep.subr.mxu0 0.0
        %8333 = vmatpush1.msra.mxu0 0.0
        %8334 = vmatprep.subr.mxu0 0.0
        %8335 = vmatpush1.msra.mxu0 0.0
        %v8336 = vand.u32 %v7413, 4294901760
        %8337 = vmatprep.mubr.f32.mxu0 %v8336
        %v8338 = vand.u32 %v7396, 4294901760
        %8339 = vmatmul.mubr.f32.gmra.mrb[0].mxu0 %v8338
        %v8340 = vpop.f32.mrb[0].mxu0
        %v8341 = vadd.f32 %v8132, %v8340
        %v8342 = vpop.f32.mrb[0].mxu0
        %v8343 = vand.u32 %v7416, 4294901760
        %8344 = vmatprep.mubr.f32.mxu0 %v8343
        %v8345 = vand.u32 %v7398, 4294901760
        %8346 = vmatmul.mubr.f32.gmra.mrb[0].mxu0 %v8345
        %v8347 = vpop.f32.mrb[0].mxu0
        %v8348 = vadd.f32 %v8143, %v8347
        %v8349 = vpop.f32.mrb[0].mxu0
        %v8350 = vand.u32 %v7419, 4294901760
        %8351 = vmatprep.mubr.f32.mxu0 %v8350
        %v8352 = vand.u32 %v7400, 4294901760
        %8353 = vmatmul.mubr.f32.gmra.mrb[0].mxu0 %v8352
        %v8354 = vpop.f32.mrb[0].mxu0
        %v8355 = vadd.f32 %v8154, %v8354
        %v8356 = vpop.f32.mrb[0].mxu0
        %v8357 = vand.u32 %v7422, 4294901760
        %8358 = vmatprep.mubr.f32.mxu0 %v8357
        %v8359 = vand.u32 %v7402, 4294901760
        %8360 = vmatmul.mubr.f32.gmra.mrb[0].mxu0 %v8359
        %v8361 = vpop.f32.mrb[0].mxu0
        %v8362 = vadd.f32 %v8165, %v8361
        %v8363 = vpop.f32.mrb[0].mxu0
        %v8364 = vand.u32 %v7425, 4294901760
        %8365 = vmatprep.mubr.f32.mxu0 %v8364
        %v8366 = vand.u32 %v7404, 4294901760
        %8367 = vmatmul.mubr.f32.gmra.mrb[0].mxu0 %v8366
        %v8368 = vpop.f32.mrb[0].mxu0
        %v8369 = vadd.f32 %v8176, %v8368
        %v8370 = vpop.f32.mrb[0].mxu0
        %v8371 = vand.u32 %v7428, 4294901760
        %8372 = vmatprep.mubr.f32.mxu0 %v8371
        %v8373 = vand.u32 %v7406, 4294901760
        %8374 = vmatmul.mubr.f32.gmra.mrb[0].mxu0 %v8373
        %v8375 = vpop.f32.mrb[0].mxu0
        %v8376 = vadd.f32 %v8187, %v8375
        %v8377 = vpop.f32.mrb[0].mxu0
        %v8378 = vand.u32 %v7431, 4294901760
        %8379 = vmatprep.mubr.f32.mxu0 %v8378
        %v8380 = vand.u32 %v7408, 4294901760
        %8381 = vmatmul.mubr.f32.gmra.mrb[0].mxu0 %v8380
        %v8382 = vpop.f32.mrb[0].mxu0
        %v8383 = vadd.f32 %v8198, %v8382
        %v8384 = vpop.f32.mrb[0].mxu0
        %v8385 = vand.u32 %v7434, 4294901760
        %8386 = vmatprep.mubr.f32.mxu0 %v8385
        %v8387 = vand.u32 %v7410, 4294901760
        %8388 = vmatmul.mubr.f32.gmra.mrb[0].mxu0 %v8387
        %v8389 = vpop.f32.mrb[0].mxu0
        %v8390 = vadd.f32 %v8209, %v8389
        %v8391 = vpop.f32.mrb[0].mxu0
        %8392 = vdwg.mxu0
        %8393 = vmatprep.subr.mxu0 0.0
        %v8394 = vand.u32 %v265, 4294901760
        %8395 = vmatpush1.msra.mxu0 %v8394
        %8396 = vmatprep.subr.mxu0 0.0
        %v8397 = vand.u32 %v266, 4294901760
        %8398 = vmatpush1.msra.mxu0 %v8397
        %8399 = vmatprep.subr.mxu0 0.0
        %v8400 = vand.u32 %v267, 4294901760
        %8401 = vmatpush1.msra.mxu0 %v8400
        %8402 = vmatprep.subr.mxu0 0.0
        %v8403 = vand.u32 %v268, 4294901760
        %8404 = vmatpush1.msra.mxu0 %v8403
        %8405 = vmatprep.subr.mxu0 0.0
        %v8406 = vand.u32 %v269, 4294901760
        %8407 = vmatpush1.msra.mxu0 %v8406
        %8408 = vmatprep.subr.mxu0 0.0
        %v8409 = vand.u32 %v270, 4294901760
        %8410 = vmatpush1.msra.mxu0 %v8409
        %8411 = vmatprep.subr.mxu0 0.0
        %v8412 = vand.u32 %v271, 4294901760
        %8413 = vmatpush1.msra.mxu0 %v8412
        %8414 = vmatprep.subr.mxu0 0.0
        %v8415 = vand.u32 %v272, 4294901760
        %8416 = vmatpush1.msra.mxu0 %v8415
        %8417 = vmatprep.subr.mxu0 0.0
        %v8418 = vand.u32 %v273, 4294901760
        %8419 = vmatpush1.msra.mxu0 %v8418
        %8420 = vmatprep.subr.mxu0 0.0
        %v8421 = vand.u32 %v274, 4294901760
        %8422 = vmatpush1.msra.mxu0 %v8421
        %8423 = vmatprep.subr.mxu0 0.0
        %v8424 = vand.u32 %v275, 4294901760
        %8425 = vmatpush1.msra.mxu0 %v8424
        %8426 = vmatprep.subr.mxu0 0.0
        %v8427 = vand.u32 %v276, 4294901760
        %8428 = vmatpush1.msra.mxu0 %v8427
        %8429 = vmatprep.subr.mxu0 0.0
        %v8430 = vand.u32 %v277, 4294901760
        %8431 = vmatpush1.msra.mxu0 %v8430
        %8432 = vmatprep.subr.mxu0 0.0
        %v8433 = vand.u32 %v278, 4294901760
        %8434 = vmatpush1.msra.mxu0 %v8433
        %8435 = vmatprep.subr.mxu0 0.0
        %v8436 = vand.u32 %v279, 4294901760
        %8437 = vmatpush1.msra.mxu0 %v8436
        %8438 = vmatprep.subr.mxu0 0.0
        %v8439 = vand.u32 %v280, 4294901760
        %8440 = vmatpush1.msra.mxu0 %v8439
        %8441 = vmatprep.subr.mxu0 0.0
        %v8442 = vand.u32 %v281, 4294901760
        %8443 = vmatpush1.msra.mxu0 %v8442
        %8444 = vmatprep.subr.mxu0 0.0
        %v8445 = vand.u32 %v282, 4294901760
        %8446 = vmatpush1.msra.mxu0 %v8445
        %8447 = vmatprep.subr.mxu0 0.0
        %v8448 = vand.u32 %v283, 4294901760
        %8449 = vmatpush1.msra.mxu0 %v8448
        %8450 = vmatprep.subr.mxu0 0.0
        %v8451 = vand.u32 %v284, 4294901760
        %8452 = vmatpush1.msra.mxu0 %v8451
        %8453 = vmatprep.subr.mxu0 0.0
        %8454 = vmatpush1.msra.mxu0 0.0
        %8455 = vmatprep.subr.mxu0 0.0
        %8456 = vmatpush1.msra.mxu0 0.0
        %8457 = vmatprep.subr.mxu0 0.0
        %8458 = vmatpush1.msra.mxu0 0.0
        %8459 = vmatprep.subr.mxu0 0.0
        %8460 = vmatpush1.msra.mxu0 0.0
        %8461 = vmatprep.subr.mxu0 0.0
        %8462 = vmatpush1.msra.mxu0 0.0
        %8463 = vmatprep.subr.mxu0 0.0
        %8464 = vmatpush1.msra.mxu0 0.0
        %8465 = vmatprep.subr.mxu0 0.0
        %8466 = vmatpush1.msra.mxu0 0.0
        %8467 = vmatprep.subr.mxu0 0.0
        %8468 = vmatpush1.msra.mxu0 0.0
        %8469 = vmatprep.subr.mxu0 0.0
        %8470 = vmatpush1.msra.mxu0 0.0
        %8471 = vmatprep.subr.mxu0 0.0
        %8472 = vmatpush1.msra.mxu0 0.0
        %8473 = vmatprep.subr.mxu0 0.0
        %8474 = vmatpush1.msra.mxu0 0.0
        %8475 = vmatprep.subr.mxu0 0.0
        %8476 = vmatpush1.msra.mxu0 0.0
        %v8477 = vand.u32 %v7413, 4294901760
        %8478 = vmatprep.mubr.f32.mxu0 %v8477
        %v8479 = vand.u32 %v7396, 4294901760
        %8480 = vmatmul.mubr.f32.gmra.mrb[0].mxu0 %v8479
        %v8481 = vpop.f32.mrb[0].mxu0
        %v8482 = vadd.f32 %v8341, %v8481
        %v8483 = vpop.f32.mrb[0].mxu0
        %v8484 = vand.u32 %v7416, 4294901760
        %8485 = vmatprep.mubr.f32.mxu0 %v8484
        %v8486 = vand.u32 %v7398, 4294901760
        %8487 = vmatmul.mubr.f32.gmra.mrb[0].mxu0 %v8486
        %v8488 = vpop.f32.mrb[0].mxu0
        %v8489 = vadd.f32 %v8348, %v8488
        %v8490 = vpop.f32.mrb[0].mxu0
        %v8491 = vand.u32 %v7419, 4294901760
        %8492 = vmatprep.mubr.f32.mxu0 %v8491
        %v8493 = vand.u32 %v7400, 4294901760
        %8494 = vmatmul.mubr.f32.gmra.mrb[0].mxu0 %v8493
        %v8495 = vpop.f32.mrb[0].mxu0
        %v8496 = vadd.f32 %v8355, %v8495
        %v8497 = vpop.f32.mrb[0].mxu0
        %v8498 = vand.u32 %v7422, 4294901760
        %8499 = vmatprep.mubr.f32.mxu0 %v8498
        %v8500 = vand.u32 %v7402, 4294901760
        %8501 = vmatmul.mubr.f32.gmra.mrb[0].mxu0 %v8500
        %v8502 = vpop.f32.mrb[0].mxu0
        %v8503 = vadd.f32 %v8362, %v8502
        %v8504 = vpop.f32.mrb[0].mxu0
        %v8505 = vand.u32 %v7425, 4294901760
        %8506 = vmatprep.mubr.f32.mxu0 %v8505
        %v8507 = vand.u32 %v7404, 4294901760
        %8508 = vmatmul.mubr.f32.gmra.mrb[0].mxu0 %v8507
        %v8509 = vpop.f32.mrb[0].mxu0
        %v8510 = vadd.f32 %v8369, %v8509
        %v8511 = vpop.f32.mrb[0].mxu0
        %v8512 = vand.u32 %v7428, 4294901760
        %8513 = vmatprep.mubr.f32.mxu0 %v8512
        %v8514 = vand.u32 %v7406, 4294901760
        %8515 = vmatmul.mubr.f32.gmra.mrb[0].mxu0 %v8514
        %v8516 = vpop.f32.mrb[0].mxu0
        %v8517 = vadd.f32 %v8376, %v8516
        %v8518 = vpop.f32.mrb[0].mxu0
        %v8519 = vand.u32 %v7431, 4294901760
        %8520 = vmatprep.mubr.f32.mxu0 %v8519
        %v8521 = vand.u32 %v7408, 4294901760
        %8522 = vmatmul.mubr.f32.gmra.mrb[0].mxu0 %v8521
        %v8523 = vpop.f32.mrb[0].mxu0
        %v8524 = vadd.f32 %v8383, %v8523
        %v8525 = vpop.f32.mrb[0].mxu0
        %v8526 = vand.u32 %v7434, 4294901760
        %8527 = vmatprep.mubr.f32.mxu0 %v8526
        %v8528 = vand.u32 %v7410, 4294901760
        %8529 = vmatmul.mubr.f32.gmra.mrb[0].mxu0 %v8528
        %v8530 = vpop.f32.mrb[0].mxu0
        %v8531 = vadd.f32 %v8390, %v8530
        %v8532 = vpop.f32.mrb[0].mxu0
        %8533 = vdwg.mxu0
        %v8535 = vcombine.high %v7395, %v7395
        %v8537 = vunpack.c.l.s4 1966171168
        %v8538 = vunpack.c.0.s8 %v8537
        %v8539 = vlaneseq
        %v8540 = vshrl.u32 %v8539, 7
        %v8541 = vsub.s32 %v8538, %v8540
        %v8542 = vrot.slane %v7395, %v8541
        %v8544 = vunpack.c.l.s4 1966171168
        %v8545 = vunpack.c.0.s8 %v8544
        %v8546 = vlaneseq
        %v8547 = vshrl.u32 %v8546, 7
        %v8548 = vsub.s32 %v8545, %v8547
        %v8549 = vrot.slane %v8535, %v8548
        %v8550 = vcombine.high %v8542, %v8542
        %v8551 = vcombine.high %v8549, %v8549
        %v8553 = vunpack.c.l.s4 1966171168
        %v8554 = vunpack.c.0.s8 %v8553
        %v8555 = vlaneseq
        %v8556 = vshrl.u32 %v8555, 7
        %v8557 = vsub.s32 %v8554, %v8556
        %v8558 = vrot.slane %v8542, %v8557
        %v8560 = vunpack.c.l.s4 1966171168
        %v8561 = vunpack.c.0.s8 %v8560
        %v8562 = vlaneseq
        %v8563 = vshrl.u32 %v8562, 7
        %v8564 = vsub.s32 %v8561, %v8563
        %v8565 = vrot.slane %v8549, %v8564
        %v8567 = vunpack.c.l.s4 1966171168
        %v8568 = vunpack.c.0.s8 %v8567
        %v8569 = vlaneseq
        %v8570 = vshrl.u32 %v8569, 7
        %v8571 = vsub.s32 %v8568, %v8570
        %v8572 = vrot.slane %v8550, %v8571
        %v8574 = vunpack.c.l.s4 1966171168
        %v8575 = vunpack.c.0.s8 %v8574
        %v8576 = vlaneseq
        %v8577 = vshrl.u32 %v8576, 7
        %v8578 = vsub.s32 %v8575, %v8577
        %v8579 = vrot.slane %v8551, %v8578
        %v8580 = vcombine.high %v8558, %v8558
        %v8581 = vcombine.high %v8565, %v8565
        %v8582 = vcombine.high %v8572, %v8572
        %v8583 = vcombine.high %v8579, %v8579
        %v8584 = vlaneseq
        %v8585 = vshrl.u32 %v8584, 7
        %v8586 = vsub.s32 0, %v8585
        %v8587 = vrot.slane %v8558, %v8586
        %v8588 = vlaneseq
        %v8589 = vshrl.u32 %v8588, 7
        %v8590 = vsub.s32 0, %v8589
        %v8591 = vrot.slane %v8572, %v8590
        %v8592 = vlaneseq
        %v8593 = vshrl.u32 %v8592, 7
        %v8594 = vsub.s32 0, %v8593
        %v8595 = vrot.slane %v8580, %v8594
        %v8596 = vlaneseq
        %v8597 = vshrl.u32 %v8596, 7
        %v8598 = vsub.s32 0, %v8597
        %v8599 = vrot.slane %v8582, %v8598
        %v8600 = vlaneseq
        %v8601 = vshrl.u32 %v8600, 7
        %v8602 = vsub.s32 0, %v8601
        %v8603 = vrot.slane %v8565, %v8602
        %v8604 = vlaneseq
        %v8605 = vshrl.u32 %v8604, 7
        %v8606 = vsub.s32 0, %v8605
        %v8607 = vrot.slane %v8579, %v8606
        %v8608 = vlaneseq
        %v8609 = vshrl.u32 %v8608, 7
        %v8610 = vsub.s32 0, %v8609
        %v8611 = vrot.slane %v8581, %v8610
        %v8612 = vlaneseq
        %v8613 = vshrl.u32 %v8612, 7
        %v8614 = vsub.s32 0, %v8613
        %v8615 = vrot.slane %v8583, %v8614
        %v8624 = vmul.f32 %v8482, %v8587
        %v8625 = vmul.f32 %v8489, %v8591
        %v8626 = vmul.f32 %v8496, %v8595
        %v8627 = vmul.f32 %v8503, %v8599
        %v8628 = vmul.f32 %v8510, %v8603
        %v8629 = vmul.f32 %v8517, %v8607
        %v8630 = vmul.f32 %v8524, %v8611
        %v8631 = vmul.f32 %v8531, %v8615
        %v8632 = vadd.f32 %v5530, %v8624
        %v8633 = vadd.f32 %v5531, %v8625
        %v8634 = vadd.f32 %v5532, %v8626
        %v8635 = vadd.f32 %v5533, %v8627
        %v8636 = vadd.f32 %v5534, %v8628
        %v8637 = vadd.f32 %v5535, %v8629
        %v8638 = vadd.f32 %v5536, %v8630
        %v8639 = vadd.f32 %v5537, %v8631
        %v8640 = vsel %vm2428, %v8632, -inf
        %8641 = vmax.xlane.f32.xlu0 %v8640
        %v8642 = vpop.xlane.xlu0 %8641
        %v8643 = vsel %vm2428, %v8633, -inf
        %8644 = vmax.xlane.f32.xlu0 %v8643
        %v8645 = vpop.xlane.xlu0 %8644
        %v8646 = vsel %vm2428, %v8634, -inf
        %8647 = vmax.xlane.f32.xlu0 %v8646
        %v8648 = vpop.xlane.xlu0 %8647
        %v8649 = vsel %vm2428, %v8635, -inf
        %8650 = vmax.xlane.f32.xlu0 %v8649
        %v8651 = vpop.xlane.xlu0 %8650
        %v8652 = vsel %vm2428, %v8636, -inf
        %8653 = vmax.xlane.f32.xlu0 %v8652
        %v8654 = vpop.xlane.xlu0 %8653
        %v8655 = vsel %vm2428, %v8637, -inf
        %8656 = vmax.xlane.f32.xlu0 %v8655
        %v8657 = vpop.xlane.xlu0 %8656
        %v8658 = vsel %vm2428, %v8638, -inf
        %8659 = vmax.xlane.f32.xlu0 %v8658
        %v8660 = vpop.xlane.xlu0 %8659
        %v8661 = vsel %vm2428, %v8639, -inf
        %8662 = vmax.xlane.f32.xlu0 %v8661
        %v8663 = vpop.xlane.xlu0 %8662
        %v8664 = vsub.f32 %v8632, %v8642
        %v8665 = vsub.f32 %v8633, %v8645
        %v8666 = vsub.f32 %v8634, %v8648
        %v8667 = vsub.f32 %v8635, %v8651
        %v8668 = vsub.f32 %v8636, %v8654
        %v8669 = vsub.f32 %v8637, %v8657
        %v8670 = vsub.f32 %v8638, %v8660
        %v8671 = vsub.f32 %v8639, %v8663
        %v8672 = vmul.f32 %v8664, 1.442695
        %v8673 = vpow.pop %v8672
        %v8674 = vmul.f32 %v8665, 1.442695
        %v8675 = vpow.pop %v8674
        %v8676 = vmul.f32 %v8666, 1.442695
        %v8677 = vpow.pop %v8676
        %v8678 = vmul.f32 %v8667, 1.442695
        %v8679 = vpow.pop %v8678
        %v8680 = vmul.f32 %v8668, 1.442695
        %v8681 = vpow.pop %v8680
        %v8682 = vmul.f32 %v8669, 1.442695
        %v8683 = vpow.pop %v8682
        %v8684 = vmul.f32 %v8670, 1.442695
        %v8685 = vpow.pop %v8684
        %v8686 = vmul.f32 %v8671, 1.442695
        %v8687 = vpow.pop %v8686
        %v8688 = vsel %vm2428, %v8673, 0.0
        %8689 = vadd.xlane.f32.xlu0 %v8688
        %v8690 = vpop.xlane.xlu0 %8689
        %v8691 = vsel %vm2428, %v8675, 0.0
        %8692 = vadd.xlane.f32.xlu0 %v8691
        %v8693 = vpop.xlane.xlu0 %8692
        %v8694 = vsel %vm2428, %v8677, 0.0
        %8695 = vadd.xlane.f32.xlu0 %v8694
        %v8696 = vpop.xlane.xlu0 %8695
        %v8697 = vsel %vm2428, %v8679, 0.0
        %8698 = vadd.xlane.f32.xlu0 %v8697
        %v8699 = vpop.xlane.xlu0 %8698
        %v8700 = vsel %vm2428, %v8681, 0.0
        %8701 = vadd.xlane.f32.xlu0 %v8700
        %v8702 = vpop.xlane.xlu0 %8701
        %v8703 = vsel %vm2428, %v8683, 0.0
        %8704 = vadd.xlane.f32.xlu0 %v8703
        %v8705 = vpop.xlane.xlu0 %8704
        %v8706 = vsel %vm2428, %v8685, 0.0
        %8707 = vadd.xlane.f32.xlu0 %v8706
        %v8708 = vpop.xlane.xlu0 %8707
        %v8709 = vsel %vm2428, %v8687, 0.0
        %8710 = vadd.xlane.f32.xlu0 %v8709
        %v8711 = vpop.xlane.xlu0 %8710
        %v8712 = vrcp.pop %v8690
        %v8713 = vrcp.pop %v8693
        %v8714 = vrcp.pop %v8696
        %v8715 = vrcp.pop %v8699
        %v8716 = vrcp.pop %v8702
        %v8717 = vrcp.pop %v8705
        %v8718 = vrcp.pop %v8708
        %v8719 = vrcp.pop %v8711
        %v8720 = vmul.f32 %v8690, %v8712
        %v8721 = vmul.f32 %v8693, %v8713
        %v8722 = vmul.f32 %v8696, %v8714
        %v8723 = vmul.f32 %v8699, %v8715
        %v8724 = vmul.f32 %v8702, %v8716
        %v8725 = vmul.f32 %v8705, %v8717
        %v8726 = vmul.f32 %v8708, %v8718
        %v8727 = vmul.f32 %v8711, %v8719
        %v8728 = vsub.f32 2.0, %v8720
        %v8729 = vsub.f32 2.0, %v8721
        %v8730 = vsub.f32 2.0, %v8722
        %v8731 = vsub.f32 2.0, %v8723
        %v8732 = vsub.f32 2.0, %v8724
        %v8733 = vsub.f32 2.0, %v8725
        %v8734 = vsub.f32 2.0, %v8726
        %v8735 = vsub.f32 2.0, %v8727
        %v8736 = vmul.f32 %v8712, %v8728
        %v8737 = vmul.f32 %v8713, %v8729
        %v8738 = vmul.f32 %v8714, %v8730
        %v8739 = vmul.f32 %v8715, %v8731
        %v8740 = vmul.f32 %v8716, %v8732
        %v8741 = vmul.f32 %v8717, %v8733
        %v8742 = vmul.f32 %v8718, %v8734
        %v8743 = vmul.f32 %v8719, %v8735
        %v8744 = vmul.f32 %v8673, %v8736
        %v8745 = vmul.f32 %v8675, %v8737
        %v8746 = vmul.f32 %v8677, %v8738
        %v8747 = vmul.f32 %v8679, %v8739
        %v8748 = vmul.f32 %v8681, %v8740
        %v8749 = vmul.f32 %v8683, %v8741
        %v8750 = vmul.f32 %v8685, %v8742
        %v8751 = vmul.f32 %v8687, %v8743
        %v8753 = vsel %vm2428, %v8744, 0
        %v8756 = vsel %vm2428, %v8745, 0
        %v8759 = vsel %vm2428, %v8746, 0
        %v8762 = vsel %vm2428, %v8747, 0
        %v8765 = vsel %vm2428, %v8748, 0
        %v8768 = vsel %vm2428, %v8749, 0
        %v8771 = vsel %vm2428, %v8750, 0
        %v8774 = vsel %vm2428, %v8751, 0
        %v8776 = vand.u32 %v262, 4294901760
        %8777 = vmatprep.subr.mxu0 %v8776
        %v8778 = vand.u32 %v261, 4294901760
        %8779 = vmatpush1.msra.mxu0 %v8778
        %v8780 = vand.u32 %v2570, 4294901760
        %8781 = vmatprep.subr.mxu0 %v8780
        %v8782 = vand.u32 %v2567, 4294901760
        %8783 = vmatpush1.msra.mxu0 %v8782
        %8784 = vmatprep.subr.mxu0 0.0
        %8785 = vmatpush1.msra.mxu0 0.0
        %8786 = vmatprep.subr.mxu0 0.0
        %8787 = vmatpush1.msra.mxu0 0.0
        %8788 = vmatprep.subr.mxu0 0.0
        %8789 = vmatpush1.msra.mxu0 0.0
        %8790 = vmatprep.subr.mxu0 0.0
        %8791 = vmatpush1.msra.mxu0 0.0
        %8792 = vmatprep.subr.mxu0 0.0
        %8793 = vmatpush1.msra.mxu0 0.0
        %8794 = vmatprep.subr.mxu0 0.0
        %8795 = vmatpush1.msra.mxu0 0.0
        %8796 = vmatprep.subr.mxu0 0.0
        %8797 = vmatpush1.msra.mxu0 0.0
        %8798 = vmatprep.subr.mxu0 0.0
        %8799 = vmatpush1.msra.mxu0 0.0
        %8800 = vmatprep.subr.mxu0 0.0
        %8801 = vmatpush1.msra.mxu0 0.0
        %8802 = vmatprep.subr.mxu0 0.0
        %8803 = vmatpush1.msra.mxu0 0.0
        %8804 = vmatprep.subr.mxu0 0.0
        %8805 = vmatpush1.msra.mxu0 0.0
        %8806 = vmatprep.subr.mxu0 0.0
        %8807 = vmatpush1.msra.mxu0 0.0
        %8808 = vmatprep.subr.mxu0 0.0
        %8809 = vmatpush1.msra.mxu0 0.0
        %8810 = vmatprep.subr.mxu0 0.0
        %8811 = vmatpush1.msra.mxu0 0.0
        %8812 = vmatprep.subr.mxu0 0.0
        %8813 = vmatpush1.msra.mxu0 0.0
        %8814 = vmatprep.subr.mxu0 0.0
        %8815 = vmatpush1.msra.mxu0 0.0
        %8816 = vmatprep.subr.mxu0 0.0
        %8817 = vmatpush1.msra.mxu0 0.0
        %8818 = vmatprep.subr.mxu0 0.0
        %8819 = vmatpush1.msra.mxu0 0.0
        %8820 = vmatprep.subr.mxu0 0.0
        %8821 = vmatpush1.msra.mxu0 0.0
        %8822 = vmatprep.subr.mxu0 0.0
        %8823 = vmatpush1.msra.mxu0 0.0
        %8824 = vmatprep.subr.mxu0 0.0
        %8825 = vmatpush1.msra.mxu0 0.0
        %8826 = vmatprep.subr.mxu0 0.0
        %8827 = vmatpush1.msra.mxu0 0.0
        %8828 = vmatprep.subr.mxu0 0.0
        %8829 = vmatpush1.msra.mxu0 0.0
        %8830 = vmatprep.subr.mxu0 0.0
        %8831 = vmatpush1.msra.mxu0 0.0
        %8832 = vmatprep.subr.mxu0 0.0
        %8833 = vmatpush1.msra.mxu0 0.0
        %8834 = vmatprep.subr.mxu0 0.0
        %8835 = vmatpush1.msra.mxu0 0.0
        %8836 = vmatprep.subr.mxu0 0.0
        %8837 = vmatpush1.msra.mxu0 0.0
        %8838 = vmatprep.subr.mxu0 0.0
        %8839 = vmatpush1.msra.mxu0 0.0
        %8840 = vmatprep.subr.mxu0 0.0
        %8841 = vmatpush1.msra.mxu0 0.0
        %8842 = vmatprep.subr.mxu0 0.0
        %8843 = vmatpush1.msra.mxu0 0.0
        %8844 = vmatprep.mubr.f32.mxu0 0.0
        %v8845 = vand.u32 %v8753, 4294901760
        %v8846 = vsub.f32 %v8753, %v8845
        %v8847 = vand.u32 %v8846, 4294901760
        %v8848 = vsub.f32 %v8846, %v8847
        %v8849 = vand.u32 %v8848, 4294901760
        %8850 = vmatmul.mubr.f32.gmra.mrb[0].mxu0 %v8849
        %v8851 = vpop.f32.mrb[0].mxu0
        %v8852 = vadd.f32 0.0, %v8851
        %v8853 = vpop.f32.mrb[0].mxu0
        %v8854 = vadd.f32 0.0, %v8853
        %8855 = vmatprep.mubr.f32.mxu0 0.0
        %v8856 = vand.u32 %v8756, 4294901760
        %v8857 = vsub.f32 %v8756, %v8856
        %v8858 = vand.u32 %v8857, 4294901760
        %v8859 = vsub.f32 %v8857, %v8858
        %v8860 = vand.u32 %v8859, 4294901760
        %8861 = vmatmul.mubr.f32.gmra.mrb[0].mxu0 %v8860
        %v8862 = vpop.f32.mrb[0].mxu0
        %v8863 = vadd.f32 0.0, %v8862
        %v8864 = vpop.f32.mrb[0].mxu0
        %v8865 = vadd.f32 0.0, %v8864
        %8866 = vmatprep.mubr.f32.mxu0 0.0
        %v8867 = vand.u32 %v8759, 4294901760
        %v8868 = vsub.f32 %v8759, %v8867
        %v8869 = vand.u32 %v8868, 4294901760
        %v8870 = vsub.f32 %v8868, %v8869
        %v8871 = vand.u32 %v8870, 4294901760
        %8872 = vmatmul.mubr.f32.gmra.mrb[0].mxu0 %v8871
        %v8873 = vpop.f32.mrb[0].mxu0
        %v8874 = vadd.f32 0.0, %v8873
        %v8875 = vpop.f32.mrb[0].mxu0
        %v8876 = vadd.f32 0.0, %v8875
        %8877 = vmatprep.mubr.f32.mxu0 0.0
        %v8878 = vand.u32 %v8762, 4294901760
        %v8879 = vsub.f32 %v8762, %v8878
        %v8880 = vand.u32 %v8879, 4294901760
        %v8881 = vsub.f32 %v8879, %v8880
        %v8882 = vand.u32 %v8881, 4294901760
        %8883 = vmatmul.mubr.f32.gmra.mrb[0].mxu0 %v8882
        %v8884 = vpop.f32.mrb[0].mxu0
        %v8885 = vadd.f32 0.0, %v8884
        %v8886 = vpop.f32.mrb[0].mxu0
        %v8887 = vadd.f32 0.0, %v8886
        %8888 = vmatprep.mubr.f32.mxu0 0.0
        %v8889 = vand.u32 %v8765, 4294901760
        %v8890 = vsub.f32 %v8765, %v8889
        %v8891 = vand.u32 %v8890, 4294901760
        %v8892 = vsub.f32 %v8890, %v8891
        %v8893 = vand.u32 %v8892, 4294901760
        %8894 = vmatmul.mubr.f32.gmra.mrb[0].mxu0 %v8893
        %v8895 = vpop.f32.mrb[0].mxu0
        %v8896 = vadd.f32 0.0, %v8895
        %v8897 = vpop.f32.mrb[0].mxu0
        %v8898 = vadd.f32 0.0, %v8897
        %8899 = vmatprep.mubr.f32.mxu0 0.0
        %v8900 = vand.u32 %v8768, 4294901760
        %v8901 = vsub.f32 %v8768, %v8900
        %v8902 = vand.u32 %v8901, 4294901760
        %v8903 = vsub.f32 %v8901, %v8902
        %v8904 = vand.u32 %v8903, 4294901760
        %8905 = vmatmul.mubr.f32.gmra.mrb[0].mxu0 %v8904
        %v8906 = vpop.f32.mrb[0].mxu0
        %v8907 = vadd.f32 0.0, %v8906
        %v8908 = vpop.f32.mrb[0].mxu0
        %v8909 = vadd.f32 0.0, %v8908
        %8910 = vmatprep.mubr.f32.mxu0 0.0
        %v8911 = vand.u32 %v8771, 4294901760
        %v8912 = vsub.f32 %v8771, %v8911
        %v8913 = vand.u32 %v8912, 4294901760
        %v8914 = vsub.f32 %v8912, %v8913
        %v8915 = vand.u32 %v8914, 4294901760
        %8916 = vmatmul.mubr.f32.gmra.mrb[0].mxu0 %v8915
        %v8917 = vpop.f32.mrb[0].mxu0
        %v8918 = vadd.f32 0.0, %v8917
        %v8919 = vpop.f32.mrb[0].mxu0
        %v8920 = vadd.f32 0.0, %v8919
        %8921 = vmatprep.mubr.f32.mxu0 0.0
        %v8922 = vand.u32 %v8774, 4294901760
        %v8923 = vsub.f32 %v8774, %v8922
        %v8924 = vand.u32 %v8923, 4294901760
        %v8925 = vsub.f32 %v8923, %v8924
        %v8926 = vand.u32 %v8925, 4294901760
        %8927 = vmatmul.mubr.f32.gmra.mrb[0].mxu0 %v8926
        %v8928 = vpop.f32.mrb[0].mxu0
        %v8929 = vadd.f32 0.0, %v8928
        %v8930 = vpop.f32.mrb[0].mxu0
        %v8931 = vadd.f32 0.0, %v8930
        %8932 = vdwg.mxu0
        %v8933 = vand.u32 %v262, 4294901760
        %v8934 = vsub.f32 %v262, %v8933
        %v8935 = vand.u32 %v8934, 4294901760
        %v8936 = vsub.f32 %v8934, %v8935
        %v8937 = vand.u32 %v8936, 4294901760
        %8938 = vmatprep.subr.mxu0 %v8937
        %v8939 = vand.u32 %v261, 4294901760
        %v8940 = vsub.f32 %v261, %v8939
        %v8941 = vand.u32 %v8940, 4294901760
        %v8942 = vsub.f32 %v8940, %v8941
        %v8943 = vand.u32 %v8942, 4294901760
        %8944 = vmatpush1.msra.mxu0 %v8943
        %v8945 = vand.u32 %v2570, 4294901760
        %v8946 = vsub.f32 %v2570, %v8945
        %v8947 = vand.u32 %v8946, 4294901760
        %v8948 = vsub.f32 %v8946, %v8947
        %v8949 = vand.u32 %v8948, 4294901760
        %8950 = vmatprep.subr.mxu0 %v8949
        %v8951 = vand.u32 %v2567, 4294901760
        %v8952 = vsub.f32 %v2567, %v8951
        %v8953 = vand.u32 %v8952, 4294901760
        %v8954 = vsub.f32 %v8952, %v8953
        %v8955 = vand.u32 %v8954, 4294901760
        %8956 = vmatpush1.msra.mxu0 %v8955
        %8957 = vmatprep.subr.mxu0 0.0
        %8958 = vmatpush1.msra.mxu0 0.0
        %8959 = vmatprep.subr.mxu0 0.0
        %8960 = vmatpush1.msra.mxu0 0.0
        %8961 = vmatprep.subr.mxu0 0.0
        %8962 = vmatpush1.msra.mxu0 0.0
        %8963 = vmatprep.subr.mxu0 0.0
        %8964 = vmatpush1.msra.mxu0 0.0
        %8965 = vmatprep.subr.mxu0 0.0
        %8966 = vmatpush1.msra.mxu0 0.0
        %8967 = vmatprep.subr.mxu0 0.0
        %8968 = vmatpush1.msra.mxu0 0.0
        %8969 = vmatprep.subr.mxu0 0.0
        %8970 = vmatpush1.msra.mxu0 0.0
        %8971 = vmatprep.subr.mxu0 0.0
        %8972 = vmatpush1.msra.mxu0 0.0
        %8973 = vmatprep.subr.mxu0 0.0
        %8974 = vmatpush1.msra.mxu0 0.0
        %8975 = vmatprep.subr.mxu0 0.0
        %8976 = vmatpush1.msra.mxu0 0.0
        %8977 = vmatprep.subr.mxu0 0.0
        %8978 = vmatpush1.msra.mxu0 0.0
        %8979 = vmatprep.subr.mxu0 0.0
        %8980 = vmatpush1.msra.mxu0 0.0
        %8981 = vmatprep.subr.mxu0 0.0
        %8982 = vmatpush1.msra.mxu0 0.0
        %8983 = vmatprep.subr.mxu0 0.0
        %8984 = vmatpush1.msra.mxu0 0.0
        %8985 = vmatprep.subr.mxu0 0.0
        %8986 = vmatpush1.msra.mxu0 0.0
        %8987 = vmatprep.subr.mxu0 0.0
        %8988 = vmatpush1.msra.mxu0 0.0
        %8989 = vmatprep.subr.mxu0 0.0
        %8990 = vmatpush1.msra.mxu0 0.0
        %8991 = vmatprep.subr.mxu0 0.0
        %8992 = vmatpush1.msra.mxu0 0.0
        %8993 = vmatprep.subr.mxu0 0.0
        %8994 = vmatpush1.msra.mxu0 0.0
        %8995 = vmatprep.subr.mxu0 0.0
        %8996 = vmatpush1.msra.mxu0 0.0
        %8997 = vmatprep.subr.mxu0 0.0
        %8998 = vmatpush1.msra.mxu0 0.0
        %8999 = vmatprep.subr.mxu0 0.0
        %9000 = vmatpush1.msra.mxu0 0.0
        %9001 = vmatprep.subr.mxu0 0.0
        %9002 = vmatpush1.msra.mxu0 0.0
        %9003 = vmatprep.subr.mxu0 0.0
        %9004 = vmatpush1.msra.mxu0 0.0
        %9005 = vmatprep.subr.mxu0 0.0
        %9006 = vmatpush1.msra.mxu0 0.0
        %9007 = vmatprep.subr.mxu0 0.0
        %9008 = vmatpush1.msra.mxu0 0.0
        %9009 = vmatprep.subr.mxu0 0.0
        %9010 = vmatpush1.msra.mxu0 0.0
        %9011 = vmatprep.subr.mxu0 0.0
        %9012 = vmatpush1.msra.mxu0 0.0
        %9013 = vmatprep.subr.mxu0 0.0
        %9014 = vmatpush1.msra.mxu0 0.0
        %9015 = vmatprep.subr.mxu0 0.0
        %9016 = vmatpush1.msra.mxu0 0.0
        %9017 = vmatprep.mubr.f32.mxu0 0.0
        %v9018 = vand.u32 %v8753, 4294901760
        %9019 = vmatmul.mubr.f32.gmra.mrb[0].mxu0 %v9018
        %v9020 = vpop.f32.mrb[0].mxu0
        %v9021 = vadd.f32 %v8852, %v9020
        %v9022 = vpop.f32.mrb[0].mxu0
        %v9023 = vadd.f32 %v8854, %v9022
        %9024 = vmatprep.mubr.f32.mxu0 0.0
        %v9025 = vand.u32 %v8756, 4294901760
        %9026 = vmatmul.mubr.f32.gmra.mrb[0].mxu0 %v9025
        %v9027 = vpop.f32.mrb[0].mxu0
        %v9028 = vadd.f32 %v8863, %v9027
        %v9029 = vpop.f32.mrb[0].mxu0
        %v9030 = vadd.f32 %v8865, %v9029
        %9031 = vmatprep.mubr.f32.mxu0 0.0
        %v9032 = vand.u32 %v8759, 4294901760
        %9033 = vmatmul.mubr.f32.gmra.mrb[0].mxu0 %v9032
        %v9034 = vpop.f32.mrb[0].mxu0
        %v9035 = vadd.f32 %v8874, %v9034
        %v9036 = vpop.f32.mrb[0].mxu0
        %v9037 = vadd.f32 %v8876, %v9036
        %9038 = vmatprep.mubr.f32.mxu0 0.0
        %v9039 = vand.u32 %v8762, 4294901760
        %9040 = vmatmul.mubr.f32.gmra.mrb[0].mxu0 %v9039
        %v9041 = vpop.f32.mrb[0].mxu0
        %v9042 = vadd.f32 %v8885, %v9041
        %v9043 = vpop.f32.mrb[0].mxu0
        %v9044 = vadd.f32 %v8887, %v9043
        %9045 = vmatprep.mubr.f32.mxu0 0.0
        %v9046 = vand.u32 %v8765, 4294901760
        %9047 = vmatmul.mubr.f32.gmra.mrb[0].mxu0 %v9046
        %v9048 = vpop.f32.mrb[0].mxu0
        %v9049 = vadd.f32 %v8896, %v9048
        %v9050 = vpop.f32.mrb[0].mxu0
        %v9051 = vadd.f32 %v8898, %v9050
        %9052 = vmatprep.mubr.f32.mxu0 0.0
        %v9053 = vand.u32 %v8768, 4294901760
        %9054 = vmatmul.mubr.f32.gmra.mrb[0].mxu0 %v9053
        %v9055 = vpop.f32.mrb[0].mxu0
        %v9056 = vadd.f32 %v8907, %v9055
        %v9057 = vpop.f32.mrb[0].mxu0
        %v9058 = vadd.f32 %v8909, %v9057
        %9059 = vmatprep.mubr.f32.mxu0 0.0
        %v9060 = vand.u32 %v8771, 4294901760
        %9061 = vmatmul.mubr.f32.gmra.mrb[0].mxu0 %v9060
        %v9062 = vpop.f32.mrb[0].mxu0
        %v9063 = vadd.f32 %v8918, %v9062
        %v9064 = vpop.f32.mrb[0].mxu0
        %v9065 = vadd.f32 %v8920, %v9064
        %9066 = vmatprep.mubr.f32.mxu0 0.0
        %v9067 = vand.u32 %v8774, 4294901760
        %9068 = vmatmul.mubr.f32.gmra.mrb[0].mxu0 %v9067
        %v9069 = vpop.f32.mrb[0].mxu0
        %v9070 = vadd.f32 %v8929, %v9069
        %v9071 = vpop.f32.mrb[0].mxu0
        %v9072 = vadd.f32 %v8931, %v9071
        %9073 = vdwg.mxu0
        %v9074 = vand.u32 %v262, 4294901760
        %v9075 = vsub.f32 %v262, %v9074
        %9076 = vmatprep.subr.mxu0 %v9075
        %v9077 = vand.u32 %v261, 4294901760
        %v9078 = vsub.f32 %v261, %v9077
        %9079 = vmatpush1.msra.mxu0 %v9078
        %v9080 = vand.u32 %v2570, 4294901760
        %v9081 = vsub.f32 %v2570, %v9080
        %9082 = vmatprep.subr.mxu0 %v9081
        %v9083 = vand.u32 %v2567, 4294901760
        %v9084 = vsub.f32 %v2567, %v9083
        %9085 = vmatpush1.msra.mxu0 %v9084
        %9086 = vmatprep.subr.mxu0 0.0
        %9087 = vmatpush1.msra.mxu0 0.0
        %9088 = vmatprep.subr.mxu0 0.0
        %9089 = vmatpush1.msra.mxu0 0.0
        %9090 = vmatprep.subr.mxu0 0.0
        %9091 = vmatpush1.msra.mxu0 0.0
        %9092 = vmatprep.subr.mxu0 0.0
        %9093 = vmatpush1.msra.mxu0 0.0
        %9094 = vmatprep.subr.mxu0 0.0
        %9095 = vmatpush1.msra.mxu0 0.0
        %9096 = vmatprep.subr.mxu0 0.0
        %9097 = vmatpush1.msra.mxu0 0.0
        %9098 = vmatprep.subr.mxu0 0.0
        %9099 = vmatpush1.msra.mxu0 0.0
        %9100 = vmatprep.subr.mxu0 0.0
        %9101 = vmatpush1.msra.mxu0 0.0
        %9102 = vmatprep.subr.mxu0 0.0
        %9103 = vmatpush1.msra.mxu0 0.0
        %9104 = vmatprep.subr.mxu0 0.0
        %9105 = vmatpush1.msra.mxu0 0.0
        %9106 = vmatprep.subr.mxu0 0.0
        %9107 = vmatpush1.msra.mxu0 0.0
        %9108 = vmatprep.subr.mxu0 0.0
        %9109 = vmatpush1.msra.mxu0 0.0
        %9110 = vmatprep.subr.mxu0 0.0
        %9111 = vmatpush1.msra.mxu0 0.0
        %9112 = vmatprep.subr.mxu0 0.0
        %9113 = vmatpush1.msra.mxu0 0.0
        %9114 = vmatprep.subr.mxu0 0.0
        %9115 = vmatpush1.msra.mxu0 0.0
        %9116 = vmatprep.subr.mxu0 0.0
        %9117 = vmatpush1.msra.mxu0 0.0
        %9118 = vmatprep.subr.mxu0 0.0
        %9119 = vmatpush1.msra.mxu0 0.0
        %9120 = vmatprep.subr.mxu0 0.0
        %9121 = vmatpush1.msra.mxu0 0.0
        %9122 = vmatprep.subr.mxu0 0.0
        %9123 = vmatpush1.msra.mxu0 0.0
        %9124 = vmatprep.subr.mxu0 0.0
        %9125 = vmatpush1.msra.mxu0 0.0
        %9126 = vmatprep.subr.mxu0 0.0
        %9127 = vmatpush1.msra.mxu0 0.0
        %9128 = vmatprep.subr.mxu0 0.0
        %9129 = vmatpush1.msra.mxu0 0.0
        %9130 = vmatprep.subr.mxu0 0.0
        %9131 = vmatpush1.msra.mxu0 0.0
        %9132 = vmatprep.subr.mxu0 0.0
        %9133 = vmatpush1.msra.mxu0 0.0
        %9134 = vmatprep.subr.mxu0 0.0
        %9135 = vmatpush1.msra.mxu0 0.0
        %9136 = vmatprep.subr.mxu0 0.0
        %9137 = vmatpush1.msra.mxu0 0.0
        %9138 = vmatprep.subr.mxu0 0.0
        %9139 = vmatpush1.msra.mxu0 0.0
        %9140 = vmatprep.subr.mxu0 0.0
        %9141 = vmatpush1.msra.mxu0 0.0
        %9142 = vmatprep.subr.mxu0 0.0
        %9143 = vmatpush1.msra.mxu0 0.0
        %9144 = vmatprep.subr.mxu0 0.0
        %9145 = vmatpush1.msra.mxu0 0.0
        %9146 = vmatprep.mubr.f32.mxu0 0.0
        %v9147 = vand.u32 %v8753, 4294901760
        %v9148 = vsub.f32 %v8753, %v9147
        %9149 = vmatmul.mubr.f32.gmra.mrb[0].mxu0 %v9148
        %v9150 = vpop.f32.mrb[0].mxu0
        %v9151 = vadd.f32 %v9021, %v9150
        %v9152 = vpop.f32.mrb[0].mxu0
        %v9153 = vadd.f32 %v9023, %v9152
        %9154 = vmatprep.mubr.f32.mxu0 0.0
        %v9155 = vand.u32 %v8756, 4294901760
        %v9156 = vsub.f32 %v8756, %v9155
        %9157 = vmatmul.mubr.f32.gmra.mrb[0].mxu0 %v9156
        %v9158 = vpop.f32.mrb[0].mxu0
        %v9159 = vadd.f32 %v9028, %v9158
        %v9160 = vpop.f32.mrb[0].mxu0
        %v9161 = vadd.f32 %v9030, %v9160
        %9162 = vmatprep.mubr.f32.mxu0 0.0
        %v9163 = vand.u32 %v8759, 4294901760
        %v9164 = vsub.f32 %v8759, %v9163
        %9165 = vmatmul.mubr.f32.gmra.mrb[0].mxu0 %v9164
        %v9166 = vpop.f32.mrb[0].mxu0
        %v9167 = vadd.f32 %v9035, %v9166
        %v9168 = vpop.f32.mrb[0].mxu0
        %v9169 = vadd.f32 %v9037, %v9168
        %9170 = vmatprep.mubr.f32.mxu0 0.0
        %v9171 = vand.u32 %v8762, 4294901760
        %v9172 = vsub.f32 %v8762, %v9171
        %9173 = vmatmul.mubr.f32.gmra.mrb[0].mxu0 %v9172
        %v9174 = vpop.f32.mrb[0].mxu0
        %v9175 = vadd.f32 %v9042, %v9174
        %v9176 = vpop.f32.mrb[0].mxu0
        %v9177 = vadd.f32 %v9044, %v9176
        %9178 = vmatprep.mubr.f32.mxu0 0.0
        %v9179 = vand.u32 %v8765, 4294901760
        %v9180 = vsub.f32 %v8765, %v9179
        %9181 = vmatmul.mubr.f32.gmra.mrb[0].mxu0 %v9180
        %v9182 = vpop.f32.mrb[0].mxu0
        %v9183 = vadd.f32 %v9049, %v9182
        %v9184 = vpop.f32.mrb[0].mxu0
        %v9185 = vadd.f32 %v9051, %v9184
        %9186 = vmatprep.mubr.f32.mxu0 0.0
        %v9187 = vand.u32 %v8768, 4294901760
        %v9188 = vsub.f32 %v8768, %v9187
        %9189 = vmatmul.mubr.f32.gmra.mrb[0].mxu0 %v9188
        %v9190 = vpop.f32.mrb[0].mxu0
        %v9191 = vadd.f32 %v9056, %v9190
        %v9192 = vpop.f32.mrb[0].mxu0
        %v9193 = vadd.f32 %v9058, %v9192
        %9194 = vmatprep.mubr.f32.mxu0 0.0
        %v9195 = vand.u32 %v8771, 4294901760
        %v9196 = vsub.f32 %v8771, %v9195
        %9197 = vmatmul.mubr.f32.gmra.mrb[0].mxu0 %v9196
        %v9198 = vpop.f32.mrb[0].mxu0
        %v9199 = vadd.f32 %v9063, %v9198
        %v9200 = vpop.f32.mrb[0].mxu0
        %v9201 = vadd.f32 %v9065, %v9200
        %9202 = vmatprep.mubr.f32.mxu0 0.0
        %v9203 = vand.u32 %v8774, 4294901760
        %v9204 = vsub.f32 %v8774, %v9203
        %9205 = vmatmul.mubr.f32.gmra.mrb[0].mxu0 %v9204
        %v9206 = vpop.f32.mrb[0].mxu0
        %v9207 = vadd.f32 %v9070, %v9206
        %v9208 = vpop.f32.mrb[0].mxu0
        %v9209 = vadd.f32 %v9072, %v9208
        %9210 = vdwg.mxu0
        %v9211 = vand.u32 %v262, 4294901760
        %9212 = vmatprep.subr.mxu0 %v9211
        %v9213 = vand.u32 %v261, 4294901760
        %9214 = vmatpush1.msra.mxu0 %v9213
        %v9215 = vand.u32 %v2570, 4294901760
        %9216 = vmatprep.subr.mxu0 %v9215
        %v9217 = vand.u32 %v2567, 4294901760
        %9218 = vmatpush1.msra.mxu0 %v9217
        %9219 = vmatprep.subr.mxu0 0.0
        %9220 = vmatpush1.msra.mxu0 0.0
        %9221 = vmatprep.subr.mxu0 0.0
        %9222 = vmatpush1.msra.mxu0 0.0
        %9223 = vmatprep.subr.mxu0 0.0
        %9224 = vmatpush1.msra.mxu0 0.0
        %9225 = vmatprep.subr.mxu0 0.0
        %9226 = vmatpush1.msra.mxu0 0.0
        %9227 = vmatprep.subr.mxu0 0.0
        %9228 = vmatpush1.msra.mxu0 0.0
        %9229 = vmatprep.subr.mxu0 0.0
        %9230 = vmatpush1.msra.mxu0 0.0
        %9231 = vmatprep.subr.mxu0 0.0
        %9232 = vmatpush1.msra.mxu0 0.0
        %9233 = vmatprep.subr.mxu0 0.0
        %9234 = vmatpush1.msra.mxu0 0.0
        %9235 = vmatprep.subr.mxu0 0.0
        %9236 = vmatpush1.msra.mxu0 0.0
        %9237 = vmatprep.subr.mxu0 0.0
        %9238 = vmatpush1.msra.mxu0 0.0
        %9239 = vmatprep.subr.mxu0 0.0
        %9240 = vmatpush1.msra.mxu0 0.0
        %9241 = vmatprep.subr.mxu0 0.0
        %9242 = vmatpush1.msra.mxu0 0.0
        %9243 = vmatprep.subr.mxu0 0.0
        %9244 = vmatpush1.msra.mxu0 0.0
        %9245 = vmatprep.subr.mxu0 0.0
        %9246 = vmatpush1.msra.mxu0 0.0
        %9247 = vmatprep.subr.mxu0 0.0
        %9248 = vmatpush1.msra.mxu0 0.0
        %9249 = vmatprep.subr.mxu0 0.0
        %9250 = vmatpush1.msra.mxu0 0.0
        %9251 = vmatprep.subr.mxu0 0.0
        %9252 = vmatpush1.msra.mxu0 0.0
        %9253 = vmatprep.subr.mxu0 0.0
        %9254 = vmatpush1.msra.mxu0 0.0
        %9255 = vmatprep.subr.mxu0 0.0
        %9256 = vmatpush1.msra.mxu0 0.0
        %9257 = vmatprep.subr.mxu0 0.0
        %9258 = vmatpush1.msra.mxu0 0.0
        %9259 = vmatprep.subr.mxu0 0.0
        %9260 = vmatpush1.msra.mxu0 0.0
        %9261 = vmatprep.subr.mxu0 0.0
        %9262 = vmatpush1.msra.mxu0 0.0
        %9263 = vmatprep.subr.mxu0 0.0
        %9264 = vmatpush1.msra.mxu0 0.0
        %9265 = vmatprep.subr.mxu0 0.0
        %9266 = vmatpush1.msra.mxu0 0.0
        %9267 = vmatprep.subr.mxu0 0.0
        %9268 = vmatpush1.msra.mxu0 0.0
        %9269 = vmatprep.subr.mxu0 0.0
        %9270 = vmatpush1.msra.mxu0 0.0
        %9271 = vmatprep.subr.mxu0 0.0
        %9272 = vmatpush1.msra.mxu0 0.0
        %9273 = vmatprep.subr.mxu0 0.0
        %9274 = vmatpush1.msra.mxu0 0.0
        %9275 = vmatprep.subr.mxu0 0.0
        %9276 = vmatpush1.msra.mxu0 0.0
        %9277 = vmatprep.subr.mxu0 0.0
        %9278 = vmatpush1.msra.mxu0 0.0
        %9279 = vmatprep.mubr.f32.mxu0 0.0
        %v9280 = vand.u32 %v8753, 4294901760
        %v9281 = vsub.f32 %v8753, %v9280
        %v9282 = vand.u32 %v9281, 4294901760
        %9283 = vmatmul.mubr.f32.gmra.mrb[0].mxu0 %v9282
        %v9284 = vpop.f32.mrb[0].mxu0
        %v9285 = vadd.f32 %v9151, %v9284
        %v9286 = vpop.f32.mrb[0].mxu0
        %v9287 = vadd.f32 %v9153, %v9286
        %9288 = vmatprep.mubr.f32.mxu0 0.0
        %v9289 = vand.u32 %v8756, 4294901760
        %v9290 = vsub.f32 %v8756, %v9289
        %v9291 = vand.u32 %v9290, 4294901760
        %9292 = vmatmul.mubr.f32.gmra.mrb[0].mxu0 %v9291
        %v9293 = vpop.f32.mrb[0].mxu0
        %v9294 = vadd.f32 %v9159, %v9293
        %v9295 = vpop.f32.mrb[0].mxu0
        %v9296 = vadd.f32 %v9161, %v9295
        %9297 = vmatprep.mubr.f32.mxu0 0.0
        %v9298 = vand.u32 %v8759, 4294901760
        %v9299 = vsub.f32 %v8759, %v9298
        %v9300 = vand.u32 %v9299, 4294901760
        %9301 = vmatmul.mubr.f32.gmra.mrb[0].mxu0 %v9300
        %v9302 = vpop.f32.mrb[0].mxu0
        %v9303 = vadd.f32 %v9167, %v9302
        %v9304 = vpop.f32.mrb[0].mxu0
        %v9305 = vadd.f32 %v9169, %v9304
        %9306 = vmatprep.mubr.f32.mxu0 0.0
        %v9307 = vand.u32 %v8762, 4294901760
        %v9308 = vsub.f32 %v8762, %v9307
        %v9309 = vand.u32 %v9308, 4294901760
        %9310 = vmatmul.mubr.f32.gmra.mrb[0].mxu0 %v9309
        %v9311 = vpop.f32.mrb[0].mxu0
        %v9312 = vadd.f32 %v9175, %v9311
        %v9313 = vpop.f32.mrb[0].mxu0
        %v9314 = vadd.f32 %v9177, %v9313
        %9315 = vmatprep.mubr.f32.mxu0 0.0
        %v9316 = vand.u32 %v8765, 4294901760
        %v9317 = vsub.f32 %v8765, %v9316
        %v9318 = vand.u32 %v9317, 4294901760
        %9319 = vmatmul.mubr.f32.gmra.mrb[0].mxu0 %v9318
        %v9320 = vpop.f32.mrb[0].mxu0
        %v9321 = vadd.f32 %v9183, %v9320
        %v9322 = vpop.f32.mrb[0].mxu0
        %v9323 = vadd.f32 %v9185, %v9322
        %9324 = vmatprep.mubr.f32.mxu0 0.0
        %v9325 = vand.u32 %v8768, 4294901760
        %v9326 = vsub.f32 %v8768, %v9325
        %v9327 = vand.u32 %v9326, 4294901760
        %9328 = vmatmul.mubr.f32.gmra.mrb[0].mxu0 %v9327
        %v9329 = vpop.f32.mrb[0].mxu0
        %v9330 = vadd.f32 %v9191, %v9329
        %v9331 = vpop.f32.mrb[0].mxu0
        %v9332 = vadd.f32 %v9193, %v9331
        %9333 = vmatprep.mubr.f32.mxu0 0.0
        %v9334 = vand.u32 %v8771, 4294901760
        %v9335 = vsub.f32 %v8771, %v9334
        %v9336 = vand.u32 %v9335, 4294901760
        %9337 = vmatmul.mubr.f32.gmra.mrb[0].mxu0 %v9336
        %v9338 = vpop.f32.mrb[0].mxu0
        %v9339 = vadd.f32 %v9199, %v9338
        %v9340 = vpop.f32.mrb[0].mxu0
        %v9341 = vadd.f32 %v9201, %v9340
        %9342 = vmatprep.mubr.f32.mxu0 0.0
        %v9343 = vand.u32 %v8774, 4294901760
        %v9344 = vsub.f32 %v8774, %v9343
        %v9345 = vand.u32 %v9344, 4294901760
        %9346 = vmatmul.mubr.f32.gmra.mrb[0].mxu0 %v9345
        %v9347 = vpop.f32.mrb[0].mxu0
        %v9348 = vadd.f32 %v9207, %v9347
        %v9349 = vpop.f32.mrb[0].mxu0
        %v9350 = vadd.f32 %v9209, %v9349
        %9351 = vdwg.mxu0
        %v9352 = vand.u32 %v262, 4294901760
        %v9353 = vsub.f32 %v262, %v9352
        %v9354 = vand.u32 %v9353, 4294901760
        %9355 = vmatprep.subr.mxu0 %v9354
        %v9356 = vand.u32 %v261, 4294901760
        %v9357 = vsub.f32 %v261, %v9356
        %v9358 = vand.u32 %v9357, 4294901760
        %9359 = vmatpush1.msra.mxu0 %v9358
        %v9360 = vand.u32 %v2570, 4294901760
        %v9361 = vsub.f32 %v2570, %v9360
        %v9362 = vand.u32 %v9361, 4294901760
        %9363 = vmatprep.subr.mxu0 %v9362
        %v9364 = vand.u32 %v2567, 4294901760
        %v9365 = vsub.f32 %v2567, %v9364
        %v9366 = vand.u32 %v9365, 4294901760
        %9367 = vmatpush1.msra.mxu0 %v9366
        %9368 = vmatprep.subr.mxu0 0.0
        %9369 = vmatpush1.msra.mxu0 0.0
        %9370 = vmatprep.subr.mxu0 0.0
        %9371 = vmatpush1.msra.mxu0 0.0
        %9372 = vmatprep.subr.mxu0 0.0
        %9373 = vmatpush1.msra.mxu0 0.0
        %9374 = vmatprep.subr.mxu0 0.0
        %9375 = vmatpush1.msra.mxu0 0.0
        %9376 = vmatprep.subr.mxu0 0.0
        %9377 = vmatpush1.msra.mxu0 0.0
        %9378 = vmatprep.subr.mxu0 0.0
        %9379 = vmatpush1.msra.mxu0 0.0
        %9380 = vmatprep.subr.mxu0 0.0
        %9381 = vmatpush1.msra.mxu0 0.0
        %9382 = vmatprep.subr.mxu0 0.0
        %9383 = vmatpush1.msra.mxu0 0.0
        %9384 = vmatprep.subr.mxu0 0.0
        %9385 = vmatpush1.msra.mxu0 0.0
        %9386 = vmatprep.subr.mxu0 0.0
        %9387 = vmatpush1.msra.mxu0 0.0
        %9388 = vmatprep.subr.mxu0 0.0
        %9389 = vmatpush1.msra.mxu0 0.0
        %9390 = vmatprep.subr.mxu0 0.0
        %9391 = vmatpush1.msra.mxu0 0.0
        %9392 = vmatprep.subr.mxu0 0.0
        %9393 = vmatpush1.msra.mxu0 0.0
        %9394 = vmatprep.subr.mxu0 0.0
        %9395 = vmatpush1.msra.mxu0 0.0
        %9396 = vmatprep.subr.mxu0 0.0
        %9397 = vmatpush1.msra.mxu0 0.0
        %9398 = vmatprep.subr.mxu0 0.0
        %9399 = vmatpush1.msra.mxu0 0.0
        %9400 = vmatprep.subr.mxu0 0.0
        %9401 = vmatpush1.msra.mxu0 0.0
        %9402 = vmatprep.subr.mxu0 0.0
        %9403 = vmatpush1.msra.mxu0 0.0
        %9404 = vmatprep.subr.mxu0 0.0
        %9405 = vmatpush1.msra.mxu0 0.0
        %9406 = vmatprep.subr.mxu0 0.0
        %9407 = vmatpush1.msra.mxu0 0.0
        %9408 = vmatprep.subr.mxu0 0.0
        %9409 = vmatpush1.msra.mxu0 0.0
        %9410 = vmatprep.subr.mxu0 0.0
        %9411 = vmatpush1.msra.mxu0 0.0
        %9412 = vmatprep.subr.mxu0 0.0
        %9413 = vmatpush1.msra.mxu0 0.0
        %9414 = vmatprep.subr.mxu0 0.0
        %9415 = vmatpush1.msra.mxu0 0.0
        %9416 = vmatprep.subr.mxu0 0.0
        %9417 = vmatpush1.msra.mxu0 0.0
        %9418 = vmatprep.subr.mxu0 0.0
        %9419 = vmatpush1.msra.mxu0 0.0
        %9420 = vmatprep.subr.mxu0 0.0
        %9421 = vmatpush1.msra.mxu0 0.0
        %9422 = vmatprep.subr.mxu0 0.0
        %9423 = vmatpush1.msra.mxu0 0.0
        %9424 = vmatprep.subr.mxu0 0.0
        %9425 = vmatpush1.msra.mxu0 0.0
        %9426 = vmatprep.subr.mxu0 0.0
        %9427 = vmatpush1.msra.mxu0 0.0
        %9428 = vmatprep.mubr.f32.mxu0 0.0
        %v9429 = vand.u32 %v8753, 4294901760
        %9430 = vmatmul.mubr.f32.gmra.mrb[0].mxu0 %v9429
        %v9431 = vpop.f32.mrb[0].mxu0
        %v9432 = vadd.f32 %v9285, %v9431
        %v9433 = vpop.f32.mrb[0].mxu0
        %v9434 = vadd.f32 %v9287, %v9433
        %9435 = vmatprep.mubr.f32.mxu0 0.0
        %v9436 = vand.u32 %v8756, 4294901760
        %9437 = vmatmul.mubr.f32.gmra.mrb[0].mxu0 %v9436
        %v9438 = vpop.f32.mrb[0].mxu0
        %v9439 = vadd.f32 %v9294, %v9438
        %v9440 = vpop.f32.mrb[0].mxu0
        %v9441 = vadd.f32 %v9296, %v9440
        %9442 = vmatprep.mubr.f32.mxu0 0.0
        %v9443 = vand.u32 %v8759, 4294901760
        %9444 = vmatmul.mubr.f32.gmra.mrb[0].mxu0 %v9443
        %v9445 = vpop.f32.mrb[0].mxu0
        %v9446 = vadd.f32 %v9303, %v9445
        %v9447 = vpop.f32.mrb[0].mxu0
        %v9448 = vadd.f32 %v9305, %v9447
        %9449 = vmatprep.mubr.f32.mxu0 0.0
        %v9450 = vand.u32 %v8762, 4294901760
        %9451 = vmatmul.mubr.f32.gmra.mrb[0].mxu0 %v9450
        %v9452 = vpop.f32.mrb[0].mxu0
        %v9453 = vadd.f32 %v9312, %v9452
        %v9454 = vpop.f32.mrb[0].mxu0
        %v9455 = vadd.f32 %v9314, %v9454
        %9456 = vmatprep.mubr.f32.mxu0 0.0
        %v9457 = vand.u32 %v8765, 4294901760
        %9458 = vmatmul.mubr.f32.gmra.mrb[0].mxu0 %v9457
        %v9459 = vpop.f32.mrb[0].mxu0
        %v9460 = vadd.f32 %v9321, %v9459
        %v9461 = vpop.f32.mrb[0].mxu0
        %v9462 = vadd.f32 %v9323, %v9461
        %9463 = vmatprep.mubr.f32.mxu0 0.0
        %v9464 = vand.u32 %v8768, 4294901760
        %9465 = vmatmul.mubr.f32.gmra.mrb[0].mxu0 %v9464
        %v9466 = vpop.f32.mrb[0].mxu0
        %v9467 = vadd.f32 %v9330, %v9466
        %v9468 = vpop.f32.mrb[0].mxu0
        %v9469 = vadd.f32 %v9332, %v9468
        %9470 = vmatprep.mubr.f32.mxu0 0.0
        %v9471 = vand.u32 %v8771, 4294901760
        %9472 = vmatmul.mubr.f32.gmra.mrb[0].mxu0 %v9471
        %v9473 = vpop.f32.mrb[0].mxu0
        %v9474 = vadd.f32 %v9339, %v9473
        %v9475 = vpop.f32.mrb[0].mxu0
        %v9476 = vadd.f32 %v9341, %v9475
        %9477 = vmatprep.mubr.f32.mxu0 0.0
        %v9478 = vand.u32 %v8774, 4294901760
        %9479 = vmatmul.mubr.f32.gmra.mrb[0].mxu0 %v9478
        %v9480 = vpop.f32.mrb[0].mxu0
        %v9481 = vadd.f32 %v9348, %v9480
        %v9482 = vpop.f32.mrb[0].mxu0
        %v9483 = vadd.f32 %v9350, %v9482
        %9484 = vdwg.mxu0
        %v9485 = vand.u32 %v262, 4294901760
        %9486 = vmatprep.subr.mxu0 %v9485
        %v9487 = vand.u32 %v261, 4294901760
        %9488 = vmatpush1.msra.mxu0 %v9487
        %v9489 = vand.u32 %v2570, 4294901760
        %9490 = vmatprep.subr.mxu0 %v9489
        %v9491 = vand.u32 %v2567, 4294901760
        %9492 = vmatpush1.msra.mxu0 %v9491
        %9493 = vmatprep.subr.mxu0 0.0
        %9494 = vmatpush1.msra.mxu0 0.0
        %9495 = vmatprep.subr.mxu0 0.0
        %9496 = vmatpush1.msra.mxu0 0.0
        %9497 = vmatprep.subr.mxu0 0.0
        %9498 = vmatpush1.msra.mxu0 0.0
        %9499 = vmatprep.subr.mxu0 0.0
        %9500 = vmatpush1.msra.mxu0 0.0
        %9501 = vmatprep.subr.mxu0 0.0
        %9502 = vmatpush1.msra.mxu0 0.0
        %9503 = vmatprep.subr.mxu0 0.0
        %9504 = vmatpush1.msra.mxu0 0.0
        %9505 = vmatprep.subr.mxu0 0.0
        %9506 = vmatpush1.msra.mxu0 0.0
        %9507 = vmatprep.subr.mxu0 0.0
        %9508 = vmatpush1.msra.mxu0 0.0
        %9509 = vmatprep.subr.mxu0 0.0
        %9510 = vmatpush1.msra.mxu0 0.0
        %9511 = vmatprep.subr.mxu0 0.0
        %9512 = vmatpush1.msra.mxu0 0.0
        %9513 = vmatprep.subr.mxu0 0.0
        %9514 = vmatpush1.msra.mxu0 0.0
        %9515 = vmatprep.subr.mxu0 0.0
        %9516 = vmatpush1.msra.mxu0 0.0
        %9517 = vmatprep.subr.mxu0 0.0
        %9518 = vmatpush1.msra.mxu0 0.0
        %9519 = vmatprep.subr.mxu0 0.0
        %9520 = vmatpush1.msra.mxu0 0.0
        %9521 = vmatprep.subr.mxu0 0.0
        %9522 = vmatpush1.msra.mxu0 0.0
        %9523 = vmatprep.subr.mxu0 0.0
        %9524 = vmatpush1.msra.mxu0 0.0
        %9525 = vmatprep.subr.mxu0 0.0
        %9526 = vmatpush1.msra.mxu0 0.0
        %9527 = vmatprep.subr.mxu0 0.0
        %9528 = vmatpush1.msra.mxu0 0.0
        %9529 = vmatprep.subr.mxu0 0.0
        %9530 = vmatpush1.msra.mxu0 0.0
        %9531 = vmatprep.subr.mxu0 0.0
        %9532 = vmatpush1.msra.mxu0 0.0
        %9533 = vmatprep.subr.mxu0 0.0
        %9534 = vmatpush1.msra.mxu0 0.0
        %9535 = vmatprep.subr.mxu0 0.0
        %9536 = vmatpush1.msra.mxu0 0.0
        %9537 = vmatprep.subr.mxu0 0.0
        %9538 = vmatpush1.msra.mxu0 0.0
        %9539 = vmatprep.subr.mxu0 0.0
        %9540 = vmatpush1.msra.mxu0 0.0
        %9541 = vmatprep.subr.mxu0 0.0
        %9542 = vmatpush1.msra.mxu0 0.0
        %9543 = vmatprep.subr.mxu0 0.0
        %9544 = vmatpush1.msra.mxu0 0.0
        %9545 = vmatprep.subr.mxu0 0.0
        %9546 = vmatpush1.msra.mxu0 0.0
        %9547 = vmatprep.subr.mxu0 0.0
        %9548 = vmatpush1.msra.mxu0 0.0
        %9549 = vmatprep.subr.mxu0 0.0
        %9550 = vmatpush1.msra.mxu0 0.0
        %9551 = vmatprep.subr.mxu0 0.0
        %9552 = vmatpush1.msra.mxu0 0.0
        %9553 = vmatprep.mubr.f32.mxu0 0.0
        %v9554 = vand.u32 %v8753, 4294901760
        %9555 = vmatmul.mubr.f32.gmra.mrb[0].mxu0 %v9554
        %v9556 = vpop.f32.mrb[0].mxu0
        %v9557 = vadd.f32 %v9432, %v9556
        %v9558 = vpop.f32.mrb[0].mxu0
        %v9559 = vadd.f32 %v9434, %v9558
        %9560 = vmatprep.mubr.f32.mxu0 0.0
        %v9561 = vand.u32 %v8756, 4294901760
        %9562 = vmatmul.mubr.f32.gmra.mrb[0].mxu0 %v9561
        %v9563 = vpop.f32.mrb[0].mxu0
        %v9564 = vadd.f32 %v9439, %v9563
        %v9565 = vpop.f32.mrb[0].mxu0
        %v9566 = vadd.f32 %v9441, %v9565
        %9567 = vmatprep.mubr.f32.mxu0 0.0
        %v9568 = vand.u32 %v8759, 4294901760
        %9569 = vmatmul.mubr.f32.gmra.mrb[0].mxu0 %v9568
        %v9570 = vpop.f32.mrb[0].mxu0
        %v9571 = vadd.f32 %v9446, %v9570
        %v9572 = vpop.f32.mrb[0].mxu0
        %v9573 = vadd.f32 %v9448, %v9572
        %9574 = vmatprep.mubr.f32.mxu0 0.0
        %v9575 = vand.u32 %v8762, 4294901760
        %9576 = vmatmul.mubr.f32.gmra.mrb[0].mxu0 %v9575
        %v9577 = vpop.f32.mrb[0].mxu0
        %v9578 = vadd.f32 %v9453, %v9577
        %v9579 = vpop.f32.mrb[0].mxu0
        %v9580 = vadd.f32 %v9455, %v9579
        %9581 = vmatprep.mubr.f32.mxu0 0.0
        %v9582 = vand.u32 %v8765, 4294901760
        %9583 = vmatmul.mubr.f32.gmra.mrb[0].mxu0 %v9582
        %v9584 = vpop.f32.mrb[0].mxu0
        %v9585 = vadd.f32 %v9460, %v9584
        %v9586 = vpop.f32.mrb[0].mxu0
        %v9587 = vadd.f32 %v9462, %v9586
        %9588 = vmatprep.mubr.f32.mxu0 0.0
        %v9589 = vand.u32 %v8768, 4294901760
        %9590 = vmatmul.mubr.f32.gmra.mrb[0].mxu0 %v9589
        %v9591 = vpop.f32.mrb[0].mxu0
        %v9592 = vadd.f32 %v9467, %v9591
        %v9593 = vpop.f32.mrb[0].mxu0
        %v9594 = vadd.f32 %v9469, %v9593
        %9595 = vmatprep.mubr.f32.mxu0 0.0
        %v9596 = vand.u32 %v8771, 4294901760
        %9597 = vmatmul.mubr.f32.gmra.mrb[0].mxu0 %v9596
        %v9598 = vpop.f32.mrb[0].mxu0
        %v9599 = vadd.f32 %v9474, %v9598
        %v9600 = vpop.f32.mrb[0].mxu0
        %v9601 = vadd.f32 %v9476, %v9600
        %9602 = vmatprep.mubr.f32.mxu0 0.0
        %v9603 = vand.u32 %v8774, 4294901760
        %9604 = vmatmul.mubr.f32.gmra.mrb[0].mxu0 %v9603
        %v9605 = vpop.f32.mrb[0].mxu0
        %v9606 = vadd.f32 %v9481, %v9605
        %v9607 = vpop.f32.mrb[0].mxu0
        %v9608 = vadd.f32 %v9483, %v9607
        %9609 = vdwg.mxu0
        %v9610 = vmul.f32 %v9557, %v245
        %v9611 = vmul.f32 %v9559, %v246
        %v9612 = vmul.f32 %v9564, %v247
        %v9613 = vmul.f32 %v9566, %v248
        %v9614 = vmul.f32 %v9571, %v249
        %v9615 = vmul.f32 %v9573, %v250
        %v9616 = vmul.f32 %v9578, %v251
        %v9617 = vmul.f32 %v9580, %v252
        %v9618 = vmul.f32 %v9585, %v253
        %v9619 = vmul.f32 %v9587, %v254
        %v9620 = vmul.f32 %v9592, %v255
        %v9621 = vmul.f32 %v9594, %v256
        %v9622 = vmul.f32 %v9599, %v257
        %v9623 = vmul.f32 %v9601, %v258
        %v9624 = vmul.f32 %v9606, %v259
        %v9625 = vmul.f32 %v9608, %v260
        %v9626 = vrot.slane %v9610, 4
        %v9627 = vadd.f32 %v9610, %v9626
        %v9628 = vrot.slane %v9627, 2
        %v9629 = vadd.f32 %v9627, %v9628
        %v9630 = vrot.slane %v9629, 1
        %v9631 = vadd.f32 %v9629, %v9630
        %v9632 = vsel %vm309, %v9611, 0.0
        %v9633 = vrot.slane %v9632, 4
        %v9634 = vadd.f32 %v9632, %v9633
        %v9635 = vrot.slane %v9634, 2
        %v9636 = vadd.f32 %v9634, %v9635
        %v9637 = vrot.slane %v9636, 1
        %v9638 = vadd.f32 %v9636, %v9637
        %v9639 = vrot.slane %v9612, 4
        %v9640 = vadd.f32 %v9612, %v9639
        %v9641 = vrot.slane %v9640, 2
        %v9642 = vadd.f32 %v9640, %v9641
        %v9643 = vrot.slane %v9642, 1
        %v9644 = vadd.f32 %v9642, %v9643
        %v9645 = vsel %vm309, %v9613, 0.0
        %v9646 = vrot.slane %v9645, 4
        %v9647 = vadd.f32 %v9645, %v9646
        %v9648 = vrot.slane %v9647, 2
        %v9649 = vadd.f32 %v9647, %v9648
        %v9650 = vrot.slane %v9649, 1
        %v9651 = vadd.f32 %v9649, %v9650
        %v9652 = vrot.slane %v9614, 4
        %v9653 = vadd.f32 %v9614, %v9652
        %v9654 = vrot.slane %v9653, 2
        %v9655 = vadd.f32 %v9653, %v9654
        %v9656 = vrot.slane %v9655, 1
        %v9657 = vadd.f32 %v9655, %v9656
        %v9658 = vsel %vm309, %v9615, 0.0
        %v9659 = vrot.slane %v9658, 4
        %v9660 = vadd.f32 %v9658, %v9659
        %v9661 = vrot.slane %v9660, 2
        %v9662 = vadd.f32 %v9660, %v9661
        %v9663 = vrot.slane %v9662, 1
        %v9664 = vadd.f32 %v9662, %v9663
        %v9665 = vrot.slane %v9616, 4
        %v9666 = vadd.f32 %v9616, %v9665
        %v9667 = vrot.slane %v9666, 2
        %v9668 = vadd.f32 %v9666, %v9667
        %v9669 = vrot.slane %v9668, 1
        %v9670 = vadd.f32 %v9668, %v9669
        %v9671 = vsel %vm309, %v9617, 0.0
        %v9672 = vrot.slane %v9671, 4
        %v9673 = vadd.f32 %v9671, %v9672
        %v9674 = vrot.slane %v9673, 2
        %v9675 = vadd.f32 %v9673, %v9674
        %v9676 = vrot.slane %v9675, 1
        %v9677 = vadd.f32 %v9675, %v9676
        %v9678 = vrot.slane %v9618, 4
        %v9679 = vadd.f32 %v9618, %v9678
        %v9680 = vrot.slane %v9679, 2
        %v9681 = vadd.f32 %v9679, %v9680
        %v9682 = vrot.slane %v9681, 1
        %v9683 = vadd.f32 %v9681, %v9682
        %v9684 = vsel %vm309, %v9619, 0.0
        %v9685 = vrot.slane %v9684, 4
        %v9686 = vadd.f32 %v9684, %v9685
        %v9687 = vrot.slane %v9686, 2
        %v9688 = vadd.f32 %v9686, %v9687
        %v9689 = vrot.slane %v9688, 1
        %v9690 = vadd.f32 %v9688, %v9689
        %v9691 = vrot.slane %v9620, 4
        %v9692 = vadd.f32 %v9620, %v9691
        %v9693 = vrot.slane %v9692, 2
        %v9694 = vadd.f32 %v9692, %v9693
        %v9695 = vrot.slane %v9694, 1
        %v9696 = vadd.f32 %v9694, %v9695
        %v9697 = vsel %vm309, %v9621, 0.0
        %v9698 = vrot.slane %v9697, 4
        %v9699 = vadd.f32 %v9697, %v9698
        %v9700 = vrot.slane %v9699, 2
        %v9701 = vadd.f32 %v9699, %v9700
        %v9702 = vrot.slane %v9701, 1
        %v9703 = vadd.f32 %v9701, %v9702
        %v9704 = vrot.slane %v9622, 4
        %v9705 = vadd.f32 %v9622, %v9704
        %v9706 = vrot.slane %v9705, 2
        %v9707 = vadd.f32 %v9705, %v9706
        %v9708 = vrot.slane %v9707, 1
        %v9709 = vadd.f32 %v9707, %v9708
        %v9710 = vsel %vm309, %v9623, 0.0
        %v9711 = vrot.slane %v9710, 4
        %v9712 = vadd.f32 %v9710, %v9711
        %v9713 = vrot.slane %v9712, 2
        %v9714 = vadd.f32 %v9712, %v9713
        %v9715 = vrot.slane %v9714, 1
        %v9716 = vadd.f32 %v9714, %v9715
        %v9717 = vrot.slane %v9624, 4
        %v9718 = vadd.f32 %v9624, %v9717
        %v9719 = vrot.slane %v9718, 2
        %v9720 = vadd.f32 %v9718, %v9719
        %v9721 = vrot.slane %v9720, 1
        %v9722 = vadd.f32 %v9720, %v9721
        %v9723 = vsel %vm309, %v9625, 0.0
        %v9724 = vrot.slane %v9723, 4
        %v9725 = vadd.f32 %v9723, %v9724
        %v9726 = vrot.slane %v9725, 2
        %v9727 = vadd.f32 %v9725, %v9726
        %v9728 = vrot.slane %v9727, 1
        %v9729 = vadd.f32 %v9727, %v9728
        %v9730 = vmul.f32 %v9631, %v9631
        %v9731 = vmul.f32 %v9638, %v9638
        %v9732 = vmul.f32 %v9644, %v9644
        %v9733 = vmul.f32 %v9651, %v9651
        %v9734 = vmul.f32 %v9657, %v9657
        %v9735 = vmul.f32 %v9664, %v9664
        %v9736 = vmul.f32 %v9670, %v9670
        %v9737 = vmul.f32 %v9677, %v9677
        %v9738 = vmul.f32 %v9683, %v9683
        %v9739 = vmul.f32 %v9690, %v9690
        %v9740 = vmul.f32 %v9696, %v9696
        %v9741 = vmul.f32 %v9703, %v9703
        %v9742 = vmul.f32 %v9709, %v9709
        %v9743 = vmul.f32 %v9716, %v9716
        %v9744 = vmul.f32 %v9722, %v9722
        %v9745 = vmul.f32 %v9729, %v9729
        %v9762 = vsel %vm440, %v9732, %v9730
        %v9763 = vsel %vm442, %v9734, %v9762
        %v9764 = vsel %vm444, %v9736, %v9763
        %v9765 = vsel %vm446, %v9738, %v9764
        %v9766 = vsel %vm448, %v9740, %v9765
        %v9767 = vsel %vm450, %v9742, %v9766
        %v9768 = vsel %vm452, %v9744, %v9767
        %v9769 = vsel %vm440, %v9733, %v9731
        %v9770 = vsel %vm442, %v9735, %v9769
        %v9771 = vsel %vm444, %v9737, %v9770
        %v9772 = vsel %vm446, %v9739, %v9771
        %v9773 = vsel %vm448, %v9741, %v9772
        %v9774 = vsel %vm450, %v9743, %v9773
        %v9775 = vsel %vm452, %v9745, %v9774
        %v9777 = vsel %vm309, %v9775, 0
        %9779 = vmatprep.subr.mxu0 0.0
        %v9780 = vand.u32 %v265, 4294901760
        %9781 = vmatpush1.msra.mxu0 %v9780
        %9782 = vmatprep.subr.mxu0 0.0
        %v9783 = vand.u32 %v266, 4294901760
        %9784 = vmatpush1.msra.mxu0 %v9783
        %9785 = vmatprep.subr.mxu0 0.0
        %v9786 = vand.u32 %v267, 4294901760
        %9787 = vmatpush1.msra.mxu0 %v9786
        %9788 = vmatprep.subr.mxu0 0.0
        %v9789 = vand.u32 %v268, 4294901760
        %9790 = vmatpush1.msra.mxu0 %v9789
        %9791 = vmatprep.subr.mxu0 0.0
        %v9792 = vand.u32 %v269, 4294901760
        %9793 = vmatpush1.msra.mxu0 %v9792
        %9794 = vmatprep.subr.mxu0 0.0
        %v9795 = vand.u32 %v270, 4294901760
        %9796 = vmatpush1.msra.mxu0 %v9795
        %9797 = vmatprep.subr.mxu0 0.0
        %v9798 = vand.u32 %v271, 4294901760
        %9799 = vmatpush1.msra.mxu0 %v9798
        %9800 = vmatprep.subr.mxu0 0.0
        %v9801 = vand.u32 %v272, 4294901760
        %9802 = vmatpush1.msra.mxu0 %v9801
        %9803 = vmatprep.subr.mxu0 0.0
        %v9804 = vand.u32 %v273, 4294901760
        %9805 = vmatpush1.msra.mxu0 %v9804
        %9806 = vmatprep.subr.mxu0 0.0
        %v9807 = vand.u32 %v274, 4294901760
        %9808 = vmatpush1.msra.mxu0 %v9807
        %9809 = vmatprep.subr.mxu0 0.0
        %v9810 = vand.u32 %v275, 4294901760
        %9811 = vmatpush1.msra.mxu0 %v9810
        %9812 = vmatprep.subr.mxu0 0.0
        %v9813 = vand.u32 %v276, 4294901760
        %9814 = vmatpush1.msra.mxu0 %v9813
        %9815 = vmatprep.subr.mxu0 0.0
        %v9816 = vand.u32 %v277, 4294901760
        %9817 = vmatpush1.msra.mxu0 %v9816
        %9818 = vmatprep.subr.mxu0 0.0
        %v9819 = vand.u32 %v278, 4294901760
        %9820 = vmatpush1.msra.mxu0 %v9819
        %9821 = vmatprep.subr.mxu0 0.0
        %v9822 = vand.u32 %v279, 4294901760
        %9823 = vmatpush1.msra.mxu0 %v9822
        %9824 = vmatprep.subr.mxu0 0.0
        %v9825 = vand.u32 %v280, 4294901760
        %9826 = vmatpush1.msra.mxu0 %v9825
        %9827 = vmatprep.subr.mxu0 0.0
        %v9828 = vand.u32 %v281, 4294901760
        %9829 = vmatpush1.msra.mxu0 %v9828
        %9830 = vmatprep.subr.mxu0 0.0
        %v9831 = vand.u32 %v282, 4294901760
        %9832 = vmatpush1.msra.mxu0 %v9831
        %9833 = vmatprep.subr.mxu0 0.0
        %v9834 = vand.u32 %v283, 4294901760
        %9835 = vmatpush1.msra.mxu0 %v9834
        %9836 = vmatprep.subr.mxu0 0.0
        %v9837 = vand.u32 %v284, 4294901760
        %9838 = vmatpush1.msra.mxu0 %v9837
        %9839 = vmatprep.subr.mxu0 0.0
        %9840 = vmatpush1.msra.mxu0 0.0
        %9841 = vmatprep.subr.mxu0 0.0
        %9842 = vmatpush1.msra.mxu0 0.0
        %9843 = vmatprep.subr.mxu0 0.0
        %9844 = vmatpush1.msra.mxu0 0.0
        %9845 = vmatprep.subr.mxu0 0.0
        %9846 = vmatpush1.msra.mxu0 0.0
        %9847 = vmatprep.subr.mxu0 0.0
        %9848 = vmatpush1.msra.mxu0 0.0
        %9849 = vmatprep.subr.mxu0 0.0
        %9850 = vmatpush1.msra.mxu0 0.0
        %9851 = vmatprep.subr.mxu0 0.0
        %9852 = vmatpush1.msra.mxu0 0.0
        %9853 = vmatprep.subr.mxu0 0.0
        %9854 = vmatpush1.msra.mxu0 0.0
        %9855 = vmatprep.subr.mxu0 0.0
        %9856 = vmatpush1.msra.mxu0 0.0
        %9857 = vmatprep.subr.mxu0 0.0
        %9858 = vmatpush1.msra.mxu0 0.0
        %9859 = vmatprep.subr.mxu0 0.0
        %9860 = vmatpush1.msra.mxu0 0.0
        %9861 = vmatprep.subr.mxu0 0.0
        %9862 = vmatpush1.msra.mxu0 0.0
        %v9863 = vand.u32 %v9777, 4294901760
        %v9864 = vsub.f32 %v9777, %v9863
        %v9865 = vand.u32 %v9864, 4294901760
        %v9866 = vsub.f32 %v9864, %v9865
        %v9867 = vand.u32 %v9866, 4294901760
        %9868 = vmatprep.mubr.f32.mxu0 %v9867
        %v9869 = vand.u32 %v9768, 4294901760
        %v9870 = vsub.f32 %v9768, %v9869
        %v9871 = vand.u32 %v9870, 4294901760
        %v9872 = vsub.f32 %v9870, %v9871
        %v9873 = vand.u32 %v9872, 4294901760
        %9874 = vmatmul.mubr.f32.gmra.mrb[0].mxu0 %v9873
        %v9875 = vpop.f32.mrb[0].mxu0
        %v9876 = vadd.f32 0.0, %v9875
        %v9877 = vpop.f32.mrb[0].mxu0
        %9878 = vdwg.mxu0
        %9879 = vmatprep.subr.mxu0 0.0
        %v9880 = vand.u32 %v265, 4294901760
        %v9881 = vsub.f32 %v265, %v9880
        %v9882 = vand.u32 %v9881, 4294901760
        %v9883 = vsub.f32 %v9881, %v9882
        %v9884 = vand.u32 %v9883, 4294901760
        %9885 = vmatpush1.msra.mxu0 %v9884
        %9886 = vmatprep.subr.mxu0 0.0
        %v9887 = vand.u32 %v266, 4294901760
        %v9888 = vsub.f32 %v266, %v9887
        %v9889 = vand.u32 %v9888, 4294901760
        %v9890 = vsub.f32 %v9888, %v9889
        %v9891 = vand.u32 %v9890, 4294901760
        %9892 = vmatpush1.msra.mxu0 %v9891
        %9893 = vmatprep.subr.mxu0 0.0
        %v9894 = vand.u32 %v267, 4294901760
        %v9895 = vsub.f32 %v267, %v9894
        %v9896 = vand.u32 %v9895, 4294901760
        %v9897 = vsub.f32 %v9895, %v9896
        %v9898 = vand.u32 %v9897, 4294901760
        %9899 = vmatpush1.msra.mxu0 %v9898
        %9900 = vmatprep.subr.mxu0 0.0
        %v9901 = vand.u32 %v268, 4294901760
        %v9902 = vsub.f32 %v268, %v9901
        %v9903 = vand.u32 %v9902, 4294901760
        %v9904 = vsub.f32 %v9902, %v9903
        %v9905 = vand.u32 %v9904, 4294901760
        %9906 = vmatpush1.msra.mxu0 %v9905
        %9907 = vmatprep.subr.mxu0 0.0
        %v9908 = vand.u32 %v269, 4294901760
        %v9909 = vsub.f32 %v269, %v9908
        %v9910 = vand.u32 %v9909, 4294901760
        %v9911 = vsub.f32 %v9909, %v9910
        %v9912 = vand.u32 %v9911, 4294901760
        %9913 = vmatpush1.msra.mxu0 %v9912
        %9914 = vmatprep.subr.mxu0 0.0
        %v9915 = vand.u32 %v270, 4294901760
        %v9916 = vsub.f32 %v270, %v9915
        %v9917 = vand.u32 %v9916, 4294901760
        %v9918 = vsub.f32 %v9916, %v9917
        %v9919 = vand.u32 %v9918, 4294901760
        %9920 = vmatpush1.msra.mxu0 %v9919
        %9921 = vmatprep.subr.mxu0 0.0
        %v9922 = vand.u32 %v271, 4294901760
        %v9923 = vsub.f32 %v271, %v9922
        %v9924 = vand.u32 %v9923, 4294901760
        %v9925 = vsub.f32 %v9923, %v9924
        %v9926 = vand.u32 %v9925, 4294901760
        %9927 = vmatpush1.msra.mxu0 %v9926
        %9928 = vmatprep.subr.mxu0 0.0
        %v9929 = vand.u32 %v272, 4294901760
        %v9930 = vsub.f32 %v272, %v9929
        %v9931 = vand.u32 %v9930, 4294901760
        %v9932 = vsub.f32 %v9930, %v9931
        %v9933 = vand.u32 %v9932, 4294901760
        %9934 = vmatpush1.msra.mxu0 %v9933
        %9935 = vmatprep.subr.mxu0 0.0
        %v9936 = vand.u32 %v273, 4294901760
        %v9937 = vsub.f32 %v273, %v9936
        %v9938 = vand.u32 %v9937, 4294901760
        %v9939 = vsub.f32 %v9937, %v9938
        %v9940 = vand.u32 %v9939, 4294901760
        %9941 = vmatpush1.msra.mxu0 %v9940
        %9942 = vmatprep.subr.mxu0 0.0
        %v9943 = vand.u32 %v274, 4294901760
        %v9944 = vsub.f32 %v274, %v9943
        %v9945 = vand.u32 %v9944, 4294901760
        %v9946 = vsub.f32 %v9944, %v9945
        %v9947 = vand.u32 %v9946, 4294901760
        %9948 = vmatpush1.msra.mxu0 %v9947
        %9949 = vmatprep.subr.mxu0 0.0
        %v9950 = vand.u32 %v275, 4294901760
        %v9951 = vsub.f32 %v275, %v9950
        %v9952 = vand.u32 %v9951, 4294901760
        %v9953 = vsub.f32 %v9951, %v9952
        %v9954 = vand.u32 %v9953, 4294901760
        %9955 = vmatpush1.msra.mxu0 %v9954
        %9956 = vmatprep.subr.mxu0 0.0
        %v9957 = vand.u32 %v276, 4294901760
        %v9958 = vsub.f32 %v276, %v9957
        %v9959 = vand.u32 %v9958, 4294901760
        %v9960 = vsub.f32 %v9958, %v9959
        %v9961 = vand.u32 %v9960, 4294901760
        %9962 = vmatpush1.msra.mxu0 %v9961
        %9963 = vmatprep.subr.mxu0 0.0
        %v9964 = vand.u32 %v277, 4294901760
        %v9965 = vsub.f32 %v277, %v9964
        %v9966 = vand.u32 %v9965, 4294901760
        %v9967 = vsub.f32 %v9965, %v9966
        %v9968 = vand.u32 %v9967, 4294901760
        %9969 = vmatpush1.msra.mxu0 %v9968
        %9970 = vmatprep.subr.mxu0 0.0
        %v9971 = vand.u32 %v278, 4294901760
        %v9972 = vsub.f32 %v278, %v9971
        %v9973 = vand.u32 %v9972, 4294901760
        %v9974 = vsub.f32 %v9972, %v9973
        %v9975 = vand.u32 %v9974, 4294901760
        %9976 = vmatpush1.msra.mxu0 %v9975
        %9977 = vmatprep.subr.mxu0 0.0
        %v9978 = vand.u32 %v279, 4294901760
        %v9979 = vsub.f32 %v279, %v9978
        %v9980 = vand.u32 %v9979, 4294901760
        %v9981 = vsub.f32 %v9979, %v9980
        %v9982 = vand.u32 %v9981, 4294901760
        %9983 = vmatpush1.msra.mxu0 %v9982
        %9984 = vmatprep.subr.mxu0 0.0
        %v9985 = vand.u32 %v280, 4294901760
        %v9986 = vsub.f32 %v280, %v9985
        %v9987 = vand.u32 %v9986, 4294901760
        %v9988 = vsub.f32 %v9986, %v9987
        %v9989 = vand.u32 %v9988, 4294901760
        %9990 = vmatpush1.msra.mxu0 %v9989
        %9991 = vmatprep.subr.mxu0 0.0
        %v9992 = vand.u32 %v281, 4294901760
        %v9993 = vsub.f32 %v281, %v9992
        %v9994 = vand.u32 %v9993, 4294901760
        %v9995 = vsub.f32 %v9993, %v9994
        %v9996 = vand.u32 %v9995, 4294901760
        %9997 = vmatpush1.msra.mxu0 %v9996
        %9998 = vmatprep.subr.mxu0 0.0
        %v9999 = vand.u32 %v282, 4294901760
        %v10000 = vsub.f32 %v282, %v9999
        %v10001 = vand.u32 %v10000, 4294901760
        %v10002 = vsub.f32 %v10000, %v10001
        %v10003 = vand.u32 %v10002, 4294901760
        %10004 = vmatpush1.msra.mxu0 %v10003
        %10005 = vmatprep.subr.mxu0 0.0
        %v10006 = vand.u32 %v283, 4294901760
        %v10007 = vsub.f32 %v283, %v10006
        %v10008 = vand.u32 %v10007, 4294901760
        %v10009 = vsub.f32 %v10007, %v10008
        %v10010 = vand.u32 %v10009, 4294901760
        %10011 = vmatpush1.msra.mxu0 %v10010
        %10012 = vmatprep.subr.mxu0 0.0
        %v10013 = vand.u32 %v284, 4294901760
        %v10014 = vsub.f32 %v284, %v10013
        %v10015 = vand.u32 %v10014, 4294901760
        %v10016 = vsub.f32 %v10014, %v10015
        %v10017 = vand.u32 %v10016, 4294901760
        %10018 = vmatpush1.msra.mxu0 %v10017
        %10019 = vmatprep.subr.mxu0 0.0
        %10020 = vmatpush1.msra.mxu0 0.0
        %10021 = vmatprep.subr.mxu0 0.0
        %10022 = vmatpush1.msra.mxu0 0.0
        %10023 = vmatprep.subr.mxu0 0.0
        %10024 = vmatpush1.msra.mxu0 0.0
        %10025 = vmatprep.subr.mxu0 0.0
        %10026 = vmatpush1.msra.mxu0 0.0
        %10027 = vmatprep.subr.mxu0 0.0
        %10028 = vmatpush1.msra.mxu0 0.0
        %10029 = vmatprep.subr.mxu0 0.0
        %10030 = vmatpush1.msra.mxu0 0.0
        %10031 = vmatprep.subr.mxu0 0.0
        %10032 = vmatpush1.msra.mxu0 0.0
        %10033 = vmatprep.subr.mxu0 0.0
        %10034 = vmatpush1.msra.mxu0 0.0
        %10035 = vmatprep.subr.mxu0 0.0
        %10036 = vmatpush1.msra.mxu0 0.0
        %10037 = vmatprep.subr.mxu0 0.0
        %10038 = vmatpush1.msra.mxu0 0.0
        %10039 = vmatprep.subr.mxu0 0.0
        %10040 = vmatpush1.msra.mxu0 0.0
        %10041 = vmatprep.subr.mxu0 0.0
        %10042 = vmatpush1.msra.mxu0 0.0
        %v10043 = vand.u32 %v9777, 4294901760
        %10044 = vmatprep.mubr.f32.mxu0 %v10043
        %v10045 = vand.u32 %v9768, 4294901760
        %10046 = vmatmul.mubr.f32.gmra.mrb[0].mxu0 %v10045
        %v10047 = vpop.f32.mrb[0].mxu0
        %v10048 = vadd.f32 %v9876, %v10047
        %v10049 = vpop.f32.mrb[0].mxu0
        %10050 = vdwg.mxu0
        %10051 = vmatprep.subr.mxu0 0.0
        %v10052 = vand.u32 %v265, 4294901760
        %v10053 = vsub.f32 %v265, %v10052
        %10054 = vmatpush1.msra.mxu0 %v10053
        %10055 = vmatprep.subr.mxu0 0.0
        %v10056 = vand.u32 %v266, 4294901760
        %v10057 = vsub.f32 %v266, %v10056
        %10058 = vmatpush1.msra.mxu0 %v10057
        %10059 = vmatprep.subr.mxu0 0.0
        %v10060 = vand.u32 %v267, 4294901760
        %v10061 = vsub.f32 %v267, %v10060
        %10062 = vmatpush1.msra.mxu0 %v10061
        %10063 = vmatprep.subr.mxu0 0.0
        %v10064 = vand.u32 %v268, 4294901760
        %v10065 = vsub.f32 %v268, %v10064
        %10066 = vmatpush1.msra.mxu0 %v10065
        %10067 = vmatprep.subr.mxu0 0.0
        %v10068 = vand.u32 %v269, 4294901760
        %v10069 = vsub.f32 %v269, %v10068
        %10070 = vmatpush1.msra.mxu0 %v10069
        %10071 = vmatprep.subr.mxu0 0.0
        %v10072 = vand.u32 %v270, 4294901760
        %v10073 = vsub.f32 %v270, %v10072
        %10074 = vmatpush1.msra.mxu0 %v10073
        %10075 = vmatprep.subr.mxu0 0.0
        %v10076 = vand.u32 %v271, 4294901760
        %v10077 = vsub.f32 %v271, %v10076
        %10078 = vmatpush1.msra.mxu0 %v10077
        %10079 = vmatprep.subr.mxu0 0.0
        %v10080 = vand.u32 %v272, 4294901760
        %v10081 = vsub.f32 %v272, %v10080
        %10082 = vmatpush1.msra.mxu0 %v10081
        %10083 = vmatprep.subr.mxu0 0.0
        %v10084 = vand.u32 %v273, 4294901760
        %v10085 = vsub.f32 %v273, %v10084
        %10086 = vmatpush1.msra.mxu0 %v10085
        %10087 = vmatprep.subr.mxu0 0.0
        %v10088 = vand.u32 %v274, 4294901760
        %v10089 = vsub.f32 %v274, %v10088
        %10090 = vmatpush1.msra.mxu0 %v10089
        %10091 = vmatprep.subr.mxu0 0.0
        %v10092 = vand.u32 %v275, 4294901760
        %v10093 = vsub.f32 %v275, %v10092
        %10094 = vmatpush1.msra.mxu0 %v10093
        %10095 = vmatprep.subr.mxu0 0.0
        %v10096 = vand.u32 %v276, 4294901760
        %v10097 = vsub.f32 %v276, %v10096
        %10098 = vmatpush1.msra.mxu0 %v10097
        %10099 = vmatprep.subr.mxu0 0.0
        %v10100 = vand.u32 %v277, 4294901760
        %v10101 = vsub.f32 %v277, %v10100
        %10102 = vmatpush1.msra.mxu0 %v10101
        %10103 = vmatprep.subr.mxu0 0.0
        %v10104 = vand.u32 %v278, 4294901760
        %v10105 = vsub.f32 %v278, %v10104
        %10106 = vmatpush1.msra.mxu0 %v10105
        %10107 = vmatprep.subr.mxu0 0.0
        %v10108 = vand.u32 %v279, 4294901760
        %v10109 = vsub.f32 %v279, %v10108
        %10110 = vmatpush1.msra.mxu0 %v10109
        %10111 = vmatprep.subr.mxu0 0.0
        %v10112 = vand.u32 %v280, 4294901760
        %v10113 = vsub.f32 %v280, %v10112
        %10114 = vmatpush1.msra.mxu0 %v10113
        %10115 = vmatprep.subr.mxu0 0.0
        %v10116 = vand.u32 %v281, 4294901760
        %v10117 = vsub.f32 %v281, %v10116
        %10118 = vmatpush1.msra.mxu0 %v10117
        %10119 = vmatprep.subr.mxu0 0.0
        %v10120 = vand.u32 %v282, 4294901760
        %v10121 = vsub.f32 %v282, %v10120
        %10122 = vmatpush1.msra.mxu0 %v10121
        %10123 = vmatprep.subr.mxu0 0.0
        %v10124 = vand.u32 %v283, 4294901760
        %v10125 = vsub.f32 %v283, %v10124
        %10126 = vmatpush1.msra.mxu0 %v10125
        %10127 = vmatprep.subr.mxu0 0.0
        %v10128 = vand.u32 %v284, 4294901760
        %v10129 = vsub.f32 %v284, %v10128
        %10130 = vmatpush1.msra.mxu0 %v10129
        %10131 = vmatprep.subr.mxu0 0.0
        %10132 = vmatpush1.msra.mxu0 0.0
        %10133 = vmatprep.subr.mxu0 0.0
        %10134 = vmatpush1.msra.mxu0 0.0
        %10135 = vmatprep.subr.mxu0 0.0
        %10136 = vmatpush1.msra.mxu0 0.0
        %10137 = vmatprep.subr.mxu0 0.0
        %10138 = vmatpush1.msra.mxu0 0.0
        %10139 = vmatprep.subr.mxu0 0.0
        %10140 = vmatpush1.msra.mxu0 0.0
        %10141 = vmatprep.subr.mxu0 0.0
        %10142 = vmatpush1.msra.mxu0 0.0
        %10143 = vmatprep.subr.mxu0 0.0
        %10144 = vmatpush1.msra.mxu0 0.0
        %10145 = vmatprep.subr.mxu0 0.0
        %10146 = vmatpush1.msra.mxu0 0.0
        %10147 = vmatprep.subr.mxu0 0.0
        %10148 = vmatpush1.msra.mxu0 0.0
        %10149 = vmatprep.subr.mxu0 0.0
        %10150 = vmatpush1.msra.mxu0 0.0
        %10151 = vmatprep.subr.mxu0 0.0
        %10152 = vmatpush1.msra.mxu0 0.0
        %10153 = vmatprep.subr.mxu0 0.0
        %10154 = vmatpush1.msra.mxu0 0.0
        %v10155 = vand.u32 %v9777, 4294901760
        %v10156 = vsub.f32 %v9777, %v10155
        %10157 = vmatprep.mubr.f32.mxu0 %v10156
        %v10158 = vand.u32 %v9768, 4294901760
        %v10159 = vsub.f32 %v9768, %v10158
        %10160 = vmatmul.mubr.f32.gmra.mrb[0].mxu0 %v10159
        %v10161 = vpop.f32.mrb[0].mxu0
        %v10162 = vadd.f32 %v10048, %v10161
        %v10163 = vpop.f32.mrb[0].mxu0
        %10164 = vdwg.mxu0
        %10165 = vmatprep.subr.mxu0 0.0
        %v10166 = vand.u32 %v265, 4294901760
        %10167 = vmatpush1.msra.mxu0 %v10166
        %10168 = vmatprep.subr.mxu0 0.0
        %v10169 = vand.u32 %v266, 4294901760
        %10170 = vmatpush1.msra.mxu0 %v10169
        %10171 = vmatprep.subr.mxu0 0.0
        %v10172 = vand.u32 %v267, 4294901760
        %10173 = vmatpush1.msra.mxu0 %v10172
        %10174 = vmatprep.subr.mxu0 0.0
        %v10175 = vand.u32 %v268, 4294901760
        %10176 = vmatpush1.msra.mxu0 %v10175
        %10177 = vmatprep.subr.mxu0 0.0
        %v10178 = vand.u32 %v269, 4294901760
        %10179 = vmatpush1.msra.mxu0 %v10178
        %10180 = vmatprep.subr.mxu0 0.0
        %v10181 = vand.u32 %v270, 4294901760
        %10182 = vmatpush1.msra.mxu0 %v10181
        %10183 = vmatprep.subr.mxu0 0.0
        %v10184 = vand.u32 %v271, 4294901760
        %10185 = vmatpush1.msra.mxu0 %v10184
        %10186 = vmatprep.subr.mxu0 0.0
        %v10187 = vand.u32 %v272, 4294901760
        %10188 = vmatpush1.msra.mxu0 %v10187
        %10189 = vmatprep.subr.mxu0 0.0
        %v10190 = vand.u32 %v273, 4294901760
        %10191 = vmatpush1.msra.mxu0 %v10190
        %10192 = vmatprep.subr.mxu0 0.0
        %v10193 = vand.u32 %v274, 4294901760
        %10194 = vmatpush1.msra.mxu0 %v10193
        %10195 = vmatprep.subr.mxu0 0.0
        %v10196 = vand.u32 %v275, 4294901760
        %10197 = vmatpush1.msra.mxu0 %v10196
        %10198 = vmatprep.subr.mxu0 0.0
        %v10199 = vand.u32 %v276, 4294901760
        %10200 = vmatpush1.msra.mxu0 %v10199
        %10201 = vmatprep.subr.mxu0 0.0
        %v10202 = vand.u32 %v277, 4294901760
        %10203 = vmatpush1.msra.mxu0 %v10202
        %10204 = vmatprep.subr.mxu0 0.0
        %v10205 = vand.u32 %v278, 4294901760
        %10206 = vmatpush1.msra.mxu0 %v10205
        %10207 = vmatprep.subr.mxu0 0.0
        %v10208 = vand.u32 %v279, 4294901760
        %10209 = vmatpush1.msra.mxu0 %v10208
        %10210 = vmatprep.subr.mxu0 0.0
        %v10211 = vand.u32 %v280, 4294901760
        %10212 = vmatpush1.msra.mxu0 %v10211
        %10213 = vmatprep.subr.mxu0 0.0
        %v10214 = vand.u32 %v281, 4294901760
        %10215 = vmatpush1.msra.mxu0 %v10214
        %10216 = vmatprep.subr.mxu0 0.0
        %v10217 = vand.u32 %v282, 4294901760
        %10218 = vmatpush1.msra.mxu0 %v10217
        %10219 = vmatprep.subr.mxu0 0.0
        %v10220 = vand.u32 %v283, 4294901760
        %10221 = vmatpush1.msra.mxu0 %v10220
        %10222 = vmatprep.subr.mxu0 0.0
        %v10223 = vand.u32 %v284, 4294901760
        %10224 = vmatpush1.msra.mxu0 %v10223
        %10225 = vmatprep.subr.mxu0 0.0
        %10226 = vmatpush1.msra.mxu0 0.0
        %10227 = vmatprep.subr.mxu0 0.0
        %10228 = vmatpush1.msra.mxu0 0.0
        %10229 = vmatprep.subr.mxu0 0.0
        %10230 = vmatpush1.msra.mxu0 0.0
        %10231 = vmatprep.subr.mxu0 0.0
        %10232 = vmatpush1.msra.mxu0 0.0
        %10233 = vmatprep.subr.mxu0 0.0
        %10234 = vmatpush1.msra.mxu0 0.0
        %10235 = vmatprep.subr.mxu0 0.0
        %10236 = vmatpush1.msra.mxu0 0.0
        %10237 = vmatprep.subr.mxu0 0.0
        %10238 = vmatpush1.msra.mxu0 0.0
        %10239 = vmatprep.subr.mxu0 0.0
        %10240 = vmatpush1.msra.mxu0 0.0
        %10241 = vmatprep.subr.mxu0 0.0
        %10242 = vmatpush1.msra.mxu0 0.0
        %10243 = vmatprep.subr.mxu0 0.0
        %10244 = vmatpush1.msra.mxu0 0.0
        %10245 = vmatprep.subr.mxu0 0.0
        %10246 = vmatpush1.msra.mxu0 0.0
        %10247 = vmatprep.subr.mxu0 0.0
        %10248 = vmatpush1.msra.mxu0 0.0
        %v10249 = vand.u32 %v9777, 4294901760
        %v10250 = vsub.f32 %v9777, %v10249
        %v10251 = vand.u32 %v10250, 4294901760
        %10252 = vmatprep.mubr.f32.mxu0 %v10251
        %v10253 = vand.u32 %v9768, 4294901760
        %v10254 = vsub.f32 %v9768, %v10253
        %v10255 = vand.u32 %v10254, 4294901760
        %10256 = vmatmul.mubr.f32.gmra.mrb[0].mxu0 %v10255
        %v10257 = vpop.f32.mrb[0].mxu0
        %v10258 = vadd.f32 %v10162, %v10257
        %v10259 = vpop.f32.mrb[0].mxu0
        %10260 = vdwg.mxu0
        %10261 = vmatprep.subr.mxu0 0.0
        %v10262 = vand.u32 %v265, 4294901760
        %v10263 = vsub.f32 %v265, %v10262
        %v10264 = vand.u32 %v10263, 4294901760
        %10265 = vmatpush1.msra.mxu0 %v10264
        %10266 = vmatprep.subr.mxu0 0.0
        %v10267 = vand.u32 %v266, 4294901760
        %v10268 = vsub.f32 %v266, %v10267
        %v10269 = vand.u32 %v10268, 4294901760
        %10270 = vmatpush1.msra.mxu0 %v10269
        %10271 = vmatprep.subr.mxu0 0.0
        %v10272 = vand.u32 %v267, 4294901760
        %v10273 = vsub.f32 %v267, %v10272
        %v10274 = vand.u32 %v10273, 4294901760
        %10275 = vmatpush1.msra.mxu0 %v10274
        %10276 = vmatprep.subr.mxu0 0.0
        %v10277 = vand.u32 %v268, 4294901760
        %v10278 = vsub.f32 %v268, %v10277
        %v10279 = vand.u32 %v10278, 4294901760
        %10280 = vmatpush1.msra.mxu0 %v10279
        %10281 = vmatprep.subr.mxu0 0.0
        %v10282 = vand.u32 %v269, 4294901760
        %v10283 = vsub.f32 %v269, %v10282
        %v10284 = vand.u32 %v10283, 4294901760
        %10285 = vmatpush1.msra.mxu0 %v10284
        %10286 = vmatprep.subr.mxu0 0.0
        %v10287 = vand.u32 %v270, 4294901760
        %v10288 = vsub.f32 %v270, %v10287
        %v10289 = vand.u32 %v10288, 4294901760
        %10290 = vmatpush1.msra.mxu0 %v10289
        %10291 = vmatprep.subr.mxu0 0.0
        %v10292 = vand.u32 %v271, 4294901760
        %v10293 = vsub.f32 %v271, %v10292
        %v10294 = vand.u32 %v10293, 4294901760
        %10295 = vmatpush1.msra.mxu0 %v10294
        %10296 = vmatprep.subr.mxu0 0.0
        %v10297 = vand.u32 %v272, 4294901760
        %v10298 = vsub.f32 %v272, %v10297
        %v10299 = vand.u32 %v10298, 4294901760
        %10300 = vmatpush1.msra.mxu0 %v10299
        %10301 = vmatprep.subr.mxu0 0.0
        %v10302 = vand.u32 %v273, 4294901760
        %v10303 = vsub.f32 %v273, %v10302
        %v10304 = vand.u32 %v10303, 4294901760
        %10305 = vmatpush1.msra.mxu0 %v10304
        %10306 = vmatprep.subr.mxu0 0.0
        %v10307 = vand.u32 %v274, 4294901760
        %v10308 = vsub.f32 %v274, %v10307
        %v10309 = vand.u32 %v10308, 4294901760
        %10310 = vmatpush1.msra.mxu0 %v10309
        %10311 = vmatprep.subr.mxu0 0.0
        %v10312 = vand.u32 %v275, 4294901760
        %v10313 = vsub.f32 %v275, %v10312
        %v10314 = vand.u32 %v10313, 4294901760
        %10315 = vmatpush1.msra.mxu0 %v10314
        %10316 = vmatprep.subr.mxu0 0.0
        %v10317 = vand.u32 %v276, 4294901760
        %v10318 = vsub.f32 %v276, %v10317
        %v10319 = vand.u32 %v10318, 4294901760
        %10320 = vmatpush1.msra.mxu0 %v10319
        %10321 = vmatprep.subr.mxu0 0.0
        %v10322 = vand.u32 %v277, 4294901760
        %v10323 = vsub.f32 %v277, %v10322
        %v10324 = vand.u32 %v10323, 4294901760
        %10325 = vmatpush1.msra.mxu0 %v10324
        %10326 = vmatprep.subr.mxu0 0.0
        %v10327 = vand.u32 %v278, 4294901760
        %v10328 = vsub.f32 %v278, %v10327
        %v10329 = vand.u32 %v10328, 4294901760
        %10330 = vmatpush1.msra.mxu0 %v10329
        %10331 = vmatprep.subr.mxu0 0.0
        %v10332 = vand.u32 %v279, 4294901760
        %v10333 = vsub.f32 %v279, %v10332
        %v10334 = vand.u32 %v10333, 4294901760
        %10335 = vmatpush1.msra.mxu0 %v10334
        %10336 = vmatprep.subr.mxu0 0.0
        %v10337 = vand.u32 %v280, 4294901760
        %v10338 = vsub.f32 %v280, %v10337
        %v10339 = vand.u32 %v10338, 4294901760
        %10340 = vmatpush1.msra.mxu0 %v10339
        %10341 = vmatprep.subr.mxu0 0.0
        %v10342 = vand.u32 %v281, 4294901760
        %v10343 = vsub.f32 %v281, %v10342
        %v10344 = vand.u32 %v10343, 4294901760
        %10345 = vmatpush1.msra.mxu0 %v10344
        %10346 = vmatprep.subr.mxu0 0.0
        %v10347 = vand.u32 %v282, 4294901760
        %v10348 = vsub.f32 %v282, %v10347
        %v10349 = vand.u32 %v10348, 4294901760
        %10350 = vmatpush1.msra.mxu0 %v10349
        %10351 = vmatprep.subr.mxu0 0.0
        %v10352 = vand.u32 %v283, 4294901760
        %v10353 = vsub.f32 %v283, %v10352
        %v10354 = vand.u32 %v10353, 4294901760
        %10355 = vmatpush1.msra.mxu0 %v10354
        %10356 = vmatprep.subr.mxu0 0.0
        %v10357 = vand.u32 %v284, 4294901760
        %v10358 = vsub.f32 %v284, %v10357
        %v10359 = vand.u32 %v10358, 4294901760
        %10360 = vmatpush1.msra.mxu0 %v10359
        %10361 = vmatprep.subr.mxu0 0.0
        %10362 = vmatpush1.msra.mxu0 0.0
        %10363 = vmatprep.subr.mxu0 0.0
        %10364 = vmatpush1.msra.mxu0 0.0
        %10365 = vmatprep.subr.mxu0 0.0
        %10366 = vmatpush1.msra.mxu0 0.0
        %10367 = vmatprep.subr.mxu0 0.0
        %10368 = vmatpush1.msra.mxu0 0.0
        %10369 = vmatprep.subr.mxu0 0.0
        %10370 = vmatpush1.msra.mxu0 0.0
        %10371 = vmatprep.subr.mxu0 0.0
        %10372 = vmatpush1.msra.mxu0 0.0
        %10373 = vmatprep.subr.mxu0 0.0
        %10374 = vmatpush1.msra.mxu0 0.0
        %10375 = vmatprep.subr.mxu0 0.0
        %10376 = vmatpush1.msra.mxu0 0.0
        %10377 = vmatprep.subr.mxu0 0.0
        %10378 = vmatpush1.msra.mxu0 0.0
        %10379 = vmatprep.subr.mxu0 0.0
        %10380 = vmatpush1.msra.mxu0 0.0
        %10381 = vmatprep.subr.mxu0 0.0
        %10382 = vmatpush1.msra.mxu0 0.0
        %10383 = vmatprep.subr.mxu0 0.0
        %10384 = vmatpush1.msra.mxu0 0.0
        %v10385 = vand.u32 %v9777, 4294901760
        %10386 = vmatprep.mubr.f32.mxu0 %v10385
        %v10387 = vand.u32 %v9768, 4294901760
        %10388 = vmatmul.mubr.f32.gmra.mrb[0].mxu0 %v10387
        %v10389 = vpop.f32.mrb[0].mxu0
        %v10390 = vadd.f32 %v10258, %v10389
        %v10391 = vpop.f32.mrb[0].mxu0
        %10392 = vdwg.mxu0
        %10393 = vmatprep.subr.mxu0 0.0
        %v10394 = vand.u32 %v265, 4294901760
        %10395 = vmatpush1.msra.mxu0 %v10394
        %10396 = vmatprep.subr.mxu0 0.0
        %v10397 = vand.u32 %v266, 4294901760
        %10398 = vmatpush1.msra.mxu0 %v10397
        %10399 = vmatprep.subr.mxu0 0.0
        %v10400 = vand.u32 %v267, 4294901760
        %10401 = vmatpush1.msra.mxu0 %v10400
        %10402 = vmatprep.subr.mxu0 0.0
        %v10403 = vand.u32 %v268, 4294901760
        %10404 = vmatpush1.msra.mxu0 %v10403
        %10405 = vmatprep.subr.mxu0 0.0
        %v10406 = vand.u32 %v269, 4294901760
        %10407 = vmatpush1.msra.mxu0 %v10406
        %10408 = vmatprep.subr.mxu0 0.0
        %v10409 = vand.u32 %v270, 4294901760
        %10410 = vmatpush1.msra.mxu0 %v10409
        %10411 = vmatprep.subr.mxu0 0.0
        %v10412 = vand.u32 %v271, 4294901760
        %10413 = vmatpush1.msra.mxu0 %v10412
        %10414 = vmatprep.subr.mxu0 0.0
        %v10415 = vand.u32 %v272, 4294901760
        %10416 = vmatpush1.msra.mxu0 %v10415
        %10417 = vmatprep.subr.mxu0 0.0
        %v10418 = vand.u32 %v273, 4294901760
        %10419 = vmatpush1.msra.mxu0 %v10418
        %10420 = vmatprep.subr.mxu0 0.0
        %v10421 = vand.u32 %v274, 4294901760
        %10422 = vmatpush1.msra.mxu0 %v10421
        %10423 = vmatprep.subr.mxu0 0.0
        %v10424 = vand.u32 %v275, 4294901760
        %10425 = vmatpush1.msra.mxu0 %v10424
        %10426 = vmatprep.subr.mxu0 0.0
        %v10427 = vand.u32 %v276, 4294901760
        %10428 = vmatpush1.msra.mxu0 %v10427
        %10429 = vmatprep.subr.mxu0 0.0
        %v10430 = vand.u32 %v277, 4294901760
        %10431 = vmatpush1.msra.mxu0 %v10430
        %10432 = vmatprep.subr.mxu0 0.0
        %v10433 = vand.u32 %v278, 4294901760
        %10434 = vmatpush1.msra.mxu0 %v10433
        %10435 = vmatprep.subr.mxu0 0.0
        %v10436 = vand.u32 %v279, 4294901760
        %10437 = vmatpush1.msra.mxu0 %v10436
        %10438 = vmatprep.subr.mxu0 0.0
        %v10439 = vand.u32 %v280, 4294901760
        %10440 = vmatpush1.msra.mxu0 %v10439
        %10441 = vmatprep.subr.mxu0 0.0
        %v10442 = vand.u32 %v281, 4294901760
        %10443 = vmatpush1.msra.mxu0 %v10442
        %10444 = vmatprep.subr.mxu0 0.0
        %v10445 = vand.u32 %v282, 4294901760
        %10446 = vmatpush1.msra.mxu0 %v10445
        %10447 = vmatprep.subr.mxu0 0.0
        %v10448 = vand.u32 %v283, 4294901760
        %10449 = vmatpush1.msra.mxu0 %v10448
        %10450 = vmatprep.subr.mxu0 0.0
        %v10451 = vand.u32 %v284, 4294901760
        %10452 = vmatpush1.msra.mxu0 %v10451
        %10453 = vmatprep.subr.mxu0 0.0
        %10454 = vmatpush1.msra.mxu0 0.0
        %10455 = vmatprep.subr.mxu0 0.0
        %10456 = vmatpush1.msra.mxu0 0.0
        %10457 = vmatprep.subr.mxu0 0.0
        %10458 = vmatpush1.msra.mxu0 0.0
        %10459 = vmatprep.subr.mxu0 0.0
        %10460 = vmatpush1.msra.mxu0 0.0
        %10461 = vmatprep.subr.mxu0 0.0
        %10462 = vmatpush1.msra.mxu0 0.0
        %10463 = vmatprep.subr.mxu0 0.0
        %10464 = vmatpush1.msra.mxu0 0.0
        %10465 = vmatprep.subr.mxu0 0.0
        %10466 = vmatpush1.msra.mxu0 0.0
        %10467 = vmatprep.subr.mxu0 0.0
        %10468 = vmatpush1.msra.mxu0 0.0
        %10469 = vmatprep.subr.mxu0 0.0
        %10470 = vmatpush1.msra.mxu0 0.0
        %10471 = vmatprep.subr.mxu0 0.0
        %10472 = vmatpush1.msra.mxu0 0.0
        %10473 = vmatprep.subr.mxu0 0.0
        %10474 = vmatpush1.msra.mxu0 0.0
        %10475 = vmatprep.subr.mxu0 0.0
        %10476 = vmatpush1.msra.mxu0 0.0
        %v10477 = vand.u32 %v9777, 4294901760
        %10478 = vmatprep.mubr.f32.mxu0 %v10477
        %v10479 = vand.u32 %v9768, 4294901760
        %10480 = vmatmul.mubr.f32.gmra.mrb[0].mxu0 %v10479
        %v10481 = vpop.f32.mrb[0].mxu0
        %v10482 = vadd.f32 %v10390, %v10481
        %v10483 = vpop.f32.mrb[0].mxu0
        %10484 = vdwg.mxu0
        %v10485 = vrsqrt.pop %v10482
        %v10486 = vmul.f32 %v10482, %v10485
        %vm10487 = vcmp.eq.f32.partialorder %v10482, inf
        %v10488 = vsel %vm10487, %v10482, %v10486
        %vm10489 = vcmp.eq.f32.partialorder %v10482, 0.0
        %v10490 = vand.u32 %v10482, 2147483648
        %v10491 = vsel %vm10489, %v10490, %v10488
        %v10492 = vadd.f32 %v10482, 1.0
        %v10493 = vrcp.pop %v10492
        %v10494 = vmul.f32 %v10492, %v10493
        %v10495 = vsub.f32 2.0, %v10494
        %v10496 = vmul.f32 %v10493, %v10495
        %v10497 = vmul.f32 %v10491, %v10496
        %v10499 = vsel %vm2428, %v10497, 0
        %v10501 = vand.u32 %v262, 4294901760
        %10502 = vmatprep.subr.mxu0 %v10501
        %v10503 = vand.u32 %v261, 4294901760
        %10504 = vmatpush1.msra.mxu0 %v10503
        %v10505 = vand.u32 %v2570, 4294901760
        %10506 = vmatprep.subr.mxu0 %v10505
        %v10507 = vand.u32 %v2567, 4294901760
        %10508 = vmatpush1.msra.mxu0 %v10507
        %10509 = vmatprep.subr.mxu0 0.0
        %10510 = vmatpush1.msra.mxu0 0.0
        %10511 = vmatprep.subr.mxu0 0.0
        %10512 = vmatpush1.msra.mxu0 0.0
        %10513 = vmatprep.subr.mxu0 0.0
        %10514 = vmatpush1.msra.mxu0 0.0
        %10515 = vmatprep.subr.mxu0 0.0
        %10516 = vmatpush1.msra.mxu0 0.0
        %10517 = vmatprep.subr.mxu0 0.0
        %10518 = vmatpush1.msra.mxu0 0.0
        %10519 = vmatprep.subr.mxu0 0.0
        %10520 = vmatpush1.msra.mxu0 0.0
        %10521 = vmatprep.subr.mxu0 0.0
        %10522 = vmatpush1.msra.mxu0 0.0
        %10523 = vmatprep.subr.mxu0 0.0
        %10524 = vmatpush1.msra.mxu0 0.0
        %10525 = vmatprep.subr.mxu0 0.0
        %10526 = vmatpush1.msra.mxu0 0.0
        %10527 = vmatprep.subr.mxu0 0.0
        %10528 = vmatpush1.msra.mxu0 0.0
        %10529 = vmatprep.subr.mxu0 0.0
        %10530 = vmatpush1.msra.mxu0 0.0
        %10531 = vmatprep.subr.mxu0 0.0
        %10532 = vmatpush1.msra.mxu0 0.0
        %10533 = vmatprep.subr.mxu0 0.0
        %10534 = vmatpush1.msra.mxu0 0.0
        %10535 = vmatprep.subr.mxu0 0.0
        %10536 = vmatpush1.msra.mxu0 0.0
        %10537 = vmatprep.subr.mxu0 0.0
        %10538 = vmatpush1.msra.mxu0 0.0
        %10539 = vmatprep.subr.mxu0 0.0
        %10540 = vmatpush1.msra.mxu0 0.0
        %10541 = vmatprep.subr.mxu0 0.0
        %10542 = vmatpush1.msra.mxu0 0.0
        %10543 = vmatprep.subr.mxu0 0.0
        %10544 = vmatpush1.msra.mxu0 0.0
        %10545 = vmatprep.subr.mxu0 0.0
        %10546 = vmatpush1.msra.mxu0 0.0
        %10547 = vmatprep.subr.mxu0 0.0
        %10548 = vmatpush1.msra.mxu0 0.0
        %10549 = vmatprep.subr.mxu0 0.0
        %10550 = vmatpush1.msra.mxu0 0.0
        %10551 = vmatprep.subr.mxu0 0.0
        %10552 = vmatpush1.msra.mxu0 0.0
        %10553 = vmatprep.subr.mxu0 0.0
        %10554 = vmatpush1.msra.mxu0 0.0
        %10555 = vmatprep.subr.mxu0 0.0
        %10556 = vmatpush1.msra.mxu0 0.0
        %10557 = vmatprep.subr.mxu0 0.0
        %10558 = vmatpush1.msra.mxu0 0.0
        %10559 = vmatprep.subr.mxu0 0.0
        %10560 = vmatpush1.msra.mxu0 0.0
        %10561 = vmatprep.subr.mxu0 0.0
        %10562 = vmatpush1.msra.mxu0 0.0
        %10563 = vmatprep.subr.mxu0 0.0
        %10564 = vmatpush1.msra.mxu0 0.0
        %10565 = vmatprep.subr.mxu0 0.0
        %10566 = vmatpush1.msra.mxu0 0.0
        %10567 = vmatprep.subr.mxu0 0.0
        %10568 = vmatpush1.msra.mxu0 0.0
        %10569 = vmatprep.mubr.f32.mxu0 0.0
        %v10570 = vand.u32 %v10499, 4294901760
        %v10571 = vsub.f32 %v10499, %v10570
        %v10572 = vand.u32 %v10571, 4294901760
        %v10573 = vsub.f32 %v10571, %v10572
        %v10574 = vand.u32 %v10573, 4294901760
        %10575 = vmatmul.mubr.f32.gmra.mrb[0].mxu0 %v10574
        %v10576 = vpop.f32.mrb[0].mxu0
        %v10577 = vadd.f32 0.0, %v10576
        %v10578 = vpop.f32.mrb[0].mxu0
        %v10579 = vadd.f32 0.0, %v10578
        %10580 = vdwg.mxu0
        %v10581 = vand.u32 %v262, 4294901760
        %v10582 = vsub.f32 %v262, %v10581
        %v10583 = vand.u32 %v10582, 4294901760
        %v10584 = vsub.f32 %v10582, %v10583
        %v10585 = vand.u32 %v10584, 4294901760
        %10586 = vmatprep.subr.mxu0 %v10585
        %v10587 = vand.u32 %v261, 4294901760
        %v10588 = vsub.f32 %v261, %v10587
        %v10589 = vand.u32 %v10588, 4294901760
        %v10590 = vsub.f32 %v10588, %v10589
        %v10591 = vand.u32 %v10590, 4294901760
        %10592 = vmatpush1.msra.mxu0 %v10591
        %v10593 = vand.u32 %v2570, 4294901760
        %v10594 = vsub.f32 %v2570, %v10593
        %v10595 = vand.u32 %v10594, 4294901760
        %v10596 = vsub.f32 %v10594, %v10595
        %v10597 = vand.u32 %v10596, 4294901760
        %10598 = vmatprep.subr.mxu0 %v10597
        %v10599 = vand.u32 %v2567, 4294901760
        %v10600 = vsub.f32 %v2567, %v10599
        %v10601 = vand.u32 %v10600, 4294901760
        %v10602 = vsub.f32 %v10600, %v10601
        %v10603 = vand.u32 %v10602, 4294901760
        %10604 = vmatpush1.msra.mxu0 %v10603
        %10605 = vmatprep.subr.mxu0 0.0
        %10606 = vmatpush1.msra.mxu0 0.0
        %10607 = vmatprep.subr.mxu0 0.0
        %10608 = vmatpush1.msra.mxu0 0.0
        %10609 = vmatprep.subr.mxu0 0.0
        %10610 = vmatpush1.msra.mxu0 0.0
        %10611 = vmatprep.subr.mxu0 0.0
        %10612 = vmatpush1.msra.mxu0 0.0
        %10613 = vmatprep.subr.mxu0 0.0
        %10614 = vmatpush1.msra.mxu0 0.0
        %10615 = vmatprep.subr.mxu0 0.0
        %10616 = vmatpush1.msra.mxu0 0.0
        %10617 = vmatprep.subr.mxu0 0.0
        %10618 = vmatpush1.msra.mxu0 0.0
        %10619 = vmatprep.subr.mxu0 0.0
        %10620 = vmatpush1.msra.mxu0 0.0
        %10621 = vmatprep.subr.mxu0 0.0
        %10622 = vmatpush1.msra.mxu0 0.0
        %10623 = vmatprep.subr.mxu0 0.0
        %10624 = vmatpush1.msra.mxu0 0.0
        %10625 = vmatprep.subr.mxu0 0.0
        %10626 = vmatpush1.msra.mxu0 0.0
        %10627 = vmatprep.subr.mxu0 0.0
        %10628 = vmatpush1.msra.mxu0 0.0
        %10629 = vmatprep.subr.mxu0 0.0
        %10630 = vmatpush1.msra.mxu0 0.0
        %10631 = vmatprep.subr.mxu0 0.0
        %10632 = vmatpush1.msra.mxu0 0.0
        %10633 = vmatprep.subr.mxu0 0.0
        %10634 = vmatpush1.msra.mxu0 0.0
        %10635 = vmatprep.subr.mxu0 0.0
        %10636 = vmatpush1.msra.mxu0 0.0
        %10637 = vmatprep.subr.mxu0 0.0
        %10638 = vmatpush1.msra.mxu0 0.0
        %10639 = vmatprep.subr.mxu0 0.0
        %10640 = vmatpush1.msra.mxu0 0.0
        %10641 = vmatprep.subr.mxu0 0.0
        %10642 = vmatpush1.msra.mxu0 0.0
        %10643 = vmatprep.subr.mxu0 0.0
        %10644 = vmatpush1.msra.mxu0 0.0
        %10645 = vmatprep.subr.mxu0 0.0
        %10646 = vmatpush1.msra.mxu0 0.0
        %10647 = vmatprep.subr.mxu0 0.0
        %10648 = vmatpush1.msra.mxu0 0.0
        %10649 = vmatprep.subr.mxu0 0.0
        %10650 = vmatpush1.msra.mxu0 0.0
        %10651 = vmatprep.subr.mxu0 0.0
        %10652 = vmatpush1.msra.mxu0 0.0
        %10653 = vmatprep.subr.mxu0 0.0
        %10654 = vmatpush1.msra.mxu0 0.0
        %10655 = vmatprep.subr.mxu0 0.0
        %10656 = vmatpush1.msra.mxu0 0.0
        %10657 = vmatprep.subr.mxu0 0.0
        %10658 = vmatpush1.msra.mxu0 0.0
        %10659 = vmatprep.subr.mxu0 0.0
        %10660 = vmatpush1.msra.mxu0 0.0
        %10661 = vmatprep.subr.mxu0 0.0
        %10662 = vmatpush1.msra.mxu0 0.0
        %10663 = vmatprep.subr.mxu0 0.0
        %10664 = vmatpush1.msra.mxu0 0.0
        %10665 = vmatprep.mubr.f32.mxu0 0.0
        %v10666 = vand.u32 %v10499, 4294901760
        %10667 = vmatmul.mubr.f32.gmra.mrb[0].mxu0 %v10666
        %v10668 = vpop.f32.mrb[0].mxu0
        %v10669 = vadd.f32 %v10577, %v10668
        %v10670 = vpop.f32.mrb[0].mxu0
        %v10671 = vadd.f32 %v10579, %v10670
        %10672 = vdwg.mxu0
        %v10673 = vand.u32 %v262, 4294901760
        %v10674 = vsub.f32 %v262, %v10673
        %10675 = vmatprep.subr.mxu0 %v10674
        %v10676 = vand.u32 %v261, 4294901760
        %v10677 = vsub.f32 %v261, %v10676
        %10678 = vmatpush1.msra.mxu0 %v10677
        %v10679 = vand.u32 %v2570, 4294901760
        %v10680 = vsub.f32 %v2570, %v10679
        %10681 = vmatprep.subr.mxu0 %v10680
        %v10682 = vand.u32 %v2567, 4294901760
        %v10683 = vsub.f32 %v2567, %v10682
        %10684 = vmatpush1.msra.mxu0 %v10683
        %10685 = vmatprep.subr.mxu0 0.0
        %10686 = vmatpush1.msra.mxu0 0.0
        %10687 = vmatprep.subr.mxu0 0.0
        %10688 = vmatpush1.msra.mxu0 0.0
        %10689 = vmatprep.subr.mxu0 0.0
        %10690 = vmatpush1.msra.mxu0 0.0
        %10691 = vmatprep.subr.mxu0 0.0
        %10692 = vmatpush1.msra.mxu0 0.0
        %10693 = vmatprep.subr.mxu0 0.0
        %10694 = vmatpush1.msra.mxu0 0.0
        %10695 = vmatprep.subr.mxu0 0.0
        %10696 = vmatpush1.msra.mxu0 0.0
        %10697 = vmatprep.subr.mxu0 0.0
        %10698 = vmatpush1.msra.mxu0 0.0
        %10699 = vmatprep.subr.mxu0 0.0
        %10700 = vmatpush1.msra.mxu0 0.0
        %10701 = vmatprep.subr.mxu0 0.0
        %10702 = vmatpush1.msra.mxu0 0.0
        %10703 = vmatprep.subr.mxu0 0.0
        %10704 = vmatpush1.msra.mxu0 0.0
        %10705 = vmatprep.subr.mxu0 0.0
        %10706 = vmatpush1.msra.mxu0 0.0
        %10707 = vmatprep.subr.mxu0 0.0
        %10708 = vmatpush1.msra.mxu0 0.0
        %10709 = vmatprep.subr.mxu0 0.0
        %10710 = vmatpush1.msra.mxu0 0.0
        %10711 = vmatprep.subr.mxu0 0.0
        %10712 = vmatpush1.msra.mxu0 0.0
        %10713 = vmatprep.subr.mxu0 0.0
        %10714 = vmatpush1.msra.mxu0 0.0
        %10715 = vmatprep.subr.mxu0 0.0
        %10716 = vmatpush1.msra.mxu0 0.0
        %10717 = vmatprep.subr.mxu0 0.0
        %10718 = vmatpush1.msra.mxu0 0.0
        %10719 = vmatprep.subr.mxu0 0.0
        %10720 = vmatpush1.msra.mxu0 0.0
        %10721 = vmatprep.subr.mxu0 0.0
        %10722 = vmatpush1.msra.mxu0 0.0
        %10723 = vmatprep.subr.mxu0 0.0
        %10724 = vmatpush1.msra.mxu0 0.0
        %10725 = vmatprep.subr.mxu0 0.0
        %10726 = vmatpush1.msra.mxu0 0.0
        %10727 = vmatprep.subr.mxu0 0.0
        %10728 = vmatpush1.msra.mxu0 0.0
        %10729 = vmatprep.subr.mxu0 0.0
        %10730 = vmatpush1.msra.mxu0 0.0
        %10731 = vmatprep.subr.mxu0 0.0
        %10732 = vmatpush1.msra.mxu0 0.0
        %10733 = vmatprep.subr.mxu0 0.0
        %10734 = vmatpush1.msra.mxu0 0.0
        %10735 = vmatprep.subr.mxu0 0.0
        %10736 = vmatpush1.msra.mxu0 0.0
        %10737 = vmatprep.subr.mxu0 0.0
        %10738 = vmatpush1.msra.mxu0 0.0
        %10739 = vmatprep.subr.mxu0 0.0
        %10740 = vmatpush1.msra.mxu0 0.0
        %10741 = vmatprep.subr.mxu0 0.0
        %10742 = vmatpush1.msra.mxu0 0.0
        %10743 = vmatprep.subr.mxu0 0.0
        %10744 = vmatpush1.msra.mxu0 0.0
        %10745 = vmatprep.mubr.f32.mxu0 0.0
        %v10746 = vand.u32 %v10499, 4294901760
        %v10747 = vsub.f32 %v10499, %v10746
        %10748 = vmatmul.mubr.f32.gmra.mrb[0].mxu0 %v10747
        %v10749 = vpop.f32.mrb[0].mxu0
        %v10750 = vadd.f32 %v10669, %v10749
        %v10751 = vpop.f32.mrb[0].mxu0
        %v10752 = vadd.f32 %v10671, %v10751
        %10753 = vdwg.mxu0
        %v10754 = vand.u32 %v262, 4294901760
        %10755 = vmatprep.subr.mxu0 %v10754
        %v10756 = vand.u32 %v261, 4294901760
        %10757 = vmatpush1.msra.mxu0 %v10756
        %v10758 = vand.u32 %v2570, 4294901760
        %10759 = vmatprep.subr.mxu0 %v10758
        %v10760 = vand.u32 %v2567, 4294901760
        %10761 = vmatpush1.msra.mxu0 %v10760
        %10762 = vmatprep.subr.mxu0 0.0
        %10763 = vmatpush1.msra.mxu0 0.0
        %10764 = vmatprep.subr.mxu0 0.0
        %10765 = vmatpush1.msra.mxu0 0.0
        %10766 = vmatprep.subr.mxu0 0.0
        %10767 = vmatpush1.msra.mxu0 0.0
        %10768 = vmatprep.subr.mxu0 0.0
        %10769 = vmatpush1.msra.mxu0 0.0
        %10770 = vmatprep.subr.mxu0 0.0
        %10771 = vmatpush1.msra.mxu0 0.0
        %10772 = vmatprep.subr.mxu0 0.0
        %10773 = vmatpush1.msra.mxu0 0.0
        %10774 = vmatprep.subr.mxu0 0.0
        %10775 = vmatpush1.msra.mxu0 0.0
        %10776 = vmatprep.subr.mxu0 0.0
        %10777 = vmatpush1.msra.mxu0 0.0
        %10778 = vmatprep.subr.mxu0 0.0
        %10779 = vmatpush1.msra.mxu0 0.0
        %10780 = vmatprep.subr.mxu0 0.0
        %10781 = vmatpush1.msra.mxu0 0.0
        %10782 = vmatprep.subr.mxu0 0.0
        %10783 = vmatpush1.msra.mxu0 0.0
        %10784 = vmatprep.subr.mxu0 0.0
        %10785 = vmatpush1.msra.mxu0 0.0
        %10786 = vmatprep.subr.mxu0 0.0
        %10787 = vmatpush1.msra.mxu0 0.0
        %10788 = vmatprep.subr.mxu0 0.0
        %10789 = vmatpush1.msra.mxu0 0.0
        %10790 = vmatprep.subr.mxu0 0.0
        %10791 = vmatpush1.msra.mxu0 0.0
        %10792 = vmatprep.subr.mxu0 0.0
        %10793 = vmatpush1.msra.mxu0 0.0
        %10794 = vmatprep.subr.mxu0 0.0
        %10795 = vmatpush1.msra.mxu0 0.0
        %10796 = vmatprep.subr.mxu0 0.0
        %10797 = vmatpush1.msra.mxu0 0.0
        %10798 = vmatprep.subr.mxu0 0.0
        %10799 = vmatpush1.msra.mxu0 0.0
        %10800 = vmatprep.subr.mxu0 0.0
        %10801 = vmatpush1.msra.mxu0 0.0
        %10802 = vmatprep.subr.mxu0 0.0
        %10803 = vmatpush1.msra.mxu0 0.0
        %10804 = vmatprep.subr.mxu0 0.0
        %10805 = vmatpush1.msra.mxu0 0.0
        %10806 = vmatprep.subr.mxu0 0.0
        %10807 = vmatpush1.msra.mxu0 0.0
        %10808 = vmatprep.subr.mxu0 0.0
        %10809 = vmatpush1.msra.mxu0 0.0
        %10810 = vmatprep.subr.mxu0 0.0
        %10811 = vmatpush1.msra.mxu0 0.0
        %10812 = vmatprep.subr.mxu0 0.0
        %10813 = vmatpush1.msra.mxu0 0.0
        %10814 = vmatprep.subr.mxu0 0.0
        %10815 = vmatpush1.msra.mxu0 0.0
        %10816 = vmatprep.subr.mxu0 0.0
        %10817 = vmatpush1.msra.mxu0 0.0
        %10818 = vmatprep.subr.mxu0 0.0
        %10819 = vmatpush1.msra.mxu0 0.0
        %10820 = vmatprep.subr.mxu0 0.0
        %10821 = vmatpush1.msra.mxu0 0.0
        %10822 = vmatprep.mubr.f32.mxu0 0.0
        %v10823 = vand.u32 %v10499, 4294901760
        %v10824 = vsub.f32 %v10499, %v10823
        %v10825 = vand.u32 %v10824, 4294901760
        %10826 = vmatmul.mubr.f32.gmra.mrb[0].mxu0 %v10825
        %v10827 = vpop.f32.mrb[0].mxu0
        %v10828 = vadd.f32 %v10750, %v10827
        %v10829 = vpop.f32.mrb[0].mxu0
        %v10830 = vadd.f32 %v10752, %v10829
        %10831 = vdwg.mxu0
        %v10832 = vand.u32 %v262, 4294901760
        %v10833 = vsub.f32 %v262, %v10832
        %v10834 = vand.u32 %v10833, 4294901760
        %10835 = vmatprep.subr.mxu0 %v10834
        %v10836 = vand.u32 %v261, 4294901760
        %v10837 = vsub.f32 %v261, %v10836
        %v10838 = vand.u32 %v10837, 4294901760
        %10839 = vmatpush1.msra.mxu0 %v10838
        %v10840 = vand.u32 %v2570, 4294901760
        %v10841 = vsub.f32 %v2570, %v10840
        %v10842 = vand.u32 %v10841, 4294901760
        %10843 = vmatprep.subr.mxu0 %v10842
        %v10844 = vand.u32 %v2567, 4294901760
        %v10845 = vsub.f32 %v2567, %v10844
        %v10846 = vand.u32 %v10845, 4294901760
        %10847 = vmatpush1.msra.mxu0 %v10846
        %10848 = vmatprep.subr.mxu0 0.0
        %10849 = vmatpush1.msra.mxu0 0.0
        %10850 = vmatprep.subr.mxu0 0.0
        %10851 = vmatpush1.msra.mxu0 0.0
        %10852 = vmatprep.subr.mxu0 0.0
        %10853 = vmatpush1.msra.mxu0 0.0
        %10854 = vmatprep.subr.mxu0 0.0
        %10855 = vmatpush1.msra.mxu0 0.0
        %10856 = vmatprep.subr.mxu0 0.0
        %10857 = vmatpush1.msra.mxu0 0.0
        %10858 = vmatprep.subr.mxu0 0.0
        %10859 = vmatpush1.msra.mxu0 0.0
        %10860 = vmatprep.subr.mxu0 0.0
        %10861 = vmatpush1.msra.mxu0 0.0
        %10862 = vmatprep.subr.mxu0 0.0
        %10863 = vmatpush1.msra.mxu0 0.0
        %10864 = vmatprep.subr.mxu0 0.0
        %10865 = vmatpush1.msra.mxu0 0.0
        %10866 = vmatprep.subr.mxu0 0.0
        %10867 = vmatpush1.msra.mxu0 0.0
        %10868 = vmatprep.subr.mxu0 0.0
        %10869 = vmatpush1.msra.mxu0 0.0
        %10870 = vmatprep.subr.mxu0 0.0
        %10871 = vmatpush1.msra.mxu0 0.0
        %10872 = vmatprep.subr.mxu0 0.0
        %10873 = vmatpush1.msra.mxu0 0.0
        %10874 = vmatprep.subr.mxu0 0.0
        %10875 = vmatpush1.msra.mxu0 0.0
        %10876 = vmatprep.subr.mxu0 0.0
        %10877 = vmatpush1.msra.mxu0 0.0
        %10878 = vmatprep.subr.mxu0 0.0
        %10879 = vmatpush1.msra.mxu0 0.0
        %10880 = vmatprep.subr.mxu0 0.0
        %10881 = vmatpush1.msra.mxu0 0.0
        %10882 = vmatprep.subr.mxu0 0.0
        %10883 = vmatpush1.msra.mxu0 0.0
        %10884 = vmatprep.subr.mxu0 0.0
        %10885 = vmatpush1.msra.mxu0 0.0
        %10886 = vmatprep.subr.mxu0 0.0
        %10887 = vmatpush1.msra.mxu0 0.0
        %10888 = vmatprep.subr.mxu0 0.0
        %10889 = vmatpush1.msra.mxu0 0.0
        %10890 = vmatprep.subr.mxu0 0.0
        %10891 = vmatpush1.msra.mxu0 0.0
        %10892 = vmatprep.subr.mxu0 0.0
        %10893 = vmatpush1.msra.mxu0 0.0
        %10894 = vmatprep.subr.mxu0 0.0
        %10895 = vmatpush1.msra.mxu0 0.0
        %10896 = vmatprep.subr.mxu0 0.0
        %10897 = vmatpush1.msra.mxu0 0.0
        %10898 = vmatprep.subr.mxu0 0.0
        %10899 = vmatpush1.msra.mxu0 0.0
        %10900 = vmatprep.subr.mxu0 0.0
        %10901 = vmatpush1.msra.mxu0 0.0
        %10902 = vmatprep.subr.mxu0 0.0
        %10903 = vmatpush1.msra.mxu0 0.0
        %10904 = vmatprep.subr.mxu0 0.0
        %10905 = vmatpush1.msra.mxu0 0.0
        %10906 = vmatprep.subr.mxu0 0.0
        %10907 = vmatpush1.msra.mxu0 0.0
        %10908 = vmatprep.mubr.f32.mxu0 0.0
        %v10909 = vand.u32 %v10499, 4294901760
        %10910 = vmatmul.mubr.f32.gmra.mrb[0].mxu0 %v10909
        %v10911 = vpop.f32.mrb[0].mxu0
        %v10912 = vadd.f32 %v10828, %v10911
        %v10913 = vpop.f32.mrb[0].mxu0
        %v10914 = vadd.f32 %v10830, %v10913
        %10915 = vdwg.mxu0
        %v10916 = vand.u32 %v262, 4294901760
        %10917 = vmatprep.subr.mxu0 %v10916
        %v10918 = vand.u32 %v261, 4294901760
        %10919 = vmatpush1.msra.mxu0 %v10918
        %v10920 = vand.u32 %v2570, 4294901760
        %10921 = vmatprep.subr.mxu0 %v10920
        %v10922 = vand.u32 %v2567, 4294901760
        %10923 = vmatpush1.msra.mxu0 %v10922
        %10924 = vmatprep.subr.mxu0 0.0
        %10925 = vmatpush1.msra.mxu0 0.0
        %10926 = vmatprep.subr.mxu0 0.0
        %10927 = vmatpush1.msra.mxu0 0.0
        %10928 = vmatprep.subr.mxu0 0.0
        %10929 = vmatpush1.msra.mxu0 0.0
        %10930 = vmatprep.subr.mxu0 0.0
        %10931 = vmatpush1.msra.mxu0 0.0
        %10932 = vmatprep.subr.mxu0 0.0
        %10933 = vmatpush1.msra.mxu0 0.0
        %10934 = vmatprep.subr.mxu0 0.0
        %10935 = vmatpush1.msra.mxu0 0.0
        %10936 = vmatprep.subr.mxu0 0.0
        %10937 = vmatpush1.msra.mxu0 0.0
        %10938 = vmatprep.subr.mxu0 0.0
        %10939 = vmatpush1.msra.mxu0 0.0
        %10940 = vmatprep.subr.mxu0 0.0
        %10941 = vmatpush1.msra.mxu0 0.0
        %10942 = vmatprep.subr.mxu0 0.0
        %10943 = vmatpush1.msra.mxu0 0.0
        %10944 = vmatprep.subr.mxu0 0.0
        %10945 = vmatpush1.msra.mxu0 0.0
        %10946 = vmatprep.subr.mxu0 0.0
        %10947 = vmatpush1.msra.mxu0 0.0
        %10948 = vmatprep.subr.mxu0 0.0
        %10949 = vmatpush1.msra.mxu0 0.0
        %10950 = vmatprep.subr.mxu0 0.0
        %10951 = vmatpush1.msra.mxu0 0.0
        %10952 = vmatprep.subr.mxu0 0.0
        %10953 = vmatpush1.msra.mxu0 0.0
        %10954 = vmatprep.subr.mxu0 0.0
        %10955 = vmatpush1.msra.mxu0 0.0
        %10956 = vmatprep.subr.mxu0 0.0
        %10957 = vmatpush1.msra.mxu0 0.0
        %10958 = vmatprep.subr.mxu0 0.0
        %10959 = vmatpush1.msra.mxu0 0.0
        %10960 = vmatprep.subr.mxu0 0.0
        %10961 = vmatpush1.msra.mxu0 0.0
        %10962 = vmatprep.subr.mxu0 0.0
        %10963 = vmatpush1.msra.mxu0 0.0
        %10964 = vmatprep.subr.mxu0 0.0
        %10965 = vmatpush1.msra.mxu0 0.0
        %10966 = vmatprep.subr.mxu0 0.0
        %10967 = vmatpush1.msra.mxu0 0.0
        %10968 = vmatprep.subr.mxu0 0.0
        %10969 = vmatpush1.msra.mxu0 0.0
        %10970 = vmatprep.subr.mxu0 0.0
        %10971 = vmatpush1.msra.mxu0 0.0
        %10972 = vmatprep.subr.mxu0 0.0
        %10973 = vmatpush1.msra.mxu0 0.0
        %10974 = vmatprep.subr.mxu0 0.0
        %10975 = vmatpush1.msra.mxu0 0.0
        %10976 = vmatprep.subr.mxu0 0.0
        %10977 = vmatpush1.msra.mxu0 0.0
        %10978 = vmatprep.subr.mxu0 0.0
        %10979 = vmatpush1.msra.mxu0 0.0
        %10980 = vmatprep.subr.mxu0 0.0
        %10981 = vmatpush1.msra.mxu0 0.0
        %10982 = vmatprep.subr.mxu0 0.0
        %10983 = vmatpush1.msra.mxu0 0.0
        %10984 = vmatprep.mubr.f32.mxu0 0.0
        %v10985 = vand.u32 %v10499, 4294901760
        %10986 = vmatmul.mubr.f32.gmra.mrb[0].mxu0 %v10985
        %v10987 = vpop.f32.mrb[0].mxu0
        %v10988 = vadd.f32 %v10912, %v10987
        %v10989 = vpop.f32.mrb[0].mxu0
        %v10990 = vadd.f32 %v10914, %v10989
        %10991 = vdwg.mxu0
        %v10994 = vrot.slane %v10988, 1
        %v10995 = vrot.slane %v10990, 1
        %v10996 = vrot.slane %v10988, 2
        %v10997 = vrot.slane %v10990, 2
        %v10998 = vrot.slane %v10988, 3
        %v10999 = vrot.slane %v10990, 3
        %v11000 = vrot.slane %v10988, 4
        %v11001 = vrot.slane %v10990, 4
        %v11002 = vrot.slane %v10988, 5
        %v11003 = vrot.slane %v10990, 5
        %v11004 = vrot.slane %v10988, 6
        %v11005 = vrot.slane %v10990, 6
        %v11006 = vrot.slane %v10988, 7
        %v11007 = vrot.slane %v10990, 7
        %v11024 = vmul.f32 %v9631, %v10988
        %v11025 = vmul.f32 %v9638, %v10990
        %v11026 = vmul.f32 %v9644, %v10994
        %v11027 = vmul.f32 %v9651, %v10995
        %v11028 = vmul.f32 %v9657, %v10996
        %v11029 = vmul.f32 %v9664, %v10997
        %v11030 = vmul.f32 %v9670, %v10998
        %v11031 = vmul.f32 %v9677, %v10999
        %v11032 = vmul.f32 %v9683, %v11000
        %v11033 = vmul.f32 %v9690, %v11001
        %v11034 = vmul.f32 %v9696, %v11002
        %v11035 = vmul.f32 %v9703, %v11003
        %v11036 = vmul.f32 %v9709, %v11004
        %v11037 = vmul.f32 %v9716, %v11005
        %v11038 = vmul.f32 %v9722, %v11006
        %v11039 = vmul.f32 %v9729, %v11007
        %v11056 = vrot.slane %v11026, 7
        %v11057 = vsel %vm440, %v11056, %v11024
        %v11058 = vrot.slane %v11028, 6
        %v11059 = vsel %vm442, %v11058, %v11057
        %v11060 = vrot.slane %v11030, 5
        %v11061 = vsel %vm444, %v11060, %v11059
        %v11062 = vrot.slane %v11032, 4
        %v11063 = vsel %vm446, %v11062, %v11061
        %v11064 = vrot.slane %v11034, 3
        %v11065 = vsel %vm448, %v11064, %v11063
        %v11066 = vrot.slane %v11036, 2
        %v11067 = vsel %vm450, %v11066, %v11065
        %v11068 = vrot.slane %v11038, 1
        %v11069 = vsel %vm452, %v11068, %v11067
        %v11070 = vrot.slane %v11027, 7
        %v11071 = vsel %vm440, %v11070, %v11025
        %v11072 = vrot.slane %v11029, 6
        %v11073 = vsel %vm442, %v11072, %v11071
        %v11074 = vrot.slane %v11031, 5
        %v11075 = vsel %vm444, %v11074, %v11073
        %v11076 = vrot.slane %v11033, 4
        %v11077 = vsel %vm446, %v11076, %v11075
        %v11078 = vrot.slane %v11035, 3
        %v11079 = vsel %vm448, %v11078, %v11077
        %v11080 = vrot.slane %v11037, 2
        %v11081 = vsel %vm450, %v11080, %v11079
        %v11082 = vrot.slane %v11039, 1
        %v11083 = vsel %vm452, %v11082, %v11081
        %11086 = vst [vmem:[%s243] sm:$0xff] %v11069
        %11087 = vst.msk [vmem:[%s243 + $0x8] sm:$0xff] %vm309, %v11083
        %s11088 = sand.u32 %s140, 1
        %s11089 = scalar_lea.sflag [#allocation4], %s11088
        %s11090 = sand.u32 %s140, 1
        %s11091 = smul.addr %s11090, 16
        %s11092 = scalar_lea.vmem [#allocation5], %s11091
        // Predicated region
        $region45: #{tpu_custom_call.1} parent=39 // pred_check
          %p11093 = pneg %p150
        $region46: #{tpu_custom_call.1} parent=39 // pred_check_branch
          %11095 = sbr.rel (%p11093) target = $region48
        $region47: #{tpu_custom_call.1} parent=39 // pred_region
          %s11097 = ssub.s32 256, 256
          %11098 = vsyncadd %s11089, %s11097
          %s11099 = smul.addr %s22, 2
          %s11100 = smul.addr %s11099, 128
          %s11101 = scalar_lea.hbm %s5, %s11100
          %s11103 = sshll.u32 %s11092, 4
          %s11104 = int_to_ptr.vmem [resolvable:$true] %s11103
          %11106 = dma.vmem_to_hbm [thread:$0]  %s11104, 256, %s11101, %s11089
        $region48: #{tpu_custom_call.1} parent=39 // pred_fallthru
          _
      $region40: #{tpu_custom_call.1} parent=5 // pred_fallthru
        _
      %p11107 = scmp.le.s32.totalorder 2, %s17
      // Predicated region
      $region49: #{tpu_custom_call.1} parent=5 // pred_check
        %p11108 = pneg %p11107
      $region50: #{tpu_custom_call.1} parent=5 // pred_check_branch
        %11110 = sbr.rel (%p11108) target = $region52
      $region51: #{tpu_custom_call.1} parent=5 // pred_region
        %s11111 = ssub.s32 %s17, 2
        // Predicated region
        $region53: #{tpu_custom_call.1} parent=51 // pred_check
          %p11112 = pneg %p156
        $region54: #{tpu_custom_call.1} parent=51 // pred_check_branch
          %11114 = sbr.rel (%p11112) target = $region56
        $region55: #{tpu_custom_call.1} parent=51 // pred_region
          %s11115 = sand.u32 %s141, 1
          %s11116 = scalar_lea.sflag [#allocation4], %s11115
          %s11117 = sand.u32 %s141, 1
          %s11118 = smul.addr %s11117, 16
          %s11119 = scalar_lea.vmem [#allocation5], %s11118
          %11120 = dma.done %s11116, 256
        $region56: #{tpu_custom_call.1} parent=51 // pred_fallthru
          _
      $region52: #{tpu_custom_call.1} parent=5 // pred_fallthru
        _
    $region6: #{tpu_custom_call.1} parent=1 // loop_footer
      %s21 = sadd.s32 1, %s17
    $region7: #{tpu_custom_call.1} parent=1 // loop_footer_branch
      %16 = sbr.rel target = $region3
    $region8: #{tpu_custom_call.1} parent=1 // loop_exit
      _
    %11121 = vsyncpa [#allocation3], 1
    %s11122 = scalar_lea.sflag [#allocation3], 1
    %11123 = vsyncpa %s11122, 1
    %11124 = vsyncpa [#allocation4], 1
    %s11125 = scalar_lea.sflag [#allocation4], 1
    %11126 = vsyncpa %s11125, 1

</llo_original>
